<compile_context>
chip_gen: v5e
topology: v5e:2x2
jax: 0.10.0
libtpu: 0.0.40
codegen_flags: <defaults>
</compile_context>

<pallas_src>
import numpy as np
import jax
import jax.numpy as jnp
from jax import lax
from jax.experimental import pallas as pl
from jax.experimental.pallas import tpu as pltpu

SUB = 8                    # (batch, strip) rows per block == f32 sublane count
LANE = 128                 # lane width
MIN_ROWS = 2 * SUB         # aim for >= 2 grid blocks (both v7x TensorCores busy)
TS_TARGET = 1024           # target valid samples per strip for long utterances
CVM_BUDGET = 24 * 2**20    # budget for the (L*SUB, TT) sample-rate tap scratch
STATIC_TAP_UNROLL_LIMIT = 64


def _round_up(x, m):
    return (x + m - 1) // m * m


def _cdiv(a, b):
    return -(-a // b)


# ---------------------------------------------------------------------------
# Host-side glue: MelGeneralizedCepstrumToMelGeneralizedCepstrum (gamma == 0)
# ---------------------------------------------------------------------------
def freqt_matrix(m_in, m_out, alpha):
    """Linear map of SPTK freqt: c_in (m_in+1,) -> c_out (m_out+1,)."""
    A = np.zeros((m_out + 1, m_in + 1), dtype=np.float64)
    for col in range(m_in + 1):
        cin = np.zeros(m_in + 1)
        cin[col] = 1.0
        d = np.zeros(m_out + 1)
        for i in range(m_in, -1, -1):
            prev = d.copy()
            d[0] = cin[i] + alpha * prev[0]
            if m_out >= 1:
                d[1] = (1.0 - alpha * alpha) * prev[0] + alpha * prev[1]
            for m in range(2, m_out + 1):
                d[m] = prev[m - 1] + alpha * (prev[m] - d[m - 1])
        A[:, col] = d
    return A.astype(np.float32)


def mgc2c(mc, cep_order, alpha=0.0, gamma=0.0):
    # mc: (B, N, M+1) -> c: (B, N, cep_order+1)
    if gamma != 0.0:
        raise NotImplementedError("only gamma == 0 is supported")
    m_in = mc.shape[-1] - 1
    alpha_t = (0.0 - alpha) / (1.0 - alpha * 0.0)  # out_alpha = 0
    A = jnp.asarray(freqt_matrix(m_in, cep_order, alpha_t))
    return jnp.einsum("bnm,cm->bnc", mc, A)


def mirror(c, half=False):
    # c: (..., L) -> (..., 2L-1), matches diffsptk mirror()
    c0 = c[..., :1]
    c1 = c[..., 1:]
    if half:
        c1 = c1 * 0.5
    return jnp.concatenate([jnp.flip(c1, axis=-1), c0, c1], axis=-1)


def linear_interpolate(c, frame_period):
    # Reference-only host implementation: (B, N, L) -> (B, N*P, L)
    B, N, L = c.shape
    P = frame_period
    c_next = jnp.concatenate([c[:, 1:], c[:, -1:]], axis=1)
    w = (jnp.arange(P, dtype=c.dtype) / P)[None, None, :, None]
    out = (1.0 - w) * c[:, :, None, :] + w * c_next[:, :, None, :]
    return out.reshape(B, N * P, L)


# ---------------------------------------------------------------------------
# Strip geometry + static per-strip interpolation matrix
# ---------------------------------------------------------------------------
def _strip_geometry(T, P, B, L, pad_left, pad_right, taylor_order):
    H_left = taylor_order * pad_left
    H_right = taylor_order * pad_right

    def tt_of(ts):
        voff = _round_up(pad_left + H_left, LANE)   # lane-aligned valid start
        return voff, _round_up(voff + ts + H_right + pad_right, LANE)

    # Valid samples per strip: small enough to give >= MIN_ROWS rows (fills the
    # sublanes and both v7x cores at small batch), capped by TS_TARGET and the
    # VMEM budget of the (L*SUB, TT) tap scratch, and always a multiple of the
    # frame period so one static interpolation matrix serves every strip.
    ts = min(_cdiv(T, _cdiv(MIN_ROWS, B)), TS_TARGET)
    ts = min(_round_up(max(ts, 1), P), _round_up(T, P))
    while ts > P and L * SUB * tt_of(ts)[1] * 4 > CVM_BUDGET:
        ts -= P
    VOFF, TT = tt_of(ts)
    WOFF = VOFF - H_left
    TL = H_left + ts + H_right
    n_strips = _cdiv(T, ts)
    return ts, n_strips, H_left, H_right, TL, WOFF, VOFF, TT


def _strip_interp_matrix(P, phi, TL, WOFF, TT, F_pad):
    """Banded frame->sample linear-interp matrix, zero outside the live window."""
    W = np.zeros((F_pad, TT), dtype=np.float32)
    k = np.arange(TL)
    f = (phi + k) // P
    w = ((phi + k) % P) / float(P)
    cols = WOFF + k
    np.add.at(W, (f, cols), 1.0 - w)
    np.add.at(W, (f + 1, cols), w)
    return W


# ---------------------------------------------------------------------------
# Pallas kernel: multi-stage time-varying FIR (Taylor expansion of exp filter)
# ---------------------------------------------------------------------------
def mglsadf_pallas(x, c_frames, frame_period, pad_left, pad_right, taylor_order):
    """x: (B, T) f32 excitation; c_frames: (B, NF, L) f32 frame-rate taps
    (already flipped / mirrored for the requested phase)."""
    x = x.astype(jnp.float32)
    c_frames = c_frames.astype(jnp.float32)
    B, T = x.shape
    _, NF, L = c_frames.shape
    P = frame_period
    assert T == NF * P
    L8 = L * SUB

    TS, n_strips, H_left, H_right, TL, WOFF, VOFF, TT = _strip_geometry(
        T, P, B, L, pad_left, pad_right, taylor_order)
    # Roll-wrap safety: the sample-rate taps are zero outside lanes
    # [WOFF, WOFF+TL) (W columns are zero there), WOFF >= pad_left and
    # TT >= WOFF + TL + pad_right, so every circular wrap of pltpu.roll lands
    # on zero-tap / zero-signal lanes and never corrupts a live lane.
    assert WOFF >= pad_left and TT >= WOFF + TL + pad_right

    phi = (-H_left) % P
    F_loc = (phi + TL - 1) // P + 2
    F_pad = _round_up(F_loc, 8)
    W = jnp.asarray(_strip_interp_matrix(P, phi, TL, WOFF, TT, F_pad))

    # ---- row bookkeeping: row r = (batch b, strip s), padded to 8-row blocks
    R = B * n_strips
    R_pad = _round_up(max(R, SUB), SUB)
    NB = R_pad // SUB
    b_rows = np.concatenate([np.repeat(np.arange(B), n_strips),
                             np.zeros(R_pad - R, np.int64)])
    s_rows = np.concatenate([np.tile(np.arange(n_strips), B),
                             np.zeros(R_pad - R, np.int64)])
    g0_rows = s_rows * TS - H_left            # global time of lane WOFF per row

    # ---- per-row excitation window (halo included), zeros outside [0, T)
    xp = jnp.pad(x, ((0, 0), (H_left, H_right + n_strips * TS - T)))
    t_idx = s_rows[:, None] * TS + np.arange(TL)[None, :]
    x_gath = xp[jnp.asarray(b_rows)[:, None], jnp.asarray(t_idx)]     # (R_pad, TL)
    x_rows = jnp.zeros((R_pad, TT), jnp.float32).at[:, WOFF:WOFF + TL].set(x_gath)

    # ---- per-row frame-rate taps: only the F_loc bracketing frames of the strip
    f0_rows = g0_rows // P                    # floor division (can be negative)
    f_idx = np.clip(f0_rows[:, None] + np.arange(F_loc)[None, :], 0, NF - 1)
    cT = jnp.transpose(c_frames, (0, 2, 1))                           # (B, L, NF)
    cf_gath = cT[jnp.asarray(b_rows)[:, None, None],
                 jnp.arange(L)[None, :, None],
                 jnp.asarray(f_idx)[:, None, :]]                      # (R_pad, L, F_loc)
    cf_rows = (cf_gath.reshape(NB, SUB, L, F_loc)
               .transpose(0, 2, 1, 3)
               .reshape(NB, L8, F_loc))
    cf_rows = jnp.pad(cf_rows, ((0, 0), (0, 0), (0, F_pad - F_loc)))

    t0_rows = jnp.asarray(g0_rows, jnp.int32).reshape(R_pad, 1)

    inv_a = [1.0 / a for a in range(1, taylor_order + 1)]  # static Taylor recips

    def kernel(x_ref, cf_ref, w_ref, t0_ref, y_ref, cvm_ref):
        # 1) frame -> sample-rate taps via one small banded matmul on the MXU.
        #    With the banded W this is ~F_loc/NF of the old dense-interp cost,
        #    so keeping HIGHEST precision (f32-exact taps) is negligible even
        #    on v5e's MXU.
        cvm_ref[...] = jnp.dot(cf_ref[...], w_ref[...],
                               preferred_element_type=jnp.float32,
                               precision=lax.Precision.HIGHEST)

        # 2) validity mask: zero every lane whose global time is outside [0, T)
        #    so the strip-local recomputation matches the padded global filter.
        lane = lax.broadcasted_iota(jnp.int32, (SUB, TT), 1)
        g = t0_ref[...] + (lane - WOFF)
        maskf = jnp.where((g >= 0) & (g < T), 1.0, 0.0).astype(jnp.float32)

        # 3) Taylor / FIR chain, fully in registers; the per-tap rolls stay
        #    independent (XLU slot) and co-issue with the VPU FMAs.
        cur = x_ref[...]
        y = cur

        if L <= STATIC_TAP_UNROLL_LIMIT:
            # Small tap count (test config): static unroll, bounded by tiling.
            for a in range(taylor_order):
                acc = jnp.zeros_like(cur)
                for j in range(L):
                    shift = (pad_left - j) % TT
                    win = cur if shift == 0 else pltpu.roll(cur, shift, 1)
                    acc = acc + win * cvm_ref[pl.ds(j * SUB, SUB), :]
                cur = acc * maskf * inv_a[a]
                y = y + cur
        else:
            # Large tap counts: fori loops bound trace size / vreg live ranges.
            def stage_body(a, carry):
                cur, y = carry

                def tap_body(j, acc):
                    shift = (pad_left - j) % TT
                    win = pltpu.roll(cur, shift, 1)
                    off = pl.multiple_of(j * SUB, SUB)
                    return acc + win * cvm_ref[pl.ds(off, SUB), :]

                acc = lax.fori_loop(0, L, tap_body, jnp.zeros_like(cur),
                                    unroll=8)
                cur = acc * maskf * (1.0 / (a + 1).astype(jnp.float32))
                return cur, y + cur

            cur, y = lax.fori_loop(0, taylor_order, stage_body, (cur, y))

        # 4) write only the lane-aligned valid centre of the strip.
        y_ref[...] = y[:, VOFF:VOFF + TS]

    # ---- VMEM budget (generation aware) + cost estimate
    need = 4 * (L8 * TT
                + 2 * (SUB * TT + SUB * TS + L8 * F_pad + F_pad * TT + SUB))
    try:
        phys_vmem = int(getattr(pltpu.get_tpu_info(), "vmem_capacity_bytes",
                                64 * 2**20))
    except Exception:
        phys_vmem = 64 * 2**20
    vmem_limit = int(min(max(need * 5 // 4, 16 * 2**20),
                         max(phys_vmem * 3 // 4, need * 9 // 8)))

    cost = pl.CostEstimate(
        flops=int(2 * L * taylor_order * R_pad * TT
                  + 2 * NB * L8 * F_pad * TT),
        transcendentals=0,
        bytes_accessed=int(4 * (R_pad * TT + R_pad * TS + NB * L8 * F_pad
                                + F_pad * TT + R_pad)),
    )

    y_rows = pl.pallas_call(
        kernel,
        out_shape=jax.ShapeDtypeStruct((R_pad, TS), jnp.float32),
        grid=(NB,),
        in_specs=[
            pl.BlockSpec((SUB, TT), lambda g: (g, 0)),          # excitation rows
            pl.BlockSpec((None, L8, F_pad), lambda g: (g, 0, 0)),  # frame taps
            pl.BlockSpec((F_pad, TT), lambda g: (0, 0)),        # static interp W
            pl.BlockSpec((SUB, 1), lambda g: (g, 0)),           # row start times
        ],
        out_specs=pl.BlockSpec((SUB, TS), lambda g: (g, 0)),
        scratch_shapes=[pltpu.VMEM((L8, TT), jnp.float32)],
        compiler_params=pltpu.CompilerParams(
            dimension_semantics=("parallel",),
            vmem_limit_bytes=vmem_limit,
        ),
        cost_estimate=cost,
    )(x_rows, cf_rows, W, t0_rows)

    # Stitch the valid centres back together (row order is batch-major).
    y = y_rows[:R].reshape(B, n_strips * TS)[:, :T]
    return y


# ---------------------------------------------------------------------------
# Full forward (mirrors MultiStageFIRFilter.forward)
# ---------------------------------------------------------------------------
def multi_stage_fir_filter(x, mc, *, frame_period, cep_order, alpha=0.0,
                           gamma=0.0, ignore_gain=False, phase="minimum",
                           taylor_order=6):
    c = mgc2c(mc, cep_order, alpha=alpha, gamma=gamma)   # (B, NF, cep_order+1)
    if ignore_gain:
        c = c.at[..., 0].set(0.0)

    if phase == "minimum":
        c = jnp.flip(c, axis=-1)
        pad_left, pad_right = cep_order, 0
    elif phase == "maximum":
        pad_left, pad_right = 0, cep_order
    elif phase == "zero":
        c = mirror(c, half=True)
        pad_left, pad_right = cep_order, cep_order
    else:
        raise ValueError(f"phase {phase} is not supported")

    y = mglsadf_pallas(x, c, frame_period, pad_left, pad_right, taylor_order)
    return y, c, pad_left, pad_right


# ---------------------------------------------------------------------------
# Pure-JAX reference of the Taylor / unfold hot path (for verification)
# ---------------------------------------------------------------------------
def reference_filter(x, c_up, pad_left, pad_right, taylor_order):
    B, T = x.shape
    L = c_up.shape[-1]
    idx = jnp.arange(T)[:, None] + jnp.arange(L)[None, :]
    y = x
    cur = x
    for a in range(1, taylor_order + 1):
        xp = jnp.pad(cur, ((0, 0), (pad_left, pad_right)))
        win = xp[:, idx]                     # (B, T, L) unfold
        cur = (win * c_up).sum(-1) / a
        y = y + cur
    return y


if __name__ == "__main__":
    # Small, module-consistent shapes
    B = 2
    filter_order = 7       # mc has filter_order + 1 = 8 coefficients
    cep_order = 31         # cepstrum length 32
    frame_period = 8
    n_frames = 8
    T = n_frames * frame_period   # 64 samples
    taylor_order = 6

    key = jax.random.PRNGKey(0)
    kx, kmc = jax.random.split(key)
    x = jax.random.normal(kx, (B, T), dtype=jnp.float32)
    mc = 0.1 * jax.random.normal(kmc, (B, n_frames, filter_order + 1),
                                 dtype=jnp.float32)

    y, c_frames, pad_left, pad_right = multi_stage_fir_filter(
        x, mc,
        frame_period=frame_period,
        cep_order=cep_order,
        alpha=0.0, gamma=0.0,
        ignore_gain=False,
        phase="minimum",
        taylor_order=taylor_order,
    )
    y = jax.block_until_ready(y)

    # Reference: host-side linear interpolation + unfold/mul/sum Taylor chain.
    c_up = linear_interpolate(c_frames, frame_period)        # (B, T, L)
    y_ref = reference_filter(x, c_up, pad_left, pad_right, taylor_order)
    np.testing.assert_allclose(np.asarray(y), np.asarray(y_ref),
                               rtol=2e-4, atol=2e-4)
    print("KERNEL_OK")
</pallas_src>

<mosaic_0001>
module attributes {stable_mosaic.version = 11 : i64} {
  func.func @kernel(%arg0: i32, %arg1: memref<8x384xf32, #tpu.memory_space<vmem>>, %arg2: memref<1x256x32xf32, #tpu.memory_space<vmem>>, %arg3: memref<32x384xf32, #tpu.memory_space<vmem>>, %arg4: memref<8x1xi32, #tpu.memory_space<vmem>>, %arg5: memref<8x8xf32, #tpu.memory_space<vmem>>, %arg6: memref<256x384xf32, #tpu.memory_space<vmem>>) attributes {dimension_semantics = [#tpu.dimension_semantics<parallel>], iteration_bounds = array<i64: 2>, scalar_prefetch = 0 : i64, scratch_operands = 1 : i64, tpu.core_type = #tpu.core_type<tc>, window_params = [{transform_indices = @transform_0, window_bounds = array<i64: 8, 384>}, {transform_indices = @transform_1, window_bounds = array<i64: 1, 256, 32>}, {pipeline_mode = #tpu.pipeline_mode<synchronous>, transform_indices = @transform_2, window_bounds = array<i64: 32, 384>}, {transform_indices = @transform_3, window_bounds = array<i64: 8, 1>}, {transform_indices = @transform_4, window_bounds = array<i64: 8, 8>}]} {
    %c0 = arith.constant 0 : index
    %c0_0 = arith.constant 0 : index
    %c0_1 = arith.constant 0 : index
    %0 = vector.load %arg2[%c0, %c0_0, %c0_1] : memref<1x256x32xf32, #tpu.memory_space<vmem>>, vector<1x256x32xf32>
    %1 = vector.shape_cast %0 : vector<1x256x32xf32> to vector<256x32xf32>
    %c0_2 = arith.constant 0 : index
    %c0_3 = arith.constant 0 : index
    %2 = vector.load %arg3[%c0_2, %c0_3] : memref<32x384xf32, #tpu.memory_space<vmem>>, vector<32x384xf32>
    %cst = arith.constant dense<0.000000e+00> : vector<256x384xf32>
    %3 = tpu.matmul %1, %2, %cst {dimension_numbers = #tpu.dot_dimension_numbers<[1], [0], [0], [1], [0, 0, 1, 1], [], []>, precision = #tpu.contract_precision<fp32>} : vector<256x32xf32>, vector<32x384xf32>, vector<256x384xf32> -> vector<256x384xf32>
    %c0_4 = arith.constant 0 : index
    %c0_5 = arith.constant 0 : index
    %4 = vector.load %arg6[%c0_4, %c0_5] : memref<256x384xf32, #tpu.memory_space<vmem>>, vector<256x384xf32>
    tpu.vector_store %arg6[%c0_4, %c0_5], %3 {strides = array<i32>} : memref<256x384xf32, #tpu.memory_space<vmem>>, vector<256x384xf32>,
    %5 = tpu.iota {dimensions = array<i32: 1>} : vector<8x384xi32>
    %c0_6 = arith.constant 0 : index
    %c0_7 = arith.constant 0 : index
    %6 = vector.load %arg4[%c0_6, %c0_7] : memref<8x1xi32, #tpu.memory_space<vmem>>, vector<8x1xi32>
    %c70_i32 = arith.constant 70 : i32
    %7 = vector.broadcast %c70_i32 : i32 to vector<8x384xi32>
    %8 = arith.subi %5, %7 : vector<8x384xi32>
    %9 = vector.broadcast %6 : vector<8x1xi32> to vector<8x384xi32>
    %10 = arith.addi %9, %8 : vector<8x384xi32>
    %c0_i32 = arith.constant 0 : i32
    %11 = vector.broadcast %c0_i32 : i32 to vector<8x384xi32>
    %12 = arith.cmpi sge, %10, %11 : vector<8x384xi32>
    %c64_i32 = arith.constant 64 : i32
    %13 = vector.broadcast %c64_i32 : i32 to vector<8x384xi32>
    %14 = arith.cmpi slt, %10, %13 : vector<8x384xi32>
    %15 = arith.andi %12, %14 : vector<8x384xi1>
    %cst_8 = arith.constant 1.000000e+00 : f32
    %cst_9 = arith.constant 0.000000e+00 : f32
    %16 = vector.broadcast %cst_8 : f32 to vector<8x384xf32>
    %17 = vector.broadcast %cst_9 : f32 to vector<8x384xf32>
    %18 = arith.select %15, %16, %17 : vector<8x384xi1>, vector<8x384xf32>
    %c0_10 = arith.constant 0 : index
    %c0_11 = arith.constant 0 : index
    %19 = vector.load %arg1[%c0_10, %c0_11] : memref<8x384xf32, #tpu.memory_space<vmem>>, vector<8x384xf32>
    %cst_12 = arith.constant 0.000000e+00 : f32
    %20 = vector.broadcast %cst_12 : f32 to vector<8x384xf32>
    %c31_i32 = arith.constant 31 : i32
    %21 = tpu.dynamic_rotate %19 by %c31_i32 dim 1 : vector<8x384xf32>, i32 -> vector<8x384xf32>
    %c0_13 = arith.constant 0 : index
    %c0_14 = arith.constant 0 : index
    %22 = vector.load %arg6[%c0_13, %c0_14] : memref<256x384xf32, #tpu.memory_space<vmem>>, vector<8x384xf32>
    %23 = arith.mulf %21, %22 : vector<8x384xf32>
    %24 = arith.addf %20, %23 : vector<8x384xf32>
    %c30_i32 = arith.constant 30 : i32
    %25 = tpu.dynamic_rotate %19 by %c30_i32 dim 1 : vector<8x384xf32>, i32 -> vector<8x384xf32>
    %c8 = arith.constant 8 : index
    %c0_15 = arith.constant 0 : index
    %26 = vector.load %arg6[%c8, %c0_15] : memref<256x384xf32, #tpu.memory_space<vmem>>, vector<8x384xf32>
    %27 = arith.mulf %25, %26 : vector<8x384xf32>
    %28 = arith.addf %24, %27 : vector<8x384xf32>
    %c29_i32 = arith.constant 29 : i32
    %29 = tpu.dynamic_rotate %19 by %c29_i32 dim 1 : vector<8x384xf32>, i32 -> vector<8x384xf32>
    %c16 = arith.constant 16 : index
    %c0_16 = arith.constant 0 : index
    %30 = vector.load %arg6[%c16, %c0_16] : memref<256x384xf32, #tpu.memory_space<vmem>>, vector<8x384xf32>
    %31 = arith.mulf %29, %30 : vector<8x384xf32>
    %32 = arith.addf %28, %31 : vector<8x384xf32>
    %c28_i32 = arith.constant 28 : i32
    %33 = tpu.dynamic_rotate %19 by %c28_i32 dim 1 : vector<8x384xf32>, i32 -> vector<8x384xf32>
    %c24 = arith.constant 24 : index
    %c0_17 = arith.constant 0 : index
    %34 = vector.load %arg6[%c24, %c0_17] : memref<256x384xf32, #tpu.memory_space<vmem>>, vector<8x384xf32>
    %35 = arith.mulf %33, %34 : vector<8x384xf32>
    %36 = arith.addf %32, %35 : vector<8x384xf32>
    %c27_i32 = arith.constant 27 : i32
    %37 = tpu.dynamic_rotate %19 by %c27_i32 dim 1 : vector<8x384xf32>, i32 -> vector<8x384xf32>
    %c32 = arith.constant 32 : index
    %c0_18 = arith.constant 0 : index
    %38 = vector.load %arg6[%c32, %c0_18] : memref<256x384xf32, #tpu.memory_space<vmem>>, vector<8x384xf32>
    %39 = arith.mulf %37, %38 : vector<8x384xf32>
    %40 = arith.addf %36, %39 : vector<8x384xf32>
    %c26_i32 = arith.constant 26 : i32
    %41 = tpu.dynamic_rotate %19 by %c26_i32 dim 1 : vector<8x384xf32>, i32 -> vector<8x384xf32>
    %c40 = arith.constant 40 : index
    %c0_19 = arith.constant 0 : index
    %42 = vector.load %arg6[%c40, %c0_19] : memref<256x384xf32, #tpu.memory_space<vmem>>, vector<8x384xf32>
    %43 = arith.mulf %41, %42 : vector<8x384xf32>
    %44 = arith.addf %40, %43 : vector<8x384xf32>
    %c25_i32 = arith.constant 25 : i32
    %45 = tpu.dynamic_rotate %19 by %c25_i32 dim 1 : vector<8x384xf32>, i32 -> vector<8x384xf32>
    %c48 = arith.constant 48 : index
    %c0_20 = arith.constant 0 : index
    %46 = vector.load %arg6[%c48, %c0_20] : memref<256x384xf32, #tpu.memory_space<vmem>>, vector<8x384xf32>
    %47 = arith.mulf %45, %46 : vector<8x384xf32>
    %48 = arith.addf %44, %47 : vector<8x384xf32>
    %c24_i32 = arith.constant 24 : i32
    %49 = tpu.dynamic_rotate %19 by %c24_i32 dim 1 : vector<8x384xf32>, i32 -> vector<8x384xf32>
    %c56 = arith.constant 56 : index
    %c0_21 = arith.constant 0 : index
    %50 = vector.load %arg6[%c56, %c0_21] : memref<256x384xf32, #tpu.memory_space<vmem>>, vector<8x384xf32>
    %51 = arith.mulf %49, %50 : vector<8x384xf32>
    %52 = arith.addf %48, %51 : vector<8x384xf32>
    %c23_i32 = arith.constant 23 : i32
    %53 = tpu.dynamic_rotate %19 by %c23_i32 dim 1 : vector<8x384xf32>, i32 -> vector<8x384xf32>
    %c64 = arith.constant 64 : index
    %c0_22 = arith.constant 0 : index
    %54 = vector.load %arg6[%c64, %c0_22] : memref<256x384xf32, #tpu.memory_space<vmem>>, vector<8x384xf32>
    %55 = arith.mulf %53, %54 : vector<8x384xf32>
    %56 = arith.addf %52, %55 : vector<8x384xf32>
    %c22_i32 = arith.constant 22 : i32
    %57 = tpu.dynamic_rotate %19 by %c22_i32 dim 1 : vector<8x384xf32>, i32 -> vector<8x384xf32>
    %c72 = arith.constant 72 : index
    %c0_23 = arith.constant 0 : index
    %58 = vector.load %arg6[%c72, %c0_23] : memref<256x384xf32, #tpu.memory_space<vmem>>, vector<8x384xf32>
    %59 = arith.mulf %57, %58 : vector<8x384xf32>
    %60 = arith.addf %56, %59 : vector<8x384xf32>
    %c21_i32 = arith.constant 21 : i32
    %61 = tpu.dynamic_rotate %19 by %c21_i32 dim 1 : vector<8x384xf32>, i32 -> vector<8x384xf32>
    %c80 = arith.constant 80 : index
    %c0_24 = arith.constant 0 : index
    %62 = vector.load %arg6[%c80, %c0_24] : memref<256x384xf32, #tpu.memory_space<vmem>>, vector<8x384xf32>
    %63 = arith.mulf %61, %62 : vector<8x384xf32>
    %64 = arith.addf %60, %63 : vector<8x384xf32>
    %c20_i32 = arith.constant 20 : i32
    %65 = tpu.dynamic_rotate %19 by %c20_i32 dim 1 : vector<8x384xf32>, i32 -> vector<8x384xf32>
    %c88 = arith.constant 88 : index
    %c0_25 = arith.constant 0 : index
    %66 = vector.load %arg6[%c88, %c0_25] : memref<256x384xf32, #tpu.memory_space<vmem>>, vector<8x384xf32>
    %67 = arith.mulf %65, %66 : vector<8x384xf32>
    %68 = arith.addf %64, %67 : vector<8x384xf32>
    %c19_i32 = arith.constant 19 : i32
    %69 = tpu.dynamic_rotate %19 by %c19_i32 dim 1 : vector<8x384xf32>, i32 -> vector<8x384xf32>
    %c96 = arith.constant 96 : index
    %c0_26 = arith.constant 0 : index
    %70 = vector.load %arg6[%c96, %c0_26] : memref<256x384xf32, #tpu.memory_space<vmem>>, vector<8x384xf32>
    %71 = arith.mulf %69, %70 : vector<8x384xf32>
    %72 = arith.addf %68, %71 : vector<8x384xf32>
    %c18_i32 = arith.constant 18 : i32
    %73 = tpu.dynamic_rotate %19 by %c18_i32 dim 1 : vector<8x384xf32>, i32 -> vector<8x384xf32>
    %c104 = arith.constant 104 : index
    %c0_27 = arith.constant 0 : index
    %74 = vector.load %arg6[%c104, %c0_27] : memref<256x384xf32, #tpu.memory_space<vmem>>, vector<8x384xf32>
    %75 = arith.mulf %73, %74 : vector<8x384xf32>
    %76 = arith.addf %72, %75 : vector<8x384xf32>
    %c17_i32 = arith.constant 17 : i32
    %77 = tpu.dynamic_rotate %19 by %c17_i32 dim 1 : vector<8x384xf32>, i32 -> vector<8x384xf32>
    %c112 = arith.constant 112 : index
    %c0_28 = arith.constant 0 : index
    %78 = vector.load %arg6[%c112, %c0_28] : memref<256x384xf32, #tpu.memory_space<vmem>>, vector<8x384xf32>
    %79 = arith.mulf %77, %78 : vector<8x384xf32>
    %80 = arith.addf %76, %79 : vector<8x384xf32>
    %c16_i32 = arith.constant 16 : i32
    %81 = tpu.dynamic_rotate %19 by %c16_i32 dim 1 : vector<8x384xf32>, i32 -> vector<8x384xf32>
    %c120 = arith.constant 120 : index
    %c0_29 = arith.constant 0 : index
    %82 = vector.load %arg6[%c120, %c0_29] : memref<256x384xf32, #tpu.memory_space<vmem>>, vector<8x384xf32>
    %83 = arith.mulf %81, %82 : vector<8x384xf32>
    %84 = arith.addf %80, %83 : vector<8x384xf32>
    %c15_i32 = arith.constant 15 : i32
    %85 = tpu.dynamic_rotate %19 by %c15_i32 dim 1 : vector<8x384xf32>, i32 -> vector<8x384xf32>
    %c128 = arith.constant 128 : index
    %c0_30 = arith.constant 0 : index
    %86 = vector.load %arg6[%c128, %c0_30] : memref<256x384xf32, #tpu.memory_space<vmem>>, vector<8x384xf32>
    %87 = arith.mulf %85, %86 : vector<8x384xf32>
    %88 = arith.addf %84, %87 : vector<8x384xf32>
    %c14_i32 = arith.constant 14 : i32
    %89 = tpu.dynamic_rotate %19 by %c14_i32 dim 1 : vector<8x384xf32>, i32 -> vector<8x384xf32>
    %c136 = arith.constant 136 : index
    %c0_31 = arith.constant 0 : index
    %90 = vector.load %arg6[%c136, %c0_31] : memref<256x384xf32, #tpu.memory_space<vmem>>, vector<8x384xf32>
    %91 = arith.mulf %89, %90 : vector<8x384xf32>
    %92 = arith.addf %88, %91 : vector<8x384xf32>
    %c13_i32 = arith.constant 13 : i32
    %93 = tpu.dynamic_rotate %19 by %c13_i32 dim 1 : vector<8x384xf32>, i32 -> vector<8x384xf32>
    %c144 = arith.constant 144 : index
    %c0_32 = arith.constant 0 : index
    %94 = vector.load %arg6[%c144, %c0_32] : memref<256x384xf32, #tpu.memory_space<vmem>>, vector<8x384xf32>
    %95 = arith.mulf %93, %94 : vector<8x384xf32>
    %96 = arith.addf %92, %95 : vector<8x384xf32>
    %c12_i32 = arith.constant 12 : i32
    %97 = tpu.dynamic_rotate %19 by %c12_i32 dim 1 : vector<8x384xf32>, i32 -> vector<8x384xf32>
    %c152 = arith.constant 152 : index
    %c0_33 = arith.constant 0 : index
    %98 = vector.load %arg6[%c152, %c0_33] : memref<256x384xf32, #tpu.memory_space<vmem>>, vector<8x384xf32>
    %99 = arith.mulf %97, %98 : vector<8x384xf32>
    %100 = arith.addf %96, %99 : vector<8x384xf32>
    %c11_i32 = arith.constant 11 : i32
    %101 = tpu.dynamic_rotate %19 by %c11_i32 dim 1 : vector<8x384xf32>, i32 -> vector<8x384xf32>
    %c160 = arith.constant 160 : index
    %c0_34 = arith.constant 0 : index
    %102 = vector.load %arg6[%c160, %c0_34] : memref<256x384xf32, #tpu.memory_space<vmem>>, vector<8x384xf32>
    %103 = arith.mulf %101, %102 : vector<8x384xf32>
    %104 = arith.addf %100, %103 : vector<8x384xf32>
    %c10_i32 = arith.constant 10 : i32
    %105 = tpu.dynamic_rotate %19 by %c10_i32 dim 1 : vector<8x384xf32>, i32 -> vector<8x384xf32>
    %c168 = arith.constant 168 : index
    %c0_35 = arith.constant 0 : index
    %106 = vector.load %arg6[%c168, %c0_35] : memref<256x384xf32, #tpu.memory_space<vmem>>, vector<8x384xf32>
    %107 = arith.mulf %105, %106 : vector<8x384xf32>
    %108 = arith.addf %104, %107 : vector<8x384xf32>
    %c9_i32 = arith.constant 9 : i32
    %109 = tpu.dynamic_rotate %19 by %c9_i32 dim 1 : vector<8x384xf32>, i32 -> vector<8x384xf32>
    %c176 = arith.constant 176 : index
    %c0_36 = arith.constant 0 : index
    %110 = vector.load %arg6[%c176, %c0_36] : memref<256x384xf32, #tpu.memory_space<vmem>>, vector<8x384xf32>
    %111 = arith.mulf %109, %110 : vector<8x384xf32>
    %112 = arith.addf %108, %111 : vector<8x384xf32>
    %c8_i32 = arith.constant 8 : i32
    %113 = tpu.dynamic_rotate %19 by %c8_i32 dim 1 : vector<8x384xf32>, i32 -> vector<8x384xf32>
    %c184 = arith.constant 184 : index
    %c0_37 = arith.constant 0 : index
    %114 = vector.load %arg6[%c184, %c0_37] : memref<256x384xf32, #tpu.memory_space<vmem>>, vector<8x384xf32>
    %115 = arith.mulf %113, %114 : vector<8x384xf32>
    %116 = arith.addf %112, %115 : vector<8x384xf32>
    %c7_i32 = arith.constant 7 : i32
    %117 = tpu.dynamic_rotate %19 by %c7_i32 dim 1 : vector<8x384xf32>, i32 -> vector<8x384xf32>
    %c192 = arith.constant 192 : index
    %c0_38 = arith.constant 0 : index
    %118 = vector.load %arg6[%c192, %c0_38] : memref<256x384xf32, #tpu.memory_space<vmem>>, vector<8x384xf32>
    %119 = arith.mulf %117, %118 : vector<8x384xf32>
    %120 = arith.addf %116, %119 : vector<8x384xf32>
    %c6_i32 = arith.constant 6 : i32
    %121 = tpu.dynamic_rotate %19 by %c6_i32 dim 1 : vector<8x384xf32>, i32 -> vector<8x384xf32>
    %c200 = arith.constant 200 : index
    %c0_39 = arith.constant 0 : index
    %122 = vector.load %arg6[%c200, %c0_39] : memref<256x384xf32, #tpu.memory_space<vmem>>, vector<8x384xf32>
    %123 = arith.mulf %121, %122 : vector<8x384xf32>
    %124 = arith.addf %120, %123 : vector<8x384xf32>
    %c5_i32 = arith.constant 5 : i32
    %125 = tpu.dynamic_rotate %19 by %c5_i32 dim 1 : vector<8x384xf32>, i32 -> vector<8x384xf32>
    %c208 = arith.constant 208 : index
    %c0_40 = arith.constant 0 : index
    %126 = vector.load %arg6[%c208, %c0_40] : memref<256x384xf32, #tpu.memory_space<vmem>>, vector<8x384xf32>
    %127 = arith.mulf %125, %126 : vector<8x384xf32>
    %128 = arith.addf %124, %127 : vector<8x384xf32>
    %c4_i32 = arith.constant 4 : i32
    %129 = tpu.dynamic_rotate %19 by %c4_i32 dim 1 : vector<8x384xf32>, i32 -> vector<8x384xf32>
    %c216 = arith.constant 216 : index
    %c0_41 = arith.constant 0 : index
    %130 = vector.load %arg6[%c216, %c0_41] : memref<256x384xf32, #tpu.memory_space<vmem>>, vector<8x384xf32>
    %131 = arith.mulf %129, %130 : vector<8x384xf32>
    %132 = arith.addf %128, %131 : vector<8x384xf32>
    %c3_i32 = arith.constant 3 : i32
    %133 = tpu.dynamic_rotate %19 by %c3_i32 dim 1 : vector<8x384xf32>, i32 -> vector<8x384xf32>
    %c224 = arith.constant 224 : index
    %c0_42 = arith.constant 0 : index
    %134 = vector.load %arg6[%c224, %c0_42] : memref<256x384xf32, #tpu.memory_space<vmem>>, vector<8x384xf32>
    %135 = arith.mulf %133, %134 : vector<8x384xf32>
    %136 = arith.addf %132, %135 : vector<8x384xf32>
    %c2_i32 = arith.constant 2 : i32
    %137 = tpu.dynamic_rotate %19 by %c2_i32 dim 1 : vector<8x384xf32>, i32 -> vector<8x384xf32>
    %c232 = arith.constant 232 : index
    %c0_43 = arith.constant 0 : index
    %138 = vector.load %arg6[%c232, %c0_43] : memref<256x384xf32, #tpu.memory_space<vmem>>, vector<8x384xf32>
    %139 = arith.mulf %137, %138 : vector<8x384xf32>
    %140 = arith.addf %136, %139 : vector<8x384xf32>
    %c1_i32 = arith.constant 1 : i32
    %141 = tpu.dynamic_rotate %19 by %c1_i32 dim 1 : vector<8x384xf32>, i32 -> vector<8x384xf32>
    %c240 = arith.constant 240 : index
    %c0_44 = arith.constant 0 : index
    %142 = vector.load %arg6[%c240, %c0_44] : memref<256x384xf32, #tpu.memory_space<vmem>>, vector<8x384xf32>
    %143 = arith.mulf %141, %142 : vector<8x384xf32>
    %144 = arith.addf %140, %143 : vector<8x384xf32>
    %c248 = arith.constant 248 : index
    %c0_45 = arith.constant 0 : index
    %145 = vector.load %arg6[%c248, %c0_45] : memref<256x384xf32, #tpu.memory_space<vmem>>, vector<8x384xf32>
    %146 = arith.mulf %19, %145 : vector<8x384xf32>
    %147 = arith.addf %144, %146 : vector<8x384xf32>
    %148 = arith.mulf %147, %18 : vector<8x384xf32>
    %cst_46 = arith.constant 1.000000e+00 : f32
    %149 = vector.broadcast %cst_46 : f32 to vector<8x384xf32>
    %150 = arith.mulf %148, %149 : vector<8x384xf32>
    %151 = arith.addf %19, %150 : vector<8x384xf32>
    %cst_47 = arith.constant 0.000000e+00 : f32
    %152 = vector.broadcast %cst_47 : f32 to vector<8x384xf32>
    %c31_i32_48 = arith.constant 31 : i32
    %153 = tpu.dynamic_rotate %150 by %c31_i32_48 dim 1 : vector<8x384xf32>, i32 -> vector<8x384xf32>
    %c0_49 = arith.constant 0 : index
    %c0_50 = arith.constant 0 : index
    %154 = vector.load %arg6[%c0_49, %c0_50] : memref<256x384xf32, #tpu.memory_space<vmem>>, vector<8x384xf32>
    %155 = arith.mulf %153, %154 : vector<8x384xf32>
    %156 = arith.addf %152, %155 : vector<8x384xf32>
    %c30_i32_51 = arith.constant 30 : i32
    %157 = tpu.dynamic_rotate %150 by %c30_i32_51 dim 1 : vector<8x384xf32>, i32 -> vector<8x384xf32>
    %c8_52 = arith.constant 8 : index
    %c0_53 = arith.constant 0 : index
    %158 = vector.load %arg6[%c8_52, %c0_53] : memref<256x384xf32, #tpu.memory_space<vmem>>, vector<8x384xf32>
    %159 = arith.mulf %157, %158 : vector<8x384xf32>
    %160 = arith.addf %156, %159 : vector<8x384xf32>
    %c29_i32_54 = arith.constant 29 : i32
    %161 = tpu.dynamic_rotate %150 by %c29_i32_54 dim 1 : vector<8x384xf32>, i32 -> vector<8x384xf32>
    %c16_55 = arith.constant 16 : index
    %c0_56 = arith.constant 0 : index
    %162 = vector.load %arg6[%c16_55, %c0_56] : memref<256x384xf32, #tpu.memory_space<vmem>>, vector<8x384xf32>
    %163 = arith.mulf %161, %162 : vector<8x384xf32>
    %164 = arith.addf %160, %163 : vector<8x384xf32>
    %c28_i32_57 = arith.constant 28 : i32
    %165 = tpu.dynamic_rotate %150 by %c28_i32_57 dim 1 : vector<8x384xf32>, i32 -> vector<8x384xf32>
    %c24_58 = arith.constant 24 : index
    %c0_59 = arith.constant 0 : index
    %166 = vector.load %arg6[%c24_58, %c0_59] : memref<256x384xf32, #tpu.memory_space<vmem>>, vector<8x384xf32>
    %167 = arith.mulf %165, %166 : vector<8x384xf32>
    %168 = arith.addf %164, %167 : vector<8x384xf32>
    %c27_i32_60 = arith.constant 27 : i32
    %169 = tpu.dynamic_rotate %150 by %c27_i32_60 dim 1 : vector<8x384xf32>, i32 -> vector<8x384xf32>
    %c32_61 = arith.constant 32 : index
    %c0_62 = arith.constant 0 : index
    %170 = vector.load %arg6[%c32_61, %c0_62] : memref<256x384xf32, #tpu.memory_space<vmem>>, vector<8x384xf32>
    %171 = arith.mulf %169, %170 : vector<8x384xf32>
    %172 = arith.addf %168, %171 : vector<8x384xf32>
    %c26_i32_63 = arith.constant 26 : i32
    %173 = tpu.dynamic_rotate %150 by %c26_i32_63 dim 1 : vector<8x384xf32>, i32 -> vector<8x384xf32>
    %c40_64 = arith.constant 40 : index
    %c0_65 = arith.constant 0 : index
    %174 = vector.load %arg6[%c40_64, %c0_65] : memref<256x384xf32, #tpu.memory_space<vmem>>, vector<8x384xf32>
    %175 = arith.mulf %173, %174 : vector<8x384xf32>
    %176 = arith.addf %172, %175 : vector<8x384xf32>
    %c25_i32_66 = arith.constant 25 : i32
    %177 = tpu.dynamic_rotate %150 by %c25_i32_66 dim 1 : vector<8x384xf32>, i32 -> vector<8x384xf32>
    %c48_67 = arith.constant 48 : index
    %c0_68 = arith.constant 0 : index
    %178 = vector.load %arg6[%c48_67, %c0_68] : memref<256x384xf32, #tpu.memory_space<vmem>>, vector<8x384xf32>
    %179 = arith.mulf %177, %178 : vector<8x384xf32>
    %180 = arith.addf %176, %179 : vector<8x384xf32>
    %c24_i32_69 = arith.constant 24 : i32
    %181 = tpu.dynamic_rotate %150 by %c24_i32_69 dim 1 : vector<8x384xf32>, i32 -> vector<8x384xf32>
    %c56_70 = arith.constant 56 : index
    %c0_71 = arith.constant 0 : index
    %182 = vector.load %arg6[%c56_70, %c0_71] : memref<256x384xf32, #tpu.memory_space<vmem>>, vector<8x384xf32>
    %183 = arith.mulf %181, %182 : vector<8x384xf32>
    %184 = arith.addf %180, %183 : vector<8x384xf32>
    %c23_i32_72 = arith.constant 23 : i32
    %185 = tpu.dynamic_rotate %150 by %c23_i32_72 dim 1 : vector<8x384xf32>, i32 -> vector<8x384xf32>
    %c64_73 = arith.constant 64 : index
    %c0_74 = arith.constant 0 : index
    %186 = vector.load %arg6[%c64_73, %c0_74] : memref<256x384xf32, #tpu.memory_space<vmem>>, vector<8x384xf32>
    %187 = arith.mulf %185, %186 : vector<8x384xf32>
    %188 = arith.addf %184, %187 : vector<8x384xf32>
    %c22_i32_75 = arith.constant 22 : i32
    %189 = tpu.dynamic_rotate %150 by %c22_i32_75 dim 1 : vector<8x384xf32>, i32 -> vector<8x384xf32>
    %c72_76 = arith.constant 72 : index
    %c0_77 = arith.constant 0 : index
    %190 = vector.load %arg6[%c72_76, %c0_77] : memref<256x384xf32, #tpu.memory_space<vmem>>, vector<8x384xf32>
    %191 = arith.mulf %189, %190 : vector<8x384xf32>
    %192 = arith.addf %188, %191 : vector<8x384xf32>
    %c21_i32_78 = arith.constant 21 : i32
    %193 = tpu.dynamic_rotate %150 by %c21_i32_78 dim 1 : vector<8x384xf32>, i32 -> vector<8x384xf32>
    %c80_79 = arith.constant 80 : index
    %c0_80 = arith.constant 0 : index
    %194 = vector.load %arg6[%c80_79, %c0_80] : memref<256x384xf32, #tpu.memory_space<vmem>>, vector<8x384xf32>
    %195 = arith.mulf %193, %194 : vector<8x384xf32>
    %196 = arith.addf %192, %195 : vector<8x384xf32>
    %c20_i32_81 = arith.constant 20 : i32
    %197 = tpu.dynamic_rotate %150 by %c20_i32_81 dim 1 : vector<8x384xf32>, i32 -> vector<8x384xf32>
    %c88_82 = arith.constant 88 : index
    %c0_83 = arith.constant 0 : index
    %198 = vector.load %arg6[%c88_82, %c0_83] : memref<256x384xf32, #tpu.memory_space<vmem>>, vector<8x384xf32>
    %199 = arith.mulf %197, %198 : vector<8x384xf32>
    %200 = arith.addf %196, %199 : vector<8x384xf32>
    %c19_i32_84 = arith.constant 19 : i32
    %201 = tpu.dynamic_rotate %150 by %c19_i32_84 dim 1 : vector<8x384xf32>, i32 -> vector<8x384xf32>
    %c96_85 = arith.constant 96 : index
    %c0_86 = arith.constant 0 : index
    %202 = vector.load %arg6[%c96_85, %c0_86] : memref<256x384xf32, #tpu.memory_space<vmem>>, vector<8x384xf32>
    %203 = arith.mulf %201, %202 : vector<8x384xf32>
    %204 = arith.addf %200, %203 : vector<8x384xf32>
    %c18_i32_87 = arith.constant 18 : i32
    %205 = tpu.dynamic_rotate %150 by %c18_i32_87 dim 1 : vector<8x384xf32>, i32 -> vector<8x384xf32>
    %c104_88 = arith.constant 104 : index
    %c0_89 = arith.constant 0 : index
    %206 = vector.load %arg6[%c104_88, %c0_89] : memref<256x384xf32, #tpu.memory_space<vmem>>, vector<8x384xf32>
    %207 = arith.mulf %205, %206 : vector<8x384xf32>
    %208 = arith.addf %204, %207 : vector<8x384xf32>
    %c17_i32_90 = arith.constant 17 : i32
    %209 = tpu.dynamic_rotate %150 by %c17_i32_90 dim 1 : vector<8x384xf32>, i32 -> vector<8x384xf32>
    %c112_91 = arith.constant 112 : index
    %c0_92 = arith.constant 0 : index
    %210 = vector.load %arg6[%c112_91, %c0_92] : memref<256x384xf32, #tpu.memory_space<vmem>>, vector<8x384xf32>
    %211 = arith.mulf %209, %210 : vector<8x384xf32>
    %212 = arith.addf %208, %211 : vector<8x384xf32>
    %c16_i32_93 = arith.constant 16 : i32
    %213 = tpu.dynamic_rotate %150 by %c16_i32_93 dim 1 : vector<8x384xf32>, i32 -> vector<8x384xf32>
    %c120_94 = arith.constant 120 : index
    %c0_95 = arith.constant 0 : index
    %214 = vector.load %arg6[%c120_94, %c0_95] : memref<256x384xf32, #tpu.memory_space<vmem>>, vector<8x384xf32>
    %215 = arith.mulf %213, %214 : vector<8x384xf32>
    %216 = arith.addf %212, %215 : vector<8x384xf32>
    %c15_i32_96 = arith.constant 15 : i32
    %217 = tpu.dynamic_rotate %150 by %c15_i32_96 dim 1 : vector<8x384xf32>, i32 -> vector<8x384xf32>
    %c128_97 = arith.constant 128 : index
    %c0_98 = arith.constant 0 : index
    %218 = vector.load %arg6[%c128_97, %c0_98] : memref<256x384xf32, #tpu.memory_space<vmem>>, vector<8x384xf32>
    %219 = arith.mulf %217, %218 : vector<8x384xf32>
    %220 = arith.addf %216, %219 : vector<8x384xf32>
    %c14_i32_99 = arith.constant 14 : i32
    %221 = tpu.dynamic_rotate %150 by %c14_i32_99 dim 1 : vector<8x384xf32>, i32 -> vector<8x384xf32>
    %c136_100 = arith.constant 136 : index
    %c0_101 = arith.constant 0 : index
    %222 = vector.load %arg6[%c136_100, %c0_101] : memref<256x384xf32, #tpu.memory_space<vmem>>, vector<8x384xf32>
    %223 = arith.mulf %221, %222 : vector<8x384xf32>
    %224 = arith.addf %220, %223 : vector<8x384xf32>
    %c13_i32_102 = arith.constant 13 : i32
    %225 = tpu.dynamic_rotate %150 by %c13_i32_102 dim 1 : vector<8x384xf32>, i32 -> vector<8x384xf32>
    %c144_103 = arith.constant 144 : index
    %c0_104 = arith.constant 0 : index
    %226 = vector.load %arg6[%c144_103, %c0_104] : memref<256x384xf32, #tpu.memory_space<vmem>>, vector<8x384xf32>
    %227 = arith.mulf %225, %226 : vector<8x384xf32>
    %228 = arith.addf %224, %227 : vector<8x384xf32>
    %c12_i32_105 = arith.constant 12 : i32
    %229 = tpu.dynamic_rotate %150 by %c12_i32_105 dim 1 : vector<8x384xf32>, i32 -> vector<8x384xf32>
    %c152_106 = arith.constant 152 : index
    %c0_107 = arith.constant 0 : index
    %230 = vector.load %arg6[%c152_106, %c0_107] : memref<256x384xf32, #tpu.memory_space<vmem>>, vector<8x384xf32>
    %231 = arith.mulf %229, %230 : vector<8x384xf32>
    %232 = arith.addf %228, %231 : vector<8x384xf32>
    %c11_i32_108 = arith.constant 11 : i32
    %233 = tpu.dynamic_rotate %150 by %c11_i32_108 dim 1 : vector<8x384xf32>, i32 -> vector<8x384xf32>
    %c160_109 = arith.constant 160 : index
    %c0_110 = arith.constant 0 : index
    %234 = vector.load %arg6[%c160_109, %c0_110] : memref<256x384xf32, #tpu.memory_space<vmem>>, vector<8x384xf32>
    %235 = arith.mulf %233, %234 : vector<8x384xf32>
    %236 = arith.addf %232, %235 : vector<8x384xf32>
    %c10_i32_111 = arith.constant 10 : i32
    %237 = tpu.dynamic_rotate %150 by %c10_i32_111 dim 1 : vector<8x384xf32>, i32 -> vector<8x384xf32>
    %c168_112 = arith.constant 168 : index
    %c0_113 = arith.constant 0 : index
    %238 = vector.load %arg6[%c168_112, %c0_113] : memref<256x384xf32, #tpu.memory_space<vmem>>, vector<8x384xf32>
    %239 = arith.mulf %237, %238 : vector<8x384xf32>
    %240 = arith.addf %236, %239 : vector<8x384xf32>
    %c9_i32_114 = arith.constant 9 : i32
    %241 = tpu.dynamic_rotate %150 by %c9_i32_114 dim 1 : vector<8x384xf32>, i32 -> vector<8x384xf32>
    %c176_115 = arith.constant 176 : index
    %c0_116 = arith.constant 0 : index
    %242 = vector.load %arg6[%c176_115, %c0_116] : memref<256x384xf32, #tpu.memory_space<vmem>>, vector<8x384xf32>
    %243 = arith.mulf %241, %242 : vector<8x384xf32>
    %244 = arith.addf %240, %243 : vector<8x384xf32>
    %c8_i32_117 = arith.constant 8 : i32
    %245 = tpu.dynamic_rotate %150 by %c8_i32_117 dim 1 : vector<8x384xf32>, i32 -> vector<8x384xf32>
    %c184_118 = arith.constant 184 : index
    %c0_119 = arith.constant 0 : index
    %246 = vector.load %arg6[%c184_118, %c0_119] : memref<256x384xf32, #tpu.memory_space<vmem>>, vector<8x384xf32>
    %247 = arith.mulf %245, %246 : vector<8x384xf32>
    %248 = arith.addf %244, %247 : vector<8x384xf32>
    %c7_i32_120 = arith.constant 7 : i32
    %249 = tpu.dynamic_rotate %150 by %c7_i32_120 dim 1 : vector<8x384xf32>, i32 -> vector<8x384xf32>
    %c192_121 = arith.constant 192 : index
    %c0_122 = arith.constant 0 : index
    %250 = vector.load %arg6[%c192_121, %c0_122] : memref<256x384xf32, #tpu.memory_space<vmem>>, vector<8x384xf32>
    %251 = arith.mulf %249, %250 : vector<8x384xf32>
    %252 = arith.addf %248, %251 : vector<8x384xf32>
    %c6_i32_123 = arith.constant 6 : i32
    %253 = tpu.dynamic_rotate %150 by %c6_i32_123 dim 1 : vector<8x384xf32>, i32 -> vector<8x384xf32>
    %c200_124 = arith.constant 200 : index
    %c0_125 = arith.constant 0 : index
    %254 = vector.load %arg6[%c200_124, %c0_125] : memref<256x384xf32, #tpu.memory_space<vmem>>, vector<8x384xf32>
    %255 = arith.mulf %253, %254 : vector<8x384xf32>
    %256 = arith.addf %252, %255 : vector<8x384xf32>
    %c5_i32_126 = arith.constant 5 : i32
    %257 = tpu.dynamic_rotate %150 by %c5_i32_126 dim 1 : vector<8x384xf32>, i32 -> vector<8x384xf32>
    %c208_127 = arith.constant 208 : index
    %c0_128 = arith.constant 0 : index
    %258 = vector.load %arg6[%c208_127, %c0_128] : memref<256x384xf32, #tpu.memory_space<vmem>>, vector<8x384xf32>
    %259 = arith.mulf %257, %258 : vector<8x384xf32>
    %260 = arith.addf %256, %259 : vector<8x384xf32>
    %c4_i32_129 = arith.constant 4 : i32
    %261 = tpu.dynamic_rotate %150 by %c4_i32_129 dim 1 : vector<8x384xf32>, i32 -> vector<8x384xf32>
    %c216_130 = arith.constant 216 : index
    %c0_131 = arith.constant 0 : index
    %262 = vector.load %arg6[%c216_130, %c0_131] : memref<256x384xf32, #tpu.memory_space<vmem>>, vector<8x384xf32>
    %263 = arith.mulf %261, %262 : vector<8x384xf32>
    %264 = arith.addf %260, %263 : vector<8x384xf32>
    %c3_i32_132 = arith.constant 3 : i32
    %265 = tpu.dynamic_rotate %150 by %c3_i32_132 dim 1 : vector<8x384xf32>, i32 -> vector<8x384xf32>
    %c224_133 = arith.constant 224 : index
    %c0_134 = arith.constant 0 : index
    %266 = vector.load %arg6[%c224_133, %c0_134] : memref<256x384xf32, #tpu.memory_space<vmem>>, vector<8x384xf32>
    %267 = arith.mulf %265, %266 : vector<8x384xf32>
    %268 = arith.addf %264, %267 : vector<8x384xf32>
    %c2_i32_135 = arith.constant 2 : i32
    %269 = tpu.dynamic_rotate %150 by %c2_i32_135 dim 1 : vector<8x384xf32>, i32 -> vector<8x384xf32>
    %c232_136 = arith.constant 232 : index
    %c0_137 = arith.constant 0 : index
    %270 = vector.load %arg6[%c232_136, %c0_137] : memref<256x384xf32, #tpu.memory_space<vmem>>, vector<8x384xf32>
    %271 = arith.mulf %269, %270 : vector<8x384xf32>
    %272 = arith.addf %268, %271 : vector<8x384xf32>
    %c1_i32_138 = arith.constant 1 : i32
    %273 = tpu.dynamic_rotate %150 by %c1_i32_138 dim 1 : vector<8x384xf32>, i32 -> vector<8x384xf32>
    %c240_139 = arith.constant 240 : index
    %c0_140 = arith.constant 0 : index
    %274 = vector.load %arg6[%c240_139, %c0_140] : memref<256x384xf32, #tpu.memory_space<vmem>>, vector<8x384xf32>
    %275 = arith.mulf %273, %274 : vector<8x384xf32>
    %276 = arith.addf %272, %275 : vector<8x384xf32>
    %c248_141 = arith.constant 248 : index
    %c0_142 = arith.constant 0 : index
    %277 = vector.load %arg6[%c248_141, %c0_142] : memref<256x384xf32, #tpu.memory_space<vmem>>, vector<8x384xf32>
    %278 = arith.mulf %150, %277 : vector<8x384xf32>
    %279 = arith.addf %276, %278 : vector<8x384xf32>
    %280 = arith.mulf %279, %18 : vector<8x384xf32>
    %cst_143 = arith.constant 5.000000e-01 : f32
    %281 = vector.broadcast %cst_143 : f32 to vector<8x384xf32>
    %282 = arith.mulf %280, %281 : vector<8x384xf32>
    %283 = arith.addf %151, %282 : vector<8x384xf32>
    %cst_144 = arith.constant 0.000000e+00 : f32
    %284 = vector.broadcast %cst_144 : f32 to vector<8x384xf32>
    %c31_i32_145 = arith.constant 31 : i32
    %285 = tpu.dynamic_rotate %282 by %c31_i32_145 dim 1 : vector<8x384xf32>, i32 -> vector<8x384xf32>
    %c0_146 = arith.constant 0 : index
    %c0_147 = arith.constant 0 : index
    %286 = vector.load %arg6[%c0_146, %c0_147] : memref<256x384xf32, #tpu.memory_space<vmem>>, vector<8x384xf32>
    %287 = arith.mulf %285, %286 : vector<8x384xf32>
    %288 = arith.addf %284, %287 : vector<8x384xf32>
    %c30_i32_148 = arith.constant 30 : i32
    %289 = tpu.dynamic_rotate %282 by %c30_i32_148 dim 1 : vector<8x384xf32>, i32 -> vector<8x384xf32>
    %c8_149 = arith.constant 8 : index
    %c0_150 = arith.constant 0 : index
    %290 = vector.load %arg6[%c8_149, %c0_150] : memref<256x384xf32, #tpu.memory_space<vmem>>, vector<8x384xf32>
    %291 = arith.mulf %289, %290 : vector<8x384xf32>
    %292 = arith.addf %288, %291 : vector<8x384xf32>
    %c29_i32_151 = arith.constant 29 : i32
    %293 = tpu.dynamic_rotate %282 by %c29_i32_151 dim 1 : vector<8x384xf32>, i32 -> vector<8x384xf32>
    %c16_152 = arith.constant 16 : index
    %c0_153 = arith.constant 0 : index
    %294 = vector.load %arg6[%c16_152, %c0_153] : memref<256x384xf32, #tpu.memory_space<vmem>>, vector<8x384xf32>
    %295 = arith.mulf %293, %294 : vector<8x384xf32>
    %296 = arith.addf %292, %295 : vector<8x384xf32>
    %c28_i32_154 = arith.constant 28 : i32
    %297 = tpu.dynamic_rotate %282 by %c28_i32_154 dim 1 : vector<8x384xf32>, i32 -> vector<8x384xf32>
    %c24_155 = arith.constant 24 : index
    %c0_156 = arith.constant 0 : index
    %298 = vector.load %arg6[%c24_155, %c0_156] : memref<256x384xf32, #tpu.memory_space<vmem>>, vector<8x384xf32>
    %299 = arith.mulf %297, %298 : vector<8x384xf32>
    %300 = arith.addf %296, %299 : vector<8x384xf32>
    %c27_i32_157 = arith.constant 27 : i32
    %301 = tpu.dynamic_rotate %282 by %c27_i32_157 dim 1 : vector<8x384xf32>, i32 -> vector<8x384xf32>
    %c32_158 = arith.constant 32 : index
    %c0_159 = arith.constant 0 : index
    %302 = vector.load %arg6[%c32_158, %c0_159] : memref<256x384xf32, #tpu.memory_space<vmem>>, vector<8x384xf32>
    %303 = arith.mulf %301, %302 : vector<8x384xf32>
    %304 = arith.addf %300, %303 : vector<8x384xf32>
    %c26_i32_160 = arith.constant 26 : i32
    %305 = tpu.dynamic_rotate %282 by %c26_i32_160 dim 1 : vector<8x384xf32>, i32 -> vector<8x384xf32>
    %c40_161 = arith.constant 40 : index
    %c0_162 = arith.constant 0 : index
    %306 = vector.load %arg6[%c40_161, %c0_162] : memref<256x384xf32, #tpu.memory_space<vmem>>, vector<8x384xf32>
    %307 = arith.mulf %305, %306 : vector<8x384xf32>
    %308 = arith.addf %304, %307 : vector<8x384xf32>
    %c25_i32_163 = arith.constant 25 : i32
    %309 = tpu.dynamic_rotate %282 by %c25_i32_163 dim 1 : vector<8x384xf32>, i32 -> vector<8x384xf32>
    %c48_164 = arith.constant 48 : index
    %c0_165 = arith.constant 0 : index
    %310 = vector.load %arg6[%c48_164, %c0_165] : memref<256x384xf32, #tpu.memory_space<vmem>>, vector<8x384xf32>
    %311 = arith.mulf %309, %310 : vector<8x384xf32>
    %312 = arith.addf %308, %311 : vector<8x384xf32>
    %c24_i32_166 = arith.constant 24 : i32
    %313 = tpu.dynamic_rotate %282 by %c24_i32_166 dim 1 : vector<8x384xf32>, i32 -> vector<8x384xf32>
    %c56_167 = arith.constant 56 : index
    %c0_168 = arith.constant 0 : index
    %314 = vector.load %arg6[%c56_167, %c0_168] : memref<256x384xf32, #tpu.memory_space<vmem>>, vector<8x384xf32>
    %315 = arith.mulf %313, %314 : vector<8x384xf32>
    %316 = arith.addf %312, %315 : vector<8x384xf32>
    %c23_i32_169 = arith.constant 23 : i32
    %317 = tpu.dynamic_rotate %282 by %c23_i32_169 dim 1 : vector<8x384xf32>, i32 -> vector<8x384xf32>
    %c64_170 = arith.constant 64 : index
    %c0_171 = arith.constant 0 : index
    %318 = vector.load %arg6[%c64_170, %c0_171] : memref<256x384xf32, #tpu.memory_space<vmem>>, vector<8x384xf32>
    %319 = arith.mulf %317, %318 : vector<8x384xf32>
    %320 = arith.addf %316, %319 : vector<8x384xf32>
    %c22_i32_172 = arith.constant 22 : i32
    %321 = tpu.dynamic_rotate %282 by %c22_i32_172 dim 1 : vector<8x384xf32>, i32 -> vector<8x384xf32>
    %c72_173 = arith.constant 72 : index
    %c0_174 = arith.constant 0 : index
    %322 = vector.load %arg6[%c72_173, %c0_174] : memref<256x384xf32, #tpu.memory_space<vmem>>, vector<8x384xf32>
    %323 = arith.mulf %321, %322 : vector<8x384xf32>
    %324 = arith.addf %320, %323 : vector<8x384xf32>
    %c21_i32_175 = arith.constant 21 : i32
    %325 = tpu.dynamic_rotate %282 by %c21_i32_175 dim 1 : vector<8x384xf32>, i32 -> vector<8x384xf32>
    %c80_176 = arith.constant 80 : index
    %c0_177 = arith.constant 0 : index
    %326 = vector.load %arg6[%c80_176, %c0_177] : memref<256x384xf32, #tpu.memory_space<vmem>>, vector<8x384xf32>
    %327 = arith.mulf %325, %326 : vector<8x384xf32>
    %328 = arith.addf %324, %327 : vector<8x384xf32>
    %c20_i32_178 = arith.constant 20 : i32
    %329 = tpu.dynamic_rotate %282 by %c20_i32_178 dim 1 : vector<8x384xf32>, i32 -> vector<8x384xf32>
    %c88_179 = arith.constant 88 : index
    %c0_180 = arith.constant 0 : index
    %330 = vector.load %arg6[%c88_179, %c0_180] : memref<256x384xf32, #tpu.memory_space<vmem>>, vector<8x384xf32>
    %331 = arith.mulf %329, %330 : vector<8x384xf32>
    %332 = arith.addf %328, %331 : vector<8x384xf32>
    %c19_i32_181 = arith.constant 19 : i32
    %333 = tpu.dynamic_rotate %282 by %c19_i32_181 dim 1 : vector<8x384xf32>, i32 -> vector<8x384xf32>
    %c96_182 = arith.constant 96 : index
    %c0_183 = arith.constant 0 : index
    %334 = vector.load %arg6[%c96_182, %c0_183] : memref<256x384xf32, #tpu.memory_space<vmem>>, vector<8x384xf32>
    %335 = arith.mulf %333, %334 : vector<8x384xf32>
    %336 = arith.addf %332, %335 : vector<8x384xf32>
    %c18_i32_184 = arith.constant 18 : i32
    %337 = tpu.dynamic_rotate %282 by %c18_i32_184 dim 1 : vector<8x384xf32>, i32 -> vector<8x384xf32>
    %c104_185 = arith.constant 104 : index
    %c0_186 = arith.constant 0 : index
    %338 = vector.load %arg6[%c104_185, %c0_186] : memref<256x384xf32, #tpu.memory_space<vmem>>, vector<8x384xf32>
    %339 = arith.mulf %337, %338 : vector<8x384xf32>
    %340 = arith.addf %336, %339 : vector<8x384xf32>
    %c17_i32_187 = arith.constant 17 : i32
    %341 = tpu.dynamic_rotate %282 by %c17_i32_187 dim 1 : vector<8x384xf32>, i32 -> vector<8x384xf32>
    %c112_188 = arith.constant 112 : index
    %c0_189 = arith.constant 0 : index
    %342 = vector.load %arg6[%c112_188, %c0_189] : memref<256x384xf32, #tpu.memory_space<vmem>>, vector<8x384xf32>
    %343 = arith.mulf %341, %342 : vector<8x384xf32>
    %344 = arith.addf %340, %343 : vector<8x384xf32>
    %c16_i32_190 = arith.constant 16 : i32
    %345 = tpu.dynamic_rotate %282 by %c16_i32_190 dim 1 : vector<8x384xf32>, i32 -> vector<8x384xf32>
    %c120_191 = arith.constant 120 : index
    %c0_192 = arith.constant 0 : index
    %346 = vector.load %arg6[%c120_191, %c0_192] : memref<256x384xf32, #tpu.memory_space<vmem>>, vector<8x384xf32>
    %347 = arith.mulf %345, %346 : vector<8x384xf32>
    %348 = arith.addf %344, %347 : vector<8x384xf32>
    %c15_i32_193 = arith.constant 15 : i32
    %349 = tpu.dynamic_rotate %282 by %c15_i32_193 dim 1 : vector<8x384xf32>, i32 -> vector<8x384xf32>
    %c128_194 = arith.constant 128 : index
    %c0_195 = arith.constant 0 : index
    %350 = vector.load %arg6[%c128_194, %c0_195] : memref<256x384xf32, #tpu.memory_space<vmem>>, vector<8x384xf32>
    %351 = arith.mulf %349, %350 : vector<8x384xf32>
    %352 = arith.addf %348, %351 : vector<8x384xf32>
    %c14_i32_196 = arith.constant 14 : i32
    %353 = tpu.dynamic_rotate %282 by %c14_i32_196 dim 1 : vector<8x384xf32>, i32 -> vector<8x384xf32>
    %c136_197 = arith.constant 136 : index
    %c0_198 = arith.constant 0 : index
    %354 = vector.load %arg6[%c136_197, %c0_198] : memref<256x384xf32, #tpu.memory_space<vmem>>, vector<8x384xf32>
    %355 = arith.mulf %353, %354 : vector<8x384xf32>
    %356 = arith.addf %352, %355 : vector<8x384xf32>
    %c13_i32_199 = arith.constant 13 : i32
    %357 = tpu.dynamic_rotate %282 by %c13_i32_199 dim 1 : vector<8x384xf32>, i32 -> vector<8x384xf32>
    %c144_200 = arith.constant 144 : index
    %c0_201 = arith.constant 0 : index
    %358 = vector.load %arg6[%c144_200, %c0_201] : memref<256x384xf32, #tpu.memory_space<vmem>>, vector<8x384xf32>
    %359 = arith.mulf %357, %358 : vector<8x384xf32>
    %360 = arith.addf %356, %359 : vector<8x384xf32>
    %c12_i32_202 = arith.constant 12 : i32
    %361 = tpu.dynamic_rotate %282 by %c12_i32_202 dim 1 : vector<8x384xf32>, i32 -> vector<8x384xf32>
    %c152_203 = arith.constant 152 : index
    %c0_204 = arith.constant 0 : index
    %362 = vector.load %arg6[%c152_203, %c0_204] : memref<256x384xf32, #tpu.memory_space<vmem>>, vector<8x384xf32>
    %363 = arith.mulf %361, %362 : vector<8x384xf32>
    %364 = arith.addf %360, %363 : vector<8x384xf32>
    %c11_i32_205 = arith.constant 11 : i32
    %365 = tpu.dynamic_rotate %282 by %c11_i32_205 dim 1 : vector<8x384xf32>, i32 -> vector<8x384xf32>
    %c160_206 = arith.constant 160 : index
    %c0_207 = arith.constant 0 : index
    %366 = vector.load %arg6[%c160_206, %c0_207] : memref<256x384xf32, #tpu.memory_space<vmem>>, vector<8x384xf32>
    %367 = arith.mulf %365, %366 : vector<8x384xf32>
    %368 = arith.addf %364, %367 : vector<8x384xf32>
    %c10_i32_208 = arith.constant 10 : i32
    %369 = tpu.dynamic_rotate %282 by %c10_i32_208 dim 1 : vector<8x384xf32>, i32 -> vector<8x384xf32>
    %c168_209 = arith.constant 168 : index
    %c0_210 = arith.constant 0 : index
    %370 = vector.load %arg6[%c168_209, %c0_210] : memref<256x384xf32, #tpu.memory_space<vmem>>, vector<8x384xf32>
    %371 = arith.mulf %369, %370 : vector<8x384xf32>
    %372 = arith.addf %368, %371 : vector<8x384xf32>
    %c9_i32_211 = arith.constant 9 : i32
    %373 = tpu.dynamic_rotate %282 by %c9_i32_211 dim 1 : vector<8x384xf32>, i32 -> vector<8x384xf32>
    %c176_212 = arith.constant 176 : index
    %c0_213 = arith.constant 0 : index
    %374 = vector.load %arg6[%c176_212, %c0_213] : memref<256x384xf32, #tpu.memory_space<vmem>>, vector<8x384xf32>
    %375 = arith.mulf %373, %374 : vector<8x384xf32>
    %376 = arith.addf %372, %375 : vector<8x384xf32>
    %c8_i32_214 = arith.constant 8 : i32
    %377 = tpu.dynamic_rotate %282 by %c8_i32_214 dim 1 : vector<8x384xf32>, i32 -> vector<8x384xf32>
    %c184_215 = arith.constant 184 : index
    %c0_216 = arith.constant 0 : index
    %378 = vector.load %arg6[%c184_215, %c0_216] : memref<256x384xf32, #tpu.memory_space<vmem>>, vector<8x384xf32>
    %379 = arith.mulf %377, %378 : vector<8x384xf32>
    %380 = arith.addf %376, %379 : vector<8x384xf32>
    %c7_i32_217 = arith.constant 7 : i32
    %381 = tpu.dynamic_rotate %282 by %c7_i32_217 dim 1 : vector<8x384xf32>, i32 -> vector<8x384xf32>
    %c192_218 = arith.constant 192 : index
    %c0_219 = arith.constant 0 : index
    %382 = vector.load %arg6[%c192_218, %c0_219] : memref<256x384xf32, #tpu.memory_space<vmem>>, vector<8x384xf32>
    %383 = arith.mulf %381, %382 : vector<8x384xf32>
    %384 = arith.addf %380, %383 : vector<8x384xf32>
    %c6_i32_220 = arith.constant 6 : i32
    %385 = tpu.dynamic_rotate %282 by %c6_i32_220 dim 1 : vector<8x384xf32>, i32 -> vector<8x384xf32>
    %c200_221 = arith.constant 200 : index
    %c0_222 = arith.constant 0 : index
    %386 = vector.load %arg6[%c200_221, %c0_222] : memref<256x384xf32, #tpu.memory_space<vmem>>, vector<8x384xf32>
    %387 = arith.mulf %385, %386 : vector<8x384xf32>
    %388 = arith.addf %384, %387 : vector<8x384xf32>
    %c5_i32_223 = arith.constant 5 : i32
    %389 = tpu.dynamic_rotate %282 by %c5_i32_223 dim 1 : vector<8x384xf32>, i32 -> vector<8x384xf32>
    %c208_224 = arith.constant 208 : index
    %c0_225 = arith.constant 0 : index
    %390 = vector.load %arg6[%c208_224, %c0_225] : memref<256x384xf32, #tpu.memory_space<vmem>>, vector<8x384xf32>
    %391 = arith.mulf %389, %390 : vector<8x384xf32>
    %392 = arith.addf %388, %391 : vector<8x384xf32>
    %c4_i32_226 = arith.constant 4 : i32
    %393 = tpu.dynamic_rotate %282 by %c4_i32_226 dim 1 : vector<8x384xf32>, i32 -> vector<8x384xf32>
    %c216_227 = arith.constant 216 : index
    %c0_228 = arith.constant 0 : index
    %394 = vector.load %arg6[%c216_227, %c0_228] : memref<256x384xf32, #tpu.memory_space<vmem>>, vector<8x384xf32>
    %395 = arith.mulf %393, %394 : vector<8x384xf32>
    %396 = arith.addf %392, %395 : vector<8x384xf32>
    %c3_i32_229 = arith.constant 3 : i32
    %397 = tpu.dynamic_rotate %282 by %c3_i32_229 dim 1 : vector<8x384xf32>, i32 -> vector<8x384xf32>
    %c224_230 = arith.constant 224 : index
    %c0_231 = arith.constant 0 : index
    %398 = vector.load %arg6[%c224_230, %c0_231] : memref<256x384xf32, #tpu.memory_space<vmem>>, vector<8x384xf32>
    %399 = arith.mulf %397, %398 : vector<8x384xf32>
    %400 = arith.addf %396, %399 : vector<8x384xf32>
    %c2_i32_232 = arith.constant 2 : i32
    %401 = tpu.dynamic_rotate %282 by %c2_i32_232 dim 1 : vector<8x384xf32>, i32 -> vector<8x384xf32>
    %c232_233 = arith.constant 232 : index
    %c0_234 = arith.constant 0 : index
    %402 = vector.load %arg6[%c232_233, %c0_234] : memref<256x384xf32, #tpu.memory_space<vmem>>, vector<8x384xf32>
    %403 = arith.mulf %401, %402 : vector<8x384xf32>
    %404 = arith.addf %400, %403 : vector<8x384xf32>
    %c1_i32_235 = arith.constant 1 : i32
    %405 = tpu.dynamic_rotate %282 by %c1_i32_235 dim 1 : vector<8x384xf32>, i32 -> vector<8x384xf32>
    %c240_236 = arith.constant 240 : index
    %c0_237 = arith.constant 0 : index
    %406 = vector.load %arg6[%c240_236, %c0_237] : memref<256x384xf32, #tpu.memory_space<vmem>>, vector<8x384xf32>
    %407 = arith.mulf %405, %406 : vector<8x384xf32>
    %408 = arith.addf %404, %407 : vector<8x384xf32>
    %c248_238 = arith.constant 248 : index
    %c0_239 = arith.constant 0 : index
    %409 = vector.load %arg6[%c248_238, %c0_239] : memref<256x384xf32, #tpu.memory_space<vmem>>, vector<8x384xf32>
    %410 = arith.mulf %282, %409 : vector<8x384xf32>
    %411 = arith.addf %408, %410 : vector<8x384xf32>
    %412 = arith.mulf %411, %18 : vector<8x384xf32>
    %cst_240 = arith.constant 0.333333343 : f32
    %413 = vector.broadcast %cst_240 : f32 to vector<8x384xf32>
    %414 = arith.mulf %412, %413 : vector<8x384xf32>
    %415 = arith.addf %283, %414 : vector<8x384xf32>
    %cst_241 = arith.constant 0.000000e+00 : f32
    %416 = vector.broadcast %cst_241 : f32 to vector<8x384xf32>
    %c31_i32_242 = arith.constant 31 : i32
    %417 = tpu.dynamic_rotate %414 by %c31_i32_242 dim 1 : vector<8x384xf32>, i32 -> vector<8x384xf32>
    %c0_243 = arith.constant 0 : index
    %c0_244 = arith.constant 0 : index
    %418 = vector.load %arg6[%c0_243, %c0_244] : memref<256x384xf32, #tpu.memory_space<vmem>>, vector<8x384xf32>
    %419 = arith.mulf %417, %418 : vector<8x384xf32>
    %420 = arith.addf %416, %419 : vector<8x384xf32>
    %c30_i32_245 = arith.constant 30 : i32
    %421 = tpu.dynamic_rotate %414 by %c30_i32_245 dim 1 : vector<8x384xf32>, i32 -> vector<8x384xf32>
    %c8_246 = arith.constant 8 : index
    %c0_247 = arith.constant 0 : index
    %422 = vector.load %arg6[%c8_246, %c0_247] : memref<256x384xf32, #tpu.memory_space<vmem>>, vector<8x384xf32>
    %423 = arith.mulf %421, %422 : vector<8x384xf32>
    %424 = arith.addf %420, %423 : vector<8x384xf32>
    %c29_i32_248 = arith.constant 29 : i32
    %425 = tpu.dynamic_rotate %414 by %c29_i32_248 dim 1 : vector<8x384xf32>, i32 -> vector<8x384xf32>
    %c16_249 = arith.constant 16 : index
    %c0_250 = arith.constant 0 : index
    %426 = vector.load %arg6[%c16_249, %c0_250] : memref<256x384xf32, #tpu.memory_space<vmem>>, vector<8x384xf32>
    %427 = arith.mulf %425, %426 : vector<8x384xf32>
    %428 = arith.addf %424, %427 : vector<8x384xf32>
    %c28_i32_251 = arith.constant 28 : i32
    %429 = tpu.dynamic_rotate %414 by %c28_i32_251 dim 1 : vector<8x384xf32>, i32 -> vector<8x384xf32>
    %c24_252 = arith.constant 24 : index
    %c0_253 = arith.constant 0 : index
    %430 = vector.load %arg6[%c24_252, %c0_253] : memref<256x384xf32, #tpu.memory_space<vmem>>, vector<8x384xf32>
    %431 = arith.mulf %429, %430 : vector<8x384xf32>
    %432 = arith.addf %428, %431 : vector<8x384xf32>
    %c27_i32_254 = arith.constant 27 : i32
    %433 = tpu.dynamic_rotate %414 by %c27_i32_254 dim 1 : vector<8x384xf32>, i32 -> vector<8x384xf32>
    %c32_255 = arith.constant 32 : index
    %c0_256 = arith.constant 0 : index
    %434 = vector.load %arg6[%c32_255, %c0_256] : memref<256x384xf32, #tpu.memory_space<vmem>>, vector<8x384xf32>
    %435 = arith.mulf %433, %434 : vector<8x384xf32>
    %436 = arith.addf %432, %435 : vector<8x384xf32>
    %c26_i32_257 = arith.constant 26 : i32
    %437 = tpu.dynamic_rotate %414 by %c26_i32_257 dim 1 : vector<8x384xf32>, i32 -> vector<8x384xf32>
    %c40_258 = arith.constant 40 : index
    %c0_259 = arith.constant 0 : index
    %438 = vector.load %arg6[%c40_258, %c0_259] : memref<256x384xf32, #tpu.memory_space<vmem>>, vector<8x384xf32>
    %439 = arith.mulf %437, %438 : vector<8x384xf32>
    %440 = arith.addf %436, %439 : vector<8x384xf32>
    %c25_i32_260 = arith.constant 25 : i32
    %441 = tpu.dynamic_rotate %414 by %c25_i32_260 dim 1 : vector<8x384xf32>, i32 -> vector<8x384xf32>
    %c48_261 = arith.constant 48 : index
    %c0_262 = arith.constant 0 : index
    %442 = vector.load %arg6[%c48_261, %c0_262] : memref<256x384xf32, #tpu.memory_space<vmem>>, vector<8x384xf32>
    %443 = arith.mulf %441, %442 : vector<8x384xf32>
    %444 = arith.addf %440, %443 : vector<8x384xf32>
    %c24_i32_263 = arith.constant 24 : i32
    %445 = tpu.dynamic_rotate %414 by %c24_i32_263 dim 1 : vector<8x384xf32>, i32 -> vector<8x384xf32>
    %c56_264 = arith.constant 56 : index
    %c0_265 = arith.constant 0 : index
    %446 = vector.load %arg6[%c56_264, %c0_265] : memref<256x384xf32, #tpu.memory_space<vmem>>, vector<8x384xf32>
    %447 = arith.mulf %445, %446 : vector<8x384xf32>
    %448 = arith.addf %444, %447 : vector<8x384xf32>
    %c23_i32_266 = arith.constant 23 : i32
    %449 = tpu.dynamic_rotate %414 by %c23_i32_266 dim 1 : vector<8x384xf32>, i32 -> vector<8x384xf32>
    %c64_267 = arith.constant 64 : index
    %c0_268 = arith.constant 0 : index
    %450 = vector.load %arg6[%c64_267, %c0_268] : memref<256x384xf32, #tpu.memory_space<vmem>>, vector<8x384xf32>
    %451 = arith.mulf %449, %450 : vector<8x384xf32>
    %452 = arith.addf %448, %451 : vector<8x384xf32>
    %c22_i32_269 = arith.constant 22 : i32
    %453 = tpu.dynamic_rotate %414 by %c22_i32_269 dim 1 : vector<8x384xf32>, i32 -> vector<8x384xf32>
    %c72_270 = arith.constant 72 : index
    %c0_271 = arith.constant 0 : index
    %454 = vector.load %arg6[%c72_270, %c0_271] : memref<256x384xf32, #tpu.memory_space<vmem>>, vector<8x384xf32>
    %455 = arith.mulf %453, %454 : vector<8x384xf32>
    %456 = arith.addf %452, %455 : vector<8x384xf32>
    %c21_i32_272 = arith.constant 21 : i32
    %457 = tpu.dynamic_rotate %414 by %c21_i32_272 dim 1 : vector<8x384xf32>, i32 -> vector<8x384xf32>
    %c80_273 = arith.constant 80 : index
    %c0_274 = arith.constant 0 : index
    %458 = vector.load %arg6[%c80_273, %c0_274] : memref<256x384xf32, #tpu.memory_space<vmem>>, vector<8x384xf32>
    %459 = arith.mulf %457, %458 : vector<8x384xf32>
    %460 = arith.addf %456, %459 : vector<8x384xf32>
    %c20_i32_275 = arith.constant 20 : i32
    %461 = tpu.dynamic_rotate %414 by %c20_i32_275 dim 1 : vector<8x384xf32>, i32 -> vector<8x384xf32>
    %c88_276 = arith.constant 88 : index
    %c0_277 = arith.constant 0 : index
    %462 = vector.load %arg6[%c88_276, %c0_277] : memref<256x384xf32, #tpu.memory_space<vmem>>, vector<8x384xf32>
    %463 = arith.mulf %461, %462 : vector<8x384xf32>
    %464 = arith.addf %460, %463 : vector<8x384xf32>
    %c19_i32_278 = arith.constant 19 : i32
    %465 = tpu.dynamic_rotate %414 by %c19_i32_278 dim 1 : vector<8x384xf32>, i32 -> vector<8x384xf32>
    %c96_279 = arith.constant 96 : index
    %c0_280 = arith.constant 0 : index
    %466 = vector.load %arg6[%c96_279, %c0_280] : memref<256x384xf32, #tpu.memory_space<vmem>>, vector<8x384xf32>
    %467 = arith.mulf %465, %466 : vector<8x384xf32>
    %468 = arith.addf %464, %467 : vector<8x384xf32>
    %c18_i32_281 = arith.constant 18 : i32
    %469 = tpu.dynamic_rotate %414 by %c18_i32_281 dim 1 : vector<8x384xf32>, i32 -> vector<8x384xf32>
    %c104_282 = arith.constant 104 : index
    %c0_283 = arith.constant 0 : index
    %470 = vector.load %arg6[%c104_282, %c0_283] : memref<256x384xf32, #tpu.memory_space<vmem>>, vector<8x384xf32>
    %471 = arith.mulf %469, %470 : vector<8x384xf32>
    %472 = arith.addf %468, %471 : vector<8x384xf32>
    %c17_i32_284 = arith.constant 17 : i32
    %473 = tpu.dynamic_rotate %414 by %c17_i32_284 dim 1 : vector<8x384xf32>, i32 -> vector<8x384xf32>
    %c112_285 = arith.constant 112 : index
    %c0_286 = arith.constant 0 : index
    %474 = vector.load %arg6[%c112_285, %c0_286] : memref<256x384xf32, #tpu.memory_space<vmem>>, vector<8x384xf32>
    %475 = arith.mulf %473, %474 : vector<8x384xf32>
    %476 = arith.addf %472, %475 : vector<8x384xf32>
    %c16_i32_287 = arith.constant 16 : i32
    %477 = tpu.dynamic_rotate %414 by %c16_i32_287 dim 1 : vector<8x384xf32>, i32 -> vector<8x384xf32>
    %c120_288 = arith.constant 120 : index
    %c0_289 = arith.constant 0 : index
    %478 = vector.load %arg6[%c120_288, %c0_289] : memref<256x384xf32, #tpu.memory_space<vmem>>, vector<8x384xf32>
    %479 = arith.mulf %477, %478 : vector<8x384xf32>
    %480 = arith.addf %476, %479 : vector<8x384xf32>
    %c15_i32_290 = arith.constant 15 : i32
    %481 = tpu.dynamic_rotate %414 by %c15_i32_290 dim 1 : vector<8x384xf32>, i32 -> vector<8x384xf32>
    %c128_291 = arith.constant 128 : index
    %c0_292 = arith.constant 0 : index
    %482 = vector.load %arg6[%c128_291, %c0_292] : memref<256x384xf32, #tpu.memory_space<vmem>>, vector<8x384xf32>
    %483 = arith.mulf %481, %482 : vector<8x384xf32>
    %484 = arith.addf %480, %483 : vector<8x384xf32>
    %c14_i32_293 = arith.constant 14 : i32
    %485 = tpu.dynamic_rotate %414 by %c14_i32_293 dim 1 : vector<8x384xf32>, i32 -> vector<8x384xf32>
    %c136_294 = arith.constant 136 : index
    %c0_295 = arith.constant 0 : index
    %486 = vector.load %arg6[%c136_294, %c0_295] : memref<256x384xf32, #tpu.memory_space<vmem>>, vector<8x384xf32>
    %487 = arith.mulf %485, %486 : vector<8x384xf32>
    %488 = arith.addf %484, %487 : vector<8x384xf32>
    %c13_i32_296 = arith.constant 13 : i32
    %489 = tpu.dynamic_rotate %414 by %c13_i32_296 dim 1 : vector<8x384xf32>, i32 -> vector<8x384xf32>
    %c144_297 = arith.constant 144 : index
    %c0_298 = arith.constant 0 : index
    %490 = vector.load %arg6[%c144_297, %c0_298] : memref<256x384xf32, #tpu.memory_space<vmem>>, vector<8x384xf32>
    %491 = arith.mulf %489, %490 : vector<8x384xf32>
    %492 = arith.addf %488, %491 : vector<8x384xf32>
    %c12_i32_299 = arith.constant 12 : i32
    %493 = tpu.dynamic_rotate %414 by %c12_i32_299 dim 1 : vector<8x384xf32>, i32 -> vector<8x384xf32>
    %c152_300 = arith.constant 152 : index
    %c0_301 = arith.constant 0 : index
    %494 = vector.load %arg6[%c152_300, %c0_301] : memref<256x384xf32, #tpu.memory_space<vmem>>, vector<8x384xf32>
    %495 = arith.mulf %493, %494 : vector<8x384xf32>
    %496 = arith.addf %492, %495 : vector<8x384xf32>
    %c11_i32_302 = arith.constant 11 : i32
    %497 = tpu.dynamic_rotate %414 by %c11_i32_302 dim 1 : vector<8x384xf32>, i32 -> vector<8x384xf32>
    %c160_303 = arith.constant 160 : index
    %c0_304 = arith.constant 0 : index
    %498 = vector.load %arg6[%c160_303, %c0_304] : memref<256x384xf32, #tpu.memory_space<vmem>>, vector<8x384xf32>
    %499 = arith.mulf %497, %498 : vector<8x384xf32>
    %500 = arith.addf %496, %499 : vector<8x384xf32>
    %c10_i32_305 = arith.constant 10 : i32
    %501 = tpu.dynamic_rotate %414 by %c10_i32_305 dim 1 : vector<8x384xf32>, i32 -> vector<8x384xf32>
    %c168_306 = arith.constant 168 : index
    %c0_307 = arith.constant 0 : index
    %502 = vector.load %arg6[%c168_306, %c0_307] : memref<256x384xf32, #tpu.memory_space<vmem>>, vector<8x384xf32>
    %503 = arith.mulf %501, %502 : vector<8x384xf32>
    %504 = arith.addf %500, %503 : vector<8x384xf32>
    %c9_i32_308 = arith.constant 9 : i32
    %505 = tpu.dynamic_rotate %414 by %c9_i32_308 dim 1 : vector<8x384xf32>, i32 -> vector<8x384xf32>
    %c176_309 = arith.constant 176 : index
    %c0_310 = arith.constant 0 : index
    %506 = vector.load %arg6[%c176_309, %c0_310] : memref<256x384xf32, #tpu.memory_space<vmem>>, vector<8x384xf32>
    %507 = arith.mulf %505, %506 : vector<8x384xf32>
    %508 = arith.addf %504, %507 : vector<8x384xf32>
    %c8_i32_311 = arith.constant 8 : i32
    %509 = tpu.dynamic_rotate %414 by %c8_i32_311 dim 1 : vector<8x384xf32>, i32 -> vector<8x384xf32>
    %c184_312 = arith.constant 184 : index
    %c0_313 = arith.constant 0 : index
    %510 = vector.load %arg6[%c184_312, %c0_313] : memref<256x384xf32, #tpu.memory_space<vmem>>, vector<8x384xf32>
    %511 = arith.mulf %509, %510 : vector<8x384xf32>
    %512 = arith.addf %508, %511 : vector<8x384xf32>
    %c7_i32_314 = arith.constant 7 : i32
    %513 = tpu.dynamic_rotate %414 by %c7_i32_314 dim 1 : vector<8x384xf32>, i32 -> vector<8x384xf32>
    %c192_315 = arith.constant 192 : index
    %c0_316 = arith.constant 0 : index
    %514 = vector.load %arg6[%c192_315, %c0_316] : memref<256x384xf32, #tpu.memory_space<vmem>>, vector<8x384xf32>
    %515 = arith.mulf %513, %514 : vector<8x384xf32>
    %516 = arith.addf %512, %515 : vector<8x384xf32>
    %c6_i32_317 = arith.constant 6 : i32
    %517 = tpu.dynamic_rotate %414 by %c6_i32_317 dim 1 : vector<8x384xf32>, i32 -> vector<8x384xf32>
    %c200_318 = arith.constant 200 : index
    %c0_319 = arith.constant 0 : index
    %518 = vector.load %arg6[%c200_318, %c0_319] : memref<256x384xf32, #tpu.memory_space<vmem>>, vector<8x384xf32>
    %519 = arith.mulf %517, %518 : vector<8x384xf32>
    %520 = arith.addf %516, %519 : vector<8x384xf32>
    %c5_i32_320 = arith.constant 5 : i32
    %521 = tpu.dynamic_rotate %414 by %c5_i32_320 dim 1 : vector<8x384xf32>, i32 -> vector<8x384xf32>
    %c208_321 = arith.constant 208 : index
    %c0_322 = arith.constant 0 : index
    %522 = vector.load %arg6[%c208_321, %c0_322] : memref<256x384xf32, #tpu.memory_space<vmem>>, vector<8x384xf32>
    %523 = arith.mulf %521, %522 : vector<8x384xf32>
    %524 = arith.addf %520, %523 : vector<8x384xf32>
    %c4_i32_323 = arith.constant 4 : i32
    %525 = tpu.dynamic_rotate %414 by %c4_i32_323 dim 1 : vector<8x384xf32>, i32 -> vector<8x384xf32>
    %c216_324 = arith.constant 216 : index
    %c0_325 = arith.constant 0 : index
    %526 = vector.load %arg6[%c216_324, %c0_325] : memref<256x384xf32, #tpu.memory_space<vmem>>, vector<8x384xf32>
    %527 = arith.mulf %525, %526 : vector<8x384xf32>
    %528 = arith.addf %524, %527 : vector<8x384xf32>
    %c3_i32_326 = arith.constant 3 : i32
    %529 = tpu.dynamic_rotate %414 by %c3_i32_326 dim 1 : vector<8x384xf32>, i32 -> vector<8x384xf32>
    %c224_327 = arith.constant 224 : index
    %c0_328 = arith.constant 0 : index
    %530 = vector.load %arg6[%c224_327, %c0_328] : memref<256x384xf32, #tpu.memory_space<vmem>>, vector<8x384xf32>
    %531 = arith.mulf %529, %530 : vector<8x384xf32>
    %532 = arith.addf %528, %531 : vector<8x384xf32>
    %c2_i32_329 = arith.constant 2 : i32
    %533 = tpu.dynamic_rotate %414 by %c2_i32_329 dim 1 : vector<8x384xf32>, i32 -> vector<8x384xf32>
    %c232_330 = arith.constant 232 : index
    %c0_331 = arith.constant 0 : index
    %534 = vector.load %arg6[%c232_330, %c0_331] : memref<256x384xf32, #tpu.memory_space<vmem>>, vector<8x384xf32>
    %535 = arith.mulf %533, %534 : vector<8x384xf32>
    %536 = arith.addf %532, %535 : vector<8x384xf32>
    %c1_i32_332 = arith.constant 1 : i32
    %537 = tpu.dynamic_rotate %414 by %c1_i32_332 dim 1 : vector<8x384xf32>, i32 -> vector<8x384xf32>
    %c240_333 = arith.constant 240 : index
    %c0_334 = arith.constant 0 : index
    %538 = vector.load %arg6[%c240_333, %c0_334] : memref<256x384xf32, #tpu.memory_space<vmem>>, vector<8x384xf32>
    %539 = arith.mulf %537, %538 : vector<8x384xf32>
    %540 = arith.addf %536, %539 : vector<8x384xf32>
    %c248_335 = arith.constant 248 : index
    %c0_336 = arith.constant 0 : index
    %541 = vector.load %arg6[%c248_335, %c0_336] : memref<256x384xf32, #tpu.memory_space<vmem>>, vector<8x384xf32>
    %542 = arith.mulf %414, %541 : vector<8x384xf32>
    %543 = arith.addf %540, %542 : vector<8x384xf32>
    %544 = arith.mulf %543, %18 : vector<8x384xf32>
    %cst_337 = arith.constant 2.500000e-01 : f32
    %545 = vector.broadcast %cst_337 : f32 to vector<8x384xf32>
    %546 = arith.mulf %544, %545 : vector<8x384xf32>
    %547 = arith.addf %415, %546 : vector<8x384xf32>
    %cst_338 = arith.constant 0.000000e+00 : f32
    %548 = vector.broadcast %cst_338 : f32 to vector<8x384xf32>
    %c31_i32_339 = arith.constant 31 : i32
    %549 = tpu.dynamic_rotate %546 by %c31_i32_339 dim 1 : vector<8x384xf32>, i32 -> vector<8x384xf32>
    %c0_340 = arith.constant 0 : index
    %c0_341 = arith.constant 0 : index
    %550 = vector.load %arg6[%c0_340, %c0_341] : memref<256x384xf32, #tpu.memory_space<vmem>>, vector<8x384xf32>
    %551 = arith.mulf %549, %550 : vector<8x384xf32>
    %552 = arith.addf %548, %551 : vector<8x384xf32>
    %c30_i32_342 = arith.constant 30 : i32
    %553 = tpu.dynamic_rotate %546 by %c30_i32_342 dim 1 : vector<8x384xf32>, i32 -> vector<8x384xf32>
    %c8_343 = arith.constant 8 : index
    %c0_344 = arith.constant 0 : index
    %554 = vector.load %arg6[%c8_343, %c0_344] : memref<256x384xf32, #tpu.memory_space<vmem>>, vector<8x384xf32>
    %555 = arith.mulf %553, %554 : vector<8x384xf32>
    %556 = arith.addf %552, %555 : vector<8x384xf32>
    %c29_i32_345 = arith.constant 29 : i32
    %557 = tpu.dynamic_rotate %546 by %c29_i32_345 dim 1 : vector<8x384xf32>, i32 -> vector<8x384xf32>
    %c16_346 = arith.constant 16 : index
    %c0_347 = arith.constant 0 : index
    %558 = vector.load %arg6[%c16_346, %c0_347] : memref<256x384xf32, #tpu.memory_space<vmem>>, vector<8x384xf32>
    %559 = arith.mulf %557, %558 : vector<8x384xf32>
    %560 = arith.addf %556, %559 : vector<8x384xf32>
    %c28_i32_348 = arith.constant 28 : i32
    %561 = tpu.dynamic_rotate %546 by %c28_i32_348 dim 1 : vector<8x384xf32>, i32 -> vector<8x384xf32>
    %c24_349 = arith.constant 24 : index
    %c0_350 = arith.constant 0 : index
    %562 = vector.load %arg6[%c24_349, %c0_350] : memref<256x384xf32, #tpu.memory_space<vmem>>, vector<8x384xf32>
    %563 = arith.mulf %561, %562 : vector<8x384xf32>
    %564 = arith.addf %560, %563 : vector<8x384xf32>
    %c27_i32_351 = arith.constant 27 : i32
    %565 = tpu.dynamic_rotate %546 by %c27_i32_351 dim 1 : vector<8x384xf32>, i32 -> vector<8x384xf32>
    %c32_352 = arith.constant 32 : index
    %c0_353 = arith.constant 0 : index
    %566 = vector.load %arg6[%c32_352, %c0_353] : memref<256x384xf32, #tpu.memory_space<vmem>>, vector<8x384xf32>
    %567 = arith.mulf %565, %566 : vector<8x384xf32>
    %568 = arith.addf %564, %567 : vector<8x384xf32>
    %c26_i32_354 = arith.constant 26 : i32
    %569 = tpu.dynamic_rotate %546 by %c26_i32_354 dim 1 : vector<8x384xf32>, i32 -> vector<8x384xf32>
    %c40_355 = arith.constant 40 : index
    %c0_356 = arith.constant 0 : index
    %570 = vector.load %arg6[%c40_355, %c0_356] : memref<256x384xf32, #tpu.memory_space<vmem>>, vector<8x384xf32>
    %571 = arith.mulf %569, %570 : vector<8x384xf32>
    %572 = arith.addf %568, %571 : vector<8x384xf32>
    %c25_i32_357 = arith.constant 25 : i32
    %573 = tpu.dynamic_rotate %546 by %c25_i32_357 dim 1 : vector<8x384xf32>, i32 -> vector<8x384xf32>
    %c48_358 = arith.constant 48 : index
    %c0_359 = arith.constant 0 : index
    %574 = vector.load %arg6[%c48_358, %c0_359] : memref<256x384xf32, #tpu.memory_space<vmem>>, vector<8x384xf32>
    %575 = arith.mulf %573, %574 : vector<8x384xf32>
    %576 = arith.addf %572, %575 : vector<8x384xf32>
    %c24_i32_360 = arith.constant 24 : i32
    %577 = tpu.dynamic_rotate %546 by %c24_i32_360 dim 1 : vector<8x384xf32>, i32 -> vector<8x384xf32>
    %c56_361 = arith.constant 56 : index
    %c0_362 = arith.constant 0 : index
    %578 = vector.load %arg6[%c56_361, %c0_362] : memref<256x384xf32, #tpu.memory_space<vmem>>, vector<8x384xf32>
    %579 = arith.mulf %577, %578 : vector<8x384xf32>
    %580 = arith.addf %576, %579 : vector<8x384xf32>
    %c23_i32_363 = arith.constant 23 : i32
    %581 = tpu.dynamic_rotate %546 by %c23_i32_363 dim 1 : vector<8x384xf32>, i32 -> vector<8x384xf32>
    %c64_364 = arith.constant 64 : index
    %c0_365 = arith.constant 0 : index
    %582 = vector.load %arg6[%c64_364, %c0_365] : memref<256x384xf32, #tpu.memory_space<vmem>>, vector<8x384xf32>
    %583 = arith.mulf %581, %582 : vector<8x384xf32>
    %584 = arith.addf %580, %583 : vector<8x384xf32>
    %c22_i32_366 = arith.constant 22 : i32
    %585 = tpu.dynamic_rotate %546 by %c22_i32_366 dim 1 : vector<8x384xf32>, i32 -> vector<8x384xf32>
    %c72_367 = arith.constant 72 : index
    %c0_368 = arith.constant 0 : index
    %586 = vector.load %arg6[%c72_367, %c0_368] : memref<256x384xf32, #tpu.memory_space<vmem>>, vector<8x384xf32>
    %587 = arith.mulf %585, %586 : vector<8x384xf32>
    %588 = arith.addf %584, %587 : vector<8x384xf32>
    %c21_i32_369 = arith.constant 21 : i32
    %589 = tpu.dynamic_rotate %546 by %c21_i32_369 dim 1 : vector<8x384xf32>, i32 -> vector<8x384xf32>
    %c80_370 = arith.constant 80 : index
    %c0_371 = arith.constant 0 : index
    %590 = vector.load %arg6[%c80_370, %c0_371] : memref<256x384xf32, #tpu.memory_space<vmem>>, vector<8x384xf32>
    %591 = arith.mulf %589, %590 : vector<8x384xf32>
    %592 = arith.addf %588, %591 : vector<8x384xf32>
    %c20_i32_372 = arith.constant 20 : i32
    %593 = tpu.dynamic_rotate %546 by %c20_i32_372 dim 1 : vector<8x384xf32>, i32 -> vector<8x384xf32>
    %c88_373 = arith.constant 88 : index
    %c0_374 = arith.constant 0 : index
    %594 = vector.load %arg6[%c88_373, %c0_374] : memref<256x384xf32, #tpu.memory_space<vmem>>, vector<8x384xf32>
    %595 = arith.mulf %593, %594 : vector<8x384xf32>
    %596 = arith.addf %592, %595 : vector<8x384xf32>
    %c19_i32_375 = arith.constant 19 : i32
    %597 = tpu.dynamic_rotate %546 by %c19_i32_375 dim 1 : vector<8x384xf32>, i32 -> vector<8x384xf32>
    %c96_376 = arith.constant 96 : index
    %c0_377 = arith.constant 0 : index
    %598 = vector.load %arg6[%c96_376, %c0_377] : memref<256x384xf32, #tpu.memory_space<vmem>>, vector<8x384xf32>
    %599 = arith.mulf %597, %598 : vector<8x384xf32>
    %600 = arith.addf %596, %599 : vector<8x384xf32>
    %c18_i32_378 = arith.constant 18 : i32
    %601 = tpu.dynamic_rotate %546 by %c18_i32_378 dim 1 : vector<8x384xf32>, i32 -> vector<8x384xf32>
    %c104_379 = arith.constant 104 : index
    %c0_380 = arith.constant 0 : index
    %602 = vector.load %arg6[%c104_379, %c0_380] : memref<256x384xf32, #tpu.memory_space<vmem>>, vector<8x384xf32>
    %603 = arith.mulf %601, %602 : vector<8x384xf32>
    %604 = arith.addf %600, %603 : vector<8x384xf32>
    %c17_i32_381 = arith.constant 17 : i32
    %605 = tpu.dynamic_rotate %546 by %c17_i32_381 dim 1 : vector<8x384xf32>, i32 -> vector<8x384xf32>
    %c112_382 = arith.constant 112 : index
    %c0_383 = arith.constant 0 : index
    %606 = vector.load %arg6[%c112_382, %c0_383] : memref<256x384xf32, #tpu.memory_space<vmem>>, vector<8x384xf32>
    %607 = arith.mulf %605, %606 : vector<8x384xf32>
    %608 = arith.addf %604, %607 : vector<8x384xf32>
    %c16_i32_384 = arith.constant 16 : i32
    %609 = tpu.dynamic_rotate %546 by %c16_i32_384 dim 1 : vector<8x384xf32>, i32 -> vector<8x384xf32>
    %c120_385 = arith.constant 120 : index
    %c0_386 = arith.constant 0 : index
    %610 = vector.load %arg6[%c120_385, %c0_386] : memref<256x384xf32, #tpu.memory_space<vmem>>, vector<8x384xf32>
    %611 = arith.mulf %609, %610 : vector<8x384xf32>
    %612 = arith.addf %608, %611 : vector<8x384xf32>
    %c15_i32_387 = arith.constant 15 : i32
    %613 = tpu.dynamic_rotate %546 by %c15_i32_387 dim 1 : vector<8x384xf32>, i32 -> vector<8x384xf32>
    %c128_388 = arith.constant 128 : index
    %c0_389 = arith.constant 0 : index
    %614 = vector.load %arg6[%c128_388, %c0_389] : memref<256x384xf32, #tpu.memory_space<vmem>>, vector<8x384xf32>
    %615 = arith.mulf %613, %614 : vector<8x384xf32>
    %616 = arith.addf %612, %615 : vector<8x384xf32>
    %c14_i32_390 = arith.constant 14 : i32
    %617 = tpu.dynamic_rotate %546 by %c14_i32_390 dim 1 : vector<8x384xf32>, i32 -> vector<8x384xf32>
    %c136_391 = arith.constant 136 : index
    %c0_392 = arith.constant 0 : index
    %618 = vector.load %arg6[%c136_391, %c0_392] : memref<256x384xf32, #tpu.memory_space<vmem>>, vector<8x384xf32>
    %619 = arith.mulf %617, %618 : vector<8x384xf32>
    %620 = arith.addf %616, %619 : vector<8x384xf32>
    %c13_i32_393 = arith.constant 13 : i32
    %621 = tpu.dynamic_rotate %546 by %c13_i32_393 dim 1 : vector<8x384xf32>, i32 -> vector<8x384xf32>
    %c144_394 = arith.constant 144 : index
    %c0_395 = arith.constant 0 : index
    %622 = vector.load %arg6[%c144_394, %c0_395] : memref<256x384xf32, #tpu.memory_space<vmem>>, vector<8x384xf32>
    %623 = arith.mulf %621, %622 : vector<8x384xf32>
    %624 = arith.addf %620, %623 : vector<8x384xf32>
    %c12_i32_396 = arith.constant 12 : i32
    %625 = tpu.dynamic_rotate %546 by %c12_i32_396 dim 1 : vector<8x384xf32>, i32 -> vector<8x384xf32>
    %c152_397 = arith.constant 152 : index
    %c0_398 = arith.constant 0 : index
    %626 = vector.load %arg6[%c152_397, %c0_398] : memref<256x384xf32, #tpu.memory_space<vmem>>, vector<8x384xf32>
    %627 = arith.mulf %625, %626 : vector<8x384xf32>
    %628 = arith.addf %624, %627 : vector<8x384xf32>
    %c11_i32_399 = arith.constant 11 : i32
    %629 = tpu.dynamic_rotate %546 by %c11_i32_399 dim 1 : vector<8x384xf32>, i32 -> vector<8x384xf32>
    %c160_400 = arith.constant 160 : index
    %c0_401 = arith.constant 0 : index
    %630 = vector.load %arg6[%c160_400, %c0_401] : memref<256x384xf32, #tpu.memory_space<vmem>>, vector<8x384xf32>
    %631 = arith.mulf %629, %630 : vector<8x384xf32>
    %632 = arith.addf %628, %631 : vector<8x384xf32>
    %c10_i32_402 = arith.constant 10 : i32
    %633 = tpu.dynamic_rotate %546 by %c10_i32_402 dim 1 : vector<8x384xf32>, i32 -> vector<8x384xf32>
    %c168_403 = arith.constant 168 : index
    %c0_404 = arith.constant 0 : index
    %634 = vector.load %arg6[%c168_403, %c0_404] : memref<256x384xf32, #tpu.memory_space<vmem>>, vector<8x384xf32>
    %635 = arith.mulf %633, %634 : vector<8x384xf32>
    %636 = arith.addf %632, %635 : vector<8x384xf32>
    %c9_i32_405 = arith.constant 9 : i32
    %637 = tpu.dynamic_rotate %546 by %c9_i32_405 dim 1 : vector<8x384xf32>, i32 -> vector<8x384xf32>
    %c176_406 = arith.constant 176 : index
    %c0_407 = arith.constant 0 : index
    %638 = vector.load %arg6[%c176_406, %c0_407] : memref<256x384xf32, #tpu.memory_space<vmem>>, vector<8x384xf32>
    %639 = arith.mulf %637, %638 : vector<8x384xf32>
    %640 = arith.addf %636, %639 : vector<8x384xf32>
    %c8_i32_408 = arith.constant 8 : i32
    %641 = tpu.dynamic_rotate %546 by %c8_i32_408 dim 1 : vector<8x384xf32>, i32 -> vector<8x384xf32>
    %c184_409 = arith.constant 184 : index
    %c0_410 = arith.constant 0 : index
    %642 = vector.load %arg6[%c184_409, %c0_410] : memref<256x384xf32, #tpu.memory_space<vmem>>, vector<8x384xf32>
    %643 = arith.mulf %641, %642 : vector<8x384xf32>
    %644 = arith.addf %640, %643 : vector<8x384xf32>
    %c7_i32_411 = arith.constant 7 : i32
    %645 = tpu.dynamic_rotate %546 by %c7_i32_411 dim 1 : vector<8x384xf32>, i32 -> vector<8x384xf32>
    %c192_412 = arith.constant 192 : index
    %c0_413 = arith.constant 0 : index
    %646 = vector.load %arg6[%c192_412, %c0_413] : memref<256x384xf32, #tpu.memory_space<vmem>>, vector<8x384xf32>
    %647 = arith.mulf %645, %646 : vector<8x384xf32>
    %648 = arith.addf %644, %647 : vector<8x384xf32>
    %c6_i32_414 = arith.constant 6 : i32
    %649 = tpu.dynamic_rotate %546 by %c6_i32_414 dim 1 : vector<8x384xf32>, i32 -> vector<8x384xf32>
    %c200_415 = arith.constant 200 : index
    %c0_416 = arith.constant 0 : index
    %650 = vector.load %arg6[%c200_415, %c0_416] : memref<256x384xf32, #tpu.memory_space<vmem>>, vector<8x384xf32>
    %651 = arith.mulf %649, %650 : vector<8x384xf32>
    %652 = arith.addf %648, %651 : vector<8x384xf32>
    %c5_i32_417 = arith.constant 5 : i32
    %653 = tpu.dynamic_rotate %546 by %c5_i32_417 dim 1 : vector<8x384xf32>, i32 -> vector<8x384xf32>
    %c208_418 = arith.constant 208 : index
    %c0_419 = arith.constant 0 : index
    %654 = vector.load %arg6[%c208_418, %c0_419] : memref<256x384xf32, #tpu.memory_space<vmem>>, vector<8x384xf32>
    %655 = arith.mulf %653, %654 : vector<8x384xf32>
    %656 = arith.addf %652, %655 : vector<8x384xf32>
    %c4_i32_420 = arith.constant 4 : i32
    %657 = tpu.dynamic_rotate %546 by %c4_i32_420 dim 1 : vector<8x384xf32>, i32 -> vector<8x384xf32>
    %c216_421 = arith.constant 216 : index
    %c0_422 = arith.constant 0 : index
    %658 = vector.load %arg6[%c216_421, %c0_422] : memref<256x384xf32, #tpu.memory_space<vmem>>, vector<8x384xf32>
    %659 = arith.mulf %657, %658 : vector<8x384xf32>
    %660 = arith.addf %656, %659 : vector<8x384xf32>
    %c3_i32_423 = arith.constant 3 : i32
    %661 = tpu.dynamic_rotate %546 by %c3_i32_423 dim 1 : vector<8x384xf32>, i32 -> vector<8x384xf32>
    %c224_424 = arith.constant 224 : index
    %c0_425 = arith.constant 0 : index
    %662 = vector.load %arg6[%c224_424, %c0_425] : memref<256x384xf32, #tpu.memory_space<vmem>>, vector<8x384xf32>
    %663 = arith.mulf %661, %662 : vector<8x384xf32>
    %664 = arith.addf %660, %663 : vector<8x384xf32>
    %c2_i32_426 = arith.constant 2 : i32
    %665 = tpu.dynamic_rotate %546 by %c2_i32_426 dim 1 : vector<8x384xf32>, i32 -> vector<8x384xf32>
    %c232_427 = arith.constant 232 : index
    %c0_428 = arith.constant 0 : index
    %666 = vector.load %arg6[%c232_427, %c0_428] : memref<256x384xf32, #tpu.memory_space<vmem>>, vector<8x384xf32>
    %667 = arith.mulf %665, %666 : vector<8x384xf32>
    %668 = arith.addf %664, %667 : vector<8x384xf32>
    %c1_i32_429 = arith.constant 1 : i32
    %669 = tpu.dynamic_rotate %546 by %c1_i32_429 dim 1 : vector<8x384xf32>, i32 -> vector<8x384xf32>
    %c240_430 = arith.constant 240 : index
    %c0_431 = arith.constant 0 : index
    %670 = vector.load %arg6[%c240_430, %c0_431] : memref<256x384xf32, #tpu.memory_space<vmem>>, vector<8x384xf32>
    %671 = arith.mulf %669, %670 : vector<8x384xf32>
    %672 = arith.addf %668, %671 : vector<8x384xf32>
    %c248_432 = arith.constant 248 : index
    %c0_433 = arith.constant 0 : index
    %673 = vector.load %arg6[%c248_432, %c0_433] : memref<256x384xf32, #tpu.memory_space<vmem>>, vector<8x384xf32>
    %674 = arith.mulf %546, %673 : vector<8x384xf32>
    %675 = arith.addf %672, %674 : vector<8x384xf32>
    %676 = arith.mulf %675, %18 : vector<8x384xf32>
    %cst_434 = arith.constant 2.000000e-01 : f32
    %677 = vector.broadcast %cst_434 : f32 to vector<8x384xf32>
    %678 = arith.mulf %676, %677 : vector<8x384xf32>
    %679 = arith.addf %547, %678 : vector<8x384xf32>
    %cst_435 = arith.constant 0.000000e+00 : f32
    %680 = vector.broadcast %cst_435 : f32 to vector<8x384xf32>
    %c31_i32_436 = arith.constant 31 : i32
    %681 = tpu.dynamic_rotate %678 by %c31_i32_436 dim 1 : vector<8x384xf32>, i32 -> vector<8x384xf32>
    %c0_437 = arith.constant 0 : index
    %c0_438 = arith.constant 0 : index
    %682 = vector.load %arg6[%c0_437, %c0_438] : memref<256x384xf32, #tpu.memory_space<vmem>>, vector<8x384xf32>
    %683 = arith.mulf %681, %682 : vector<8x384xf32>
    %684 = arith.addf %680, %683 : vector<8x384xf32>
    %c30_i32_439 = arith.constant 30 : i32
    %685 = tpu.dynamic_rotate %678 by %c30_i32_439 dim 1 : vector<8x384xf32>, i32 -> vector<8x384xf32>
    %c8_440 = arith.constant 8 : index
    %c0_441 = arith.constant 0 : index
    %686 = vector.load %arg6[%c8_440, %c0_441] : memref<256x384xf32, #tpu.memory_space<vmem>>, vector<8x384xf32>
    %687 = arith.mulf %685, %686 : vector<8x384xf32>
    %688 = arith.addf %684, %687 : vector<8x384xf32>
    %c29_i32_442 = arith.constant 29 : i32
    %689 = tpu.dynamic_rotate %678 by %c29_i32_442 dim 1 : vector<8x384xf32>, i32 -> vector<8x384xf32>
    %c16_443 = arith.constant 16 : index
    %c0_444 = arith.constant 0 : index
    %690 = vector.load %arg6[%c16_443, %c0_444] : memref<256x384xf32, #tpu.memory_space<vmem>>, vector<8x384xf32>
    %691 = arith.mulf %689, %690 : vector<8x384xf32>
    %692 = arith.addf %688, %691 : vector<8x384xf32>
    %c28_i32_445 = arith.constant 28 : i32
    %693 = tpu.dynamic_rotate %678 by %c28_i32_445 dim 1 : vector<8x384xf32>, i32 -> vector<8x384xf32>
    %c24_446 = arith.constant 24 : index
    %c0_447 = arith.constant 0 : index
    %694 = vector.load %arg6[%c24_446, %c0_447] : memref<256x384xf32, #tpu.memory_space<vmem>>, vector<8x384xf32>
    %695 = arith.mulf %693, %694 : vector<8x384xf32>
    %696 = arith.addf %692, %695 : vector<8x384xf32>
    %c27_i32_448 = arith.constant 27 : i32
    %697 = tpu.dynamic_rotate %678 by %c27_i32_448 dim 1 : vector<8x384xf32>, i32 -> vector<8x384xf32>
    %c32_449 = arith.constant 32 : index
    %c0_450 = arith.constant 0 : index
    %698 = vector.load %arg6[%c32_449, %c0_450] : memref<256x384xf32, #tpu.memory_space<vmem>>, vector<8x384xf32>
    %699 = arith.mulf %697, %698 : vector<8x384xf32>
    %700 = arith.addf %696, %699 : vector<8x384xf32>
    %c26_i32_451 = arith.constant 26 : i32
    %701 = tpu.dynamic_rotate %678 by %c26_i32_451 dim 1 : vector<8x384xf32>, i32 -> vector<8x384xf32>
    %c40_452 = arith.constant 40 : index
    %c0_453 = arith.constant 0 : index
    %702 = vector.load %arg6[%c40_452, %c0_453] : memref<256x384xf32, #tpu.memory_space<vmem>>, vector<8x384xf32>
    %703 = arith.mulf %701, %702 : vector<8x384xf32>
    %704 = arith.addf %700, %703 : vector<8x384xf32>
    %c25_i32_454 = arith.constant 25 : i32
    %705 = tpu.dynamic_rotate %678 by %c25_i32_454 dim 1 : vector<8x384xf32>, i32 -> vector<8x384xf32>
    %c48_455 = arith.constant 48 : index
    %c0_456 = arith.constant 0 : index
    %706 = vector.load %arg6[%c48_455, %c0_456] : memref<256x384xf32, #tpu.memory_space<vmem>>, vector<8x384xf32>
    %707 = arith.mulf %705, %706 : vector<8x384xf32>
    %708 = arith.addf %704, %707 : vector<8x384xf32>
    %c24_i32_457 = arith.constant 24 : i32
    %709 = tpu.dynamic_rotate %678 by %c24_i32_457 dim 1 : vector<8x384xf32>, i32 -> vector<8x384xf32>
    %c56_458 = arith.constant 56 : index
    %c0_459 = arith.constant 0 : index
    %710 = vector.load %arg6[%c56_458, %c0_459] : memref<256x384xf32, #tpu.memory_space<vmem>>, vector<8x384xf32>
    %711 = arith.mulf %709, %710 : vector<8x384xf32>
    %712 = arith.addf %708, %711 : vector<8x384xf32>
    %c23_i32_460 = arith.constant 23 : i32
    %713 = tpu.dynamic_rotate %678 by %c23_i32_460 dim 1 : vector<8x384xf32>, i32 -> vector<8x384xf32>
    %c64_461 = arith.constant 64 : index
    %c0_462 = arith.constant 0 : index
    %714 = vector.load %arg6[%c64_461, %c0_462] : memref<256x384xf32, #tpu.memory_space<vmem>>, vector<8x384xf32>
    %715 = arith.mulf %713, %714 : vector<8x384xf32>
    %716 = arith.addf %712, %715 : vector<8x384xf32>
    %c22_i32_463 = arith.constant 22 : i32
    %717 = tpu.dynamic_rotate %678 by %c22_i32_463 dim 1 : vector<8x384xf32>, i32 -> vector<8x384xf32>
    %c72_464 = arith.constant 72 : index
    %c0_465 = arith.constant 0 : index
    %718 = vector.load %arg6[%c72_464, %c0_465] : memref<256x384xf32, #tpu.memory_space<vmem>>, vector<8x384xf32>
    %719 = arith.mulf %717, %718 : vector<8x384xf32>
    %720 = arith.addf %716, %719 : vector<8x384xf32>
    %c21_i32_466 = arith.constant 21 : i32
    %721 = tpu.dynamic_rotate %678 by %c21_i32_466 dim 1 : vector<8x384xf32>, i32 -> vector<8x384xf32>
    %c80_467 = arith.constant 80 : index
    %c0_468 = arith.constant 0 : index
    %722 = vector.load %arg6[%c80_467, %c0_468] : memref<256x384xf32, #tpu.memory_space<vmem>>, vector<8x384xf32>
    %723 = arith.mulf %721, %722 : vector<8x384xf32>
    %724 = arith.addf %720, %723 : vector<8x384xf32>
    %c20_i32_469 = arith.constant 20 : i32
    %725 = tpu.dynamic_rotate %678 by %c20_i32_469 dim 1 : vector<8x384xf32>, i32 -> vector<8x384xf32>
    %c88_470 = arith.constant 88 : index
    %c0_471 = arith.constant 0 : index
    %726 = vector.load %arg6[%c88_470, %c0_471] : memref<256x384xf32, #tpu.memory_space<vmem>>, vector<8x384xf32>
    %727 = arith.mulf %725, %726 : vector<8x384xf32>
    %728 = arith.addf %724, %727 : vector<8x384xf32>
    %c19_i32_472 = arith.constant 19 : i32
    %729 = tpu.dynamic_rotate %678 by %c19_i32_472 dim 1 : vector<8x384xf32>, i32 -> vector<8x384xf32>
    %c96_473 = arith.constant 96 : index
    %c0_474 = arith.constant 0 : index
    %730 = vector.load %arg6[%c96_473, %c0_474] : memref<256x384xf32, #tpu.memory_space<vmem>>, vector<8x384xf32>
    %731 = arith.mulf %729, %730 : vector<8x384xf32>
    %732 = arith.addf %728, %731 : vector<8x384xf32>
    %c18_i32_475 = arith.constant 18 : i32
    %733 = tpu.dynamic_rotate %678 by %c18_i32_475 dim 1 : vector<8x384xf32>, i32 -> vector<8x384xf32>
    %c104_476 = arith.constant 104 : index
    %c0_477 = arith.constant 0 : index
    %734 = vector.load %arg6[%c104_476, %c0_477] : memref<256x384xf32, #tpu.memory_space<vmem>>, vector<8x384xf32>
    %735 = arith.mulf %733, %734 : vector<8x384xf32>
    %736 = arith.addf %732, %735 : vector<8x384xf32>
    %c17_i32_478 = arith.constant 17 : i32
    %737 = tpu.dynamic_rotate %678 by %c17_i32_478 dim 1 : vector<8x384xf32>, i32 -> vector<8x384xf32>
    %c112_479 = arith.constant 112 : index
    %c0_480 = arith.constant 0 : index
    %738 = vector.load %arg6[%c112_479, %c0_480] : memref<256x384xf32, #tpu.memory_space<vmem>>, vector<8x384xf32>
    %739 = arith.mulf %737, %738 : vector<8x384xf32>
    %740 = arith.addf %736, %739 : vector<8x384xf32>
    %c16_i32_481 = arith.constant 16 : i32
    %741 = tpu.dynamic_rotate %678 by %c16_i32_481 dim 1 : vector<8x384xf32>, i32 -> vector<8x384xf32>
    %c120_482 = arith.constant 120 : index
    %c0_483 = arith.constant 0 : index
    %742 = vector.load %arg6[%c120_482, %c0_483] : memref<256x384xf32, #tpu.memory_space<vmem>>, vector<8x384xf32>
    %743 = arith.mulf %741, %742 : vector<8x384xf32>
    %744 = arith.addf %740, %743 : vector<8x384xf32>
    %c15_i32_484 = arith.constant 15 : i32
    %745 = tpu.dynamic_rotate %678 by %c15_i32_484 dim 1 : vector<8x384xf32>, i32 -> vector<8x384xf32>
    %c128_485 = arith.constant 128 : index
    %c0_486 = arith.constant 0 : index
    %746 = vector.load %arg6[%c128_485, %c0_486] : memref<256x384xf32, #tpu.memory_space<vmem>>, vector<8x384xf32>
    %747 = arith.mulf %745, %746 : vector<8x384xf32>
    %748 = arith.addf %744, %747 : vector<8x384xf32>
    %c14_i32_487 = arith.constant 14 : i32
    %749 = tpu.dynamic_rotate %678 by %c14_i32_487 dim 1 : vector<8x384xf32>, i32 -> vector<8x384xf32>
    %c136_488 = arith.constant 136 : index
    %c0_489 = arith.constant 0 : index
    %750 = vector.load %arg6[%c136_488, %c0_489] : memref<256x384xf32, #tpu.memory_space<vmem>>, vector<8x384xf32>
    %751 = arith.mulf %749, %750 : vector<8x384xf32>
    %752 = arith.addf %748, %751 : vector<8x384xf32>
    %c13_i32_490 = arith.constant 13 : i32
    %753 = tpu.dynamic_rotate %678 by %c13_i32_490 dim 1 : vector<8x384xf32>, i32 -> vector<8x384xf32>
    %c144_491 = arith.constant 144 : index
    %c0_492 = arith.constant 0 : index
    %754 = vector.load %arg6[%c144_491, %c0_492] : memref<256x384xf32, #tpu.memory_space<vmem>>, vector<8x384xf32>
    %755 = arith.mulf %753, %754 : vector<8x384xf32>
    %756 = arith.addf %752, %755 : vector<8x384xf32>
    %c12_i32_493 = arith.constant 12 : i32
    %757 = tpu.dynamic_rotate %678 by %c12_i32_493 dim 1 : vector<8x384xf32>, i32 -> vector<8x384xf32>
    %c152_494 = arith.constant 152 : index
    %c0_495 = arith.constant 0 : index
    %758 = vector.load %arg6[%c152_494, %c0_495] : memref<256x384xf32, #tpu.memory_space<vmem>>, vector<8x384xf32>
    %759 = arith.mulf %757, %758 : vector<8x384xf32>
    %760 = arith.addf %756, %759 : vector<8x384xf32>
    %c11_i32_496 = arith.constant 11 : i32
    %761 = tpu.dynamic_rotate %678 by %c11_i32_496 dim 1 : vector<8x384xf32>, i32 -> vector<8x384xf32>
    %c160_497 = arith.constant 160 : index
    %c0_498 = arith.constant 0 : index
    %762 = vector.load %arg6[%c160_497, %c0_498] : memref<256x384xf32, #tpu.memory_space<vmem>>, vector<8x384xf32>
    %763 = arith.mulf %761, %762 : vector<8x384xf32>
    %764 = arith.addf %760, %763 : vector<8x384xf32>
    %c10_i32_499 = arith.constant 10 : i32
    %765 = tpu.dynamic_rotate %678 by %c10_i32_499 dim 1 : vector<8x384xf32>, i32 -> vector<8x384xf32>
    %c168_500 = arith.constant 168 : index
    %c0_501 = arith.constant 0 : index
    %766 = vector.load %arg6[%c168_500, %c0_501] : memref<256x384xf32, #tpu.memory_space<vmem>>, vector<8x384xf32>
    %767 = arith.mulf %765, %766 : vector<8x384xf32>
    %768 = arith.addf %764, %767 : vector<8x384xf32>
    %c9_i32_502 = arith.constant 9 : i32
    %769 = tpu.dynamic_rotate %678 by %c9_i32_502 dim 1 : vector<8x384xf32>, i32 -> vector<8x384xf32>
    %c176_503 = arith.constant 176 : index
    %c0_504 = arith.constant 0 : index
    %770 = vector.load %arg6[%c176_503, %c0_504] : memref<256x384xf32, #tpu.memory_space<vmem>>, vector<8x384xf32>
    %771 = arith.mulf %769, %770 : vector<8x384xf32>
    %772 = arith.addf %768, %771 : vector<8x384xf32>
    %c8_i32_505 = arith.constant 8 : i32
    %773 = tpu.dynamic_rotate %678 by %c8_i32_505 dim 1 : vector<8x384xf32>, i32 -> vector<8x384xf32>
    %c184_506 = arith.constant 184 : index
    %c0_507 = arith.constant 0 : index
    %774 = vector.load %arg6[%c184_506, %c0_507] : memref<256x384xf32, #tpu.memory_space<vmem>>, vector<8x384xf32>
    %775 = arith.mulf %773, %774 : vector<8x384xf32>
    %776 = arith.addf %772, %775 : vector<8x384xf32>
    %c7_i32_508 = arith.constant 7 : i32
    %777 = tpu.dynamic_rotate %678 by %c7_i32_508 dim 1 : vector<8x384xf32>, i32 -> vector<8x384xf32>
    %c192_509 = arith.constant 192 : index
    %c0_510 = arith.constant 0 : index
    %778 = vector.load %arg6[%c192_509, %c0_510] : memref<256x384xf32, #tpu.memory_space<vmem>>, vector<8x384xf32>
    %779 = arith.mulf %777, %778 : vector<8x384xf32>
    %780 = arith.addf %776, %779 : vector<8x384xf32>
    %c6_i32_511 = arith.constant 6 : i32
    %781 = tpu.dynamic_rotate %678 by %c6_i32_511 dim 1 : vector<8x384xf32>, i32 -> vector<8x384xf32>
    %c200_512 = arith.constant 200 : index
    %c0_513 = arith.constant 0 : index
    %782 = vector.load %arg6[%c200_512, %c0_513] : memref<256x384xf32, #tpu.memory_space<vmem>>, vector<8x384xf32>
    %783 = arith.mulf %781, %782 : vector<8x384xf32>
    %784 = arith.addf %780, %783 : vector<8x384xf32>
    %c5_i32_514 = arith.constant 5 : i32
    %785 = tpu.dynamic_rotate %678 by %c5_i32_514 dim 1 : vector<8x384xf32>, i32 -> vector<8x384xf32>
    %c208_515 = arith.constant 208 : index
    %c0_516 = arith.constant 0 : index
    %786 = vector.load %arg6[%c208_515, %c0_516] : memref<256x384xf32, #tpu.memory_space<vmem>>, vector<8x384xf32>
    %787 = arith.mulf %785, %786 : vector<8x384xf32>
    %788 = arith.addf %784, %787 : vector<8x384xf32>
    %c4_i32_517 = arith.constant 4 : i32
    %789 = tpu.dynamic_rotate %678 by %c4_i32_517 dim 1 : vector<8x384xf32>, i32 -> vector<8x384xf32>
    %c216_518 = arith.constant 216 : index
    %c0_519 = arith.constant 0 : index
    %790 = vector.load %arg6[%c216_518, %c0_519] : memref<256x384xf32, #tpu.memory_space<vmem>>, vector<8x384xf32>
    %791 = arith.mulf %789, %790 : vector<8x384xf32>
    %792 = arith.addf %788, %791 : vector<8x384xf32>
    %c3_i32_520 = arith.constant 3 : i32
    %793 = tpu.dynamic_rotate %678 by %c3_i32_520 dim 1 : vector<8x384xf32>, i32 -> vector<8x384xf32>
    %c224_521 = arith.constant 224 : index
    %c0_522 = arith.constant 0 : index
    %794 = vector.load %arg6[%c224_521, %c0_522] : memref<256x384xf32, #tpu.memory_space<vmem>>, vector<8x384xf32>
    %795 = arith.mulf %793, %794 : vector<8x384xf32>
    %796 = arith.addf %792, %795 : vector<8x384xf32>
    %c2_i32_523 = arith.constant 2 : i32
    %797 = tpu.dynamic_rotate %678 by %c2_i32_523 dim 1 : vector<8x384xf32>, i32 -> vector<8x384xf32>
    %c232_524 = arith.constant 232 : index
    %c0_525 = arith.constant 0 : index
    %798 = vector.load %arg6[%c232_524, %c0_525] : memref<256x384xf32, #tpu.memory_space<vmem>>, vector<8x384xf32>
    %799 = arith.mulf %797, %798 : vector<8x384xf32>
    %800 = arith.addf %796, %799 : vector<8x384xf32>
    %c1_i32_526 = arith.constant 1 : i32
    %801 = tpu.dynamic_rotate %678 by %c1_i32_526 dim 1 : vector<8x384xf32>, i32 -> vector<8x384xf32>
    %c240_527 = arith.constant 240 : index
    %c0_528 = arith.constant 0 : index
    %802 = vector.load %arg6[%c240_527, %c0_528] : memref<256x384xf32, #tpu.memory_space<vmem>>, vector<8x384xf32>
    %803 = arith.mulf %801, %802 : vector<8x384xf32>
    %804 = arith.addf %800, %803 : vector<8x384xf32>
    %c248_529 = arith.constant 248 : index
    %c0_530 = arith.constant 0 : index
    %805 = vector.load %arg6[%c248_529, %c0_530] : memref<256x384xf32, #tpu.memory_space<vmem>>, vector<8x384xf32>
    %806 = arith.mulf %678, %805 : vector<8x384xf32>
    %807 = arith.addf %804, %806 : vector<8x384xf32>
    %808 = arith.mulf %807, %18 : vector<8x384xf32>
    %cst_531 = arith.constant 0.166666672 : f32
    %809 = vector.broadcast %cst_531 : f32 to vector<8x384xf32>
    %810 = arith.mulf %808, %809 : vector<8x384xf32>
    %811 = arith.addf %679, %810 : vector<8x384xf32>
    %812 = vector.extract_strided_slice %811 {offsets = [0, 256], sizes = [8, 8], strides = [1, 1]} : vector<8x384xf32> to vector<8x8xf32>
    %c0_532 = arith.constant 0 : index
    %c0_533 = arith.constant 0 : index
    %813 = vector.load %arg5[%c0_532, %c0_533] : memref<8x8xf32, #tpu.memory_space<vmem>>, vector<8x8xf32>
    tpu.vector_store %arg5[%c0_532, %c0_533], %812 {strides = array<i32>} : memref<8x8xf32, #tpu.memory_space<vmem>>, vector<8x8xf32>,
    return
  }
  func.func @transform_0(%arg0: i32) -> (i32, i32) {
    %c0_i32 = arith.constant 0 : i32
    %c0_i32_0 = arith.constant 0 : i32
    return %arg0, %c0_i32 : i32, i32
  }
  func.func @transform_1(%arg0: i32) -> (i32, i32, i32) {
    %c0_i32 = arith.constant 0 : i32
    %c0_i32_0 = arith.constant 0 : i32
    %c0_i32_1 = arith.constant 0 : i32
    return %arg0, %c0_i32, %c0_i32_0 : i32, i32, i32
  }
  func.func @transform_2(%arg0: i32) -> (i32, i32) {
    %c0_i32 = arith.constant 0 : i32
    %c0_i32_0 = arith.constant 0 : i32
    %c0_i32_1 = arith.constant 0 : i32
    return %c0_i32, %c0_i32_0 : i32, i32
  }
  func.func @transform_3(%arg0: i32) -> (i32, i32) {
    %c0_i32 = arith.constant 0 : i32
    %c0_i32_0 = arith.constant 0 : i32
    return %arg0, %c0_i32 : i32, i32
  }
  func.func @transform_4(%arg0: i32) -> (i32, i32) {
    %c0_i32 = arith.constant 0 : i32
    %c0_i32_0 = arith.constant 0 : i32
    return %arg0, %c0_i32 : i32, i32
  }
}

</mosaic_0001>

<llo_original>
// kernel: tpu_custom_call.1
$region0: #{tpu_custom_call.1}
  #allocation0 [shape = 'u32[]', space=smem, size = 0x4, offset = 0x4, fixed_abs, tag = 'smem constant byte address 0x4 - core index']
  #allocation1 [shape = 'u32[72,128]{1,0:T(1,128)}', space=vmem, size = 0x9000, scoped, tag = 'internal scratch']
  #allocation2 [shape = 'f32[256,384]{1,0:T(8,128)}', space=vmem, size = 0x60000, scoped, tag = 'scratch operand']
  %s0 = inlined_call_operand.vmem [shape: f32[16,384], index: 0, kind: input, shape index: {}]
  %s1 = inlined_call_operand.vmem [shape: f32[2,256,32], index: 1, kind: input, shape index: {}]
  %s2 = inlined_call_operand.vmem [shape: f32[32,384], index: 2, kind: input, shape index: {}]
  %s3 = inlined_call_operand.vmem [shape: s32[16,1], index: 3, kind: input, shape index: {}]
  %s4 = inlined_call_operand.vmem [shape: f32[16,8], index: 4, kind: output, shape index: {}]
  %s5 = sld [smem:[#allocation0]]
  $region49: #{tpu_custom_call.1} parent=0
    _
  %s7 = ssub.s32 1, %s5
  %s8 = scalar_select 0, %s7, %s5
  loop: start=0, step=1, limit=4
  $region2: #{tpu_custom_call.1} parent=0 // loop_pre_header
    _
  $region3: #{tpu_custom_call.1} parent=0 // loop_header
    %s10 = sphi 0, %s14
    %p11 = scmp.ge.s32.totalorder %s10, 4
    %s20 = sphi 0, %s22
    %s23 = sphi 0, %s20
    %s24 = sphi 0, %s23
    %s40 = sphi 0, %s24
    %s46 = sphi 0, %s48
    %s49 = sphi 0, %s46
    %s50 = sphi 0, %s49
    %s66 = sphi 0, %s50
    %s70 = sphi 0, %s70
    %s72 = sphi 0, %s70
    %s73 = sphi 0, %s72
    %s87 = sphi 0, %s73
    %s93 = sphi 0, %s95
    %s96 = sphi 0, %s93
    %s97 = sphi 0, %s96
    %s113 = sphi 0, %s97
    %s119 = sphi 0, %s121
    %s122 = sphi 0, %s119
    %s123 = sphi 0, %s122
    %s139 = sphi 0, %s123
  $region4: #{tpu_custom_call.1} parent=0 // loop_header_branch
    %13 = sbr.rel (%p11) target = $region8
  $region5: #{tpu_custom_call.1} parent=0 // loop_body
    %s15 = ssub.s32 %s10, 1
    %s16 = ssub.s32 %s10, 2
    %s17 = sadd.s32 %s10, 1
    %s18 = ssub.s32 %s10, %s17
    %p19 = scmp.eq.s32.totalorder %s18, 0
    %s21 = sadd.s32 %s20, 1
    %s22 = scalar_select %p19, %s20, %s21
    %p25 = pneg %p19
    %p26 = scmp.eq.s32.totalorder %s10, 1
    %p27 = por %p25, %p26
    %p28 = scmp.ne.s32.totalorder %s20, %s23
    %p29 = scmp.eq.s32.totalorder %s10, 0
    %p30 = por %p28, %p29
    %p31 = scmp.ne.s32.totalorder %s20, %s23
    %p32 = scmp.eq.s32.totalorder %s15, 1
    %p33 = por %p31, %p32
    %p34 = scmp.ne.s32.totalorder %s23, %s24
    %p35 = scmp.eq.s32.totalorder %s15, 0
    %p36 = por %p34, %p35
    %p37 = scmp.ne.s32.totalorder %s23, %s24
    %p38 = scmp.eq.s32.totalorder %s16, 1
    %p39 = por %p37, %p38
    %p41 = scmp.ne.s32.totalorder %s24, %s40
    %p42 = scmp.eq.s32.totalorder %s16, 0
    %p43 = por %p41, %p42
    %s44 = ssub.s32 %s10, %s17
    %p45 = scmp.eq.s32.totalorder %s44, 0
    %s47 = sadd.s32 %s46, 1
    %s48 = scalar_select %p45, %s46, %s47
    %p51 = pneg %p45
    %p52 = scmp.eq.s32.totalorder %s10, 1
    %p53 = por %p51, %p52
    %p54 = scmp.ne.s32.totalorder %s46, %s49
    %p55 = scmp.eq.s32.totalorder %s10, 0
    %p56 = por %p54, %p55
    %p57 = scmp.ne.s32.totalorder %s46, %s49
    %p58 = scmp.eq.s32.totalorder %s15, 1
    %p59 = por %p57, %p58
    %p60 = scmp.ne.s32.totalorder %s49, %s50
    %p61 = scmp.eq.s32.totalorder %s15, 0
    %p62 = por %p60, %p61
    %p63 = scmp.ne.s32.totalorder %s49, %s50
    %p64 = scmp.eq.s32.totalorder %s16, 1
    %p65 = por %p63, %p64
    %p67 = scmp.ne.s32.totalorder %s50, %s66
    %p68 = scmp.eq.s32.totalorder %s16, 0
    %p69 = por %p67, %p68
    %s71 = sadd.s32 %s70, 1
    %p74 = scmp.eq.s32.totalorder %s10, 1
    %p75 = scmp.ne.s32.totalorder %s70, %s72
    %p76 = scmp.eq.s32.totalorder %s10, 0
    %p77 = por %p75, %p76
    %p78 = scmp.ne.s32.totalorder %s70, %s72
    %p79 = scmp.eq.s32.totalorder %s15, 1
    %p80 = por %p78, %p79
    %p81 = scmp.ne.s32.totalorder %s72, %s73
    %p82 = scmp.eq.s32.totalorder %s15, 0
    %p83 = por %p81, %p82
    %p84 = scmp.ne.s32.totalorder %s72, %s73
    %p85 = scmp.eq.s32.totalorder %s16, 1
    %p86 = por %p84, %p85
    %p88 = scmp.ne.s32.totalorder %s73, %s87
    %p89 = scmp.eq.s32.totalorder %s16, 0
    %p90 = por %p88, %p89
    %s91 = ssub.s32 %s10, %s17
    %p92 = scmp.eq.s32.totalorder %s91, 0
    %s94 = sadd.s32 %s93, 1
    %s95 = scalar_select %p92, %s93, %s94
    %p98 = pneg %p92
    %p99 = scmp.eq.s32.totalorder %s10, 1
    %p100 = por %p98, %p99
    %p101 = scmp.ne.s32.totalorder %s93, %s96
    %p102 = scmp.eq.s32.totalorder %s10, 0
    %p103 = por %p101, %p102
    %p104 = scmp.ne.s32.totalorder %s93, %s96
    %p105 = scmp.eq.s32.totalorder %s15, 1
    %p106 = por %p104, %p105
    %p107 = scmp.ne.s32.totalorder %s96, %s97
    %p108 = scmp.eq.s32.totalorder %s15, 0
    %p109 = por %p107, %p108
    %p110 = scmp.ne.s32.totalorder %s96, %s97
    %p111 = scmp.eq.s32.totalorder %s16, 1
    %p112 = por %p110, %p111
    %p114 = scmp.ne.s32.totalorder %s97, %s113
    %p115 = scmp.eq.s32.totalorder %s16, 0
    %p116 = por %p114, %p115
    %s117 = ssub.s32 %s10, %s17
    %p118 = scmp.eq.s32.totalorder %s117, 0
    %s120 = sadd.s32 %s119, 1
    %s121 = scalar_select %p118, %s119, %s120
    %p124 = pneg %p118
    %p125 = scmp.eq.s32.totalorder %s10, 1
    %p126 = por %p124, %p125
    %p127 = scmp.ne.s32.totalorder %s119, %s122
    %p128 = scmp.eq.s32.totalorder %s10, 0
    %p129 = por %p127, %p128
    %p130 = scmp.ne.s32.totalorder %s119, %s122
    %p131 = scmp.eq.s32.totalorder %s15, 1
    %p132 = por %p130, %p131
    %p133 = scmp.ne.s32.totalorder %s122, %s123
    %p134 = scmp.eq.s32.totalorder %s15, 0
    %p135 = por %p133, %p134
    %p136 = scmp.ne.s32.totalorder %s122, %s123
    %p137 = scmp.eq.s32.totalorder %s16, 1
    %p138 = por %p136, %p137
    %p140 = scmp.ne.s32.totalorder %s123, %s139
    %p141 = scmp.eq.s32.totalorder %s16, 0
    %p142 = por %p140, %p141
    %p143 = scmp.le.s32.totalorder 1, %s10
    %p144 = scmp.lt.s32.totalorder %s10, 3
    %p145 = pnand %p143, %p144
    %p146 = pneg %p145
    // Predicated region
    $region9: #{tpu_custom_call.1} parent=5 // pred_check
      _
    $region10: #{tpu_custom_call.1} parent=5 // pred_check_branch
      %148 = sbr.rel (%p145) target = $region12
    $region11: #{tpu_custom_call.1} parent=5 // pred_region
      %s149 = ssub.s32 %s10, 1
      // Predicated region
      $region13: #{tpu_custom_call.1} parent=11 // pred_check
        %p150 = pneg %p83
      $region14: #{tpu_custom_call.1} parent=11 // pred_check_branch
        %152 = sbr.rel (%p150) target = $region16
      $region15: #{tpu_custom_call.1} parent=11 // pred_region
        _
      $region16: #{tpu_custom_call.1} parent=11 // pred_fallthru
        _
    $region12: #{tpu_custom_call.1} parent=5 // pred_fallthru
      _
    %p153 = scmp.lt.s32.totalorder %s10, 2
    // Predicated region
    $region17: #{tpu_custom_call.1} parent=5 // pred_check
      %p154 = pneg %p153
    $region18: #{tpu_custom_call.1} parent=5 // pred_check_branch
      %156 = sbr.rel (%p154) target = $region20
    $region19: #{tpu_custom_call.1} parent=5 // pred_region
      // Predicated region
      $region21: #{tpu_custom_call.1} parent=19 // pred_check
        %p157 = pneg %p30
      $region22: #{tpu_custom_call.1} parent=19 // pred_check_branch
        %159 = sbr.rel (%p157) target = $region24
      $region23: #{tpu_custom_call.1} parent=19 // pred_region
        %p160 = scmp.lt.s32.totalorder %s10, 1
        %s161 = scalar_select %p160, %s10, 1
        %s162 = smul.addr %s161, 3
        %s163 = smul.addr %s162, 8
        %s164 = scalar_lea.vmem %s0, %s163
      $region24: #{tpu_custom_call.1} parent=19 // pred_fallthru
        _
      // Predicated region
      $region25: #{tpu_custom_call.1} parent=19 // pred_check
        %p165 = pneg %p56
      $region26: #{tpu_custom_call.1} parent=19 // pred_check_branch
        %167 = sbr.rel (%p165) target = $region28
      $region27: #{tpu_custom_call.1} parent=19 // pred_region
        %p168 = scmp.lt.s32.totalorder %s10, 1
        %s169 = scalar_select %p168, %s10, 1
        %s170 = smul.addr %s169, 32
        %s171 = smul.addr %s170, 8
        %s172 = scalar_lea.vmem %s1, %s171
      $region28: #{tpu_custom_call.1} parent=19 // pred_fallthru
        _
      // Predicated region
      $region29: #{tpu_custom_call.1} parent=19 // pred_check
        %p173 = pneg %p103
      $region30: #{tpu_custom_call.1} parent=19 // pred_check_branch
        %175 = sbr.rel (%p173) target = $region32
      $region31: #{tpu_custom_call.1} parent=19 // pred_region
        %p176 = scmp.lt.s32.totalorder %s10, 1
        %s177 = scalar_select %p176, %s10, 1
        %s178 = smul.addr %s177, 8
        %s179 = scalar_lea.vmem %s3, %s178
      $region32: #{tpu_custom_call.1} parent=19 // pred_fallthru
        _
    $region20: #{tpu_custom_call.1} parent=5 // pred_fallthru
      _
    %p180 = scmp.le.s32.totalorder 1, %s10
    %p181 = scmp.lt.s32.totalorder %s10, 3
    %p182 = pnand %p180, %p181
    %p183 = pneg %p182
    // Predicated region
    $region33: #{tpu_custom_call.1} parent=5 // pred_check
      _
    $region34: #{tpu_custom_call.1} parent=5 // pred_check_branch
      %185 = sbr.rel (%p182) target = $region36
    $region35: #{tpu_custom_call.1} parent=5 // pred_region
      %s186 = ssub.s32 %s10, 1
      %p187 = scmp.lt.s32.totalorder %s15, 1
      %s188 = scalar_select %p187, %s15, 1
      %s189 = smul.addr %s188, 3
      %s190 = smul.addr %s189, 8
      %s191 = scalar_lea.vmem %s0, %s190
      %p192 = pneg %p36
      %p193 = pneg %p33
      %p194 = scmp.lt.s32.totalorder %s15, 1
      %s195 = scalar_select %p194, %s15, 1
      %s196 = smul.addr %s195, 32
      %s197 = smul.addr %s196, 8
      %s198 = scalar_lea.vmem %s1, %s197
      %p199 = pneg %p62
      %p200 = pneg %p59
      %p201 = pneg %p83
      %p202 = pneg %p80
      %p203 = scmp.lt.s32.totalorder %s15, 1
      %s204 = scalar_select %p203, %s15, 1
      %s205 = smul.addr %s204, 8
      %s206 = scalar_lea.vmem %s3, %s205
      %p207 = pneg %p109
      %p208 = pneg %p106
      %p209 = pneg %p135
      %p210 = pneg %p132
      %p211 = scmp.lt.s32.totalorder %s15, 1
      %s212 = scalar_select %p211, %s15, 1
      %s213 = smul.addr %s212, 8
      %s214 = scalar_lea.vmem %s4, %s213
      %p215 = scmp.lt.s32.totalorder %s15, 1
      %s216 = scalar_select %p215, %s15, 1
      %s217 = smul.addr %s216, 3
      %s218 = smul.addr %s217, 8
      %s219 = scalar_lea.vmem %s0, %s218
      %p220 = scmp.lt.s32.totalorder %s15, 1
      %s221 = scalar_select %p220, %s15, 1
      %s222 = smul.addr %s221, 32
      %s223 = smul.addr %s222, 8
      %s224 = scalar_lea.vmem %s1, %s223
      %p225 = scmp.lt.s32.totalorder %s15, 1
      %s226 = scalar_select %p225, %s15, 1
      %s227 = smul.addr %s226, 8
      %s228 = scalar_lea.vmem %s3, %s227
      %p229 = scmp.lt.s32.totalorder %s15, 1
      %s230 = scalar_select %p229, %s15, 1
      %s231 = smul.addr %s230, 8
      %s232 = scalar_lea.vmem %s4, %s231
      %v233 = vld [vmem:[%s224] sm:$0xff]
      %v234 = vld [vmem:[%s224 + $0x8] sm:$0xff]
      %v235 = vld [vmem:[%s224 + $0x10] sm:$0xff]
      %v236 = vld [vmem:[%s224 + $0x18] sm:$0xff]
      %v237 = vld [vmem:[%s224 + $0x20] sm:$0xff]
      %v238 = vld [vmem:[%s224 + $0x28] sm:$0xff]
      %v239 = vld [vmem:[%s224 + $0x30] sm:$0xff]
      %v240 = vld [vmem:[%s224 + $0x38] sm:$0xff]
      %v241 = vld [vmem:[%s224 + $0x40] sm:$0xff]
      %v242 = vld [vmem:[%s224 + $0x48] sm:$0xff]
      %v243 = vld [vmem:[%s224 + $0x50] sm:$0xff]
      %v244 = vld [vmem:[%s224 + $0x58] sm:$0xff]
      %v245 = vld [vmem:[%s224 + $0x60] sm:$0xff]
      %v246 = vld [vmem:[%s224 + $0x68] sm:$0xff]
      %v247 = vld [vmem:[%s224 + $0x70] sm:$0xff]
      %v248 = vld [vmem:[%s224 + $0x78] sm:$0xff]
      %v249 = vld [vmem:[%s224 + $0x80] sm:$0xff]
      %v250 = vld [vmem:[%s224 + $0x88] sm:$0xff]
      %v251 = vld [vmem:[%s224 + $0x90] sm:$0xff]
      %v252 = vld [vmem:[%s224 + $0x98] sm:$0xff]
      %v253 = vld [vmem:[%s224 + $0xa0] sm:$0xff]
      %v254 = vld [vmem:[%s224 + $0xa8] sm:$0xff]
      %v255 = vld [vmem:[%s224 + $0xb0] sm:$0xff]
      %v256 = vld [vmem:[%s224 + $0xb8] sm:$0xff]
      %v257 = vld [vmem:[%s224 + $0xc0] sm:$0xff]
      %v258 = vld [vmem:[%s224 + $0xc8] sm:$0xff]
      %v259 = vld [vmem:[%s224 + $0xd0] sm:$0xff]
      %v260 = vld [vmem:[%s224 + $0xd8] sm:$0xff]
      %v261 = vld [vmem:[%s224 + $0xe0] sm:$0xff]
      %v262 = vld [vmem:[%s224 + $0xe8] sm:$0xff]
      %v263 = vld [vmem:[%s224 + $0xf0] sm:$0xff]
      %v264 = vld [vmem:[%s224 + $0xf8] sm:$0xff]
      %v265 = vld [vmem:[%s2] sm:$0xff]
      %v266 = vld [vmem:[%s2 + $0x8] sm:$0xff]
      %v267 = vld [vmem:[%s2 + $0x10] sm:$0xff]
      %v268 = vld [vmem:[%s2 + $0x18] sm:$0xff]
      %v269 = vld [vmem:[%s2 + $0x20] sm:$0xff]
      %v270 = vld [vmem:[%s2 + $0x28] sm:$0xff]
      %v271 = vld [vmem:[%s2 + $0x30] sm:$0xff]
      %v272 = vld [vmem:[%s2 + $0x38] sm:$0xff]
      %v273 = vld [vmem:[%s2 + $0x40] sm:$0xff]
      %v274 = vld [vmem:[%s2 + $0x48] sm:$0xff]
      %v275 = vld [vmem:[%s2 + $0x50] sm:$0xff]
      %v276 = vld [vmem:[%s2 + $0x58] sm:$0xff]
      %vm277 = vcmask 261120
      %v279 = vsel %vm277, %v233, 0
      %v282 = vsel %vm277, %v234, 0
      %v285 = vsel %vm277, %v235, 0
      %v288 = vsel %vm277, %v236, 0
      %v291 = vsel %vm277, %v237, 0
      %v294 = vsel %vm277, %v238, 0
      %v297 = vsel %vm277, %v239, 0
      %v300 = vsel %vm277, %v240, 0
      %v303 = vsel %vm277, %v241, 0
      %v306 = vsel %vm277, %v242, 0
      %v309 = vsel %vm277, %v243, 0
      %v312 = vsel %vm277, %v244, 0
      %v315 = vsel %vm277, %v245, 0
      %v318 = vsel %vm277, %v246, 0
      %v321 = vsel %vm277, %v247, 0
      %v324 = vsel %vm277, %v248, 0
      %v327 = vsel %vm277, %v249, 0
      %v330 = vsel %vm277, %v250, 0
      %v333 = vsel %vm277, %v251, 0
      %v336 = vsel %vm277, %v252, 0
      %v339 = vsel %vm277, %v253, 0
      %v342 = vsel %vm277, %v254, 0
      %v345 = vsel %vm277, %v255, 0
      %v348 = vsel %vm277, %v256, 0
      %v351 = vsel %vm277, %v257, 0
      %v354 = vsel %vm277, %v258, 0
      %v357 = vsel %vm277, %v259, 0
      %v360 = vsel %vm277, %v260, 0
      %v363 = vsel %vm277, %v261, 0
      %v366 = vsel %vm277, %v262, 0
      %v369 = vsel %vm277, %v263, 0
      %v372 = vsel %vm277, %v264, 0
      %374 = vmatpush.msra.mxu0 0.0
      %375 = vmatpush.msra.mxu0 0.0
      %376 = vmatpush.msra.mxu0 0.0
      %377 = vmatpush.msra.mxu0 0.0
      %378 = vmatpush.msra.mxu0 0.0
      %379 = vmatpush.msra.mxu0 0.0
      %380 = vmatpush.msra.mxu0 0.0
      %381 = vmatpush.msra.mxu0 0.0
      %382 = vmatpush.msra.mxu0 0.0
      %383 = vmatpush.msra.mxu0 0.0
      %384 = vmatpush.msra.mxu0 0.0
      %385 = vmatpush.msra.mxu0 0.0
      %v386 = vand.u32 %v274, 4294901760
      %387 = vmatpush.msra.mxu0 %v386
      %v388 = vand.u32 %v271, 4294901760
      %389 = vmatpush.msra.mxu0 %v388
      %v390 = vand.u32 %v268, 4294901760
      %391 = vmatpush.msra.mxu0 %v390
      %v392 = vand.u32 %v265, 4294901760
      %393 = vmatpush.msra.mxu0 %v392
      %v394 = vand.u32 %v279, 4294901760
      %v395 = vsub.f32 %v279, %v394
      %v396 = vand.u32 %v395, 4294901760
      %v397 = vsub.f32 %v395, %v396
      %v398 = vand.u32 %v397, 4294901760
      %399 = vmatmul.f32.gmra.mxu0 %v398
      %v400 = vpop.f32.mrf.mxu0
      %v401 = vadd.f32 0.0, %v400
      %v402 = vand.u32 %v282, 4294901760
      %v403 = vsub.f32 %v282, %v402
      %v404 = vand.u32 %v403, 4294901760
      %v405 = vsub.f32 %v403, %v404
      %v406 = vand.u32 %v405, 4294901760
      %407 = vmatmul.f32.gmra.mxu0 %v406
      %v408 = vpop.f32.mrf.mxu0
      %v409 = vadd.f32 0.0, %v408
      %v410 = vand.u32 %v285, 4294901760
      %v411 = vsub.f32 %v285, %v410
      %v412 = vand.u32 %v411, 4294901760
      %v413 = vsub.f32 %v411, %v412
      %v414 = vand.u32 %v413, 4294901760
      %415 = vmatmul.f32.gmra.mxu0 %v414
      %v416 = vpop.f32.mrf.mxu0
      %v417 = vadd.f32 0.0, %v416
      %v418 = vand.u32 %v288, 4294901760
      %v419 = vsub.f32 %v288, %v418
      %v420 = vand.u32 %v419, 4294901760
      %v421 = vsub.f32 %v419, %v420
      %v422 = vand.u32 %v421, 4294901760
      %423 = vmatmul.f32.gmra.mxu0 %v422
      %v424 = vpop.f32.mrf.mxu0
      %v425 = vadd.f32 0.0, %v424
      %v426 = vand.u32 %v291, 4294901760
      %v427 = vsub.f32 %v291, %v426
      %v428 = vand.u32 %v427, 4294901760
      %v429 = vsub.f32 %v427, %v428
      %v430 = vand.u32 %v429, 4294901760
      %431 = vmatmul.f32.gmra.mxu0 %v430
      %v432 = vpop.f32.mrf.mxu0
      %v433 = vadd.f32 0.0, %v432
      %v434 = vand.u32 %v294, 4294901760
      %v435 = vsub.f32 %v294, %v434
      %v436 = vand.u32 %v435, 4294901760
      %v437 = vsub.f32 %v435, %v436
      %v438 = vand.u32 %v437, 4294901760
      %439 = vmatmul.f32.gmra.mxu0 %v438
      %v440 = vpop.f32.mrf.mxu0
      %v441 = vadd.f32 0.0, %v440
      %v442 = vand.u32 %v297, 4294901760
      %v443 = vsub.f32 %v297, %v442
      %v444 = vand.u32 %v443, 4294901760
      %v445 = vsub.f32 %v443, %v444
      %v446 = vand.u32 %v445, 4294901760
      %447 = vmatmul.f32.gmra.mxu0 %v446
      %v448 = vpop.f32.mrf.mxu0
      %v449 = vadd.f32 0.0, %v448
      %v450 = vand.u32 %v300, 4294901760
      %v451 = vsub.f32 %v300, %v450
      %v452 = vand.u32 %v451, 4294901760
      %v453 = vsub.f32 %v451, %v452
      %v454 = vand.u32 %v453, 4294901760
      %455 = vmatmul.f32.gmra.mxu0 %v454
      %v456 = vpop.f32.mrf.mxu0
      %v457 = vadd.f32 0.0, %v456
      %v458 = vand.u32 %v303, 4294901760
      %v459 = vsub.f32 %v303, %v458
      %v460 = vand.u32 %v459, 4294901760
      %v461 = vsub.f32 %v459, %v460
      %v462 = vand.u32 %v461, 4294901760
      %463 = vmatmul.f32.gmra.mxu0 %v462
      %v464 = vpop.f32.mrf.mxu0
      %v465 = vadd.f32 0.0, %v464
      %v466 = vand.u32 %v306, 4294901760
      %v467 = vsub.f32 %v306, %v466
      %v468 = vand.u32 %v467, 4294901760
      %v469 = vsub.f32 %v467, %v468
      %v470 = vand.u32 %v469, 4294901760
      %471 = vmatmul.f32.gmra.mxu0 %v470
      %v472 = vpop.f32.mrf.mxu0
      %v473 = vadd.f32 0.0, %v472
      %v474 = vand.u32 %v309, 4294901760
      %v475 = vsub.f32 %v309, %v474
      %v476 = vand.u32 %v475, 4294901760
      %v477 = vsub.f32 %v475, %v476
      %v478 = vand.u32 %v477, 4294901760
      %479 = vmatmul.f32.gmra.mxu0 %v478
      %v480 = vpop.f32.mrf.mxu0
      %v481 = vadd.f32 0.0, %v480
      %v482 = vand.u32 %v312, 4294901760
      %v483 = vsub.f32 %v312, %v482
      %v484 = vand.u32 %v483, 4294901760
      %v485 = vsub.f32 %v483, %v484
      %v486 = vand.u32 %v485, 4294901760
      %487 = vmatmul.f32.gmra.mxu0 %v486
      %v488 = vpop.f32.mrf.mxu0
      %v489 = vadd.f32 0.0, %v488
      %v490 = vand.u32 %v315, 4294901760
      %v491 = vsub.f32 %v315, %v490
      %v492 = vand.u32 %v491, 4294901760
      %v493 = vsub.f32 %v491, %v492
      %v494 = vand.u32 %v493, 4294901760
      %495 = vmatmul.f32.gmra.mxu0 %v494
      %v496 = vpop.f32.mrf.mxu0
      %v497 = vadd.f32 0.0, %v496
      %v498 = vand.u32 %v318, 4294901760
      %v499 = vsub.f32 %v318, %v498
      %v500 = vand.u32 %v499, 4294901760
      %v501 = vsub.f32 %v499, %v500
      %v502 = vand.u32 %v501, 4294901760
      %503 = vmatmul.f32.gmra.mxu0 %v502
      %v504 = vpop.f32.mrf.mxu0
      %v505 = vadd.f32 0.0, %v504
      %v506 = vand.u32 %v321, 4294901760
      %v507 = vsub.f32 %v321, %v506
      %v508 = vand.u32 %v507, 4294901760
      %v509 = vsub.f32 %v507, %v508
      %v510 = vand.u32 %v509, 4294901760
      %511 = vmatmul.f32.gmra.mxu0 %v510
      %v512 = vpop.f32.mrf.mxu0
      %v513 = vadd.f32 0.0, %v512
      %v514 = vand.u32 %v324, 4294901760
      %v515 = vsub.f32 %v324, %v514
      %v516 = vand.u32 %v515, 4294901760
      %v517 = vsub.f32 %v515, %v516
      %v518 = vand.u32 %v517, 4294901760
      %519 = vmatmul.f32.gmra.mxu0 %v518
      %v520 = vpop.f32.mrf.mxu0
      %v521 = vadd.f32 0.0, %v520
      %v522 = vand.u32 %v327, 4294901760
      %v523 = vsub.f32 %v327, %v522
      %v524 = vand.u32 %v523, 4294901760
      %v525 = vsub.f32 %v523, %v524
      %v526 = vand.u32 %v525, 4294901760
      %527 = vmatmul.f32.gmra.mxu0 %v526
      %v528 = vpop.f32.mrf.mxu0
      %v529 = vadd.f32 0.0, %v528
      %v530 = vand.u32 %v330, 4294901760
      %v531 = vsub.f32 %v330, %v530
      %v532 = vand.u32 %v531, 4294901760
      %v533 = vsub.f32 %v531, %v532
      %v534 = vand.u32 %v533, 4294901760
      %535 = vmatmul.f32.gmra.mxu0 %v534
      %v536 = vpop.f32.mrf.mxu0
      %v537 = vadd.f32 0.0, %v536
      %v538 = vand.u32 %v333, 4294901760
      %v539 = vsub.f32 %v333, %v538
      %v540 = vand.u32 %v539, 4294901760
      %v541 = vsub.f32 %v539, %v540
      %v542 = vand.u32 %v541, 4294901760
      %543 = vmatmul.f32.gmra.mxu0 %v542
      %v544 = vpop.f32.mrf.mxu0
      %v545 = vadd.f32 0.0, %v544
      %v546 = vand.u32 %v336, 4294901760
      %v547 = vsub.f32 %v336, %v546
      %v548 = vand.u32 %v547, 4294901760
      %v549 = vsub.f32 %v547, %v548
      %v550 = vand.u32 %v549, 4294901760
      %551 = vmatmul.f32.gmra.mxu0 %v550
      %v552 = vpop.f32.mrf.mxu0
      %v553 = vadd.f32 0.0, %v552
      %v554 = vand.u32 %v339, 4294901760
      %v555 = vsub.f32 %v339, %v554
      %v556 = vand.u32 %v555, 4294901760
      %v557 = vsub.f32 %v555, %v556
      %v558 = vand.u32 %v557, 4294901760
      %559 = vmatmul.f32.gmra.mxu0 %v558
      %v560 = vpop.f32.mrf.mxu0
      %v561 = vadd.f32 0.0, %v560
      %v562 = vand.u32 %v342, 4294901760
      %v563 = vsub.f32 %v342, %v562
      %v564 = vand.u32 %v563, 4294901760
      %v565 = vsub.f32 %v563, %v564
      %v566 = vand.u32 %v565, 4294901760
      %567 = vmatmul.f32.gmra.mxu0 %v566
      %v568 = vpop.f32.mrf.mxu0
      %v569 = vadd.f32 0.0, %v568
      %v570 = vand.u32 %v345, 4294901760
      %v571 = vsub.f32 %v345, %v570
      %v572 = vand.u32 %v571, 4294901760
      %v573 = vsub.f32 %v571, %v572
      %v574 = vand.u32 %v573, 4294901760
      %575 = vmatmul.f32.gmra.mxu0 %v574
      %v576 = vpop.f32.mrf.mxu0
      %v577 = vadd.f32 0.0, %v576
      %v578 = vand.u32 %v348, 4294901760
      %v579 = vsub.f32 %v348, %v578
      %v580 = vand.u32 %v579, 4294901760
      %v581 = vsub.f32 %v579, %v580
      %v582 = vand.u32 %v581, 4294901760
      %583 = vmatmul.f32.gmra.mxu0 %v582
      %v584 = vpop.f32.mrf.mxu0
      %v585 = vadd.f32 0.0, %v584
      %v586 = vand.u32 %v351, 4294901760
      %v587 = vsub.f32 %v351, %v586
      %v588 = vand.u32 %v587, 4294901760
      %v589 = vsub.f32 %v587, %v588
      %v590 = vand.u32 %v589, 4294901760
      %591 = vmatmul.f32.gmra.mxu0 %v590
      %v592 = vpop.f32.mrf.mxu0
      %v593 = vadd.f32 0.0, %v592
      %v594 = vand.u32 %v354, 4294901760
      %v595 = vsub.f32 %v354, %v594
      %v596 = vand.u32 %v595, 4294901760
      %v597 = vsub.f32 %v595, %v596
      %v598 = vand.u32 %v597, 4294901760
      %599 = vmatmul.f32.gmra.mxu0 %v598
      %v600 = vpop.f32.mrf.mxu0
      %v601 = vadd.f32 0.0, %v600
      %v602 = vand.u32 %v357, 4294901760
      %v603 = vsub.f32 %v357, %v602
      %v604 = vand.u32 %v603, 4294901760
      %v605 = vsub.f32 %v603, %v604
      %v606 = vand.u32 %v605, 4294901760
      %607 = vmatmul.f32.gmra.mxu0 %v606
      %v608 = vpop.f32.mrf.mxu0
      %v609 = vadd.f32 0.0, %v608
      %v610 = vand.u32 %v360, 4294901760
      %v611 = vsub.f32 %v360, %v610
      %v612 = vand.u32 %v611, 4294901760
      %v613 = vsub.f32 %v611, %v612
      %v614 = vand.u32 %v613, 4294901760
      %615 = vmatmul.f32.gmra.mxu0 %v614
      %v616 = vpop.f32.mrf.mxu0
      %v617 = vadd.f32 0.0, %v616
      %v618 = vand.u32 %v363, 4294901760
      %v619 = vsub.f32 %v363, %v618
      %v620 = vand.u32 %v619, 4294901760
      %v621 = vsub.f32 %v619, %v620
      %v622 = vand.u32 %v621, 4294901760
      %623 = vmatmul.f32.gmra.mxu0 %v622
      %v624 = vpop.f32.mrf.mxu0
      %v625 = vadd.f32 0.0, %v624
      %v626 = vand.u32 %v366, 4294901760
      %v627 = vsub.f32 %v366, %v626
      %v628 = vand.u32 %v627, 4294901760
      %v629 = vsub.f32 %v627, %v628
      %v630 = vand.u32 %v629, 4294901760
      %631 = vmatmul.f32.gmra.mxu0 %v630
      %v632 = vpop.f32.mrf.mxu0
      %v633 = vadd.f32 0.0, %v632
      %v634 = vand.u32 %v369, 4294901760
      %v635 = vsub.f32 %v369, %v634
      %v636 = vand.u32 %v635, 4294901760
      %v637 = vsub.f32 %v635, %v636
      %v638 = vand.u32 %v637, 4294901760
      %639 = vmatmul.f32.gmra.mxu0 %v638
      %v640 = vpop.f32.mrf.mxu0
      %v641 = vadd.f32 0.0, %v640
      %v642 = vand.u32 %v372, 4294901760
      %v643 = vsub.f32 %v372, %v642
      %v644 = vand.u32 %v643, 4294901760
      %v645 = vsub.f32 %v643, %v644
      %v646 = vand.u32 %v645, 4294901760
      %647 = vmatmul.f32.gmra.mxu0 %v646
      %v648 = vpop.f32.mrf.mxu0
      %v649 = vadd.f32 0.0, %v648
      %650 = vdwg.mxu0
      %651 = vmatpush.msra.mxu0 0.0
      %652 = vmatpush.msra.mxu0 0.0
      %653 = vmatpush.msra.mxu0 0.0
      %654 = vmatpush.msra.mxu0 0.0
      %655 = vmatpush.msra.mxu0 0.0
      %656 = vmatpush.msra.mxu0 0.0
      %657 = vmatpush.msra.mxu0 0.0
      %658 = vmatpush.msra.mxu0 0.0
      %659 = vmatpush.msra.mxu0 0.0
      %660 = vmatpush.msra.mxu0 0.0
      %661 = vmatpush.msra.mxu0 0.0
      %662 = vmatpush.msra.mxu0 0.0
      %v663 = vand.u32 %v274, 4294901760
      %v664 = vsub.f32 %v274, %v663
      %v665 = vand.u32 %v664, 4294901760
      %v666 = vsub.f32 %v664, %v665
      %v667 = vand.u32 %v666, 4294901760
      %668 = vmatpush.msra.mxu0 %v667
      %v669 = vand.u32 %v271, 4294901760
      %v670 = vsub.f32 %v271, %v669
      %v671 = vand.u32 %v670, 4294901760
      %v672 = vsub.f32 %v670, %v671
      %v673 = vand.u32 %v672, 4294901760
      %674 = vmatpush.msra.mxu0 %v673
      %v675 = vand.u32 %v268, 4294901760
      %v676 = vsub.f32 %v268, %v675
      %v677 = vand.u32 %v676, 4294901760
      %v678 = vsub.f32 %v676, %v677
      %v679 = vand.u32 %v678, 4294901760
      %680 = vmatpush.msra.mxu0 %v679
      %v681 = vand.u32 %v265, 4294901760
      %v682 = vsub.f32 %v265, %v681
      %v683 = vand.u32 %v682, 4294901760
      %v684 = vsub.f32 %v682, %v683
      %v685 = vand.u32 %v684, 4294901760
      %686 = vmatpush.msra.mxu0 %v685
      %v687 = vand.u32 %v279, 4294901760
      %688 = vmatmul.f32.gmra.mxu0 %v687
      %v689 = vpop.f32.mrf.mxu0
      %v690 = vadd.f32 %v401, %v689
      %v691 = vand.u32 %v282, 4294901760
      %692 = vmatmul.f32.gmra.mxu0 %v691
      %v693 = vpop.f32.mrf.mxu0
      %v694 = vadd.f32 %v409, %v693
      %v695 = vand.u32 %v285, 4294901760
      %696 = vmatmul.f32.gmra.mxu0 %v695
      %v697 = vpop.f32.mrf.mxu0
      %v698 = vadd.f32 %v417, %v697
      %v699 = vand.u32 %v288, 4294901760
      %700 = vmatmul.f32.gmra.mxu0 %v699
      %v701 = vpop.f32.mrf.mxu0
      %v702 = vadd.f32 %v425, %v701
      %v703 = vand.u32 %v291, 4294901760
      %704 = vmatmul.f32.gmra.mxu0 %v703
      %v705 = vpop.f32.mrf.mxu0
      %v706 = vadd.f32 %v433, %v705
      %v707 = vand.u32 %v294, 4294901760
      %708 = vmatmul.f32.gmra.mxu0 %v707
      %v709 = vpop.f32.mrf.mxu0
      %v710 = vadd.f32 %v441, %v709
      %v711 = vand.u32 %v297, 4294901760
      %712 = vmatmul.f32.gmra.mxu0 %v711
      %v713 = vpop.f32.mrf.mxu0
      %v714 = vadd.f32 %v449, %v713
      %v715 = vand.u32 %v300, 4294901760
      %716 = vmatmul.f32.gmra.mxu0 %v715
      %v717 = vpop.f32.mrf.mxu0
      %v718 = vadd.f32 %v457, %v717
      %v719 = vand.u32 %v303, 4294901760
      %720 = vmatmul.f32.gmra.mxu0 %v719
      %v721 = vpop.f32.mrf.mxu0
      %v722 = vadd.f32 %v465, %v721
      %v723 = vand.u32 %v306, 4294901760
      %724 = vmatmul.f32.gmra.mxu0 %v723
      %v725 = vpop.f32.mrf.mxu0
      %v726 = vadd.f32 %v473, %v725
      %v727 = vand.u32 %v309, 4294901760
      %728 = vmatmul.f32.gmra.mxu0 %v727
      %v729 = vpop.f32.mrf.mxu0
      %v730 = vadd.f32 %v481, %v729
      %v731 = vand.u32 %v312, 4294901760
      %732 = vmatmul.f32.gmra.mxu0 %v731
      %v733 = vpop.f32.mrf.mxu0
      %v734 = vadd.f32 %v489, %v733
      %v735 = vand.u32 %v315, 4294901760
      %736 = vmatmul.f32.gmra.mxu0 %v735
      %v737 = vpop.f32.mrf.mxu0
      %v738 = vadd.f32 %v497, %v737
      %v739 = vand.u32 %v318, 4294901760
      %740 = vmatmul.f32.gmra.mxu0 %v739
      %v741 = vpop.f32.mrf.mxu0
      %v742 = vadd.f32 %v505, %v741
      %v743 = vand.u32 %v321, 4294901760
      %744 = vmatmul.f32.gmra.mxu0 %v743
      %v745 = vpop.f32.mrf.mxu0
      %v746 = vadd.f32 %v513, %v745
      %v747 = vand.u32 %v324, 4294901760
      %748 = vmatmul.f32.gmra.mxu0 %v747
      %v749 = vpop.f32.mrf.mxu0
      %v750 = vadd.f32 %v521, %v749
      %v751 = vand.u32 %v327, 4294901760
      %752 = vmatmul.f32.gmra.mxu0 %v751
      %v753 = vpop.f32.mrf.mxu0
      %v754 = vadd.f32 %v529, %v753
      %v755 = vand.u32 %v330, 4294901760
      %756 = vmatmul.f32.gmra.mxu0 %v755
      %v757 = vpop.f32.mrf.mxu0
      %v758 = vadd.f32 %v537, %v757
      %v759 = vand.u32 %v333, 4294901760
      %760 = vmatmul.f32.gmra.mxu0 %v759
      %v761 = vpop.f32.mrf.mxu0
      %v762 = vadd.f32 %v545, %v761
      %v763 = vand.u32 %v336, 4294901760
      %764 = vmatmul.f32.gmra.mxu0 %v763
      %v765 = vpop.f32.mrf.mxu0
      %v766 = vadd.f32 %v553, %v765
      %v767 = vand.u32 %v339, 4294901760
      %768 = vmatmul.f32.gmra.mxu0 %v767
      %v769 = vpop.f32.mrf.mxu0
      %v770 = vadd.f32 %v561, %v769
      %v771 = vand.u32 %v342, 4294901760
      %772 = vmatmul.f32.gmra.mxu0 %v771
      %v773 = vpop.f32.mrf.mxu0
      %v774 = vadd.f32 %v569, %v773
      %v775 = vand.u32 %v345, 4294901760
      %776 = vmatmul.f32.gmra.mxu0 %v775
      %v777 = vpop.f32.mrf.mxu0
      %v778 = vadd.f32 %v577, %v777
      %v779 = vand.u32 %v348, 4294901760
      %780 = vmatmul.f32.gmra.mxu0 %v779
      %v781 = vpop.f32.mrf.mxu0
      %v782 = vadd.f32 %v585, %v781
      %v783 = vand.u32 %v351, 4294901760
      %784 = vmatmul.f32.gmra.mxu0 %v783
      %v785 = vpop.f32.mrf.mxu0
      %v786 = vadd.f32 %v593, %v785
      %v787 = vand.u32 %v354, 4294901760
      %788 = vmatmul.f32.gmra.mxu0 %v787
      %v789 = vpop.f32.mrf.mxu0
      %v790 = vadd.f32 %v601, %v789
      %v791 = vand.u32 %v357, 4294901760
      %792 = vmatmul.f32.gmra.mxu0 %v791
      %v793 = vpop.f32.mrf.mxu0
      %v794 = vadd.f32 %v609, %v793
      %v795 = vand.u32 %v360, 4294901760
      %796 = vmatmul.f32.gmra.mxu0 %v795
      %v797 = vpop.f32.mrf.mxu0
      %v798 = vadd.f32 %v617, %v797
      %v799 = vand.u32 %v363, 4294901760
      %800 = vmatmul.f32.gmra.mxu0 %v799
      %v801 = vpop.f32.mrf.mxu0
      %v802 = vadd.f32 %v625, %v801
      %v803 = vand.u32 %v366, 4294901760
      %804 = vmatmul.f32.gmra.mxu0 %v803
      %v805 = vpop.f32.mrf.mxu0
      %v806 = vadd.f32 %v633, %v805
      %v807 = vand.u32 %v369, 4294901760
      %808 = vmatmul.f32.gmra.mxu0 %v807
      %v809 = vpop.f32.mrf.mxu0
      %v810 = vadd.f32 %v641, %v809
      %v811 = vand.u32 %v372, 4294901760
      %812 = vmatmul.f32.gmra.mxu0 %v811
      %v813 = vpop.f32.mrf.mxu0
      %v814 = vadd.f32 %v649, %v813
      %815 = vdwg.mxu0
      %816 = vmatpush.msra.mxu0 0.0
      %817 = vmatpush.msra.mxu0 0.0
      %818 = vmatpush.msra.mxu0 0.0
      %819 = vmatpush.msra.mxu0 0.0
      %820 = vmatpush.msra.mxu0 0.0
      %821 = vmatpush.msra.mxu0 0.0
      %822 = vmatpush.msra.mxu0 0.0
      %823 = vmatpush.msra.mxu0 0.0
      %824 = vmatpush.msra.mxu0 0.0
      %825 = vmatpush.msra.mxu0 0.0
      %826 = vmatpush.msra.mxu0 0.0
      %827 = vmatpush.msra.mxu0 0.0
      %v828 = vand.u32 %v274, 4294901760
      %v829 = vsub.f32 %v274, %v828
      %830 = vmatpush.msra.mxu0 %v829
      %v831 = vand.u32 %v271, 4294901760
      %v832 = vsub.f32 %v271, %v831
      %833 = vmatpush.msra.mxu0 %v832
      %v834 = vand.u32 %v268, 4294901760
      %v835 = vsub.f32 %v268, %v834
      %836 = vmatpush.msra.mxu0 %v835
      %v837 = vand.u32 %v265, 4294901760
      %v838 = vsub.f32 %v265, %v837
      %839 = vmatpush.msra.mxu0 %v838
      %v840 = vand.u32 %v279, 4294901760
      %v841 = vsub.f32 %v279, %v840
      %842 = vmatmul.f32.gmra.mxu0 %v841
      %v843 = vpop.f32.mrf.mxu0
      %v844 = vadd.f32 %v690, %v843
      %v845 = vand.u32 %v282, 4294901760
      %v846 = vsub.f32 %v282, %v845
      %847 = vmatmul.f32.gmra.mxu0 %v846
      %v848 = vpop.f32.mrf.mxu0
      %v849 = vadd.f32 %v694, %v848
      %v850 = vand.u32 %v285, 4294901760
      %v851 = vsub.f32 %v285, %v850
      %852 = vmatmul.f32.gmra.mxu0 %v851
      %v853 = vpop.f32.mrf.mxu0
      %v854 = vadd.f32 %v698, %v853
      %v855 = vand.u32 %v288, 4294901760
      %v856 = vsub.f32 %v288, %v855
      %857 = vmatmul.f32.gmra.mxu0 %v856
      %v858 = vpop.f32.mrf.mxu0
      %v859 = vadd.f32 %v702, %v858
      %v860 = vand.u32 %v291, 4294901760
      %v861 = vsub.f32 %v291, %v860
      %862 = vmatmul.f32.gmra.mxu0 %v861
      %v863 = vpop.f32.mrf.mxu0
      %v864 = vadd.f32 %v706, %v863
      %v865 = vand.u32 %v294, 4294901760
      %v866 = vsub.f32 %v294, %v865
      %867 = vmatmul.f32.gmra.mxu0 %v866
      %v868 = vpop.f32.mrf.mxu0
      %v869 = vadd.f32 %v710, %v868
      %v870 = vand.u32 %v297, 4294901760
      %v871 = vsub.f32 %v297, %v870
      %872 = vmatmul.f32.gmra.mxu0 %v871
      %v873 = vpop.f32.mrf.mxu0
      %v874 = vadd.f32 %v714, %v873
      %v875 = vand.u32 %v300, 4294901760
      %v876 = vsub.f32 %v300, %v875
      %877 = vmatmul.f32.gmra.mxu0 %v876
      %v878 = vpop.f32.mrf.mxu0
      %v879 = vadd.f32 %v718, %v878
      %v880 = vand.u32 %v303, 4294901760
      %v881 = vsub.f32 %v303, %v880
      %882 = vmatmul.f32.gmra.mxu0 %v881
      %v883 = vpop.f32.mrf.mxu0
      %v884 = vadd.f32 %v722, %v883
      %v885 = vand.u32 %v306, 4294901760
      %v886 = vsub.f32 %v306, %v885
      %887 = vmatmul.f32.gmra.mxu0 %v886
      %v888 = vpop.f32.mrf.mxu0
      %v889 = vadd.f32 %v726, %v888
      %v890 = vand.u32 %v309, 4294901760
      %v891 = vsub.f32 %v309, %v890
      %892 = vmatmul.f32.gmra.mxu0 %v891
      %v893 = vpop.f32.mrf.mxu0
      %v894 = vadd.f32 %v730, %v893
      %v895 = vand.u32 %v312, 4294901760
      %v896 = vsub.f32 %v312, %v895
      %897 = vmatmul.f32.gmra.mxu0 %v896
      %v898 = vpop.f32.mrf.mxu0
      %v899 = vadd.f32 %v734, %v898
      %v900 = vand.u32 %v315, 4294901760
      %v901 = vsub.f32 %v315, %v900
      %902 = vmatmul.f32.gmra.mxu0 %v901
      %v903 = vpop.f32.mrf.mxu0
      %v904 = vadd.f32 %v738, %v903
      %v905 = vand.u32 %v318, 4294901760
      %v906 = vsub.f32 %v318, %v905
      %907 = vmatmul.f32.gmra.mxu0 %v906
      %v908 = vpop.f32.mrf.mxu0
      %v909 = vadd.f32 %v742, %v908
      %v910 = vand.u32 %v321, 4294901760
      %v911 = vsub.f32 %v321, %v910
      %912 = vmatmul.f32.gmra.mxu0 %v911
      %v913 = vpop.f32.mrf.mxu0
      %v914 = vadd.f32 %v746, %v913
      %v915 = vand.u32 %v324, 4294901760
      %v916 = vsub.f32 %v324, %v915
      %917 = vmatmul.f32.gmra.mxu0 %v916
      %v918 = vpop.f32.mrf.mxu0
      %v919 = vadd.f32 %v750, %v918
      %v920 = vand.u32 %v327, 4294901760
      %v921 = vsub.f32 %v327, %v920
      %922 = vmatmul.f32.gmra.mxu0 %v921
      %v923 = vpop.f32.mrf.mxu0
      %v924 = vadd.f32 %v754, %v923
      %v925 = vand.u32 %v330, 4294901760
      %v926 = vsub.f32 %v330, %v925
      %927 = vmatmul.f32.gmra.mxu0 %v926
      %v928 = vpop.f32.mrf.mxu0
      %v929 = vadd.f32 %v758, %v928
      %v930 = vand.u32 %v333, 4294901760
      %v931 = vsub.f32 %v333, %v930
      %932 = vmatmul.f32.gmra.mxu0 %v931
      %v933 = vpop.f32.mrf.mxu0
      %v934 = vadd.f32 %v762, %v933
      %v935 = vand.u32 %v336, 4294901760
      %v936 = vsub.f32 %v336, %v935
      %937 = vmatmul.f32.gmra.mxu0 %v936
      %v938 = vpop.f32.mrf.mxu0
      %v939 = vadd.f32 %v766, %v938
      %v940 = vand.u32 %v339, 4294901760
      %v941 = vsub.f32 %v339, %v940
      %942 = vmatmul.f32.gmra.mxu0 %v941
      %v943 = vpop.f32.mrf.mxu0
      %v944 = vadd.f32 %v770, %v943
      %v945 = vand.u32 %v342, 4294901760
      %v946 = vsub.f32 %v342, %v945
      %947 = vmatmul.f32.gmra.mxu0 %v946
      %v948 = vpop.f32.mrf.mxu0
      %v949 = vadd.f32 %v774, %v948
      %v950 = vand.u32 %v345, 4294901760
      %v951 = vsub.f32 %v345, %v950
      %952 = vmatmul.f32.gmra.mxu0 %v951
      %v953 = vpop.f32.mrf.mxu0
      %v954 = vadd.f32 %v778, %v953
      %v955 = vand.u32 %v348, 4294901760
      %v956 = vsub.f32 %v348, %v955
      %957 = vmatmul.f32.gmra.mxu0 %v956
      %v958 = vpop.f32.mrf.mxu0
      %v959 = vadd.f32 %v782, %v958
      %v960 = vand.u32 %v351, 4294901760
      %v961 = vsub.f32 %v351, %v960
      %962 = vmatmul.f32.gmra.mxu0 %v961
      %v963 = vpop.f32.mrf.mxu0
      %v964 = vadd.f32 %v786, %v963
      %v965 = vand.u32 %v354, 4294901760
      %v966 = vsub.f32 %v354, %v965
      %967 = vmatmul.f32.gmra.mxu0 %v966
      %v968 = vpop.f32.mrf.mxu0
      %v969 = vadd.f32 %v790, %v968
      %v970 = vand.u32 %v357, 4294901760
      %v971 = vsub.f32 %v357, %v970
      %972 = vmatmul.f32.gmra.mxu0 %v971
      %v973 = vpop.f32.mrf.mxu0
      %v974 = vadd.f32 %v794, %v973
      %v975 = vand.u32 %v360, 4294901760
      %v976 = vsub.f32 %v360, %v975
      %977 = vmatmul.f32.gmra.mxu0 %v976
      %v978 = vpop.f32.mrf.mxu0
      %v979 = vadd.f32 %v798, %v978
      %v980 = vand.u32 %v363, 4294901760
      %v981 = vsub.f32 %v363, %v980
      %982 = vmatmul.f32.gmra.mxu0 %v981
      %v983 = vpop.f32.mrf.mxu0
      %v984 = vadd.f32 %v802, %v983
      %v985 = vand.u32 %v366, 4294901760
      %v986 = vsub.f32 %v366, %v985
      %987 = vmatmul.f32.gmra.mxu0 %v986
      %v988 = vpop.f32.mrf.mxu0
      %v989 = vadd.f32 %v806, %v988
      %v990 = vand.u32 %v369, 4294901760
      %v991 = vsub.f32 %v369, %v990
      %992 = vmatmul.f32.gmra.mxu0 %v991
      %v993 = vpop.f32.mrf.mxu0
      %v994 = vadd.f32 %v810, %v993
      %v995 = vand.u32 %v372, 4294901760
      %v996 = vsub.f32 %v372, %v995
      %997 = vmatmul.f32.gmra.mxu0 %v996
      %v998 = vpop.f32.mrf.mxu0
      %v999 = vadd.f32 %v814, %v998
      %1000 = vdwg.mxu0
      %1001 = vmatpush.msra.mxu0 0.0
      %1002 = vmatpush.msra.mxu0 0.0
      %1003 = vmatpush.msra.mxu0 0.0
      %1004 = vmatpush.msra.mxu0 0.0
      %1005 = vmatpush.msra.mxu0 0.0
      %1006 = vmatpush.msra.mxu0 0.0
      %1007 = vmatpush.msra.mxu0 0.0
      %1008 = vmatpush.msra.mxu0 0.0
      %1009 = vmatpush.msra.mxu0 0.0
      %1010 = vmatpush.msra.mxu0 0.0
      %1011 = vmatpush.msra.mxu0 0.0
      %1012 = vmatpush.msra.mxu0 0.0
      %v1013 = vand.u32 %v274, 4294901760
      %1014 = vmatpush.msra.mxu0 %v1013
      %v1015 = vand.u32 %v271, 4294901760
      %1016 = vmatpush.msra.mxu0 %v1015
      %v1017 = vand.u32 %v268, 4294901760
      %1018 = vmatpush.msra.mxu0 %v1017
      %v1019 = vand.u32 %v265, 4294901760
      %1020 = vmatpush.msra.mxu0 %v1019
      %v1021 = vand.u32 %v279, 4294901760
      %v1022 = vsub.f32 %v279, %v1021
      %v1023 = vand.u32 %v1022, 4294901760
      %1024 = vmatmul.f32.gmra.mxu0 %v1023
      %v1025 = vpop.f32.mrf.mxu0
      %v1026 = vadd.f32 %v844, %v1025
      %v1027 = vand.u32 %v282, 4294901760
      %v1028 = vsub.f32 %v282, %v1027
      %v1029 = vand.u32 %v1028, 4294901760
      %1030 = vmatmul.f32.gmra.mxu0 %v1029
      %v1031 = vpop.f32.mrf.mxu0
      %v1032 = vadd.f32 %v849, %v1031
      %v1033 = vand.u32 %v285, 4294901760
      %v1034 = vsub.f32 %v285, %v1033
      %v1035 = vand.u32 %v1034, 4294901760
      %1036 = vmatmul.f32.gmra.mxu0 %v1035
      %v1037 = vpop.f32.mrf.mxu0
      %v1038 = vadd.f32 %v854, %v1037
      %v1039 = vand.u32 %v288, 4294901760
      %v1040 = vsub.f32 %v288, %v1039
      %v1041 = vand.u32 %v1040, 4294901760
      %1042 = vmatmul.f32.gmra.mxu0 %v1041
      %v1043 = vpop.f32.mrf.mxu0
      %v1044 = vadd.f32 %v859, %v1043
      %v1045 = vand.u32 %v291, 4294901760
      %v1046 = vsub.f32 %v291, %v1045
      %v1047 = vand.u32 %v1046, 4294901760
      %1048 = vmatmul.f32.gmra.mxu0 %v1047
      %v1049 = vpop.f32.mrf.mxu0
      %v1050 = vadd.f32 %v864, %v1049
      %v1051 = vand.u32 %v294, 4294901760
      %v1052 = vsub.f32 %v294, %v1051
      %v1053 = vand.u32 %v1052, 4294901760
      %1054 = vmatmul.f32.gmra.mxu0 %v1053
      %v1055 = vpop.f32.mrf.mxu0
      %v1056 = vadd.f32 %v869, %v1055
      %v1057 = vand.u32 %v297, 4294901760
      %v1058 = vsub.f32 %v297, %v1057
      %v1059 = vand.u32 %v1058, 4294901760
      %1060 = vmatmul.f32.gmra.mxu0 %v1059
      %v1061 = vpop.f32.mrf.mxu0
      %v1062 = vadd.f32 %v874, %v1061
      %v1063 = vand.u32 %v300, 4294901760
      %v1064 = vsub.f32 %v300, %v1063
      %v1065 = vand.u32 %v1064, 4294901760
      %1066 = vmatmul.f32.gmra.mxu0 %v1065
      %v1067 = vpop.f32.mrf.mxu0
      %v1068 = vadd.f32 %v879, %v1067
      %v1069 = vand.u32 %v303, 4294901760
      %v1070 = vsub.f32 %v303, %v1069
      %v1071 = vand.u32 %v1070, 4294901760
      %1072 = vmatmul.f32.gmra.mxu0 %v1071
      %v1073 = vpop.f32.mrf.mxu0
      %v1074 = vadd.f32 %v884, %v1073
      %v1075 = vand.u32 %v306, 4294901760
      %v1076 = vsub.f32 %v306, %v1075
      %v1077 = vand.u32 %v1076, 4294901760
      %1078 = vmatmul.f32.gmra.mxu0 %v1077
      %v1079 = vpop.f32.mrf.mxu0
      %v1080 = vadd.f32 %v889, %v1079
      %v1081 = vand.u32 %v309, 4294901760
      %v1082 = vsub.f32 %v309, %v1081
      %v1083 = vand.u32 %v1082, 4294901760
      %1084 = vmatmul.f32.gmra.mxu0 %v1083
      %v1085 = vpop.f32.mrf.mxu0
      %v1086 = vadd.f32 %v894, %v1085
      %v1087 = vand.u32 %v312, 4294901760
      %v1088 = vsub.f32 %v312, %v1087
      %v1089 = vand.u32 %v1088, 4294901760
      %1090 = vmatmul.f32.gmra.mxu0 %v1089
      %v1091 = vpop.f32.mrf.mxu0
      %v1092 = vadd.f32 %v899, %v1091
      %v1093 = vand.u32 %v315, 4294901760
      %v1094 = vsub.f32 %v315, %v1093
      %v1095 = vand.u32 %v1094, 4294901760
      %1096 = vmatmul.f32.gmra.mxu0 %v1095
      %v1097 = vpop.f32.mrf.mxu0
      %v1098 = vadd.f32 %v904, %v1097
      %v1099 = vand.u32 %v318, 4294901760
      %v1100 = vsub.f32 %v318, %v1099
      %v1101 = vand.u32 %v1100, 4294901760
      %1102 = vmatmul.f32.gmra.mxu0 %v1101
      %v1103 = vpop.f32.mrf.mxu0
      %v1104 = vadd.f32 %v909, %v1103
      %v1105 = vand.u32 %v321, 4294901760
      %v1106 = vsub.f32 %v321, %v1105
      %v1107 = vand.u32 %v1106, 4294901760
      %1108 = vmatmul.f32.gmra.mxu0 %v1107
      %v1109 = vpop.f32.mrf.mxu0
      %v1110 = vadd.f32 %v914, %v1109
      %v1111 = vand.u32 %v324, 4294901760
      %v1112 = vsub.f32 %v324, %v1111
      %v1113 = vand.u32 %v1112, 4294901760
      %1114 = vmatmul.f32.gmra.mxu0 %v1113
      %v1115 = vpop.f32.mrf.mxu0
      %v1116 = vadd.f32 %v919, %v1115
      %v1117 = vand.u32 %v327, 4294901760
      %v1118 = vsub.f32 %v327, %v1117
      %v1119 = vand.u32 %v1118, 4294901760
      %1120 = vmatmul.f32.gmra.mxu0 %v1119
      %v1121 = vpop.f32.mrf.mxu0
      %v1122 = vadd.f32 %v924, %v1121
      %v1123 = vand.u32 %v330, 4294901760
      %v1124 = vsub.f32 %v330, %v1123
      %v1125 = vand.u32 %v1124, 4294901760
      %1126 = vmatmul.f32.gmra.mxu0 %v1125
      %v1127 = vpop.f32.mrf.mxu0
      %v1128 = vadd.f32 %v929, %v1127
      %v1129 = vand.u32 %v333, 4294901760
      %v1130 = vsub.f32 %v333, %v1129
      %v1131 = vand.u32 %v1130, 4294901760
      %1132 = vmatmul.f32.gmra.mxu0 %v1131
      %v1133 = vpop.f32.mrf.mxu0
      %v1134 = vadd.f32 %v934, %v1133
      %v1135 = vand.u32 %v336, 4294901760
      %v1136 = vsub.f32 %v336, %v1135
      %v1137 = vand.u32 %v1136, 4294901760
      %1138 = vmatmul.f32.gmra.mxu0 %v1137
      %v1139 = vpop.f32.mrf.mxu0
      %v1140 = vadd.f32 %v939, %v1139
      %v1141 = vand.u32 %v339, 4294901760
      %v1142 = vsub.f32 %v339, %v1141
      %v1143 = vand.u32 %v1142, 4294901760
      %1144 = vmatmul.f32.gmra.mxu0 %v1143
      %v1145 = vpop.f32.mrf.mxu0
      %v1146 = vadd.f32 %v944, %v1145
      %v1147 = vand.u32 %v342, 4294901760
      %v1148 = vsub.f32 %v342, %v1147
      %v1149 = vand.u32 %v1148, 4294901760
      %1150 = vmatmul.f32.gmra.mxu0 %v1149
      %v1151 = vpop.f32.mrf.mxu0
      %v1152 = vadd.f32 %v949, %v1151
      %v1153 = vand.u32 %v345, 4294901760
      %v1154 = vsub.f32 %v345, %v1153
      %v1155 = vand.u32 %v1154, 4294901760
      %1156 = vmatmul.f32.gmra.mxu0 %v1155
      %v1157 = vpop.f32.mrf.mxu0
      %v1158 = vadd.f32 %v954, %v1157
      %v1159 = vand.u32 %v348, 4294901760
      %v1160 = vsub.f32 %v348, %v1159
      %v1161 = vand.u32 %v1160, 4294901760
      %1162 = vmatmul.f32.gmra.mxu0 %v1161
      %v1163 = vpop.f32.mrf.mxu0
      %v1164 = vadd.f32 %v959, %v1163
      %v1165 = vand.u32 %v351, 4294901760
      %v1166 = vsub.f32 %v351, %v1165
      %v1167 = vand.u32 %v1166, 4294901760
      %1168 = vmatmul.f32.gmra.mxu0 %v1167
      %v1169 = vpop.f32.mrf.mxu0
      %v1170 = vadd.f32 %v964, %v1169
      %v1171 = vand.u32 %v354, 4294901760
      %v1172 = vsub.f32 %v354, %v1171
      %v1173 = vand.u32 %v1172, 4294901760
      %1174 = vmatmul.f32.gmra.mxu0 %v1173
      %v1175 = vpop.f32.mrf.mxu0
      %v1176 = vadd.f32 %v969, %v1175
      %v1177 = vand.u32 %v357, 4294901760
      %v1178 = vsub.f32 %v357, %v1177
      %v1179 = vand.u32 %v1178, 4294901760
      %1180 = vmatmul.f32.gmra.mxu0 %v1179
      %v1181 = vpop.f32.mrf.mxu0
      %v1182 = vadd.f32 %v974, %v1181
      %v1183 = vand.u32 %v360, 4294901760
      %v1184 = vsub.f32 %v360, %v1183
      %v1185 = vand.u32 %v1184, 4294901760
      %1186 = vmatmul.f32.gmra.mxu0 %v1185
      %v1187 = vpop.f32.mrf.mxu0
      %v1188 = vadd.f32 %v979, %v1187
      %v1189 = vand.u32 %v363, 4294901760
      %v1190 = vsub.f32 %v363, %v1189
      %v1191 = vand.u32 %v1190, 4294901760
      %1192 = vmatmul.f32.gmra.mxu0 %v1191
      %v1193 = vpop.f32.mrf.mxu0
      %v1194 = vadd.f32 %v984, %v1193
      %v1195 = vand.u32 %v366, 4294901760
      %v1196 = vsub.f32 %v366, %v1195
      %v1197 = vand.u32 %v1196, 4294901760
      %1198 = vmatmul.f32.gmra.mxu0 %v1197
      %v1199 = vpop.f32.mrf.mxu0
      %v1200 = vadd.f32 %v989, %v1199
      %v1201 = vand.u32 %v369, 4294901760
      %v1202 = vsub.f32 %v369, %v1201
      %v1203 = vand.u32 %v1202, 4294901760
      %1204 = vmatmul.f32.gmra.mxu0 %v1203
      %v1205 = vpop.f32.mrf.mxu0
      %v1206 = vadd.f32 %v994, %v1205
      %v1207 = vand.u32 %v372, 4294901760
      %v1208 = vsub.f32 %v372, %v1207
      %v1209 = vand.u32 %v1208, 4294901760
      %1210 = vmatmul.f32.gmra.mxu0 %v1209
      %v1211 = vpop.f32.mrf.mxu0
      %v1212 = vadd.f32 %v999, %v1211
      %1213 = vdwg.mxu0
      %1214 = vmatpush.msra.mxu0 0.0
      %1215 = vmatpush.msra.mxu0 0.0
      %1216 = vmatpush.msra.mxu0 0.0
      %1217 = vmatpush.msra.mxu0 0.0
      %1218 = vmatpush.msra.mxu0 0.0
      %1219 = vmatpush.msra.mxu0 0.0
      %1220 = vmatpush.msra.mxu0 0.0
      %1221 = vmatpush.msra.mxu0 0.0
      %1222 = vmatpush.msra.mxu0 0.0
      %1223 = vmatpush.msra.mxu0 0.0
      %1224 = vmatpush.msra.mxu0 0.0
      %1225 = vmatpush.msra.mxu0 0.0
      %v1226 = vand.u32 %v274, 4294901760
      %v1227 = vsub.f32 %v274, %v1226
      %v1228 = vand.u32 %v1227, 4294901760
      %1229 = vmatpush.msra.mxu0 %v1228
      %v1230 = vand.u32 %v271, 4294901760
      %v1231 = vsub.f32 %v271, %v1230
      %v1232 = vand.u32 %v1231, 4294901760
      %1233 = vmatpush.msra.mxu0 %v1232
      %v1234 = vand.u32 %v268, 4294901760
      %v1235 = vsub.f32 %v268, %v1234
      %v1236 = vand.u32 %v1235, 4294901760
      %1237 = vmatpush.msra.mxu0 %v1236
      %v1238 = vand.u32 %v265, 4294901760
      %v1239 = vsub.f32 %v265, %v1238
      %v1240 = vand.u32 %v1239, 4294901760
      %1241 = vmatpush.msra.mxu0 %v1240
      %v1242 = vand.u32 %v279, 4294901760
      %1243 = vmatmul.f32.gmra.mxu0 %v1242
      %v1244 = vpop.f32.mrf.mxu0
      %v1245 = vadd.f32 %v1026, %v1244
      %v1246 = vand.u32 %v282, 4294901760
      %1247 = vmatmul.f32.gmra.mxu0 %v1246
      %v1248 = vpop.f32.mrf.mxu0
      %v1249 = vadd.f32 %v1032, %v1248
      %v1250 = vand.u32 %v285, 4294901760
      %1251 = vmatmul.f32.gmra.mxu0 %v1250
      %v1252 = vpop.f32.mrf.mxu0
      %v1253 = vadd.f32 %v1038, %v1252
      %v1254 = vand.u32 %v288, 4294901760
      %1255 = vmatmul.f32.gmra.mxu0 %v1254
      %v1256 = vpop.f32.mrf.mxu0
      %v1257 = vadd.f32 %v1044, %v1256
      %v1258 = vand.u32 %v291, 4294901760
      %1259 = vmatmul.f32.gmra.mxu0 %v1258
      %v1260 = vpop.f32.mrf.mxu0
      %v1261 = vadd.f32 %v1050, %v1260
      %v1262 = vand.u32 %v294, 4294901760
      %1263 = vmatmul.f32.gmra.mxu0 %v1262
      %v1264 = vpop.f32.mrf.mxu0
      %v1265 = vadd.f32 %v1056, %v1264
      %v1266 = vand.u32 %v297, 4294901760
      %1267 = vmatmul.f32.gmra.mxu0 %v1266
      %v1268 = vpop.f32.mrf.mxu0
      %v1269 = vadd.f32 %v1062, %v1268
      %v1270 = vand.u32 %v300, 4294901760
      %1271 = vmatmul.f32.gmra.mxu0 %v1270
      %v1272 = vpop.f32.mrf.mxu0
      %v1273 = vadd.f32 %v1068, %v1272
      %v1274 = vand.u32 %v303, 4294901760
      %1275 = vmatmul.f32.gmra.mxu0 %v1274
      %v1276 = vpop.f32.mrf.mxu0
      %v1277 = vadd.f32 %v1074, %v1276
      %v1278 = vand.u32 %v306, 4294901760
      %1279 = vmatmul.f32.gmra.mxu0 %v1278
      %v1280 = vpop.f32.mrf.mxu0
      %v1281 = vadd.f32 %v1080, %v1280
      %v1282 = vand.u32 %v309, 4294901760
      %1283 = vmatmul.f32.gmra.mxu0 %v1282
      %v1284 = vpop.f32.mrf.mxu0
      %v1285 = vadd.f32 %v1086, %v1284
      %v1286 = vand.u32 %v312, 4294901760
      %1287 = vmatmul.f32.gmra.mxu0 %v1286
      %v1288 = vpop.f32.mrf.mxu0
      %v1289 = vadd.f32 %v1092, %v1288
      %v1290 = vand.u32 %v315, 4294901760
      %1291 = vmatmul.f32.gmra.mxu0 %v1290
      %v1292 = vpop.f32.mrf.mxu0
      %v1293 = vadd.f32 %v1098, %v1292
      %v1294 = vand.u32 %v318, 4294901760
      %1295 = vmatmul.f32.gmra.mxu0 %v1294
      %v1296 = vpop.f32.mrf.mxu0
      %v1297 = vadd.f32 %v1104, %v1296
      %v1298 = vand.u32 %v321, 4294901760
      %1299 = vmatmul.f32.gmra.mxu0 %v1298
      %v1300 = vpop.f32.mrf.mxu0
      %v1301 = vadd.f32 %v1110, %v1300
      %v1302 = vand.u32 %v324, 4294901760
      %1303 = vmatmul.f32.gmra.mxu0 %v1302
      %v1304 = vpop.f32.mrf.mxu0
      %v1305 = vadd.f32 %v1116, %v1304
      %v1306 = vand.u32 %v327, 4294901760
      %1307 = vmatmul.f32.gmra.mxu0 %v1306
      %v1308 = vpop.f32.mrf.mxu0
      %v1309 = vadd.f32 %v1122, %v1308
      %v1310 = vand.u32 %v330, 4294901760
      %1311 = vmatmul.f32.gmra.mxu0 %v1310
      %v1312 = vpop.f32.mrf.mxu0
      %v1313 = vadd.f32 %v1128, %v1312
      %v1314 = vand.u32 %v333, 4294901760
      %1315 = vmatmul.f32.gmra.mxu0 %v1314
      %v1316 = vpop.f32.mrf.mxu0
      %v1317 = vadd.f32 %v1134, %v1316
      %v1318 = vand.u32 %v336, 4294901760
      %1319 = vmatmul.f32.gmra.mxu0 %v1318
      %v1320 = vpop.f32.mrf.mxu0
      %v1321 = vadd.f32 %v1140, %v1320
      %v1322 = vand.u32 %v339, 4294901760
      %1323 = vmatmul.f32.gmra.mxu0 %v1322
      %v1324 = vpop.f32.mrf.mxu0
      %v1325 = vadd.f32 %v1146, %v1324
      %v1326 = vand.u32 %v342, 4294901760
      %1327 = vmatmul.f32.gmra.mxu0 %v1326
      %v1328 = vpop.f32.mrf.mxu0
      %v1329 = vadd.f32 %v1152, %v1328
      %v1330 = vand.u32 %v345, 4294901760
      %1331 = vmatmul.f32.gmra.mxu0 %v1330
      %v1332 = vpop.f32.mrf.mxu0
      %v1333 = vadd.f32 %v1158, %v1332
      %v1334 = vand.u32 %v348, 4294901760
      %1335 = vmatmul.f32.gmra.mxu0 %v1334
      %v1336 = vpop.f32.mrf.mxu0
      %v1337 = vadd.f32 %v1164, %v1336
      %v1338 = vand.u32 %v351, 4294901760
      %1339 = vmatmul.f32.gmra.mxu0 %v1338
      %v1340 = vpop.f32.mrf.mxu0
      %v1341 = vadd.f32 %v1170, %v1340
      %v1342 = vand.u32 %v354, 4294901760
      %1343 = vmatmul.f32.gmra.mxu0 %v1342
      %v1344 = vpop.f32.mrf.mxu0
      %v1345 = vadd.f32 %v1176, %v1344
      %v1346 = vand.u32 %v357, 4294901760
      %1347 = vmatmul.f32.gmra.mxu0 %v1346
      %v1348 = vpop.f32.mrf.mxu0
      %v1349 = vadd.f32 %v1182, %v1348
      %v1350 = vand.u32 %v360, 4294901760
      %1351 = vmatmul.f32.gmra.mxu0 %v1350
      %v1352 = vpop.f32.mrf.mxu0
      %v1353 = vadd.f32 %v1188, %v1352
      %v1354 = vand.u32 %v363, 4294901760
      %1355 = vmatmul.f32.gmra.mxu0 %v1354
      %v1356 = vpop.f32.mrf.mxu0
      %v1357 = vadd.f32 %v1194, %v1356
      %v1358 = vand.u32 %v366, 4294901760
      %1359 = vmatmul.f32.gmra.mxu0 %v1358
      %v1360 = vpop.f32.mrf.mxu0
      %v1361 = vadd.f32 %v1200, %v1360
      %v1362 = vand.u32 %v369, 4294901760
      %1363 = vmatmul.f32.gmra.mxu0 %v1362
      %v1364 = vpop.f32.mrf.mxu0
      %v1365 = vadd.f32 %v1206, %v1364
      %v1366 = vand.u32 %v372, 4294901760
      %1367 = vmatmul.f32.gmra.mxu0 %v1366
      %v1368 = vpop.f32.mrf.mxu0
      %v1369 = vadd.f32 %v1212, %v1368
      %1370 = vdwg.mxu0
      %1371 = vmatpush.msra.mxu0 0.0
      %1372 = vmatpush.msra.mxu0 0.0
      %1373 = vmatpush.msra.mxu0 0.0
      %1374 = vmatpush.msra.mxu0 0.0
      %1375 = vmatpush.msra.mxu0 0.0
      %1376 = vmatpush.msra.mxu0 0.0
      %1377 = vmatpush.msra.mxu0 0.0
      %1378 = vmatpush.msra.mxu0 0.0
      %1379 = vmatpush.msra.mxu0 0.0
      %1380 = vmatpush.msra.mxu0 0.0
      %1381 = vmatpush.msra.mxu0 0.0
      %1382 = vmatpush.msra.mxu0 0.0
      %v1383 = vand.u32 %v274, 4294901760
      %1384 = vmatpush.msra.mxu0 %v1383
      %v1385 = vand.u32 %v271, 4294901760
      %1386 = vmatpush.msra.mxu0 %v1385
      %v1387 = vand.u32 %v268, 4294901760
      %1388 = vmatpush.msra.mxu0 %v1387
      %v1389 = vand.u32 %v265, 4294901760
      %1390 = vmatpush.msra.mxu0 %v1389
      %v1391 = vand.u32 %v279, 4294901760
      %1392 = vmatmul.f32.gmra.mxu0 %v1391
      %v1393 = vpop.f32.mrf.mxu0
      %v1394 = vadd.f32 %v1245, %v1393
      %v1395 = vand.u32 %v282, 4294901760
      %1396 = vmatmul.f32.gmra.mxu0 %v1395
      %v1397 = vpop.f32.mrf.mxu0
      %v1398 = vadd.f32 %v1249, %v1397
      %v1399 = vand.u32 %v285, 4294901760
      %1400 = vmatmul.f32.gmra.mxu0 %v1399
      %v1401 = vpop.f32.mrf.mxu0
      %v1402 = vadd.f32 %v1253, %v1401
      %v1403 = vand.u32 %v288, 4294901760
      %1404 = vmatmul.f32.gmra.mxu0 %v1403
      %v1405 = vpop.f32.mrf.mxu0
      %v1406 = vadd.f32 %v1257, %v1405
      %v1407 = vand.u32 %v291, 4294901760
      %1408 = vmatmul.f32.gmra.mxu0 %v1407
      %v1409 = vpop.f32.mrf.mxu0
      %v1410 = vadd.f32 %v1261, %v1409
      %v1411 = vand.u32 %v294, 4294901760
      %1412 = vmatmul.f32.gmra.mxu0 %v1411
      %v1413 = vpop.f32.mrf.mxu0
      %v1414 = vadd.f32 %v1265, %v1413
      %v1415 = vand.u32 %v297, 4294901760
      %1416 = vmatmul.f32.gmra.mxu0 %v1415
      %v1417 = vpop.f32.mrf.mxu0
      %v1418 = vadd.f32 %v1269, %v1417
      %v1419 = vand.u32 %v300, 4294901760
      %1420 = vmatmul.f32.gmra.mxu0 %v1419
      %v1421 = vpop.f32.mrf.mxu0
      %v1422 = vadd.f32 %v1273, %v1421
      %v1423 = vand.u32 %v303, 4294901760
      %1424 = vmatmul.f32.gmra.mxu0 %v1423
      %v1425 = vpop.f32.mrf.mxu0
      %v1426 = vadd.f32 %v1277, %v1425
      %v1427 = vand.u32 %v306, 4294901760
      %1428 = vmatmul.f32.gmra.mxu0 %v1427
      %v1429 = vpop.f32.mrf.mxu0
      %v1430 = vadd.f32 %v1281, %v1429
      %v1431 = vand.u32 %v309, 4294901760
      %1432 = vmatmul.f32.gmra.mxu0 %v1431
      %v1433 = vpop.f32.mrf.mxu0
      %v1434 = vadd.f32 %v1285, %v1433
      %v1435 = vand.u32 %v312, 4294901760
      %1436 = vmatmul.f32.gmra.mxu0 %v1435
      %v1437 = vpop.f32.mrf.mxu0
      %v1438 = vadd.f32 %v1289, %v1437
      %v1439 = vand.u32 %v315, 4294901760
      %1440 = vmatmul.f32.gmra.mxu0 %v1439
      %v1441 = vpop.f32.mrf.mxu0
      %v1442 = vadd.f32 %v1293, %v1441
      %v1443 = vand.u32 %v318, 4294901760
      %1444 = vmatmul.f32.gmra.mxu0 %v1443
      %v1445 = vpop.f32.mrf.mxu0
      %v1446 = vadd.f32 %v1297, %v1445
      %v1447 = vand.u32 %v321, 4294901760
      %1448 = vmatmul.f32.gmra.mxu0 %v1447
      %v1449 = vpop.f32.mrf.mxu0
      %v1450 = vadd.f32 %v1301, %v1449
      %v1451 = vand.u32 %v324, 4294901760
      %1452 = vmatmul.f32.gmra.mxu0 %v1451
      %v1453 = vpop.f32.mrf.mxu0
      %v1454 = vadd.f32 %v1305, %v1453
      %v1455 = vand.u32 %v327, 4294901760
      %1456 = vmatmul.f32.gmra.mxu0 %v1455
      %v1457 = vpop.f32.mrf.mxu0
      %v1458 = vadd.f32 %v1309, %v1457
      %v1459 = vand.u32 %v330, 4294901760
      %1460 = vmatmul.f32.gmra.mxu0 %v1459
      %v1461 = vpop.f32.mrf.mxu0
      %v1462 = vadd.f32 %v1313, %v1461
      %v1463 = vand.u32 %v333, 4294901760
      %1464 = vmatmul.f32.gmra.mxu0 %v1463
      %v1465 = vpop.f32.mrf.mxu0
      %v1466 = vadd.f32 %v1317, %v1465
      %v1467 = vand.u32 %v336, 4294901760
      %1468 = vmatmul.f32.gmra.mxu0 %v1467
      %v1469 = vpop.f32.mrf.mxu0
      %v1470 = vadd.f32 %v1321, %v1469
      %v1471 = vand.u32 %v339, 4294901760
      %1472 = vmatmul.f32.gmra.mxu0 %v1471
      %v1473 = vpop.f32.mrf.mxu0
      %v1474 = vadd.f32 %v1325, %v1473
      %v1475 = vand.u32 %v342, 4294901760
      %1476 = vmatmul.f32.gmra.mxu0 %v1475
      %v1477 = vpop.f32.mrf.mxu0
      %v1478 = vadd.f32 %v1329, %v1477
      %v1479 = vand.u32 %v345, 4294901760
      %1480 = vmatmul.f32.gmra.mxu0 %v1479
      %v1481 = vpop.f32.mrf.mxu0
      %v1482 = vadd.f32 %v1333, %v1481
      %v1483 = vand.u32 %v348, 4294901760
      %1484 = vmatmul.f32.gmra.mxu0 %v1483
      %v1485 = vpop.f32.mrf.mxu0
      %v1486 = vadd.f32 %v1337, %v1485
      %v1487 = vand.u32 %v351, 4294901760
      %1488 = vmatmul.f32.gmra.mxu0 %v1487
      %v1489 = vpop.f32.mrf.mxu0
      %v1490 = vadd.f32 %v1341, %v1489
      %v1491 = vand.u32 %v354, 4294901760
      %1492 = vmatmul.f32.gmra.mxu0 %v1491
      %v1493 = vpop.f32.mrf.mxu0
      %v1494 = vadd.f32 %v1345, %v1493
      %v1495 = vand.u32 %v357, 4294901760
      %1496 = vmatmul.f32.gmra.mxu0 %v1495
      %v1497 = vpop.f32.mrf.mxu0
      %v1498 = vadd.f32 %v1349, %v1497
      %v1499 = vand.u32 %v360, 4294901760
      %1500 = vmatmul.f32.gmra.mxu0 %v1499
      %v1501 = vpop.f32.mrf.mxu0
      %v1502 = vadd.f32 %v1353, %v1501
      %v1503 = vand.u32 %v363, 4294901760
      %1504 = vmatmul.f32.gmra.mxu0 %v1503
      %v1505 = vpop.f32.mrf.mxu0
      %v1506 = vadd.f32 %v1357, %v1505
      %v1507 = vand.u32 %v366, 4294901760
      %1508 = vmatmul.f32.gmra.mxu0 %v1507
      %v1509 = vpop.f32.mrf.mxu0
      %v1510 = vadd.f32 %v1361, %v1509
      %v1511 = vand.u32 %v369, 4294901760
      %1512 = vmatmul.f32.gmra.mxu0 %v1511
      %v1513 = vpop.f32.mrf.mxu0
      %v1514 = vadd.f32 %v1365, %v1513
      %v1515 = vand.u32 %v372, 4294901760
      %1516 = vmatmul.f32.gmra.mxu0 %v1515
      %v1517 = vpop.f32.mrf.mxu0
      %v1518 = vadd.f32 %v1369, %v1517
      %1519 = vdwg.mxu0
      %1520 = vmatpush.msra.mxu0 0.0
      %1521 = vmatpush.msra.mxu0 0.0
      %1522 = vmatpush.msra.mxu0 0.0
      %1523 = vmatpush.msra.mxu0 0.0
      %1524 = vmatpush.msra.mxu0 0.0
      %1525 = vmatpush.msra.mxu0 0.0
      %1526 = vmatpush.msra.mxu0 0.0
      %1527 = vmatpush.msra.mxu0 0.0
      %1528 = vmatpush.msra.mxu0 0.0
      %1529 = vmatpush.msra.mxu0 0.0
      %1530 = vmatpush.msra.mxu0 0.0
      %1531 = vmatpush.msra.mxu0 0.0
      %v1532 = vand.u32 %v275, 4294901760
      %1533 = vmatpush.msra.mxu0 %v1532
      %v1534 = vand.u32 %v272, 4294901760
      %1535 = vmatpush.msra.mxu0 %v1534
      %v1536 = vand.u32 %v269, 4294901760
      %1537 = vmatpush.msra.mxu0 %v1536
      %v1538 = vand.u32 %v266, 4294901760
      %1539 = vmatpush.msra.mxu0 %v1538
      %v1540 = vand.u32 %v279, 4294901760
      %v1541 = vsub.f32 %v279, %v1540
      %v1542 = vand.u32 %v1541, 4294901760
      %v1543 = vsub.f32 %v1541, %v1542
      %v1544 = vand.u32 %v1543, 4294901760
      %1545 = vmatmul.f32.gmra.mxu0 %v1544
      %v1546 = vpop.f32.mrf.mxu0
      %v1547 = vadd.f32 0.0, %v1546
      %v1548 = vand.u32 %v282, 4294901760
      %v1549 = vsub.f32 %v282, %v1548
      %v1550 = vand.u32 %v1549, 4294901760
      %v1551 = vsub.f32 %v1549, %v1550
      %v1552 = vand.u32 %v1551, 4294901760
      %1553 = vmatmul.f32.gmra.mxu0 %v1552
      %v1554 = vpop.f32.mrf.mxu0
      %v1555 = vadd.f32 0.0, %v1554
      %v1556 = vand.u32 %v285, 4294901760
      %v1557 = vsub.f32 %v285, %v1556
      %v1558 = vand.u32 %v1557, 4294901760
      %v1559 = vsub.f32 %v1557, %v1558
      %v1560 = vand.u32 %v1559, 4294901760
      %1561 = vmatmul.f32.gmra.mxu0 %v1560
      %v1562 = vpop.f32.mrf.mxu0
      %v1563 = vadd.f32 0.0, %v1562
      %v1564 = vand.u32 %v288, 4294901760
      %v1565 = vsub.f32 %v288, %v1564
      %v1566 = vand.u32 %v1565, 4294901760
      %v1567 = vsub.f32 %v1565, %v1566
      %v1568 = vand.u32 %v1567, 4294901760
      %1569 = vmatmul.f32.gmra.mxu0 %v1568
      %v1570 = vpop.f32.mrf.mxu0
      %v1571 = vadd.f32 0.0, %v1570
      %v1572 = vand.u32 %v291, 4294901760
      %v1573 = vsub.f32 %v291, %v1572
      %v1574 = vand.u32 %v1573, 4294901760
      %v1575 = vsub.f32 %v1573, %v1574
      %v1576 = vand.u32 %v1575, 4294901760
      %1577 = vmatmul.f32.gmra.mxu0 %v1576
      %v1578 = vpop.f32.mrf.mxu0
      %v1579 = vadd.f32 0.0, %v1578
      %v1580 = vand.u32 %v294, 4294901760
      %v1581 = vsub.f32 %v294, %v1580
      %v1582 = vand.u32 %v1581, 4294901760
      %v1583 = vsub.f32 %v1581, %v1582
      %v1584 = vand.u32 %v1583, 4294901760
      %1585 = vmatmul.f32.gmra.mxu0 %v1584
      %v1586 = vpop.f32.mrf.mxu0
      %v1587 = vadd.f32 0.0, %v1586
      %v1588 = vand.u32 %v297, 4294901760
      %v1589 = vsub.f32 %v297, %v1588
      %v1590 = vand.u32 %v1589, 4294901760
      %v1591 = vsub.f32 %v1589, %v1590
      %v1592 = vand.u32 %v1591, 4294901760
      %1593 = vmatmul.f32.gmra.mxu0 %v1592
      %v1594 = vpop.f32.mrf.mxu0
      %v1595 = vadd.f32 0.0, %v1594
      %v1596 = vand.u32 %v300, 4294901760
      %v1597 = vsub.f32 %v300, %v1596
      %v1598 = vand.u32 %v1597, 4294901760
      %v1599 = vsub.f32 %v1597, %v1598
      %v1600 = vand.u32 %v1599, 4294901760
      %1601 = vmatmul.f32.gmra.mxu0 %v1600
      %v1602 = vpop.f32.mrf.mxu0
      %v1603 = vadd.f32 0.0, %v1602
      %v1604 = vand.u32 %v303, 4294901760
      %v1605 = vsub.f32 %v303, %v1604
      %v1606 = vand.u32 %v1605, 4294901760
      %v1607 = vsub.f32 %v1605, %v1606
      %v1608 = vand.u32 %v1607, 4294901760
      %1609 = vmatmul.f32.gmra.mxu0 %v1608
      %v1610 = vpop.f32.mrf.mxu0
      %v1611 = vadd.f32 0.0, %v1610
      %v1612 = vand.u32 %v306, 4294901760
      %v1613 = vsub.f32 %v306, %v1612
      %v1614 = vand.u32 %v1613, 4294901760
      %v1615 = vsub.f32 %v1613, %v1614
      %v1616 = vand.u32 %v1615, 4294901760
      %1617 = vmatmul.f32.gmra.mxu0 %v1616
      %v1618 = vpop.f32.mrf.mxu0
      %v1619 = vadd.f32 0.0, %v1618
      %v1620 = vand.u32 %v309, 4294901760
      %v1621 = vsub.f32 %v309, %v1620
      %v1622 = vand.u32 %v1621, 4294901760
      %v1623 = vsub.f32 %v1621, %v1622
      %v1624 = vand.u32 %v1623, 4294901760
      %1625 = vmatmul.f32.gmra.mxu0 %v1624
      %v1626 = vpop.f32.mrf.mxu0
      %v1627 = vadd.f32 0.0, %v1626
      %v1628 = vand.u32 %v312, 4294901760
      %v1629 = vsub.f32 %v312, %v1628
      %v1630 = vand.u32 %v1629, 4294901760
      %v1631 = vsub.f32 %v1629, %v1630
      %v1632 = vand.u32 %v1631, 4294901760
      %1633 = vmatmul.f32.gmra.mxu0 %v1632
      %v1634 = vpop.f32.mrf.mxu0
      %v1635 = vadd.f32 0.0, %v1634
      %v1636 = vand.u32 %v315, 4294901760
      %v1637 = vsub.f32 %v315, %v1636
      %v1638 = vand.u32 %v1637, 4294901760
      %v1639 = vsub.f32 %v1637, %v1638
      %v1640 = vand.u32 %v1639, 4294901760
      %1641 = vmatmul.f32.gmra.mxu0 %v1640
      %v1642 = vpop.f32.mrf.mxu0
      %v1643 = vadd.f32 0.0, %v1642
      %v1644 = vand.u32 %v318, 4294901760
      %v1645 = vsub.f32 %v318, %v1644
      %v1646 = vand.u32 %v1645, 4294901760
      %v1647 = vsub.f32 %v1645, %v1646
      %v1648 = vand.u32 %v1647, 4294901760
      %1649 = vmatmul.f32.gmra.mxu0 %v1648
      %v1650 = vpop.f32.mrf.mxu0
      %v1651 = vadd.f32 0.0, %v1650
      %v1652 = vand.u32 %v321, 4294901760
      %v1653 = vsub.f32 %v321, %v1652
      %v1654 = vand.u32 %v1653, 4294901760
      %v1655 = vsub.f32 %v1653, %v1654
      %v1656 = vand.u32 %v1655, 4294901760
      %1657 = vmatmul.f32.gmra.mxu0 %v1656
      %v1658 = vpop.f32.mrf.mxu0
      %v1659 = vadd.f32 0.0, %v1658
      %v1660 = vand.u32 %v324, 4294901760
      %v1661 = vsub.f32 %v324, %v1660
      %v1662 = vand.u32 %v1661, 4294901760
      %v1663 = vsub.f32 %v1661, %v1662
      %v1664 = vand.u32 %v1663, 4294901760
      %1665 = vmatmul.f32.gmra.mxu0 %v1664
      %v1666 = vpop.f32.mrf.mxu0
      %v1667 = vadd.f32 0.0, %v1666
      %v1668 = vand.u32 %v327, 4294901760
      %v1669 = vsub.f32 %v327, %v1668
      %v1670 = vand.u32 %v1669, 4294901760
      %v1671 = vsub.f32 %v1669, %v1670
      %v1672 = vand.u32 %v1671, 4294901760
      %1673 = vmatmul.f32.gmra.mxu0 %v1672
      %v1674 = vpop.f32.mrf.mxu0
      %v1675 = vadd.f32 0.0, %v1674
      %v1676 = vand.u32 %v330, 4294901760
      %v1677 = vsub.f32 %v330, %v1676
      %v1678 = vand.u32 %v1677, 4294901760
      %v1679 = vsub.f32 %v1677, %v1678
      %v1680 = vand.u32 %v1679, 4294901760
      %1681 = vmatmul.f32.gmra.mxu0 %v1680
      %v1682 = vpop.f32.mrf.mxu0
      %v1683 = vadd.f32 0.0, %v1682
      %v1684 = vand.u32 %v333, 4294901760
      %v1685 = vsub.f32 %v333, %v1684
      %v1686 = vand.u32 %v1685, 4294901760
      %v1687 = vsub.f32 %v1685, %v1686
      %v1688 = vand.u32 %v1687, 4294901760
      %1689 = vmatmul.f32.gmra.mxu0 %v1688
      %v1690 = vpop.f32.mrf.mxu0
      %v1691 = vadd.f32 0.0, %v1690
      %v1692 = vand.u32 %v336, 4294901760
      %v1693 = vsub.f32 %v336, %v1692
      %v1694 = vand.u32 %v1693, 4294901760
      %v1695 = vsub.f32 %v1693, %v1694
      %v1696 = vand.u32 %v1695, 4294901760
      %1697 = vmatmul.f32.gmra.mxu0 %v1696
      %v1698 = vpop.f32.mrf.mxu0
      %v1699 = vadd.f32 0.0, %v1698
      %v1700 = vand.u32 %v339, 4294901760
      %v1701 = vsub.f32 %v339, %v1700
      %v1702 = vand.u32 %v1701, 4294901760
      %v1703 = vsub.f32 %v1701, %v1702
      %v1704 = vand.u32 %v1703, 4294901760
      %1705 = vmatmul.f32.gmra.mxu0 %v1704
      %v1706 = vpop.f32.mrf.mxu0
      %v1707 = vadd.f32 0.0, %v1706
      %v1708 = vand.u32 %v342, 4294901760
      %v1709 = vsub.f32 %v342, %v1708
      %v1710 = vand.u32 %v1709, 4294901760
      %v1711 = vsub.f32 %v1709, %v1710
      %v1712 = vand.u32 %v1711, 4294901760
      %1713 = vmatmul.f32.gmra.mxu0 %v1712
      %v1714 = vpop.f32.mrf.mxu0
      %v1715 = vadd.f32 0.0, %v1714
      %v1716 = vand.u32 %v345, 4294901760
      %v1717 = vsub.f32 %v345, %v1716
      %v1718 = vand.u32 %v1717, 4294901760
      %v1719 = vsub.f32 %v1717, %v1718
      %v1720 = vand.u32 %v1719, 4294901760
      %1721 = vmatmul.f32.gmra.mxu0 %v1720
      %v1722 = vpop.f32.mrf.mxu0
      %v1723 = vadd.f32 0.0, %v1722
      %v1724 = vand.u32 %v348, 4294901760
      %v1725 = vsub.f32 %v348, %v1724
      %v1726 = vand.u32 %v1725, 4294901760
      %v1727 = vsub.f32 %v1725, %v1726
      %v1728 = vand.u32 %v1727, 4294901760
      %1729 = vmatmul.f32.gmra.mxu0 %v1728
      %v1730 = vpop.f32.mrf.mxu0
      %v1731 = vadd.f32 0.0, %v1730
      %v1732 = vand.u32 %v351, 4294901760
      %v1733 = vsub.f32 %v351, %v1732
      %v1734 = vand.u32 %v1733, 4294901760
      %v1735 = vsub.f32 %v1733, %v1734
      %v1736 = vand.u32 %v1735, 4294901760
      %1737 = vmatmul.f32.gmra.mxu0 %v1736
      %v1738 = vpop.f32.mrf.mxu0
      %v1739 = vadd.f32 0.0, %v1738
      %v1740 = vand.u32 %v354, 4294901760
      %v1741 = vsub.f32 %v354, %v1740
      %v1742 = vand.u32 %v1741, 4294901760
      %v1743 = vsub.f32 %v1741, %v1742
      %v1744 = vand.u32 %v1743, 4294901760
      %1745 = vmatmul.f32.gmra.mxu0 %v1744
      %v1746 = vpop.f32.mrf.mxu0
      %v1747 = vadd.f32 0.0, %v1746
      %v1748 = vand.u32 %v357, 4294901760
      %v1749 = vsub.f32 %v357, %v1748
      %v1750 = vand.u32 %v1749, 4294901760
      %v1751 = vsub.f32 %v1749, %v1750
      %v1752 = vand.u32 %v1751, 4294901760
      %1753 = vmatmul.f32.gmra.mxu0 %v1752
      %v1754 = vpop.f32.mrf.mxu0
      %v1755 = vadd.f32 0.0, %v1754
      %v1756 = vand.u32 %v360, 4294901760
      %v1757 = vsub.f32 %v360, %v1756
      %v1758 = vand.u32 %v1757, 4294901760
      %v1759 = vsub.f32 %v1757, %v1758
      %v1760 = vand.u32 %v1759, 4294901760
      %1761 = vmatmul.f32.gmra.mxu0 %v1760
      %v1762 = vpop.f32.mrf.mxu0
      %v1763 = vadd.f32 0.0, %v1762
      %v1764 = vand.u32 %v363, 4294901760
      %v1765 = vsub.f32 %v363, %v1764
      %v1766 = vand.u32 %v1765, 4294901760
      %v1767 = vsub.f32 %v1765, %v1766
      %v1768 = vand.u32 %v1767, 4294901760
      %1769 = vmatmul.f32.gmra.mxu0 %v1768
      %v1770 = vpop.f32.mrf.mxu0
      %v1771 = vadd.f32 0.0, %v1770
      %v1772 = vand.u32 %v366, 4294901760
      %v1773 = vsub.f32 %v366, %v1772
      %v1774 = vand.u32 %v1773, 4294901760
      %v1775 = vsub.f32 %v1773, %v1774
      %v1776 = vand.u32 %v1775, 4294901760
      %1777 = vmatmul.f32.gmra.mxu0 %v1776
      %v1778 = vpop.f32.mrf.mxu0
      %v1779 = vadd.f32 0.0, %v1778
      %v1780 = vand.u32 %v369, 4294901760
      %v1781 = vsub.f32 %v369, %v1780
      %v1782 = vand.u32 %v1781, 4294901760
      %v1783 = vsub.f32 %v1781, %v1782
      %v1784 = vand.u32 %v1783, 4294901760
      %1785 = vmatmul.f32.gmra.mxu0 %v1784
      %v1786 = vpop.f32.mrf.mxu0
      %v1787 = vadd.f32 0.0, %v1786
      %v1788 = vand.u32 %v372, 4294901760
      %v1789 = vsub.f32 %v372, %v1788
      %v1790 = vand.u32 %v1789, 4294901760
      %v1791 = vsub.f32 %v1789, %v1790
      %v1792 = vand.u32 %v1791, 4294901760
      %1793 = vmatmul.f32.gmra.mxu0 %v1792
      %v1794 = vpop.f32.mrf.mxu0
      %v1795 = vadd.f32 0.0, %v1794
      %1796 = vdwg.mxu0
      %1797 = vmatpush.msra.mxu0 0.0
      %1798 = vmatpush.msra.mxu0 0.0
      %1799 = vmatpush.msra.mxu0 0.0
      %1800 = vmatpush.msra.mxu0 0.0
      %1801 = vmatpush.msra.mxu0 0.0
      %1802 = vmatpush.msra.mxu0 0.0
      %1803 = vmatpush.msra.mxu0 0.0
      %1804 = vmatpush.msra.mxu0 0.0
      %1805 = vmatpush.msra.mxu0 0.0
      %1806 = vmatpush.msra.mxu0 0.0
      %1807 = vmatpush.msra.mxu0 0.0
      %1808 = vmatpush.msra.mxu0 0.0
      %v1809 = vand.u32 %v275, 4294901760
      %v1810 = vsub.f32 %v275, %v1809
      %v1811 = vand.u32 %v1810, 4294901760
      %v1812 = vsub.f32 %v1810, %v1811
      %v1813 = vand.u32 %v1812, 4294901760
      %1814 = vmatpush.msra.mxu0 %v1813
      %v1815 = vand.u32 %v272, 4294901760
      %v1816 = vsub.f32 %v272, %v1815
      %v1817 = vand.u32 %v1816, 4294901760
      %v1818 = vsub.f32 %v1816, %v1817
      %v1819 = vand.u32 %v1818, 4294901760
      %1820 = vmatpush.msra.mxu0 %v1819
      %v1821 = vand.u32 %v269, 4294901760
      %v1822 = vsub.f32 %v269, %v1821
      %v1823 = vand.u32 %v1822, 4294901760
      %v1824 = vsub.f32 %v1822, %v1823
      %v1825 = vand.u32 %v1824, 4294901760
      %1826 = vmatpush.msra.mxu0 %v1825
      %v1827 = vand.u32 %v266, 4294901760
      %v1828 = vsub.f32 %v266, %v1827
      %v1829 = vand.u32 %v1828, 4294901760
      %v1830 = vsub.f32 %v1828, %v1829
      %v1831 = vand.u32 %v1830, 4294901760
      %1832 = vmatpush.msra.mxu0 %v1831
      %v1833 = vand.u32 %v279, 4294901760
      %1834 = vmatmul.f32.gmra.mxu0 %v1833
      %v1835 = vpop.f32.mrf.mxu0
      %v1836 = vadd.f32 %v1547, %v1835
      %v1837 = vand.u32 %v282, 4294901760
      %1838 = vmatmul.f32.gmra.mxu0 %v1837
      %v1839 = vpop.f32.mrf.mxu0
      %v1840 = vadd.f32 %v1555, %v1839
      %v1841 = vand.u32 %v285, 4294901760
      %1842 = vmatmul.f32.gmra.mxu0 %v1841
      %v1843 = vpop.f32.mrf.mxu0
      %v1844 = vadd.f32 %v1563, %v1843
      %v1845 = vand.u32 %v288, 4294901760
      %1846 = vmatmul.f32.gmra.mxu0 %v1845
      %v1847 = vpop.f32.mrf.mxu0
      %v1848 = vadd.f32 %v1571, %v1847
      %v1849 = vand.u32 %v291, 4294901760
      %1850 = vmatmul.f32.gmra.mxu0 %v1849
      %v1851 = vpop.f32.mrf.mxu0
      %v1852 = vadd.f32 %v1579, %v1851
      %v1853 = vand.u32 %v294, 4294901760
      %1854 = vmatmul.f32.gmra.mxu0 %v1853
      %v1855 = vpop.f32.mrf.mxu0
      %v1856 = vadd.f32 %v1587, %v1855
      %v1857 = vand.u32 %v297, 4294901760
      %1858 = vmatmul.f32.gmra.mxu0 %v1857
      %v1859 = vpop.f32.mrf.mxu0
      %v1860 = vadd.f32 %v1595, %v1859
      %v1861 = vand.u32 %v300, 4294901760
      %1862 = vmatmul.f32.gmra.mxu0 %v1861
      %v1863 = vpop.f32.mrf.mxu0
      %v1864 = vadd.f32 %v1603, %v1863
      %v1865 = vand.u32 %v303, 4294901760
      %1866 = vmatmul.f32.gmra.mxu0 %v1865
      %v1867 = vpop.f32.mrf.mxu0
      %v1868 = vadd.f32 %v1611, %v1867
      %v1869 = vand.u32 %v306, 4294901760
      %1870 = vmatmul.f32.gmra.mxu0 %v1869
      %v1871 = vpop.f32.mrf.mxu0
      %v1872 = vadd.f32 %v1619, %v1871
      %v1873 = vand.u32 %v309, 4294901760
      %1874 = vmatmul.f32.gmra.mxu0 %v1873
      %v1875 = vpop.f32.mrf.mxu0
      %v1876 = vadd.f32 %v1627, %v1875
      %v1877 = vand.u32 %v312, 4294901760
      %1878 = vmatmul.f32.gmra.mxu0 %v1877
      %v1879 = vpop.f32.mrf.mxu0
      %v1880 = vadd.f32 %v1635, %v1879
      %v1881 = vand.u32 %v315, 4294901760
      %1882 = vmatmul.f32.gmra.mxu0 %v1881
      %v1883 = vpop.f32.mrf.mxu0
      %v1884 = vadd.f32 %v1643, %v1883
      %v1885 = vand.u32 %v318, 4294901760
      %1886 = vmatmul.f32.gmra.mxu0 %v1885
      %v1887 = vpop.f32.mrf.mxu0
      %v1888 = vadd.f32 %v1651, %v1887
      %v1889 = vand.u32 %v321, 4294901760
      %1890 = vmatmul.f32.gmra.mxu0 %v1889
      %v1891 = vpop.f32.mrf.mxu0
      %v1892 = vadd.f32 %v1659, %v1891
      %v1893 = vand.u32 %v324, 4294901760
      %1894 = vmatmul.f32.gmra.mxu0 %v1893
      %v1895 = vpop.f32.mrf.mxu0
      %v1896 = vadd.f32 %v1667, %v1895
      %v1897 = vand.u32 %v327, 4294901760
      %1898 = vmatmul.f32.gmra.mxu0 %v1897
      %v1899 = vpop.f32.mrf.mxu0
      %v1900 = vadd.f32 %v1675, %v1899
      %v1901 = vand.u32 %v330, 4294901760
      %1902 = vmatmul.f32.gmra.mxu0 %v1901
      %v1903 = vpop.f32.mrf.mxu0
      %v1904 = vadd.f32 %v1683, %v1903
      %v1905 = vand.u32 %v333, 4294901760
      %1906 = vmatmul.f32.gmra.mxu0 %v1905
      %v1907 = vpop.f32.mrf.mxu0
      %v1908 = vadd.f32 %v1691, %v1907
      %v1909 = vand.u32 %v336, 4294901760
      %1910 = vmatmul.f32.gmra.mxu0 %v1909
      %v1911 = vpop.f32.mrf.mxu0
      %v1912 = vadd.f32 %v1699, %v1911
      %v1913 = vand.u32 %v339, 4294901760
      %1914 = vmatmul.f32.gmra.mxu0 %v1913
      %v1915 = vpop.f32.mrf.mxu0
      %v1916 = vadd.f32 %v1707, %v1915
      %v1917 = vand.u32 %v342, 4294901760
      %1918 = vmatmul.f32.gmra.mxu0 %v1917
      %v1919 = vpop.f32.mrf.mxu0
      %v1920 = vadd.f32 %v1715, %v1919
      %v1921 = vand.u32 %v345, 4294901760
      %1922 = vmatmul.f32.gmra.mxu0 %v1921
      %v1923 = vpop.f32.mrf.mxu0
      %v1924 = vadd.f32 %v1723, %v1923
      %v1925 = vand.u32 %v348, 4294901760
      %1926 = vmatmul.f32.gmra.mxu0 %v1925
      %v1927 = vpop.f32.mrf.mxu0
      %v1928 = vadd.f32 %v1731, %v1927
      %v1929 = vand.u32 %v351, 4294901760
      %1930 = vmatmul.f32.gmra.mxu0 %v1929
      %v1931 = vpop.f32.mrf.mxu0
      %v1932 = vadd.f32 %v1739, %v1931
      %v1933 = vand.u32 %v354, 4294901760
      %1934 = vmatmul.f32.gmra.mxu0 %v1933
      %v1935 = vpop.f32.mrf.mxu0
      %v1936 = vadd.f32 %v1747, %v1935
      %v1937 = vand.u32 %v357, 4294901760
      %1938 = vmatmul.f32.gmra.mxu0 %v1937
      %v1939 = vpop.f32.mrf.mxu0
      %v1940 = vadd.f32 %v1755, %v1939
      %v1941 = vand.u32 %v360, 4294901760
      %1942 = vmatmul.f32.gmra.mxu0 %v1941
      %v1943 = vpop.f32.mrf.mxu0
      %v1944 = vadd.f32 %v1763, %v1943
      %v1945 = vand.u32 %v363, 4294901760
      %1946 = vmatmul.f32.gmra.mxu0 %v1945
      %v1947 = vpop.f32.mrf.mxu0
      %v1948 = vadd.f32 %v1771, %v1947
      %v1949 = vand.u32 %v366, 4294901760
      %1950 = vmatmul.f32.gmra.mxu0 %v1949
      %v1951 = vpop.f32.mrf.mxu0
      %v1952 = vadd.f32 %v1779, %v1951
      %v1953 = vand.u32 %v369, 4294901760
      %1954 = vmatmul.f32.gmra.mxu0 %v1953
      %v1955 = vpop.f32.mrf.mxu0
      %v1956 = vadd.f32 %v1787, %v1955
      %v1957 = vand.u32 %v372, 4294901760
      %1958 = vmatmul.f32.gmra.mxu0 %v1957
      %v1959 = vpop.f32.mrf.mxu0
      %v1960 = vadd.f32 %v1795, %v1959
      %1961 = vdwg.mxu0
      %1962 = vmatpush.msra.mxu0 0.0
      %1963 = vmatpush.msra.mxu0 0.0
      %1964 = vmatpush.msra.mxu0 0.0
      %1965 = vmatpush.msra.mxu0 0.0
      %1966 = vmatpush.msra.mxu0 0.0
      %1967 = vmatpush.msra.mxu0 0.0
      %1968 = vmatpush.msra.mxu0 0.0
      %1969 = vmatpush.msra.mxu0 0.0
      %1970 = vmatpush.msra.mxu0 0.0
      %1971 = vmatpush.msra.mxu0 0.0
      %1972 = vmatpush.msra.mxu0 0.0
      %1973 = vmatpush.msra.mxu0 0.0
      %v1974 = vand.u32 %v275, 4294901760
      %v1975 = vsub.f32 %v275, %v1974
      %1976 = vmatpush.msra.mxu0 %v1975
      %v1977 = vand.u32 %v272, 4294901760
      %v1978 = vsub.f32 %v272, %v1977
      %1979 = vmatpush.msra.mxu0 %v1978
      %v1980 = vand.u32 %v269, 4294901760
      %v1981 = vsub.f32 %v269, %v1980
      %1982 = vmatpush.msra.mxu0 %v1981
      %v1983 = vand.u32 %v266, 4294901760
      %v1984 = vsub.f32 %v266, %v1983
      %1985 = vmatpush.msra.mxu0 %v1984
      %v1986 = vand.u32 %v279, 4294901760
      %v1987 = vsub.f32 %v279, %v1986
      %1988 = vmatmul.f32.gmra.mxu0 %v1987
      %v1989 = vpop.f32.mrf.mxu0
      %v1990 = vadd.f32 %v1836, %v1989
      %v1991 = vand.u32 %v282, 4294901760
      %v1992 = vsub.f32 %v282, %v1991
      %1993 = vmatmul.f32.gmra.mxu0 %v1992
      %v1994 = vpop.f32.mrf.mxu0
      %v1995 = vadd.f32 %v1840, %v1994
      %v1996 = vand.u32 %v285, 4294901760
      %v1997 = vsub.f32 %v285, %v1996
      %1998 = vmatmul.f32.gmra.mxu0 %v1997
      %v1999 = vpop.f32.mrf.mxu0
      %v2000 = vadd.f32 %v1844, %v1999
      %v2001 = vand.u32 %v288, 4294901760
      %v2002 = vsub.f32 %v288, %v2001
      %2003 = vmatmul.f32.gmra.mxu0 %v2002
      %v2004 = vpop.f32.mrf.mxu0
      %v2005 = vadd.f32 %v1848, %v2004
      %v2006 = vand.u32 %v291, 4294901760
      %v2007 = vsub.f32 %v291, %v2006
      %2008 = vmatmul.f32.gmra.mxu0 %v2007
      %v2009 = vpop.f32.mrf.mxu0
      %v2010 = vadd.f32 %v1852, %v2009
      %v2011 = vand.u32 %v294, 4294901760
      %v2012 = vsub.f32 %v294, %v2011
      %2013 = vmatmul.f32.gmra.mxu0 %v2012
      %v2014 = vpop.f32.mrf.mxu0
      %v2015 = vadd.f32 %v1856, %v2014
      %v2016 = vand.u32 %v297, 4294901760
      %v2017 = vsub.f32 %v297, %v2016
      %2018 = vmatmul.f32.gmra.mxu0 %v2017
      %v2019 = vpop.f32.mrf.mxu0
      %v2020 = vadd.f32 %v1860, %v2019
      %v2021 = vand.u32 %v300, 4294901760
      %v2022 = vsub.f32 %v300, %v2021
      %2023 = vmatmul.f32.gmra.mxu0 %v2022
      %v2024 = vpop.f32.mrf.mxu0
      %v2025 = vadd.f32 %v1864, %v2024
      %v2026 = vand.u32 %v303, 4294901760
      %v2027 = vsub.f32 %v303, %v2026
      %2028 = vmatmul.f32.gmra.mxu0 %v2027
      %v2029 = vpop.f32.mrf.mxu0
      %v2030 = vadd.f32 %v1868, %v2029
      %v2031 = vand.u32 %v306, 4294901760
      %v2032 = vsub.f32 %v306, %v2031
      %2033 = vmatmul.f32.gmra.mxu0 %v2032
      %v2034 = vpop.f32.mrf.mxu0
      %v2035 = vadd.f32 %v1872, %v2034
      %v2036 = vand.u32 %v309, 4294901760
      %v2037 = vsub.f32 %v309, %v2036
      %2038 = vmatmul.f32.gmra.mxu0 %v2037
      %v2039 = vpop.f32.mrf.mxu0
      %v2040 = vadd.f32 %v1876, %v2039
      %v2041 = vand.u32 %v312, 4294901760
      %v2042 = vsub.f32 %v312, %v2041
      %2043 = vmatmul.f32.gmra.mxu0 %v2042
      %v2044 = vpop.f32.mrf.mxu0
      %v2045 = vadd.f32 %v1880, %v2044
      %v2046 = vand.u32 %v315, 4294901760
      %v2047 = vsub.f32 %v315, %v2046
      %2048 = vmatmul.f32.gmra.mxu0 %v2047
      %v2049 = vpop.f32.mrf.mxu0
      %v2050 = vadd.f32 %v1884, %v2049
      %v2051 = vand.u32 %v318, 4294901760
      %v2052 = vsub.f32 %v318, %v2051
      %2053 = vmatmul.f32.gmra.mxu0 %v2052
      %v2054 = vpop.f32.mrf.mxu0
      %v2055 = vadd.f32 %v1888, %v2054
      %v2056 = vand.u32 %v321, 4294901760
      %v2057 = vsub.f32 %v321, %v2056
      %2058 = vmatmul.f32.gmra.mxu0 %v2057
      %v2059 = vpop.f32.mrf.mxu0
      %v2060 = vadd.f32 %v1892, %v2059
      %v2061 = vand.u32 %v324, 4294901760
      %v2062 = vsub.f32 %v324, %v2061
      %2063 = vmatmul.f32.gmra.mxu0 %v2062
      %v2064 = vpop.f32.mrf.mxu0
      %v2065 = vadd.f32 %v1896, %v2064
      %v2066 = vand.u32 %v327, 4294901760
      %v2067 = vsub.f32 %v327, %v2066
      %2068 = vmatmul.f32.gmra.mxu0 %v2067
      %v2069 = vpop.f32.mrf.mxu0
      %v2070 = vadd.f32 %v1900, %v2069
      %v2071 = vand.u32 %v330, 4294901760
      %v2072 = vsub.f32 %v330, %v2071
      %2073 = vmatmul.f32.gmra.mxu0 %v2072
      %v2074 = vpop.f32.mrf.mxu0
      %v2075 = vadd.f32 %v1904, %v2074
      %v2076 = vand.u32 %v333, 4294901760
      %v2077 = vsub.f32 %v333, %v2076
      %2078 = vmatmul.f32.gmra.mxu0 %v2077
      %v2079 = vpop.f32.mrf.mxu0
      %v2080 = vadd.f32 %v1908, %v2079
      %v2081 = vand.u32 %v336, 4294901760
      %v2082 = vsub.f32 %v336, %v2081
      %2083 = vmatmul.f32.gmra.mxu0 %v2082
      %v2084 = vpop.f32.mrf.mxu0
      %v2085 = vadd.f32 %v1912, %v2084
      %v2086 = vand.u32 %v339, 4294901760
      %v2087 = vsub.f32 %v339, %v2086
      %2088 = vmatmul.f32.gmra.mxu0 %v2087
      %v2089 = vpop.f32.mrf.mxu0
      %v2090 = vadd.f32 %v1916, %v2089
      %v2091 = vand.u32 %v342, 4294901760
      %v2092 = vsub.f32 %v342, %v2091
      %2093 = vmatmul.f32.gmra.mxu0 %v2092
      %v2094 = vpop.f32.mrf.mxu0
      %v2095 = vadd.f32 %v1920, %v2094
      %v2096 = vand.u32 %v345, 4294901760
      %v2097 = vsub.f32 %v345, %v2096
      %2098 = vmatmul.f32.gmra.mxu0 %v2097
      %v2099 = vpop.f32.mrf.mxu0
      %v2100 = vadd.f32 %v1924, %v2099
      %v2101 = vand.u32 %v348, 4294901760
      %v2102 = vsub.f32 %v348, %v2101
      %2103 = vmatmul.f32.gmra.mxu0 %v2102
      %v2104 = vpop.f32.mrf.mxu0
      %v2105 = vadd.f32 %v1928, %v2104
      %v2106 = vand.u32 %v351, 4294901760
      %v2107 = vsub.f32 %v351, %v2106
      %2108 = vmatmul.f32.gmra.mxu0 %v2107
      %v2109 = vpop.f32.mrf.mxu0
      %v2110 = vadd.f32 %v1932, %v2109
      %v2111 = vand.u32 %v354, 4294901760
      %v2112 = vsub.f32 %v354, %v2111
      %2113 = vmatmul.f32.gmra.mxu0 %v2112
      %v2114 = vpop.f32.mrf.mxu0
      %v2115 = vadd.f32 %v1936, %v2114
      %v2116 = vand.u32 %v357, 4294901760
      %v2117 = vsub.f32 %v357, %v2116
      %2118 = vmatmul.f32.gmra.mxu0 %v2117
      %v2119 = vpop.f32.mrf.mxu0
      %v2120 = vadd.f32 %v1940, %v2119
      %v2121 = vand.u32 %v360, 4294901760
      %v2122 = vsub.f32 %v360, %v2121
      %2123 = vmatmul.f32.gmra.mxu0 %v2122
      %v2124 = vpop.f32.mrf.mxu0
      %v2125 = vadd.f32 %v1944, %v2124
      %v2126 = vand.u32 %v363, 4294901760
      %v2127 = vsub.f32 %v363, %v2126
      %2128 = vmatmul.f32.gmra.mxu0 %v2127
      %v2129 = vpop.f32.mrf.mxu0
      %v2130 = vadd.f32 %v1948, %v2129
      %v2131 = vand.u32 %v366, 4294901760
      %v2132 = vsub.f32 %v366, %v2131
      %2133 = vmatmul.f32.gmra.mxu0 %v2132
      %v2134 = vpop.f32.mrf.mxu0
      %v2135 = vadd.f32 %v1952, %v2134
      %v2136 = vand.u32 %v369, 4294901760
      %v2137 = vsub.f32 %v369, %v2136
      %2138 = vmatmul.f32.gmra.mxu0 %v2137
      %v2139 = vpop.f32.mrf.mxu0
      %v2140 = vadd.f32 %v1956, %v2139
      %v2141 = vand.u32 %v372, 4294901760
      %v2142 = vsub.f32 %v372, %v2141
      %2143 = vmatmul.f32.gmra.mxu0 %v2142
      %v2144 = vpop.f32.mrf.mxu0
      %v2145 = vadd.f32 %v1960, %v2144
      %2146 = vdwg.mxu0
      %2147 = vmatpush.msra.mxu0 0.0
      %2148 = vmatpush.msra.mxu0 0.0
      %2149 = vmatpush.msra.mxu0 0.0
      %2150 = vmatpush.msra.mxu0 0.0
      %2151 = vmatpush.msra.mxu0 0.0
      %2152 = vmatpush.msra.mxu0 0.0
      %2153 = vmatpush.msra.mxu0 0.0
      %2154 = vmatpush.msra.mxu0 0.0
      %2155 = vmatpush.msra.mxu0 0.0
      %2156 = vmatpush.msra.mxu0 0.0
      %2157 = vmatpush.msra.mxu0 0.0
      %2158 = vmatpush.msra.mxu0 0.0
      %v2159 = vand.u32 %v275, 4294901760
      %2160 = vmatpush.msra.mxu0 %v2159
      %v2161 = vand.u32 %v272, 4294901760
      %2162 = vmatpush.msra.mxu0 %v2161
      %v2163 = vand.u32 %v269, 4294901760
      %2164 = vmatpush.msra.mxu0 %v2163
      %v2165 = vand.u32 %v266, 4294901760
      %2166 = vmatpush.msra.mxu0 %v2165
      %v2167 = vand.u32 %v279, 4294901760
      %v2168 = vsub.f32 %v279, %v2167
      %v2169 = vand.u32 %v2168, 4294901760
      %2170 = vmatmul.f32.gmra.mxu0 %v2169
      %v2171 = vpop.f32.mrf.mxu0
      %v2172 = vadd.f32 %v1990, %v2171
      %v2173 = vand.u32 %v282, 4294901760
      %v2174 = vsub.f32 %v282, %v2173
      %v2175 = vand.u32 %v2174, 4294901760
      %2176 = vmatmul.f32.gmra.mxu0 %v2175
      %v2177 = vpop.f32.mrf.mxu0
      %v2178 = vadd.f32 %v1995, %v2177
      %v2179 = vand.u32 %v285, 4294901760
      %v2180 = vsub.f32 %v285, %v2179
      %v2181 = vand.u32 %v2180, 4294901760
      %2182 = vmatmul.f32.gmra.mxu0 %v2181
      %v2183 = vpop.f32.mrf.mxu0
      %v2184 = vadd.f32 %v2000, %v2183
      %v2185 = vand.u32 %v288, 4294901760
      %v2186 = vsub.f32 %v288, %v2185
      %v2187 = vand.u32 %v2186, 4294901760
      %2188 = vmatmul.f32.gmra.mxu0 %v2187
      %v2189 = vpop.f32.mrf.mxu0
      %v2190 = vadd.f32 %v2005, %v2189
      %v2191 = vand.u32 %v291, 4294901760
      %v2192 = vsub.f32 %v291, %v2191
      %v2193 = vand.u32 %v2192, 4294901760
      %2194 = vmatmul.f32.gmra.mxu0 %v2193
      %v2195 = vpop.f32.mrf.mxu0
      %v2196 = vadd.f32 %v2010, %v2195
      %v2197 = vand.u32 %v294, 4294901760
      %v2198 = vsub.f32 %v294, %v2197
      %v2199 = vand.u32 %v2198, 4294901760
      %2200 = vmatmul.f32.gmra.mxu0 %v2199
      %v2201 = vpop.f32.mrf.mxu0
      %v2202 = vadd.f32 %v2015, %v2201
      %v2203 = vand.u32 %v297, 4294901760
      %v2204 = vsub.f32 %v297, %v2203
      %v2205 = vand.u32 %v2204, 4294901760
      %2206 = vmatmul.f32.gmra.mxu0 %v2205
      %v2207 = vpop.f32.mrf.mxu0
      %v2208 = vadd.f32 %v2020, %v2207
      %v2209 = vand.u32 %v300, 4294901760
      %v2210 = vsub.f32 %v300, %v2209
      %v2211 = vand.u32 %v2210, 4294901760
      %2212 = vmatmul.f32.gmra.mxu0 %v2211
      %v2213 = vpop.f32.mrf.mxu0
      %v2214 = vadd.f32 %v2025, %v2213
      %v2215 = vand.u32 %v303, 4294901760
      %v2216 = vsub.f32 %v303, %v2215
      %v2217 = vand.u32 %v2216, 4294901760
      %2218 = vmatmul.f32.gmra.mxu0 %v2217
      %v2219 = vpop.f32.mrf.mxu0
      %v2220 = vadd.f32 %v2030, %v2219
      %v2221 = vand.u32 %v306, 4294901760
      %v2222 = vsub.f32 %v306, %v2221
      %v2223 = vand.u32 %v2222, 4294901760
      %2224 = vmatmul.f32.gmra.mxu0 %v2223
      %v2225 = vpop.f32.mrf.mxu0
      %v2226 = vadd.f32 %v2035, %v2225
      %v2227 = vand.u32 %v309, 4294901760
      %v2228 = vsub.f32 %v309, %v2227
      %v2229 = vand.u32 %v2228, 4294901760
      %2230 = vmatmul.f32.gmra.mxu0 %v2229
      %v2231 = vpop.f32.mrf.mxu0
      %v2232 = vadd.f32 %v2040, %v2231
      %v2233 = vand.u32 %v312, 4294901760
      %v2234 = vsub.f32 %v312, %v2233
      %v2235 = vand.u32 %v2234, 4294901760
      %2236 = vmatmul.f32.gmra.mxu0 %v2235
      %v2237 = vpop.f32.mrf.mxu0
      %v2238 = vadd.f32 %v2045, %v2237
      %v2239 = vand.u32 %v315, 4294901760
      %v2240 = vsub.f32 %v315, %v2239
      %v2241 = vand.u32 %v2240, 4294901760
      %2242 = vmatmul.f32.gmra.mxu0 %v2241
      %v2243 = vpop.f32.mrf.mxu0
      %v2244 = vadd.f32 %v2050, %v2243
      %v2245 = vand.u32 %v318, 4294901760
      %v2246 = vsub.f32 %v318, %v2245
      %v2247 = vand.u32 %v2246, 4294901760
      %2248 = vmatmul.f32.gmra.mxu0 %v2247
      %v2249 = vpop.f32.mrf.mxu0
      %v2250 = vadd.f32 %v2055, %v2249
      %v2251 = vand.u32 %v321, 4294901760
      %v2252 = vsub.f32 %v321, %v2251
      %v2253 = vand.u32 %v2252, 4294901760
      %2254 = vmatmul.f32.gmra.mxu0 %v2253
      %v2255 = vpop.f32.mrf.mxu0
      %v2256 = vadd.f32 %v2060, %v2255
      %v2257 = vand.u32 %v324, 4294901760
      %v2258 = vsub.f32 %v324, %v2257
      %v2259 = vand.u32 %v2258, 4294901760
      %2260 = vmatmul.f32.gmra.mxu0 %v2259
      %v2261 = vpop.f32.mrf.mxu0
      %v2262 = vadd.f32 %v2065, %v2261
      %v2263 = vand.u32 %v327, 4294901760
      %v2264 = vsub.f32 %v327, %v2263
      %v2265 = vand.u32 %v2264, 4294901760
      %2266 = vmatmul.f32.gmra.mxu0 %v2265
      %v2267 = vpop.f32.mrf.mxu0
      %v2268 = vadd.f32 %v2070, %v2267
      %v2269 = vand.u32 %v330, 4294901760
      %v2270 = vsub.f32 %v330, %v2269
      %v2271 = vand.u32 %v2270, 4294901760
      %2272 = vmatmul.f32.gmra.mxu0 %v2271
      %v2273 = vpop.f32.mrf.mxu0
      %v2274 = vadd.f32 %v2075, %v2273
      %v2275 = vand.u32 %v333, 4294901760
      %v2276 = vsub.f32 %v333, %v2275
      %v2277 = vand.u32 %v2276, 4294901760
      %2278 = vmatmul.f32.gmra.mxu0 %v2277
      %v2279 = vpop.f32.mrf.mxu0
      %v2280 = vadd.f32 %v2080, %v2279
      %v2281 = vand.u32 %v336, 4294901760
      %v2282 = vsub.f32 %v336, %v2281
      %v2283 = vand.u32 %v2282, 4294901760
      %2284 = vmatmul.f32.gmra.mxu0 %v2283
      %v2285 = vpop.f32.mrf.mxu0
      %v2286 = vadd.f32 %v2085, %v2285
      %v2287 = vand.u32 %v339, 4294901760
      %v2288 = vsub.f32 %v339, %v2287
      %v2289 = vand.u32 %v2288, 4294901760
      %2290 = vmatmul.f32.gmra.mxu0 %v2289
      %v2291 = vpop.f32.mrf.mxu0
      %v2292 = vadd.f32 %v2090, %v2291
      %v2293 = vand.u32 %v342, 4294901760
      %v2294 = vsub.f32 %v342, %v2293
      %v2295 = vand.u32 %v2294, 4294901760
      %2296 = vmatmul.f32.gmra.mxu0 %v2295
      %v2297 = vpop.f32.mrf.mxu0
      %v2298 = vadd.f32 %v2095, %v2297
      %v2299 = vand.u32 %v345, 4294901760
      %v2300 = vsub.f32 %v345, %v2299
      %v2301 = vand.u32 %v2300, 4294901760
      %2302 = vmatmul.f32.gmra.mxu0 %v2301
      %v2303 = vpop.f32.mrf.mxu0
      %v2304 = vadd.f32 %v2100, %v2303
      %v2305 = vand.u32 %v348, 4294901760
      %v2306 = vsub.f32 %v348, %v2305
      %v2307 = vand.u32 %v2306, 4294901760
      %2308 = vmatmul.f32.gmra.mxu0 %v2307
      %v2309 = vpop.f32.mrf.mxu0
      %v2310 = vadd.f32 %v2105, %v2309
      %v2311 = vand.u32 %v351, 4294901760
      %v2312 = vsub.f32 %v351, %v2311
      %v2313 = vand.u32 %v2312, 4294901760
      %2314 = vmatmul.f32.gmra.mxu0 %v2313
      %v2315 = vpop.f32.mrf.mxu0
      %v2316 = vadd.f32 %v2110, %v2315
      %v2317 = vand.u32 %v354, 4294901760
      %v2318 = vsub.f32 %v354, %v2317
      %v2319 = vand.u32 %v2318, 4294901760
      %2320 = vmatmul.f32.gmra.mxu0 %v2319
      %v2321 = vpop.f32.mrf.mxu0
      %v2322 = vadd.f32 %v2115, %v2321
      %v2323 = vand.u32 %v357, 4294901760
      %v2324 = vsub.f32 %v357, %v2323
      %v2325 = vand.u32 %v2324, 4294901760
      %2326 = vmatmul.f32.gmra.mxu0 %v2325
      %v2327 = vpop.f32.mrf.mxu0
      %v2328 = vadd.f32 %v2120, %v2327
      %v2329 = vand.u32 %v360, 4294901760
      %v2330 = vsub.f32 %v360, %v2329
      %v2331 = vand.u32 %v2330, 4294901760
      %2332 = vmatmul.f32.gmra.mxu0 %v2331
      %v2333 = vpop.f32.mrf.mxu0
      %v2334 = vadd.f32 %v2125, %v2333
      %v2335 = vand.u32 %v363, 4294901760
      %v2336 = vsub.f32 %v363, %v2335
      %v2337 = vand.u32 %v2336, 4294901760
      %2338 = vmatmul.f32.gmra.mxu0 %v2337
      %v2339 = vpop.f32.mrf.mxu0
      %v2340 = vadd.f32 %v2130, %v2339
      %v2341 = vand.u32 %v366, 4294901760
      %v2342 = vsub.f32 %v366, %v2341
      %v2343 = vand.u32 %v2342, 4294901760
      %2344 = vmatmul.f32.gmra.mxu0 %v2343
      %v2345 = vpop.f32.mrf.mxu0
      %v2346 = vadd.f32 %v2135, %v2345
      %v2347 = vand.u32 %v369, 4294901760
      %v2348 = vsub.f32 %v369, %v2347
      %v2349 = vand.u32 %v2348, 4294901760
      %2350 = vmatmul.f32.gmra.mxu0 %v2349
      %v2351 = vpop.f32.mrf.mxu0
      %v2352 = vadd.f32 %v2140, %v2351
      %v2353 = vand.u32 %v372, 4294901760
      %v2354 = vsub.f32 %v372, %v2353
      %v2355 = vand.u32 %v2354, 4294901760
      %2356 = vmatmul.f32.gmra.mxu0 %v2355
      %v2357 = vpop.f32.mrf.mxu0
      %v2358 = vadd.f32 %v2145, %v2357
      %2359 = vdwg.mxu0
      %2360 = vmatpush.msra.mxu0 0.0
      %2361 = vmatpush.msra.mxu0 0.0
      %2362 = vmatpush.msra.mxu0 0.0
      %2363 = vmatpush.msra.mxu0 0.0
      %2364 = vmatpush.msra.mxu0 0.0
      %2365 = vmatpush.msra.mxu0 0.0
      %2366 = vmatpush.msra.mxu0 0.0
      %2367 = vmatpush.msra.mxu0 0.0
      %2368 = vmatpush.msra.mxu0 0.0
      %2369 = vmatpush.msra.mxu0 0.0
      %2370 = vmatpush.msra.mxu0 0.0
      %2371 = vmatpush.msra.mxu0 0.0
      %v2372 = vand.u32 %v275, 4294901760
      %v2373 = vsub.f32 %v275, %v2372
      %v2374 = vand.u32 %v2373, 4294901760
      %2375 = vmatpush.msra.mxu0 %v2374
      %v2376 = vand.u32 %v272, 4294901760
      %v2377 = vsub.f32 %v272, %v2376
      %v2378 = vand.u32 %v2377, 4294901760
      %2379 = vmatpush.msra.mxu0 %v2378
      %v2380 = vand.u32 %v269, 4294901760
      %v2381 = vsub.f32 %v269, %v2380
      %v2382 = vand.u32 %v2381, 4294901760
      %2383 = vmatpush.msra.mxu0 %v2382
      %v2384 = vand.u32 %v266, 4294901760
      %v2385 = vsub.f32 %v266, %v2384
      %v2386 = vand.u32 %v2385, 4294901760
      %2387 = vmatpush.msra.mxu0 %v2386
      %v2388 = vand.u32 %v279, 4294901760
      %2389 = vmatmul.f32.gmra.mxu0 %v2388
      %v2390 = vpop.f32.mrf.mxu0
      %v2391 = vadd.f32 %v2172, %v2390
      %v2392 = vand.u32 %v282, 4294901760
      %2393 = vmatmul.f32.gmra.mxu0 %v2392
      %v2394 = vpop.f32.mrf.mxu0
      %v2395 = vadd.f32 %v2178, %v2394
      %v2396 = vand.u32 %v285, 4294901760
      %2397 = vmatmul.f32.gmra.mxu0 %v2396
      %v2398 = vpop.f32.mrf.mxu0
      %v2399 = vadd.f32 %v2184, %v2398
      %v2400 = vand.u32 %v288, 4294901760
      %2401 = vmatmul.f32.gmra.mxu0 %v2400
      %v2402 = vpop.f32.mrf.mxu0
      %v2403 = vadd.f32 %v2190, %v2402
      %v2404 = vand.u32 %v291, 4294901760
      %2405 = vmatmul.f32.gmra.mxu0 %v2404
      %v2406 = vpop.f32.mrf.mxu0
      %v2407 = vadd.f32 %v2196, %v2406
      %v2408 = vand.u32 %v294, 4294901760
      %2409 = vmatmul.f32.gmra.mxu0 %v2408
      %v2410 = vpop.f32.mrf.mxu0
      %v2411 = vadd.f32 %v2202, %v2410
      %v2412 = vand.u32 %v297, 4294901760
      %2413 = vmatmul.f32.gmra.mxu0 %v2412
      %v2414 = vpop.f32.mrf.mxu0
      %v2415 = vadd.f32 %v2208, %v2414
      %v2416 = vand.u32 %v300, 4294901760
      %2417 = vmatmul.f32.gmra.mxu0 %v2416
      %v2418 = vpop.f32.mrf.mxu0
      %v2419 = vadd.f32 %v2214, %v2418
      %v2420 = vand.u32 %v303, 4294901760
      %2421 = vmatmul.f32.gmra.mxu0 %v2420
      %v2422 = vpop.f32.mrf.mxu0
      %v2423 = vadd.f32 %v2220, %v2422
      %v2424 = vand.u32 %v306, 4294901760
      %2425 = vmatmul.f32.gmra.mxu0 %v2424
      %v2426 = vpop.f32.mrf.mxu0
      %v2427 = vadd.f32 %v2226, %v2426
      %v2428 = vand.u32 %v309, 4294901760
      %2429 = vmatmul.f32.gmra.mxu0 %v2428
      %v2430 = vpop.f32.mrf.mxu0
      %v2431 = vadd.f32 %v2232, %v2430
      %v2432 = vand.u32 %v312, 4294901760
      %2433 = vmatmul.f32.gmra.mxu0 %v2432
      %v2434 = vpop.f32.mrf.mxu0
      %v2435 = vadd.f32 %v2238, %v2434
      %v2436 = vand.u32 %v315, 4294901760
      %2437 = vmatmul.f32.gmra.mxu0 %v2436
      %v2438 = vpop.f32.mrf.mxu0
      %v2439 = vadd.f32 %v2244, %v2438
      %v2440 = vand.u32 %v318, 4294901760
      %2441 = vmatmul.f32.gmra.mxu0 %v2440
      %v2442 = vpop.f32.mrf.mxu0
      %v2443 = vadd.f32 %v2250, %v2442
      %v2444 = vand.u32 %v321, 4294901760
      %2445 = vmatmul.f32.gmra.mxu0 %v2444
      %v2446 = vpop.f32.mrf.mxu0
      %v2447 = vadd.f32 %v2256, %v2446
      %v2448 = vand.u32 %v324, 4294901760
      %2449 = vmatmul.f32.gmra.mxu0 %v2448
      %v2450 = vpop.f32.mrf.mxu0
      %v2451 = vadd.f32 %v2262, %v2450
      %v2452 = vand.u32 %v327, 4294901760
      %2453 = vmatmul.f32.gmra.mxu0 %v2452
      %v2454 = vpop.f32.mrf.mxu0
      %v2455 = vadd.f32 %v2268, %v2454
      %v2456 = vand.u32 %v330, 4294901760
      %2457 = vmatmul.f32.gmra.mxu0 %v2456
      %v2458 = vpop.f32.mrf.mxu0
      %v2459 = vadd.f32 %v2274, %v2458
      %v2460 = vand.u32 %v333, 4294901760
      %2461 = vmatmul.f32.gmra.mxu0 %v2460
      %v2462 = vpop.f32.mrf.mxu0
      %v2463 = vadd.f32 %v2280, %v2462
      %v2464 = vand.u32 %v336, 4294901760
      %2465 = vmatmul.f32.gmra.mxu0 %v2464
      %v2466 = vpop.f32.mrf.mxu0
      %v2467 = vadd.f32 %v2286, %v2466
      %v2468 = vand.u32 %v339, 4294901760
      %2469 = vmatmul.f32.gmra.mxu0 %v2468
      %v2470 = vpop.f32.mrf.mxu0
      %v2471 = vadd.f32 %v2292, %v2470
      %v2472 = vand.u32 %v342, 4294901760
      %2473 = vmatmul.f32.gmra.mxu0 %v2472
      %v2474 = vpop.f32.mrf.mxu0
      %v2475 = vadd.f32 %v2298, %v2474
      %v2476 = vand.u32 %v345, 4294901760
      %2477 = vmatmul.f32.gmra.mxu0 %v2476
      %v2478 = vpop.f32.mrf.mxu0
      %v2479 = vadd.f32 %v2304, %v2478
      %v2480 = vand.u32 %v348, 4294901760
      %2481 = vmatmul.f32.gmra.mxu0 %v2480
      %v2482 = vpop.f32.mrf.mxu0
      %v2483 = vadd.f32 %v2310, %v2482
      %v2484 = vand.u32 %v351, 4294901760
      %2485 = vmatmul.f32.gmra.mxu0 %v2484
      %v2486 = vpop.f32.mrf.mxu0
      %v2487 = vadd.f32 %v2316, %v2486
      %v2488 = vand.u32 %v354, 4294901760
      %2489 = vmatmul.f32.gmra.mxu0 %v2488
      %v2490 = vpop.f32.mrf.mxu0
      %v2491 = vadd.f32 %v2322, %v2490
      %v2492 = vand.u32 %v357, 4294901760
      %2493 = vmatmul.f32.gmra.mxu0 %v2492
      %v2494 = vpop.f32.mrf.mxu0
      %v2495 = vadd.f32 %v2328, %v2494
      %v2496 = vand.u32 %v360, 4294901760
      %2497 = vmatmul.f32.gmra.mxu0 %v2496
      %v2498 = vpop.f32.mrf.mxu0
      %v2499 = vadd.f32 %v2334, %v2498
      %v2500 = vand.u32 %v363, 4294901760
      %2501 = vmatmul.f32.gmra.mxu0 %v2500
      %v2502 = vpop.f32.mrf.mxu0
      %v2503 = vadd.f32 %v2340, %v2502
      %v2504 = vand.u32 %v366, 4294901760
      %2505 = vmatmul.f32.gmra.mxu0 %v2504
      %v2506 = vpop.f32.mrf.mxu0
      %v2507 = vadd.f32 %v2346, %v2506
      %v2508 = vand.u32 %v369, 4294901760
      %2509 = vmatmul.f32.gmra.mxu0 %v2508
      %v2510 = vpop.f32.mrf.mxu0
      %v2511 = vadd.f32 %v2352, %v2510
      %v2512 = vand.u32 %v372, 4294901760
      %2513 = vmatmul.f32.gmra.mxu0 %v2512
      %v2514 = vpop.f32.mrf.mxu0
      %v2515 = vadd.f32 %v2358, %v2514
      %2516 = vdwg.mxu0
      %2517 = vmatpush.msra.mxu0 0.0
      %2518 = vmatpush.msra.mxu0 0.0
      %2519 = vmatpush.msra.mxu0 0.0
      %2520 = vmatpush.msra.mxu0 0.0
      %2521 = vmatpush.msra.mxu0 0.0
      %2522 = vmatpush.msra.mxu0 0.0
      %2523 = vmatpush.msra.mxu0 0.0
      %2524 = vmatpush.msra.mxu0 0.0
      %2525 = vmatpush.msra.mxu0 0.0
      %2526 = vmatpush.msra.mxu0 0.0
      %2527 = vmatpush.msra.mxu0 0.0
      %2528 = vmatpush.msra.mxu0 0.0
      %v2529 = vand.u32 %v275, 4294901760
      %2530 = vmatpush.msra.mxu0 %v2529
      %v2531 = vand.u32 %v272, 4294901760
      %2532 = vmatpush.msra.mxu0 %v2531
      %v2533 = vand.u32 %v269, 4294901760
      %2534 = vmatpush.msra.mxu0 %v2533
      %v2535 = vand.u32 %v266, 4294901760
      %2536 = vmatpush.msra.mxu0 %v2535
      %v2537 = vand.u32 %v279, 4294901760
      %2538 = vmatmul.f32.gmra.mxu0 %v2537
      %v2539 = vpop.f32.mrf.mxu0
      %v2540 = vadd.f32 %v2391, %v2539
      %v2541 = vand.u32 %v282, 4294901760
      %2542 = vmatmul.f32.gmra.mxu0 %v2541
      %v2543 = vpop.f32.mrf.mxu0
      %v2544 = vadd.f32 %v2395, %v2543
      %v2545 = vand.u32 %v285, 4294901760
      %2546 = vmatmul.f32.gmra.mxu0 %v2545
      %v2547 = vpop.f32.mrf.mxu0
      %v2548 = vadd.f32 %v2399, %v2547
      %v2549 = vand.u32 %v288, 4294901760
      %2550 = vmatmul.f32.gmra.mxu0 %v2549
      %v2551 = vpop.f32.mrf.mxu0
      %v2552 = vadd.f32 %v2403, %v2551
      %v2553 = vand.u32 %v291, 4294901760
      %2554 = vmatmul.f32.gmra.mxu0 %v2553
      %v2555 = vpop.f32.mrf.mxu0
      %v2556 = vadd.f32 %v2407, %v2555
      %v2557 = vand.u32 %v294, 4294901760
      %2558 = vmatmul.f32.gmra.mxu0 %v2557
      %v2559 = vpop.f32.mrf.mxu0
      %v2560 = vadd.f32 %v2411, %v2559
      %v2561 = vand.u32 %v297, 4294901760
      %2562 = vmatmul.f32.gmra.mxu0 %v2561
      %v2563 = vpop.f32.mrf.mxu0
      %v2564 = vadd.f32 %v2415, %v2563
      %v2565 = vand.u32 %v300, 4294901760
      %2566 = vmatmul.f32.gmra.mxu0 %v2565
      %v2567 = vpop.f32.mrf.mxu0
      %v2568 = vadd.f32 %v2419, %v2567
      %v2569 = vand.u32 %v303, 4294901760
      %2570 = vmatmul.f32.gmra.mxu0 %v2569
      %v2571 = vpop.f32.mrf.mxu0
      %v2572 = vadd.f32 %v2423, %v2571
      %v2573 = vand.u32 %v306, 4294901760
      %2574 = vmatmul.f32.gmra.mxu0 %v2573
      %v2575 = vpop.f32.mrf.mxu0
      %v2576 = vadd.f32 %v2427, %v2575
      %v2577 = vand.u32 %v309, 4294901760
      %2578 = vmatmul.f32.gmra.mxu0 %v2577
      %v2579 = vpop.f32.mrf.mxu0
      %v2580 = vadd.f32 %v2431, %v2579
      %v2581 = vand.u32 %v312, 4294901760
      %2582 = vmatmul.f32.gmra.mxu0 %v2581
      %v2583 = vpop.f32.mrf.mxu0
      %v2584 = vadd.f32 %v2435, %v2583
      %v2585 = vand.u32 %v315, 4294901760
      %2586 = vmatmul.f32.gmra.mxu0 %v2585
      %v2587 = vpop.f32.mrf.mxu0
      %v2588 = vadd.f32 %v2439, %v2587
      %v2589 = vand.u32 %v318, 4294901760
      %2590 = vmatmul.f32.gmra.mxu0 %v2589
      %v2591 = vpop.f32.mrf.mxu0
      %v2592 = vadd.f32 %v2443, %v2591
      %v2593 = vand.u32 %v321, 4294901760
      %2594 = vmatmul.f32.gmra.mxu0 %v2593
      %v2595 = vpop.f32.mrf.mxu0
      %v2596 = vadd.f32 %v2447, %v2595
      %v2597 = vand.u32 %v324, 4294901760
      %2598 = vmatmul.f32.gmra.mxu0 %v2597
      %v2599 = vpop.f32.mrf.mxu0
      %v2600 = vadd.f32 %v2451, %v2599
      %v2601 = vand.u32 %v327, 4294901760
      %2602 = vmatmul.f32.gmra.mxu0 %v2601
      %v2603 = vpop.f32.mrf.mxu0
      %v2604 = vadd.f32 %v2455, %v2603
      %v2605 = vand.u32 %v330, 4294901760
      %2606 = vmatmul.f32.gmra.mxu0 %v2605
      %v2607 = vpop.f32.mrf.mxu0
      %v2608 = vadd.f32 %v2459, %v2607
      %v2609 = vand.u32 %v333, 4294901760
      %2610 = vmatmul.f32.gmra.mxu0 %v2609
      %v2611 = vpop.f32.mrf.mxu0
      %v2612 = vadd.f32 %v2463, %v2611
      %v2613 = vand.u32 %v336, 4294901760
      %2614 = vmatmul.f32.gmra.mxu0 %v2613
      %v2615 = vpop.f32.mrf.mxu0
      %v2616 = vadd.f32 %v2467, %v2615
      %v2617 = vand.u32 %v339, 4294901760
      %2618 = vmatmul.f32.gmra.mxu0 %v2617
      %v2619 = vpop.f32.mrf.mxu0
      %v2620 = vadd.f32 %v2471, %v2619
      %v2621 = vand.u32 %v342, 4294901760
      %2622 = vmatmul.f32.gmra.mxu0 %v2621
      %v2623 = vpop.f32.mrf.mxu0
      %v2624 = vadd.f32 %v2475, %v2623
      %v2625 = vand.u32 %v345, 4294901760
      %2626 = vmatmul.f32.gmra.mxu0 %v2625
      %v2627 = vpop.f32.mrf.mxu0
      %v2628 = vadd.f32 %v2479, %v2627
      %v2629 = vand.u32 %v348, 4294901760
      %2630 = vmatmul.f32.gmra.mxu0 %v2629
      %v2631 = vpop.f32.mrf.mxu0
      %v2632 = vadd.f32 %v2483, %v2631
      %v2633 = vand.u32 %v351, 4294901760
      %2634 = vmatmul.f32.gmra.mxu0 %v2633
      %v2635 = vpop.f32.mrf.mxu0
      %v2636 = vadd.f32 %v2487, %v2635
      %v2637 = vand.u32 %v354, 4294901760
      %2638 = vmatmul.f32.gmra.mxu0 %v2637
      %v2639 = vpop.f32.mrf.mxu0
      %v2640 = vadd.f32 %v2491, %v2639
      %v2641 = vand.u32 %v357, 4294901760
      %2642 = vmatmul.f32.gmra.mxu0 %v2641
      %v2643 = vpop.f32.mrf.mxu0
      %v2644 = vadd.f32 %v2495, %v2643
      %v2645 = vand.u32 %v360, 4294901760
      %2646 = vmatmul.f32.gmra.mxu0 %v2645
      %v2647 = vpop.f32.mrf.mxu0
      %v2648 = vadd.f32 %v2499, %v2647
      %v2649 = vand.u32 %v363, 4294901760
      %2650 = vmatmul.f32.gmra.mxu0 %v2649
      %v2651 = vpop.f32.mrf.mxu0
      %v2652 = vadd.f32 %v2503, %v2651
      %v2653 = vand.u32 %v366, 4294901760
      %2654 = vmatmul.f32.gmra.mxu0 %v2653
      %v2655 = vpop.f32.mrf.mxu0
      %v2656 = vadd.f32 %v2507, %v2655
      %v2657 = vand.u32 %v369, 4294901760
      %2658 = vmatmul.f32.gmra.mxu0 %v2657
      %v2659 = vpop.f32.mrf.mxu0
      %v2660 = vadd.f32 %v2511, %v2659
      %v2661 = vand.u32 %v372, 4294901760
      %2662 = vmatmul.f32.gmra.mxu0 %v2661
      %v2663 = vpop.f32.mrf.mxu0
      %v2664 = vadd.f32 %v2515, %v2663
      %2665 = vdwg.mxu0
      %2666 = vmatpush.msra.mxu0 0.0
      %2667 = vmatpush.msra.mxu0 0.0
      %2668 = vmatpush.msra.mxu0 0.0
      %2669 = vmatpush.msra.mxu0 0.0
      %2670 = vmatpush.msra.mxu0 0.0
      %2671 = vmatpush.msra.mxu0 0.0
      %2672 = vmatpush.msra.mxu0 0.0
      %2673 = vmatpush.msra.mxu0 0.0
      %2674 = vmatpush.msra.mxu0 0.0
      %2675 = vmatpush.msra.mxu0 0.0
      %2676 = vmatpush.msra.mxu0 0.0
      %2677 = vmatpush.msra.mxu0 0.0
      %v2678 = vand.u32 %v276, 4294901760
      %2679 = vmatpush.msra.mxu0 %v2678
      %v2680 = vand.u32 %v273, 4294901760
      %2681 = vmatpush.msra.mxu0 %v2680
      %v2682 = vand.u32 %v270, 4294901760
      %2683 = vmatpush.msra.mxu0 %v2682
      %v2684 = vand.u32 %v267, 4294901760
      %2685 = vmatpush.msra.mxu0 %v2684
      %v2686 = vand.u32 %v279, 4294901760
      %v2687 = vsub.f32 %v279, %v2686
      %v2688 = vand.u32 %v2687, 4294901760
      %v2689 = vsub.f32 %v2687, %v2688
      %v2690 = vand.u32 %v2689, 4294901760
      %2691 = vmatmul.f32.gmra.mxu0 %v2690
      %v2692 = vpop.f32.mrf.mxu0
      %v2693 = vadd.f32 0.0, %v2692
      %v2694 = vand.u32 %v282, 4294901760
      %v2695 = vsub.f32 %v282, %v2694
      %v2696 = vand.u32 %v2695, 4294901760
      %v2697 = vsub.f32 %v2695, %v2696
      %v2698 = vand.u32 %v2697, 4294901760
      %2699 = vmatmul.f32.gmra.mxu0 %v2698
      %v2700 = vpop.f32.mrf.mxu0
      %v2701 = vadd.f32 0.0, %v2700
      %v2702 = vand.u32 %v285, 4294901760
      %v2703 = vsub.f32 %v285, %v2702
      %v2704 = vand.u32 %v2703, 4294901760
      %v2705 = vsub.f32 %v2703, %v2704
      %v2706 = vand.u32 %v2705, 4294901760
      %2707 = vmatmul.f32.gmra.mxu0 %v2706
      %v2708 = vpop.f32.mrf.mxu0
      %v2709 = vadd.f32 0.0, %v2708
      %v2710 = vand.u32 %v288, 4294901760
      %v2711 = vsub.f32 %v288, %v2710
      %v2712 = vand.u32 %v2711, 4294901760
      %v2713 = vsub.f32 %v2711, %v2712
      %v2714 = vand.u32 %v2713, 4294901760
      %2715 = vmatmul.f32.gmra.mxu0 %v2714
      %v2716 = vpop.f32.mrf.mxu0
      %v2717 = vadd.f32 0.0, %v2716
      %v2718 = vand.u32 %v291, 4294901760
      %v2719 = vsub.f32 %v291, %v2718
      %v2720 = vand.u32 %v2719, 4294901760
      %v2721 = vsub.f32 %v2719, %v2720
      %v2722 = vand.u32 %v2721, 4294901760
      %2723 = vmatmul.f32.gmra.mxu0 %v2722
      %v2724 = vpop.f32.mrf.mxu0
      %v2725 = vadd.f32 0.0, %v2724
      %v2726 = vand.u32 %v294, 4294901760
      %v2727 = vsub.f32 %v294, %v2726
      %v2728 = vand.u32 %v2727, 4294901760
      %v2729 = vsub.f32 %v2727, %v2728
      %v2730 = vand.u32 %v2729, 4294901760
      %2731 = vmatmul.f32.gmra.mxu0 %v2730
      %v2732 = vpop.f32.mrf.mxu0
      %v2733 = vadd.f32 0.0, %v2732
      %v2734 = vand.u32 %v297, 4294901760
      %v2735 = vsub.f32 %v297, %v2734
      %v2736 = vand.u32 %v2735, 4294901760
      %v2737 = vsub.f32 %v2735, %v2736
      %v2738 = vand.u32 %v2737, 4294901760
      %2739 = vmatmul.f32.gmra.mxu0 %v2738
      %v2740 = vpop.f32.mrf.mxu0
      %v2741 = vadd.f32 0.0, %v2740
      %v2742 = vand.u32 %v300, 4294901760
      %v2743 = vsub.f32 %v300, %v2742
      %v2744 = vand.u32 %v2743, 4294901760
      %v2745 = vsub.f32 %v2743, %v2744
      %v2746 = vand.u32 %v2745, 4294901760
      %2747 = vmatmul.f32.gmra.mxu0 %v2746
      %v2748 = vpop.f32.mrf.mxu0
      %v2749 = vadd.f32 0.0, %v2748
      %v2750 = vand.u32 %v303, 4294901760
      %v2751 = vsub.f32 %v303, %v2750
      %v2752 = vand.u32 %v2751, 4294901760
      %v2753 = vsub.f32 %v2751, %v2752
      %v2754 = vand.u32 %v2753, 4294901760
      %2755 = vmatmul.f32.gmra.mxu0 %v2754
      %v2756 = vpop.f32.mrf.mxu0
      %v2757 = vadd.f32 0.0, %v2756
      %v2758 = vand.u32 %v306, 4294901760
      %v2759 = vsub.f32 %v306, %v2758
      %v2760 = vand.u32 %v2759, 4294901760
      %v2761 = vsub.f32 %v2759, %v2760
      %v2762 = vand.u32 %v2761, 4294901760
      %2763 = vmatmul.f32.gmra.mxu0 %v2762
      %v2764 = vpop.f32.mrf.mxu0
      %v2765 = vadd.f32 0.0, %v2764
      %v2766 = vand.u32 %v309, 4294901760
      %v2767 = vsub.f32 %v309, %v2766
      %v2768 = vand.u32 %v2767, 4294901760
      %v2769 = vsub.f32 %v2767, %v2768
      %v2770 = vand.u32 %v2769, 4294901760
      %2771 = vmatmul.f32.gmra.mxu0 %v2770
      %v2772 = vpop.f32.mrf.mxu0
      %v2773 = vadd.f32 0.0, %v2772
      %v2774 = vand.u32 %v312, 4294901760
      %v2775 = vsub.f32 %v312, %v2774
      %v2776 = vand.u32 %v2775, 4294901760
      %v2777 = vsub.f32 %v2775, %v2776
      %v2778 = vand.u32 %v2777, 4294901760
      %2779 = vmatmul.f32.gmra.mxu0 %v2778
      %v2780 = vpop.f32.mrf.mxu0
      %v2781 = vadd.f32 0.0, %v2780
      %v2782 = vand.u32 %v315, 4294901760
      %v2783 = vsub.f32 %v315, %v2782
      %v2784 = vand.u32 %v2783, 4294901760
      %v2785 = vsub.f32 %v2783, %v2784
      %v2786 = vand.u32 %v2785, 4294901760
      %2787 = vmatmul.f32.gmra.mxu0 %v2786
      %v2788 = vpop.f32.mrf.mxu0
      %v2789 = vadd.f32 0.0, %v2788
      %v2790 = vand.u32 %v318, 4294901760
      %v2791 = vsub.f32 %v318, %v2790
      %v2792 = vand.u32 %v2791, 4294901760
      %v2793 = vsub.f32 %v2791, %v2792
      %v2794 = vand.u32 %v2793, 4294901760
      %2795 = vmatmul.f32.gmra.mxu0 %v2794
      %v2796 = vpop.f32.mrf.mxu0
      %v2797 = vadd.f32 0.0, %v2796
      %v2798 = vand.u32 %v321, 4294901760
      %v2799 = vsub.f32 %v321, %v2798
      %v2800 = vand.u32 %v2799, 4294901760
      %v2801 = vsub.f32 %v2799, %v2800
      %v2802 = vand.u32 %v2801, 4294901760
      %2803 = vmatmul.f32.gmra.mxu0 %v2802
      %v2804 = vpop.f32.mrf.mxu0
      %v2805 = vadd.f32 0.0, %v2804
      %v2806 = vand.u32 %v324, 4294901760
      %v2807 = vsub.f32 %v324, %v2806
      %v2808 = vand.u32 %v2807, 4294901760
      %v2809 = vsub.f32 %v2807, %v2808
      %v2810 = vand.u32 %v2809, 4294901760
      %2811 = vmatmul.f32.gmra.mxu0 %v2810
      %v2812 = vpop.f32.mrf.mxu0
      %v2813 = vadd.f32 0.0, %v2812
      %v2814 = vand.u32 %v327, 4294901760
      %v2815 = vsub.f32 %v327, %v2814
      %v2816 = vand.u32 %v2815, 4294901760
      %v2817 = vsub.f32 %v2815, %v2816
      %v2818 = vand.u32 %v2817, 4294901760
      %2819 = vmatmul.f32.gmra.mxu0 %v2818
      %v2820 = vpop.f32.mrf.mxu0
      %v2821 = vadd.f32 0.0, %v2820
      %v2822 = vand.u32 %v330, 4294901760
      %v2823 = vsub.f32 %v330, %v2822
      %v2824 = vand.u32 %v2823, 4294901760
      %v2825 = vsub.f32 %v2823, %v2824
      %v2826 = vand.u32 %v2825, 4294901760
      %2827 = vmatmul.f32.gmra.mxu0 %v2826
      %v2828 = vpop.f32.mrf.mxu0
      %v2829 = vadd.f32 0.0, %v2828
      %v2830 = vand.u32 %v333, 4294901760
      %v2831 = vsub.f32 %v333, %v2830
      %v2832 = vand.u32 %v2831, 4294901760
      %v2833 = vsub.f32 %v2831, %v2832
      %v2834 = vand.u32 %v2833, 4294901760
      %2835 = vmatmul.f32.gmra.mxu0 %v2834
      %v2836 = vpop.f32.mrf.mxu0
      %v2837 = vadd.f32 0.0, %v2836
      %v2838 = vand.u32 %v336, 4294901760
      %v2839 = vsub.f32 %v336, %v2838
      %v2840 = vand.u32 %v2839, 4294901760
      %v2841 = vsub.f32 %v2839, %v2840
      %v2842 = vand.u32 %v2841, 4294901760
      %2843 = vmatmul.f32.gmra.mxu0 %v2842
      %v2844 = vpop.f32.mrf.mxu0
      %v2845 = vadd.f32 0.0, %v2844
      %v2846 = vand.u32 %v339, 4294901760
      %v2847 = vsub.f32 %v339, %v2846
      %v2848 = vand.u32 %v2847, 4294901760
      %v2849 = vsub.f32 %v2847, %v2848
      %v2850 = vand.u32 %v2849, 4294901760
      %2851 = vmatmul.f32.gmra.mxu0 %v2850
      %v2852 = vpop.f32.mrf.mxu0
      %v2853 = vadd.f32 0.0, %v2852
      %v2854 = vand.u32 %v342, 4294901760
      %v2855 = vsub.f32 %v342, %v2854
      %v2856 = vand.u32 %v2855, 4294901760
      %v2857 = vsub.f32 %v2855, %v2856
      %v2858 = vand.u32 %v2857, 4294901760
      %2859 = vmatmul.f32.gmra.mxu0 %v2858
      %v2860 = vpop.f32.mrf.mxu0
      %v2861 = vadd.f32 0.0, %v2860
      %v2862 = vand.u32 %v345, 4294901760
      %v2863 = vsub.f32 %v345, %v2862
      %v2864 = vand.u32 %v2863, 4294901760
      %v2865 = vsub.f32 %v2863, %v2864
      %v2866 = vand.u32 %v2865, 4294901760
      %2867 = vmatmul.f32.gmra.mxu0 %v2866
      %v2868 = vpop.f32.mrf.mxu0
      %v2869 = vadd.f32 0.0, %v2868
      %v2870 = vand.u32 %v348, 4294901760
      %v2871 = vsub.f32 %v348, %v2870
      %v2872 = vand.u32 %v2871, 4294901760
      %v2873 = vsub.f32 %v2871, %v2872
      %v2874 = vand.u32 %v2873, 4294901760
      %2875 = vmatmul.f32.gmra.mxu0 %v2874
      %v2876 = vpop.f32.mrf.mxu0
      %v2877 = vadd.f32 0.0, %v2876
      %v2878 = vand.u32 %v351, 4294901760
      %v2879 = vsub.f32 %v351, %v2878
      %v2880 = vand.u32 %v2879, 4294901760
      %v2881 = vsub.f32 %v2879, %v2880
      %v2882 = vand.u32 %v2881, 4294901760
      %2883 = vmatmul.f32.gmra.mxu0 %v2882
      %v2884 = vpop.f32.mrf.mxu0
      %v2885 = vadd.f32 0.0, %v2884
      %v2886 = vand.u32 %v354, 4294901760
      %v2887 = vsub.f32 %v354, %v2886
      %v2888 = vand.u32 %v2887, 4294901760
      %v2889 = vsub.f32 %v2887, %v2888
      %v2890 = vand.u32 %v2889, 4294901760
      %2891 = vmatmul.f32.gmra.mxu0 %v2890
      %v2892 = vpop.f32.mrf.mxu0
      %v2893 = vadd.f32 0.0, %v2892
      %v2894 = vand.u32 %v357, 4294901760
      %v2895 = vsub.f32 %v357, %v2894
      %v2896 = vand.u32 %v2895, 4294901760
      %v2897 = vsub.f32 %v2895, %v2896
      %v2898 = vand.u32 %v2897, 4294901760
      %2899 = vmatmul.f32.gmra.mxu0 %v2898
      %v2900 = vpop.f32.mrf.mxu0
      %v2901 = vadd.f32 0.0, %v2900
      %v2902 = vand.u32 %v360, 4294901760
      %v2903 = vsub.f32 %v360, %v2902
      %v2904 = vand.u32 %v2903, 4294901760
      %v2905 = vsub.f32 %v2903, %v2904
      %v2906 = vand.u32 %v2905, 4294901760
      %2907 = vmatmul.f32.gmra.mxu0 %v2906
      %v2908 = vpop.f32.mrf.mxu0
      %v2909 = vadd.f32 0.0, %v2908
      %v2910 = vand.u32 %v363, 4294901760
      %v2911 = vsub.f32 %v363, %v2910
      %v2912 = vand.u32 %v2911, 4294901760
      %v2913 = vsub.f32 %v2911, %v2912
      %v2914 = vand.u32 %v2913, 4294901760
      %2915 = vmatmul.f32.gmra.mxu0 %v2914
      %v2916 = vpop.f32.mrf.mxu0
      %v2917 = vadd.f32 0.0, %v2916
      %v2918 = vand.u32 %v366, 4294901760
      %v2919 = vsub.f32 %v366, %v2918
      %v2920 = vand.u32 %v2919, 4294901760
      %v2921 = vsub.f32 %v2919, %v2920
      %v2922 = vand.u32 %v2921, 4294901760
      %2923 = vmatmul.f32.gmra.mxu0 %v2922
      %v2924 = vpop.f32.mrf.mxu0
      %v2925 = vadd.f32 0.0, %v2924
      %v2926 = vand.u32 %v369, 4294901760
      %v2927 = vsub.f32 %v369, %v2926
      %v2928 = vand.u32 %v2927, 4294901760
      %v2929 = vsub.f32 %v2927, %v2928
      %v2930 = vand.u32 %v2929, 4294901760
      %2931 = vmatmul.f32.gmra.mxu0 %v2930
      %v2932 = vpop.f32.mrf.mxu0
      %v2933 = vadd.f32 0.0, %v2932
      %v2934 = vand.u32 %v372, 4294901760
      %v2935 = vsub.f32 %v372, %v2934
      %v2936 = vand.u32 %v2935, 4294901760
      %v2937 = vsub.f32 %v2935, %v2936
      %v2938 = vand.u32 %v2937, 4294901760
      %2939 = vmatmul.f32.gmra.mxu0 %v2938
      %v2940 = vpop.f32.mrf.mxu0
      %v2941 = vadd.f32 0.0, %v2940
      %2942 = vdwg.mxu0
      %2943 = vmatpush.msra.mxu0 0.0
      %2944 = vmatpush.msra.mxu0 0.0
      %2945 = vmatpush.msra.mxu0 0.0
      %2946 = vmatpush.msra.mxu0 0.0
      %2947 = vmatpush.msra.mxu0 0.0
      %2948 = vmatpush.msra.mxu0 0.0
      %2949 = vmatpush.msra.mxu0 0.0
      %2950 = vmatpush.msra.mxu0 0.0
      %2951 = vmatpush.msra.mxu0 0.0
      %2952 = vmatpush.msra.mxu0 0.0
      %2953 = vmatpush.msra.mxu0 0.0
      %2954 = vmatpush.msra.mxu0 0.0
      %v2955 = vand.u32 %v276, 4294901760
      %v2956 = vsub.f32 %v276, %v2955
      %v2957 = vand.u32 %v2956, 4294901760
      %v2958 = vsub.f32 %v2956, %v2957
      %v2959 = vand.u32 %v2958, 4294901760
      %2960 = vmatpush.msra.mxu0 %v2959
      %v2961 = vand.u32 %v273, 4294901760
      %v2962 = vsub.f32 %v273, %v2961
      %v2963 = vand.u32 %v2962, 4294901760
      %v2964 = vsub.f32 %v2962, %v2963
      %v2965 = vand.u32 %v2964, 4294901760
      %2966 = vmatpush.msra.mxu0 %v2965
      %v2967 = vand.u32 %v270, 4294901760
      %v2968 = vsub.f32 %v270, %v2967
      %v2969 = vand.u32 %v2968, 4294901760
      %v2970 = vsub.f32 %v2968, %v2969
      %v2971 = vand.u32 %v2970, 4294901760
      %2972 = vmatpush.msra.mxu0 %v2971
      %v2973 = vand.u32 %v267, 4294901760
      %v2974 = vsub.f32 %v267, %v2973
      %v2975 = vand.u32 %v2974, 4294901760
      %v2976 = vsub.f32 %v2974, %v2975
      %v2977 = vand.u32 %v2976, 4294901760
      %2978 = vmatpush.msra.mxu0 %v2977
      %v2979 = vand.u32 %v279, 4294901760
      %2980 = vmatmul.f32.gmra.mxu0 %v2979
      %v2981 = vpop.f32.mrf.mxu0
      %v2982 = vadd.f32 %v2693, %v2981
      %v2983 = vand.u32 %v282, 4294901760
      %2984 = vmatmul.f32.gmra.mxu0 %v2983
      %v2985 = vpop.f32.mrf.mxu0
      %v2986 = vadd.f32 %v2701, %v2985
      %v2987 = vand.u32 %v285, 4294901760
      %2988 = vmatmul.f32.gmra.mxu0 %v2987
      %v2989 = vpop.f32.mrf.mxu0
      %v2990 = vadd.f32 %v2709, %v2989
      %v2991 = vand.u32 %v288, 4294901760
      %2992 = vmatmul.f32.gmra.mxu0 %v2991
      %v2993 = vpop.f32.mrf.mxu0
      %v2994 = vadd.f32 %v2717, %v2993
      %v2995 = vand.u32 %v291, 4294901760
      %2996 = vmatmul.f32.gmra.mxu0 %v2995
      %v2997 = vpop.f32.mrf.mxu0
      %v2998 = vadd.f32 %v2725, %v2997
      %v2999 = vand.u32 %v294, 4294901760
      %3000 = vmatmul.f32.gmra.mxu0 %v2999
      %v3001 = vpop.f32.mrf.mxu0
      %v3002 = vadd.f32 %v2733, %v3001
      %v3003 = vand.u32 %v297, 4294901760
      %3004 = vmatmul.f32.gmra.mxu0 %v3003
      %v3005 = vpop.f32.mrf.mxu0
      %v3006 = vadd.f32 %v2741, %v3005
      %v3007 = vand.u32 %v300, 4294901760
      %3008 = vmatmul.f32.gmra.mxu0 %v3007
      %v3009 = vpop.f32.mrf.mxu0
      %v3010 = vadd.f32 %v2749, %v3009
      %v3011 = vand.u32 %v303, 4294901760
      %3012 = vmatmul.f32.gmra.mxu0 %v3011
      %v3013 = vpop.f32.mrf.mxu0
      %v3014 = vadd.f32 %v2757, %v3013
      %v3015 = vand.u32 %v306, 4294901760
      %3016 = vmatmul.f32.gmra.mxu0 %v3015
      %v3017 = vpop.f32.mrf.mxu0
      %v3018 = vadd.f32 %v2765, %v3017
      %v3019 = vand.u32 %v309, 4294901760
      %3020 = vmatmul.f32.gmra.mxu0 %v3019
      %v3021 = vpop.f32.mrf.mxu0
      %v3022 = vadd.f32 %v2773, %v3021
      %v3023 = vand.u32 %v312, 4294901760
      %3024 = vmatmul.f32.gmra.mxu0 %v3023
      %v3025 = vpop.f32.mrf.mxu0
      %v3026 = vadd.f32 %v2781, %v3025
      %v3027 = vand.u32 %v315, 4294901760
      %3028 = vmatmul.f32.gmra.mxu0 %v3027
      %v3029 = vpop.f32.mrf.mxu0
      %v3030 = vadd.f32 %v2789, %v3029
      %v3031 = vand.u32 %v318, 4294901760
      %3032 = vmatmul.f32.gmra.mxu0 %v3031
      %v3033 = vpop.f32.mrf.mxu0
      %v3034 = vadd.f32 %v2797, %v3033
      %v3035 = vand.u32 %v321, 4294901760
      %3036 = vmatmul.f32.gmra.mxu0 %v3035
      %v3037 = vpop.f32.mrf.mxu0
      %v3038 = vadd.f32 %v2805, %v3037
      %v3039 = vand.u32 %v324, 4294901760
      %3040 = vmatmul.f32.gmra.mxu0 %v3039
      %v3041 = vpop.f32.mrf.mxu0
      %v3042 = vadd.f32 %v2813, %v3041
      %v3043 = vand.u32 %v327, 4294901760
      %3044 = vmatmul.f32.gmra.mxu0 %v3043
      %v3045 = vpop.f32.mrf.mxu0
      %v3046 = vadd.f32 %v2821, %v3045
      %v3047 = vand.u32 %v330, 4294901760
      %3048 = vmatmul.f32.gmra.mxu0 %v3047
      %v3049 = vpop.f32.mrf.mxu0
      %v3050 = vadd.f32 %v2829, %v3049
      %v3051 = vand.u32 %v333, 4294901760
      %3052 = vmatmul.f32.gmra.mxu0 %v3051
      %v3053 = vpop.f32.mrf.mxu0
      %v3054 = vadd.f32 %v2837, %v3053
      %v3055 = vand.u32 %v336, 4294901760
      %3056 = vmatmul.f32.gmra.mxu0 %v3055
      %v3057 = vpop.f32.mrf.mxu0
      %v3058 = vadd.f32 %v2845, %v3057
      %v3059 = vand.u32 %v339, 4294901760
      %3060 = vmatmul.f32.gmra.mxu0 %v3059
      %v3061 = vpop.f32.mrf.mxu0
      %v3062 = vadd.f32 %v2853, %v3061
      %v3063 = vand.u32 %v342, 4294901760
      %3064 = vmatmul.f32.gmra.mxu0 %v3063
      %v3065 = vpop.f32.mrf.mxu0
      %v3066 = vadd.f32 %v2861, %v3065
      %v3067 = vand.u32 %v345, 4294901760
      %3068 = vmatmul.f32.gmra.mxu0 %v3067
      %v3069 = vpop.f32.mrf.mxu0
      %v3070 = vadd.f32 %v2869, %v3069
      %v3071 = vand.u32 %v348, 4294901760
      %3072 = vmatmul.f32.gmra.mxu0 %v3071
      %v3073 = vpop.f32.mrf.mxu0
      %v3074 = vadd.f32 %v2877, %v3073
      %v3075 = vand.u32 %v351, 4294901760
      %3076 = vmatmul.f32.gmra.mxu0 %v3075
      %v3077 = vpop.f32.mrf.mxu0
      %v3078 = vadd.f32 %v2885, %v3077
      %v3079 = vand.u32 %v354, 4294901760
      %3080 = vmatmul.f32.gmra.mxu0 %v3079
      %v3081 = vpop.f32.mrf.mxu0
      %v3082 = vadd.f32 %v2893, %v3081
      %v3083 = vand.u32 %v357, 4294901760
      %3084 = vmatmul.f32.gmra.mxu0 %v3083
      %v3085 = vpop.f32.mrf.mxu0
      %v3086 = vadd.f32 %v2901, %v3085
      %v3087 = vand.u32 %v360, 4294901760
      %3088 = vmatmul.f32.gmra.mxu0 %v3087
      %v3089 = vpop.f32.mrf.mxu0
      %v3090 = vadd.f32 %v2909, %v3089
      %v3091 = vand.u32 %v363, 4294901760
      %3092 = vmatmul.f32.gmra.mxu0 %v3091
      %v3093 = vpop.f32.mrf.mxu0
      %v3094 = vadd.f32 %v2917, %v3093
      %v3095 = vand.u32 %v366, 4294901760
      %3096 = vmatmul.f32.gmra.mxu0 %v3095
      %v3097 = vpop.f32.mrf.mxu0
      %v3098 = vadd.f32 %v2925, %v3097
      %v3099 = vand.u32 %v369, 4294901760
      %3100 = vmatmul.f32.gmra.mxu0 %v3099
      %v3101 = vpop.f32.mrf.mxu0
      %v3102 = vadd.f32 %v2933, %v3101
      %v3103 = vand.u32 %v372, 4294901760
      %3104 = vmatmul.f32.gmra.mxu0 %v3103
      %v3105 = vpop.f32.mrf.mxu0
      %v3106 = vadd.f32 %v2941, %v3105
      %3107 = vdwg.mxu0
      %3108 = vmatpush.msra.mxu0 0.0
      %3109 = vmatpush.msra.mxu0 0.0
      %3110 = vmatpush.msra.mxu0 0.0
      %3111 = vmatpush.msra.mxu0 0.0
      %3112 = vmatpush.msra.mxu0 0.0
      %3113 = vmatpush.msra.mxu0 0.0
      %3114 = vmatpush.msra.mxu0 0.0
      %3115 = vmatpush.msra.mxu0 0.0
      %3116 = vmatpush.msra.mxu0 0.0
      %3117 = vmatpush.msra.mxu0 0.0
      %3118 = vmatpush.msra.mxu0 0.0
      %3119 = vmatpush.msra.mxu0 0.0
      %v3120 = vand.u32 %v276, 4294901760
      %v3121 = vsub.f32 %v276, %v3120
      %3122 = vmatpush.msra.mxu0 %v3121
      %v3123 = vand.u32 %v273, 4294901760
      %v3124 = vsub.f32 %v273, %v3123
      %3125 = vmatpush.msra.mxu0 %v3124
      %v3126 = vand.u32 %v270, 4294901760
      %v3127 = vsub.f32 %v270, %v3126
      %3128 = vmatpush.msra.mxu0 %v3127
      %v3129 = vand.u32 %v267, 4294901760
      %v3130 = vsub.f32 %v267, %v3129
      %3131 = vmatpush.msra.mxu0 %v3130
      %v3132 = vand.u32 %v279, 4294901760
      %v3133 = vsub.f32 %v279, %v3132
      %3134 = vmatmul.f32.gmra.mxu0 %v3133
      %v3135 = vpop.f32.mrf.mxu0
      %v3136 = vadd.f32 %v2982, %v3135
      %v3137 = vand.u32 %v282, 4294901760
      %v3138 = vsub.f32 %v282, %v3137
      %3139 = vmatmul.f32.gmra.mxu0 %v3138
      %v3140 = vpop.f32.mrf.mxu0
      %v3141 = vadd.f32 %v2986, %v3140
      %v3142 = vand.u32 %v285, 4294901760
      %v3143 = vsub.f32 %v285, %v3142
      %3144 = vmatmul.f32.gmra.mxu0 %v3143
      %v3145 = vpop.f32.mrf.mxu0
      %v3146 = vadd.f32 %v2990, %v3145
      %v3147 = vand.u32 %v288, 4294901760
      %v3148 = vsub.f32 %v288, %v3147
      %3149 = vmatmul.f32.gmra.mxu0 %v3148
      %v3150 = vpop.f32.mrf.mxu0
      %v3151 = vadd.f32 %v2994, %v3150
      %v3152 = vand.u32 %v291, 4294901760
      %v3153 = vsub.f32 %v291, %v3152
      %3154 = vmatmul.f32.gmra.mxu0 %v3153
      %v3155 = vpop.f32.mrf.mxu0
      %v3156 = vadd.f32 %v2998, %v3155
      %v3157 = vand.u32 %v294, 4294901760
      %v3158 = vsub.f32 %v294, %v3157
      %3159 = vmatmul.f32.gmra.mxu0 %v3158
      %v3160 = vpop.f32.mrf.mxu0
      %v3161 = vadd.f32 %v3002, %v3160
      %v3162 = vand.u32 %v297, 4294901760
      %v3163 = vsub.f32 %v297, %v3162
      %3164 = vmatmul.f32.gmra.mxu0 %v3163
      %v3165 = vpop.f32.mrf.mxu0
      %v3166 = vadd.f32 %v3006, %v3165
      %v3167 = vand.u32 %v300, 4294901760
      %v3168 = vsub.f32 %v300, %v3167
      %3169 = vmatmul.f32.gmra.mxu0 %v3168
      %v3170 = vpop.f32.mrf.mxu0
      %v3171 = vadd.f32 %v3010, %v3170
      %v3172 = vand.u32 %v303, 4294901760
      %v3173 = vsub.f32 %v303, %v3172
      %3174 = vmatmul.f32.gmra.mxu0 %v3173
      %v3175 = vpop.f32.mrf.mxu0
      %v3176 = vadd.f32 %v3014, %v3175
      %v3177 = vand.u32 %v306, 4294901760
      %v3178 = vsub.f32 %v306, %v3177
      %3179 = vmatmul.f32.gmra.mxu0 %v3178
      %v3180 = vpop.f32.mrf.mxu0
      %v3181 = vadd.f32 %v3018, %v3180
      %v3182 = vand.u32 %v309, 4294901760
      %v3183 = vsub.f32 %v309, %v3182
      %3184 = vmatmul.f32.gmra.mxu0 %v3183
      %v3185 = vpop.f32.mrf.mxu0
      %v3186 = vadd.f32 %v3022, %v3185
      %v3187 = vand.u32 %v312, 4294901760
      %v3188 = vsub.f32 %v312, %v3187
      %3189 = vmatmul.f32.gmra.mxu0 %v3188
      %v3190 = vpop.f32.mrf.mxu0
      %v3191 = vadd.f32 %v3026, %v3190
      %v3192 = vand.u32 %v315, 4294901760
      %v3193 = vsub.f32 %v315, %v3192
      %3194 = vmatmul.f32.gmra.mxu0 %v3193
      %v3195 = vpop.f32.mrf.mxu0
      %v3196 = vadd.f32 %v3030, %v3195
      %v3197 = vand.u32 %v318, 4294901760
      %v3198 = vsub.f32 %v318, %v3197
      %3199 = vmatmul.f32.gmra.mxu0 %v3198
      %v3200 = vpop.f32.mrf.mxu0
      %v3201 = vadd.f32 %v3034, %v3200
      %v3202 = vand.u32 %v321, 4294901760
      %v3203 = vsub.f32 %v321, %v3202
      %3204 = vmatmul.f32.gmra.mxu0 %v3203
      %v3205 = vpop.f32.mrf.mxu0
      %v3206 = vadd.f32 %v3038, %v3205
      %v3207 = vand.u32 %v324, 4294901760
      %v3208 = vsub.f32 %v324, %v3207
      %3209 = vmatmul.f32.gmra.mxu0 %v3208
      %v3210 = vpop.f32.mrf.mxu0
      %v3211 = vadd.f32 %v3042, %v3210
      %v3212 = vand.u32 %v327, 4294901760
      %v3213 = vsub.f32 %v327, %v3212
      %3214 = vmatmul.f32.gmra.mxu0 %v3213
      %v3215 = vpop.f32.mrf.mxu0
      %v3216 = vadd.f32 %v3046, %v3215
      %v3217 = vand.u32 %v330, 4294901760
      %v3218 = vsub.f32 %v330, %v3217
      %3219 = vmatmul.f32.gmra.mxu0 %v3218
      %v3220 = vpop.f32.mrf.mxu0
      %v3221 = vadd.f32 %v3050, %v3220
      %v3222 = vand.u32 %v333, 4294901760
      %v3223 = vsub.f32 %v333, %v3222
      %3224 = vmatmul.f32.gmra.mxu0 %v3223
      %v3225 = vpop.f32.mrf.mxu0
      %v3226 = vadd.f32 %v3054, %v3225
      %v3227 = vand.u32 %v336, 4294901760
      %v3228 = vsub.f32 %v336, %v3227
      %3229 = vmatmul.f32.gmra.mxu0 %v3228
      %v3230 = vpop.f32.mrf.mxu0
      %v3231 = vadd.f32 %v3058, %v3230
      %v3232 = vand.u32 %v339, 4294901760
      %v3233 = vsub.f32 %v339, %v3232
      %3234 = vmatmul.f32.gmra.mxu0 %v3233
      %v3235 = vpop.f32.mrf.mxu0
      %v3236 = vadd.f32 %v3062, %v3235
      %v3237 = vand.u32 %v342, 4294901760
      %v3238 = vsub.f32 %v342, %v3237
      %3239 = vmatmul.f32.gmra.mxu0 %v3238
      %v3240 = vpop.f32.mrf.mxu0
      %v3241 = vadd.f32 %v3066, %v3240
      %v3242 = vand.u32 %v345, 4294901760
      %v3243 = vsub.f32 %v345, %v3242
      %3244 = vmatmul.f32.gmra.mxu0 %v3243
      %v3245 = vpop.f32.mrf.mxu0
      %v3246 = vadd.f32 %v3070, %v3245
      %v3247 = vand.u32 %v348, 4294901760
      %v3248 = vsub.f32 %v348, %v3247
      %3249 = vmatmul.f32.gmra.mxu0 %v3248
      %v3250 = vpop.f32.mrf.mxu0
      %v3251 = vadd.f32 %v3074, %v3250
      %v3252 = vand.u32 %v351, 4294901760
      %v3253 = vsub.f32 %v351, %v3252
      %3254 = vmatmul.f32.gmra.mxu0 %v3253
      %v3255 = vpop.f32.mrf.mxu0
      %v3256 = vadd.f32 %v3078, %v3255
      %v3257 = vand.u32 %v354, 4294901760
      %v3258 = vsub.f32 %v354, %v3257
      %3259 = vmatmul.f32.gmra.mxu0 %v3258
      %v3260 = vpop.f32.mrf.mxu0
      %v3261 = vadd.f32 %v3082, %v3260
      %v3262 = vand.u32 %v357, 4294901760
      %v3263 = vsub.f32 %v357, %v3262
      %3264 = vmatmul.f32.gmra.mxu0 %v3263
      %v3265 = vpop.f32.mrf.mxu0
      %v3266 = vadd.f32 %v3086, %v3265
      %v3267 = vand.u32 %v360, 4294901760
      %v3268 = vsub.f32 %v360, %v3267
      %3269 = vmatmul.f32.gmra.mxu0 %v3268
      %v3270 = vpop.f32.mrf.mxu0
      %v3271 = vadd.f32 %v3090, %v3270
      %v3272 = vand.u32 %v363, 4294901760
      %v3273 = vsub.f32 %v363, %v3272
      %3274 = vmatmul.f32.gmra.mxu0 %v3273
      %v3275 = vpop.f32.mrf.mxu0
      %v3276 = vadd.f32 %v3094, %v3275
      %v3277 = vand.u32 %v366, 4294901760
      %v3278 = vsub.f32 %v366, %v3277
      %3279 = vmatmul.f32.gmra.mxu0 %v3278
      %v3280 = vpop.f32.mrf.mxu0
      %v3281 = vadd.f32 %v3098, %v3280
      %v3282 = vand.u32 %v369, 4294901760
      %v3283 = vsub.f32 %v369, %v3282
      %3284 = vmatmul.f32.gmra.mxu0 %v3283
      %v3285 = vpop.f32.mrf.mxu0
      %v3286 = vadd.f32 %v3102, %v3285
      %v3287 = vand.u32 %v372, 4294901760
      %v3288 = vsub.f32 %v372, %v3287
      %3289 = vmatmul.f32.gmra.mxu0 %v3288
      %v3290 = vpop.f32.mrf.mxu0
      %v3291 = vadd.f32 %v3106, %v3290
      %3292 = vdwg.mxu0
      %3293 = vmatpush.msra.mxu0 0.0
      %3294 = vmatpush.msra.mxu0 0.0
      %3295 = vmatpush.msra.mxu0 0.0
      %3296 = vmatpush.msra.mxu0 0.0
      %3297 = vmatpush.msra.mxu0 0.0
      %3298 = vmatpush.msra.mxu0 0.0
      %3299 = vmatpush.msra.mxu0 0.0
      %3300 = vmatpush.msra.mxu0 0.0
      %3301 = vmatpush.msra.mxu0 0.0
      %3302 = vmatpush.msra.mxu0 0.0
      %3303 = vmatpush.msra.mxu0 0.0
      %3304 = vmatpush.msra.mxu0 0.0
      %v3305 = vand.u32 %v276, 4294901760
      %3306 = vmatpush.msra.mxu0 %v3305
      %v3307 = vand.u32 %v273, 4294901760
      %3308 = vmatpush.msra.mxu0 %v3307
      %v3309 = vand.u32 %v270, 4294901760
      %3310 = vmatpush.msra.mxu0 %v3309
      %v3311 = vand.u32 %v267, 4294901760
      %3312 = vmatpush.msra.mxu0 %v3311
      %v3313 = vand.u32 %v279, 4294901760
      %v3314 = vsub.f32 %v279, %v3313
      %v3315 = vand.u32 %v3314, 4294901760
      %3316 = vmatmul.f32.gmra.mxu0 %v3315
      %v3317 = vpop.f32.mrf.mxu0
      %v3318 = vadd.f32 %v3136, %v3317
      %v3319 = vand.u32 %v282, 4294901760
      %v3320 = vsub.f32 %v282, %v3319
      %v3321 = vand.u32 %v3320, 4294901760
      %3322 = vmatmul.f32.gmra.mxu0 %v3321
      %v3323 = vpop.f32.mrf.mxu0
      %v3324 = vadd.f32 %v3141, %v3323
      %v3325 = vand.u32 %v285, 4294901760
      %v3326 = vsub.f32 %v285, %v3325
      %v3327 = vand.u32 %v3326, 4294901760
      %3328 = vmatmul.f32.gmra.mxu0 %v3327
      %v3329 = vpop.f32.mrf.mxu0
      %v3330 = vadd.f32 %v3146, %v3329
      %v3331 = vand.u32 %v288, 4294901760
      %v3332 = vsub.f32 %v288, %v3331
      %v3333 = vand.u32 %v3332, 4294901760
      %3334 = vmatmul.f32.gmra.mxu0 %v3333
      %v3335 = vpop.f32.mrf.mxu0
      %v3336 = vadd.f32 %v3151, %v3335
      %v3337 = vand.u32 %v291, 4294901760
      %v3338 = vsub.f32 %v291, %v3337
      %v3339 = vand.u32 %v3338, 4294901760
      %3340 = vmatmul.f32.gmra.mxu0 %v3339
      %v3341 = vpop.f32.mrf.mxu0
      %v3342 = vadd.f32 %v3156, %v3341
      %v3343 = vand.u32 %v294, 4294901760
      %v3344 = vsub.f32 %v294, %v3343
      %v3345 = vand.u32 %v3344, 4294901760
      %3346 = vmatmul.f32.gmra.mxu0 %v3345
      %v3347 = vpop.f32.mrf.mxu0
      %v3348 = vadd.f32 %v3161, %v3347
      %v3349 = vand.u32 %v297, 4294901760
      %v3350 = vsub.f32 %v297, %v3349
      %v3351 = vand.u32 %v3350, 4294901760
      %3352 = vmatmul.f32.gmra.mxu0 %v3351
      %v3353 = vpop.f32.mrf.mxu0
      %v3354 = vadd.f32 %v3166, %v3353
      %v3355 = vand.u32 %v300, 4294901760
      %v3356 = vsub.f32 %v300, %v3355
      %v3357 = vand.u32 %v3356, 4294901760
      %3358 = vmatmul.f32.gmra.mxu0 %v3357
      %v3359 = vpop.f32.mrf.mxu0
      %v3360 = vadd.f32 %v3171, %v3359
      %v3361 = vand.u32 %v303, 4294901760
      %v3362 = vsub.f32 %v303, %v3361
      %v3363 = vand.u32 %v3362, 4294901760
      %3364 = vmatmul.f32.gmra.mxu0 %v3363
      %v3365 = vpop.f32.mrf.mxu0
      %v3366 = vadd.f32 %v3176, %v3365
      %v3367 = vand.u32 %v306, 4294901760
      %v3368 = vsub.f32 %v306, %v3367
      %v3369 = vand.u32 %v3368, 4294901760
      %3370 = vmatmul.f32.gmra.mxu0 %v3369
      %v3371 = vpop.f32.mrf.mxu0
      %v3372 = vadd.f32 %v3181, %v3371
      %v3373 = vand.u32 %v309, 4294901760
      %v3374 = vsub.f32 %v309, %v3373
      %v3375 = vand.u32 %v3374, 4294901760
      %3376 = vmatmul.f32.gmra.mxu0 %v3375
      %v3377 = vpop.f32.mrf.mxu0
      %v3378 = vadd.f32 %v3186, %v3377
      %v3379 = vand.u32 %v312, 4294901760
      %v3380 = vsub.f32 %v312, %v3379
      %v3381 = vand.u32 %v3380, 4294901760
      %3382 = vmatmul.f32.gmra.mxu0 %v3381
      %v3383 = vpop.f32.mrf.mxu0
      %v3384 = vadd.f32 %v3191, %v3383
      %v3385 = vand.u32 %v315, 4294901760
      %v3386 = vsub.f32 %v315, %v3385
      %v3387 = vand.u32 %v3386, 4294901760
      %3388 = vmatmul.f32.gmra.mxu0 %v3387
      %v3389 = vpop.f32.mrf.mxu0
      %v3390 = vadd.f32 %v3196, %v3389
      %v3391 = vand.u32 %v318, 4294901760
      %v3392 = vsub.f32 %v318, %v3391
      %v3393 = vand.u32 %v3392, 4294901760
      %3394 = vmatmul.f32.gmra.mxu0 %v3393
      %v3395 = vpop.f32.mrf.mxu0
      %v3396 = vadd.f32 %v3201, %v3395
      %v3397 = vand.u32 %v321, 4294901760
      %v3398 = vsub.f32 %v321, %v3397
      %v3399 = vand.u32 %v3398, 4294901760
      %3400 = vmatmul.f32.gmra.mxu0 %v3399
      %v3401 = vpop.f32.mrf.mxu0
      %v3402 = vadd.f32 %v3206, %v3401
      %v3403 = vand.u32 %v324, 4294901760
      %v3404 = vsub.f32 %v324, %v3403
      %v3405 = vand.u32 %v3404, 4294901760
      %3406 = vmatmul.f32.gmra.mxu0 %v3405
      %v3407 = vpop.f32.mrf.mxu0
      %v3408 = vadd.f32 %v3211, %v3407
      %v3409 = vand.u32 %v327, 4294901760
      %v3410 = vsub.f32 %v327, %v3409
      %v3411 = vand.u32 %v3410, 4294901760
      %3412 = vmatmul.f32.gmra.mxu0 %v3411
      %v3413 = vpop.f32.mrf.mxu0
      %v3414 = vadd.f32 %v3216, %v3413
      %v3415 = vand.u32 %v330, 4294901760
      %v3416 = vsub.f32 %v330, %v3415
      %v3417 = vand.u32 %v3416, 4294901760
      %3418 = vmatmul.f32.gmra.mxu0 %v3417
      %v3419 = vpop.f32.mrf.mxu0
      %v3420 = vadd.f32 %v3221, %v3419
      %v3421 = vand.u32 %v333, 4294901760
      %v3422 = vsub.f32 %v333, %v3421
      %v3423 = vand.u32 %v3422, 4294901760
      %3424 = vmatmul.f32.gmra.mxu0 %v3423
      %v3425 = vpop.f32.mrf.mxu0
      %v3426 = vadd.f32 %v3226, %v3425
      %v3427 = vand.u32 %v336, 4294901760
      %v3428 = vsub.f32 %v336, %v3427
      %v3429 = vand.u32 %v3428, 4294901760
      %3430 = vmatmul.f32.gmra.mxu0 %v3429
      %v3431 = vpop.f32.mrf.mxu0
      %v3432 = vadd.f32 %v3231, %v3431
      %v3433 = vand.u32 %v339, 4294901760
      %v3434 = vsub.f32 %v339, %v3433
      %v3435 = vand.u32 %v3434, 4294901760
      %3436 = vmatmul.f32.gmra.mxu0 %v3435
      %v3437 = vpop.f32.mrf.mxu0
      %v3438 = vadd.f32 %v3236, %v3437
      %v3439 = vand.u32 %v342, 4294901760
      %v3440 = vsub.f32 %v342, %v3439
      %v3441 = vand.u32 %v3440, 4294901760
      %3442 = vmatmul.f32.gmra.mxu0 %v3441
      %v3443 = vpop.f32.mrf.mxu0
      %v3444 = vadd.f32 %v3241, %v3443
      %v3445 = vand.u32 %v345, 4294901760
      %v3446 = vsub.f32 %v345, %v3445
      %v3447 = vand.u32 %v3446, 4294901760
      %3448 = vmatmul.f32.gmra.mxu0 %v3447
      %v3449 = vpop.f32.mrf.mxu0
      %v3450 = vadd.f32 %v3246, %v3449
      %v3451 = vand.u32 %v348, 4294901760
      %v3452 = vsub.f32 %v348, %v3451
      %v3453 = vand.u32 %v3452, 4294901760
      %3454 = vmatmul.f32.gmra.mxu0 %v3453
      %v3455 = vpop.f32.mrf.mxu0
      %v3456 = vadd.f32 %v3251, %v3455
      %v3457 = vand.u32 %v351, 4294901760
      %v3458 = vsub.f32 %v351, %v3457
      %v3459 = vand.u32 %v3458, 4294901760
      %3460 = vmatmul.f32.gmra.mxu0 %v3459
      %v3461 = vpop.f32.mrf.mxu0
      %v3462 = vadd.f32 %v3256, %v3461
      %v3463 = vand.u32 %v354, 4294901760
      %v3464 = vsub.f32 %v354, %v3463
      %v3465 = vand.u32 %v3464, 4294901760
      %3466 = vmatmul.f32.gmra.mxu0 %v3465
      %v3467 = vpop.f32.mrf.mxu0
      %v3468 = vadd.f32 %v3261, %v3467
      %v3469 = vand.u32 %v357, 4294901760
      %v3470 = vsub.f32 %v357, %v3469
      %v3471 = vand.u32 %v3470, 4294901760
      %3472 = vmatmul.f32.gmra.mxu0 %v3471
      %v3473 = vpop.f32.mrf.mxu0
      %v3474 = vadd.f32 %v3266, %v3473
      %v3475 = vand.u32 %v360, 4294901760
      %v3476 = vsub.f32 %v360, %v3475
      %v3477 = vand.u32 %v3476, 4294901760
      %3478 = vmatmul.f32.gmra.mxu0 %v3477
      %v3479 = vpop.f32.mrf.mxu0
      %v3480 = vadd.f32 %v3271, %v3479
      %v3481 = vand.u32 %v363, 4294901760
      %v3482 = vsub.f32 %v363, %v3481
      %v3483 = vand.u32 %v3482, 4294901760
      %3484 = vmatmul.f32.gmra.mxu0 %v3483
      %v3485 = vpop.f32.mrf.mxu0
      %v3486 = vadd.f32 %v3276, %v3485
      %v3487 = vand.u32 %v366, 4294901760
      %v3488 = vsub.f32 %v366, %v3487
      %v3489 = vand.u32 %v3488, 4294901760
      %3490 = vmatmul.f32.gmra.mxu0 %v3489
      %v3491 = vpop.f32.mrf.mxu0
      %v3492 = vadd.f32 %v3281, %v3491
      %v3493 = vand.u32 %v369, 4294901760
      %v3494 = vsub.f32 %v369, %v3493
      %v3495 = vand.u32 %v3494, 4294901760
      %3496 = vmatmul.f32.gmra.mxu0 %v3495
      %v3497 = vpop.f32.mrf.mxu0
      %v3498 = vadd.f32 %v3286, %v3497
      %v3499 = vand.u32 %v372, 4294901760
      %v3500 = vsub.f32 %v372, %v3499
      %v3501 = vand.u32 %v3500, 4294901760
      %3502 = vmatmul.f32.gmra.mxu0 %v3501
      %v3503 = vpop.f32.mrf.mxu0
      %v3504 = vadd.f32 %v3291, %v3503
      %3505 = vdwg.mxu0
      %3506 = vmatpush.msra.mxu0 0.0
      %3507 = vmatpush.msra.mxu0 0.0
      %3508 = vmatpush.msra.mxu0 0.0
      %3509 = vmatpush.msra.mxu0 0.0
      %3510 = vmatpush.msra.mxu0 0.0
      %3511 = vmatpush.msra.mxu0 0.0
      %3512 = vmatpush.msra.mxu0 0.0
      %3513 = vmatpush.msra.mxu0 0.0
      %3514 = vmatpush.msra.mxu0 0.0
      %3515 = vmatpush.msra.mxu0 0.0
      %3516 = vmatpush.msra.mxu0 0.0
      %3517 = vmatpush.msra.mxu0 0.0
      %v3518 = vand.u32 %v276, 4294901760
      %v3519 = vsub.f32 %v276, %v3518
      %v3520 = vand.u32 %v3519, 4294901760
      %3521 = vmatpush.msra.mxu0 %v3520
      %v3522 = vand.u32 %v273, 4294901760
      %v3523 = vsub.f32 %v273, %v3522
      %v3524 = vand.u32 %v3523, 4294901760
      %3525 = vmatpush.msra.mxu0 %v3524
      %v3526 = vand.u32 %v270, 4294901760
      %v3527 = vsub.f32 %v270, %v3526
      %v3528 = vand.u32 %v3527, 4294901760
      %3529 = vmatpush.msra.mxu0 %v3528
      %v3530 = vand.u32 %v267, 4294901760
      %v3531 = vsub.f32 %v267, %v3530
      %v3532 = vand.u32 %v3531, 4294901760
      %3533 = vmatpush.msra.mxu0 %v3532
      %v3534 = vand.u32 %v279, 4294901760
      %3535 = vmatmul.f32.gmra.mxu0 %v3534
      %v3536 = vpop.f32.mrf.mxu0
      %v3537 = vadd.f32 %v3318, %v3536
      %v3538 = vand.u32 %v282, 4294901760
      %3539 = vmatmul.f32.gmra.mxu0 %v3538
      %v3540 = vpop.f32.mrf.mxu0
      %v3541 = vadd.f32 %v3324, %v3540
      %v3542 = vand.u32 %v285, 4294901760
      %3543 = vmatmul.f32.gmra.mxu0 %v3542
      %v3544 = vpop.f32.mrf.mxu0
      %v3545 = vadd.f32 %v3330, %v3544
      %v3546 = vand.u32 %v288, 4294901760
      %3547 = vmatmul.f32.gmra.mxu0 %v3546
      %v3548 = vpop.f32.mrf.mxu0
      %v3549 = vadd.f32 %v3336, %v3548
      %v3550 = vand.u32 %v291, 4294901760
      %3551 = vmatmul.f32.gmra.mxu0 %v3550
      %v3552 = vpop.f32.mrf.mxu0
      %v3553 = vadd.f32 %v3342, %v3552
      %v3554 = vand.u32 %v294, 4294901760
      %3555 = vmatmul.f32.gmra.mxu0 %v3554
      %v3556 = vpop.f32.mrf.mxu0
      %v3557 = vadd.f32 %v3348, %v3556
      %v3558 = vand.u32 %v297, 4294901760
      %3559 = vmatmul.f32.gmra.mxu0 %v3558
      %v3560 = vpop.f32.mrf.mxu0
      %v3561 = vadd.f32 %v3354, %v3560
      %v3562 = vand.u32 %v300, 4294901760
      %3563 = vmatmul.f32.gmra.mxu0 %v3562
      %v3564 = vpop.f32.mrf.mxu0
      %v3565 = vadd.f32 %v3360, %v3564
      %v3566 = vand.u32 %v303, 4294901760
      %3567 = vmatmul.f32.gmra.mxu0 %v3566
      %v3568 = vpop.f32.mrf.mxu0
      %v3569 = vadd.f32 %v3366, %v3568
      %v3570 = vand.u32 %v306, 4294901760
      %3571 = vmatmul.f32.gmra.mxu0 %v3570
      %v3572 = vpop.f32.mrf.mxu0
      %v3573 = vadd.f32 %v3372, %v3572
      %v3574 = vand.u32 %v309, 4294901760
      %3575 = vmatmul.f32.gmra.mxu0 %v3574
      %v3576 = vpop.f32.mrf.mxu0
      %v3577 = vadd.f32 %v3378, %v3576
      %v3578 = vand.u32 %v312, 4294901760
      %3579 = vmatmul.f32.gmra.mxu0 %v3578
      %v3580 = vpop.f32.mrf.mxu0
      %v3581 = vadd.f32 %v3384, %v3580
      %v3582 = vand.u32 %v315, 4294901760
      %3583 = vmatmul.f32.gmra.mxu0 %v3582
      %v3584 = vpop.f32.mrf.mxu0
      %v3585 = vadd.f32 %v3390, %v3584
      %v3586 = vand.u32 %v318, 4294901760
      %3587 = vmatmul.f32.gmra.mxu0 %v3586
      %v3588 = vpop.f32.mrf.mxu0
      %v3589 = vadd.f32 %v3396, %v3588
      %v3590 = vand.u32 %v321, 4294901760
      %3591 = vmatmul.f32.gmra.mxu0 %v3590
      %v3592 = vpop.f32.mrf.mxu0
      %v3593 = vadd.f32 %v3402, %v3592
      %v3594 = vand.u32 %v324, 4294901760
      %3595 = vmatmul.f32.gmra.mxu0 %v3594
      %v3596 = vpop.f32.mrf.mxu0
      %v3597 = vadd.f32 %v3408, %v3596
      %v3598 = vand.u32 %v327, 4294901760
      %3599 = vmatmul.f32.gmra.mxu0 %v3598
      %v3600 = vpop.f32.mrf.mxu0
      %v3601 = vadd.f32 %v3414, %v3600
      %v3602 = vand.u32 %v330, 4294901760
      %3603 = vmatmul.f32.gmra.mxu0 %v3602
      %v3604 = vpop.f32.mrf.mxu0
      %v3605 = vadd.f32 %v3420, %v3604
      %v3606 = vand.u32 %v333, 4294901760
      %3607 = vmatmul.f32.gmra.mxu0 %v3606
      %v3608 = vpop.f32.mrf.mxu0
      %v3609 = vadd.f32 %v3426, %v3608
      %v3610 = vand.u32 %v336, 4294901760
      %3611 = vmatmul.f32.gmra.mxu0 %v3610
      %v3612 = vpop.f32.mrf.mxu0
      %v3613 = vadd.f32 %v3432, %v3612
      %v3614 = vand.u32 %v339, 4294901760
      %3615 = vmatmul.f32.gmra.mxu0 %v3614
      %v3616 = vpop.f32.mrf.mxu0
      %v3617 = vadd.f32 %v3438, %v3616
      %v3618 = vand.u32 %v342, 4294901760
      %3619 = vmatmul.f32.gmra.mxu0 %v3618
      %v3620 = vpop.f32.mrf.mxu0
      %v3621 = vadd.f32 %v3444, %v3620
      %v3622 = vand.u32 %v345, 4294901760
      %3623 = vmatmul.f32.gmra.mxu0 %v3622
      %v3624 = vpop.f32.mrf.mxu0
      %v3625 = vadd.f32 %v3450, %v3624
      %v3626 = vand.u32 %v348, 4294901760
      %3627 = vmatmul.f32.gmra.mxu0 %v3626
      %v3628 = vpop.f32.mrf.mxu0
      %v3629 = vadd.f32 %v3456, %v3628
      %v3630 = vand.u32 %v351, 4294901760
      %3631 = vmatmul.f32.gmra.mxu0 %v3630
      %v3632 = vpop.f32.mrf.mxu0
      %v3633 = vadd.f32 %v3462, %v3632
      %v3634 = vand.u32 %v354, 4294901760
      %3635 = vmatmul.f32.gmra.mxu0 %v3634
      %v3636 = vpop.f32.mrf.mxu0
      %v3637 = vadd.f32 %v3468, %v3636
      %v3638 = vand.u32 %v357, 4294901760
      %3639 = vmatmul.f32.gmra.mxu0 %v3638
      %v3640 = vpop.f32.mrf.mxu0
      %v3641 = vadd.f32 %v3474, %v3640
      %v3642 = vand.u32 %v360, 4294901760
      %3643 = vmatmul.f32.gmra.mxu0 %v3642
      %v3644 = vpop.f32.mrf.mxu0
      %v3645 = vadd.f32 %v3480, %v3644
      %v3646 = vand.u32 %v363, 4294901760
      %3647 = vmatmul.f32.gmra.mxu0 %v3646
      %v3648 = vpop.f32.mrf.mxu0
      %v3649 = vadd.f32 %v3486, %v3648
      %v3650 = vand.u32 %v366, 4294901760
      %3651 = vmatmul.f32.gmra.mxu0 %v3650
      %v3652 = vpop.f32.mrf.mxu0
      %v3653 = vadd.f32 %v3492, %v3652
      %v3654 = vand.u32 %v369, 4294901760
      %3655 = vmatmul.f32.gmra.mxu0 %v3654
      %v3656 = vpop.f32.mrf.mxu0
      %v3657 = vadd.f32 %v3498, %v3656
      %v3658 = vand.u32 %v372, 4294901760
      %3659 = vmatmul.f32.gmra.mxu0 %v3658
      %v3660 = vpop.f32.mrf.mxu0
      %v3661 = vadd.f32 %v3504, %v3660
      %3662 = vdwg.mxu0
      %3663 = vmatpush.msra.mxu0 0.0
      %3664 = vmatpush.msra.mxu0 0.0
      %3665 = vmatpush.msra.mxu0 0.0
      %3666 = vmatpush.msra.mxu0 0.0
      %3667 = vmatpush.msra.mxu0 0.0
      %3668 = vmatpush.msra.mxu0 0.0
      %3669 = vmatpush.msra.mxu0 0.0
      %3670 = vmatpush.msra.mxu0 0.0
      %3671 = vmatpush.msra.mxu0 0.0
      %3672 = vmatpush.msra.mxu0 0.0
      %3673 = vmatpush.msra.mxu0 0.0
      %3674 = vmatpush.msra.mxu0 0.0
      %v3675 = vand.u32 %v276, 4294901760
      %3676 = vmatpush.msra.mxu0 %v3675
      %v3677 = vand.u32 %v273, 4294901760
      %3678 = vmatpush.msra.mxu0 %v3677
      %v3679 = vand.u32 %v270, 4294901760
      %3680 = vmatpush.msra.mxu0 %v3679
      %v3681 = vand.u32 %v267, 4294901760
      %3682 = vmatpush.msra.mxu0 %v3681
      %v3683 = vand.u32 %v279, 4294901760
      %3684 = vmatmul.f32.gmra.mxu0 %v3683
      %v3685 = vpop.f32.mrf.mxu0
      %v3686 = vadd.f32 %v3537, %v3685
      %v3687 = vand.u32 %v282, 4294901760
      %3688 = vmatmul.f32.gmra.mxu0 %v3687
      %v3689 = vpop.f32.mrf.mxu0
      %v3690 = vadd.f32 %v3541, %v3689
      %v3691 = vand.u32 %v285, 4294901760
      %3692 = vmatmul.f32.gmra.mxu0 %v3691
      %v3693 = vpop.f32.mrf.mxu0
      %v3694 = vadd.f32 %v3545, %v3693
      %v3695 = vand.u32 %v288, 4294901760
      %3696 = vmatmul.f32.gmra.mxu0 %v3695
      %v3697 = vpop.f32.mrf.mxu0
      %v3698 = vadd.f32 %v3549, %v3697
      %v3699 = vand.u32 %v291, 4294901760
      %3700 = vmatmul.f32.gmra.mxu0 %v3699
      %v3701 = vpop.f32.mrf.mxu0
      %v3702 = vadd.f32 %v3553, %v3701
      %v3703 = vand.u32 %v294, 4294901760
      %3704 = vmatmul.f32.gmra.mxu0 %v3703
      %v3705 = vpop.f32.mrf.mxu0
      %v3706 = vadd.f32 %v3557, %v3705
      %v3707 = vand.u32 %v297, 4294901760
      %3708 = vmatmul.f32.gmra.mxu0 %v3707
      %v3709 = vpop.f32.mrf.mxu0
      %v3710 = vadd.f32 %v3561, %v3709
      %v3711 = vand.u32 %v300, 4294901760
      %3712 = vmatmul.f32.gmra.mxu0 %v3711
      %v3713 = vpop.f32.mrf.mxu0
      %v3714 = vadd.f32 %v3565, %v3713
      %v3715 = vand.u32 %v303, 4294901760
      %3716 = vmatmul.f32.gmra.mxu0 %v3715
      %v3717 = vpop.f32.mrf.mxu0
      %v3718 = vadd.f32 %v3569, %v3717
      %v3719 = vand.u32 %v306, 4294901760
      %3720 = vmatmul.f32.gmra.mxu0 %v3719
      %v3721 = vpop.f32.mrf.mxu0
      %v3722 = vadd.f32 %v3573, %v3721
      %v3723 = vand.u32 %v309, 4294901760
      %3724 = vmatmul.f32.gmra.mxu0 %v3723
      %v3725 = vpop.f32.mrf.mxu0
      %v3726 = vadd.f32 %v3577, %v3725
      %v3727 = vand.u32 %v312, 4294901760
      %3728 = vmatmul.f32.gmra.mxu0 %v3727
      %v3729 = vpop.f32.mrf.mxu0
      %v3730 = vadd.f32 %v3581, %v3729
      %v3731 = vand.u32 %v315, 4294901760
      %3732 = vmatmul.f32.gmra.mxu0 %v3731
      %v3733 = vpop.f32.mrf.mxu0
      %v3734 = vadd.f32 %v3585, %v3733
      %v3735 = vand.u32 %v318, 4294901760
      %3736 = vmatmul.f32.gmra.mxu0 %v3735
      %v3737 = vpop.f32.mrf.mxu0
      %v3738 = vadd.f32 %v3589, %v3737
      %v3739 = vand.u32 %v321, 4294901760
      %3740 = vmatmul.f32.gmra.mxu0 %v3739
      %v3741 = vpop.f32.mrf.mxu0
      %v3742 = vadd.f32 %v3593, %v3741
      %v3743 = vand.u32 %v324, 4294901760
      %3744 = vmatmul.f32.gmra.mxu0 %v3743
      %v3745 = vpop.f32.mrf.mxu0
      %v3746 = vadd.f32 %v3597, %v3745
      %v3747 = vand.u32 %v327, 4294901760
      %3748 = vmatmul.f32.gmra.mxu0 %v3747
      %v3749 = vpop.f32.mrf.mxu0
      %v3750 = vadd.f32 %v3601, %v3749
      %v3751 = vand.u32 %v330, 4294901760
      %3752 = vmatmul.f32.gmra.mxu0 %v3751
      %v3753 = vpop.f32.mrf.mxu0
      %v3754 = vadd.f32 %v3605, %v3753
      %v3755 = vand.u32 %v333, 4294901760
      %3756 = vmatmul.f32.gmra.mxu0 %v3755
      %v3757 = vpop.f32.mrf.mxu0
      %v3758 = vadd.f32 %v3609, %v3757
      %v3759 = vand.u32 %v336, 4294901760
      %3760 = vmatmul.f32.gmra.mxu0 %v3759
      %v3761 = vpop.f32.mrf.mxu0
      %v3762 = vadd.f32 %v3613, %v3761
      %v3763 = vand.u32 %v339, 4294901760
      %3764 = vmatmul.f32.gmra.mxu0 %v3763
      %v3765 = vpop.f32.mrf.mxu0
      %v3766 = vadd.f32 %v3617, %v3765
      %v3767 = vand.u32 %v342, 4294901760
      %3768 = vmatmul.f32.gmra.mxu0 %v3767
      %v3769 = vpop.f32.mrf.mxu0
      %v3770 = vadd.f32 %v3621, %v3769
      %v3771 = vand.u32 %v345, 4294901760
      %3772 = vmatmul.f32.gmra.mxu0 %v3771
      %v3773 = vpop.f32.mrf.mxu0
      %v3774 = vadd.f32 %v3625, %v3773
      %v3775 = vand.u32 %v348, 4294901760
      %3776 = vmatmul.f32.gmra.mxu0 %v3775
      %v3777 = vpop.f32.mrf.mxu0
      %v3778 = vadd.f32 %v3629, %v3777
      %v3779 = vand.u32 %v351, 4294901760
      %3780 = vmatmul.f32.gmra.mxu0 %v3779
      %v3781 = vpop.f32.mrf.mxu0
      %v3782 = vadd.f32 %v3633, %v3781
      %v3783 = vand.u32 %v354, 4294901760
      %3784 = vmatmul.f32.gmra.mxu0 %v3783
      %v3785 = vpop.f32.mrf.mxu0
      %v3786 = vadd.f32 %v3637, %v3785
      %v3787 = vand.u32 %v357, 4294901760
      %3788 = vmatmul.f32.gmra.mxu0 %v3787
      %v3789 = vpop.f32.mrf.mxu0
      %v3790 = vadd.f32 %v3641, %v3789
      %v3791 = vand.u32 %v360, 4294901760
      %3792 = vmatmul.f32.gmra.mxu0 %v3791
      %v3793 = vpop.f32.mrf.mxu0
      %v3794 = vadd.f32 %v3645, %v3793
      %v3795 = vand.u32 %v363, 4294901760
      %3796 = vmatmul.f32.gmra.mxu0 %v3795
      %v3797 = vpop.f32.mrf.mxu0
      %v3798 = vadd.f32 %v3649, %v3797
      %v3799 = vand.u32 %v366, 4294901760
      %3800 = vmatmul.f32.gmra.mxu0 %v3799
      %v3801 = vpop.f32.mrf.mxu0
      %v3802 = vadd.f32 %v3653, %v3801
      %v3803 = vand.u32 %v369, 4294901760
      %3804 = vmatmul.f32.gmra.mxu0 %v3803
      %v3805 = vpop.f32.mrf.mxu0
      %v3806 = vadd.f32 %v3657, %v3805
      %v3807 = vand.u32 %v372, 4294901760
      %3808 = vmatmul.f32.gmra.mxu0 %v3807
      %v3809 = vpop.f32.mrf.mxu0
      %v3810 = vadd.f32 %v3661, %v3809
      %3811 = vdwg.mxu0
      %3812 = vst [vmem:[#allocation2] sm:$0xff] %v1394
      %3813 = vst [vmem:[#allocation2 + $0x8] sm:$0xff] %v2540
      %3814 = vst [vmem:[#allocation2 + $0x10] sm:$0xff] %v3686
      %3815 = vst [vmem:[#allocation2 + $0x18] sm:$0xff] %v1398
      %3816 = vst [vmem:[#allocation2 + $0x20] sm:$0xff] %v2544
      %3817 = vst [vmem:[#allocation2 + $0x28] sm:$0xff] %v3690
      %3818 = vst [vmem:[#allocation2 + $0x30] sm:$0xff] %v1402
      %3819 = vst [vmem:[#allocation2 + $0x38] sm:$0xff] %v2548
      %3820 = vst [vmem:[#allocation2 + $0x40] sm:$0xff] %v3694
      %3821 = vst [vmem:[#allocation2 + $0x48] sm:$0xff] %v1406
      %3822 = vst [vmem:[#allocation2 + $0x50] sm:$0xff] %v2552
      %3823 = vst [vmem:[#allocation2 + $0x58] sm:$0xff] %v3698
      %3824 = vst [vmem:[#allocation2 + $0x60] sm:$0xff] %v1410
      %3825 = vst [vmem:[#allocation2 + $0x68] sm:$0xff] %v2556
      %3826 = vst [vmem:[#allocation2 + $0x70] sm:$0xff] %v3702
      %3827 = vst [vmem:[#allocation2 + $0x78] sm:$0xff] %v1414
      %3828 = vst [vmem:[#allocation2 + $0x80] sm:$0xff] %v2560
      %3829 = vst [vmem:[#allocation2 + $0x88] sm:$0xff] %v3706
      %3830 = vst [vmem:[#allocation2 + $0x90] sm:$0xff] %v1418
      %3831 = vst [vmem:[#allocation2 + $0x98] sm:$0xff] %v2564
      %3832 = vst [vmem:[#allocation2 + $0xa0] sm:$0xff] %v3710
      %3833 = vst [vmem:[#allocation2 + $0xa8] sm:$0xff] %v1422
      %3834 = vst [vmem:[#allocation2 + $0xb0] sm:$0xff] %v2568
      %3835 = vst [vmem:[#allocation2 + $0xb8] sm:$0xff] %v3714
      %3836 = vst [vmem:[#allocation2 + $0xc0] sm:$0xff] %v1426
      %3837 = vst [vmem:[#allocation2 + $0xc8] sm:$0xff] %v2572
      %3838 = vst [vmem:[#allocation2 + $0xd0] sm:$0xff] %v3718
      %3839 = vst [vmem:[#allocation2 + $0xd8] sm:$0xff] %v1430
      %3840 = vst [vmem:[#allocation2 + $0xe0] sm:$0xff] %v2576
      %3841 = vst [vmem:[#allocation2 + $0xe8] sm:$0xff] %v3722
      %3842 = vst [vmem:[#allocation2 + $0xf0] sm:$0xff] %v1434
      %3843 = vst [vmem:[#allocation2 + $0xf8] sm:$0xff] %v2580
      %3844 = vst [vmem:[#allocation2 + $0x100] sm:$0xff] %v3726
      %3845 = vst [vmem:[#allocation2 + $0x108] sm:$0xff] %v1438
      %3846 = vst [vmem:[#allocation2 + $0x110] sm:$0xff] %v2584
      %3847 = vst [vmem:[#allocation2 + $0x118] sm:$0xff] %v3730
      %3848 = vst [vmem:[#allocation2 + $0x120] sm:$0xff] %v1442
      %3849 = vst [vmem:[#allocation2 + $0x128] sm:$0xff] %v2588
      %3850 = vst [vmem:[#allocation2 + $0x130] sm:$0xff] %v3734
      %3851 = vst [vmem:[#allocation2 + $0x138] sm:$0xff] %v1446
      %3852 = vst [vmem:[#allocation2 + $0x140] sm:$0xff] %v2592
      %3853 = vst [vmem:[#allocation2 + $0x148] sm:$0xff] %v3738
      %3854 = vst [vmem:[#allocation2 + $0x150] sm:$0xff] %v1450
      %3855 = vst [vmem:[#allocation2 + $0x158] sm:$0xff] %v2596
      %3856 = vst [vmem:[#allocation2 + $0x160] sm:$0xff] %v3742
      %3857 = vst [vmem:[#allocation2 + $0x168] sm:$0xff] %v1454
      %3858 = vst [vmem:[#allocation2 + $0x170] sm:$0xff] %v2600
      %3859 = vst [vmem:[#allocation2 + $0x178] sm:$0xff] %v3746
      %3860 = vst [vmem:[#allocation2 + $0x180] sm:$0xff] %v1458
      %3861 = vst [vmem:[#allocation2 + $0x188] sm:$0xff] %v2604
      %3862 = vst [vmem:[#allocation2 + $0x190] sm:$0xff] %v3750
      %3863 = vst [vmem:[#allocation2 + $0x198] sm:$0xff] %v1462
      %3864 = vst [vmem:[#allocation2 + $0x1a0] sm:$0xff] %v2608
      %3865 = vst [vmem:[#allocation2 + $0x1a8] sm:$0xff] %v3754
      %3866 = vst [vmem:[#allocation2 + $0x1b0] sm:$0xff] %v1466
      %3867 = vst [vmem:[#allocation2 + $0x1b8] sm:$0xff] %v2612
      %3868 = vst [vmem:[#allocation2 + $0x1c0] sm:$0xff] %v3758
      %3869 = vst [vmem:[#allocation2 + $0x1c8] sm:$0xff] %v1470
      %3870 = vst [vmem:[#allocation2 + $0x1d0] sm:$0xff] %v2616
      %3871 = vst [vmem:[#allocation2 + $0x1d8] sm:$0xff] %v3762
      %3872 = vst [vmem:[#allocation2 + $0x1e0] sm:$0xff] %v1474
      %3873 = vst [vmem:[#allocation2 + $0x1e8] sm:$0xff] %v2620
      %3874 = vst [vmem:[#allocation2 + $0x1f0] sm:$0xff] %v3766
      %3875 = vst [vmem:[#allocation2 + $0x1f8] sm:$0xff] %v1478
      %3876 = vst [vmem:[#allocation2 + $0x200] sm:$0xff] %v2624
      %3877 = vst [vmem:[#allocation2 + $0x208] sm:$0xff] %v3770
      %3878 = vst [vmem:[#allocation2 + $0x210] sm:$0xff] %v1482
      %3879 = vst [vmem:[#allocation2 + $0x218] sm:$0xff] %v2628
      %3880 = vst [vmem:[#allocation2 + $0x220] sm:$0xff] %v3774
      %3881 = vst [vmem:[#allocation2 + $0x228] sm:$0xff] %v1486
      %3882 = vst [vmem:[#allocation2 + $0x230] sm:$0xff] %v2632
      %3883 = vst [vmem:[#allocation2 + $0x238] sm:$0xff] %v3778
      %3884 = vst [vmem:[#allocation2 + $0x240] sm:$0xff] %v1490
      %3885 = vst [vmem:[#allocation2 + $0x248] sm:$0xff] %v2636
      %3886 = vst [vmem:[#allocation2 + $0x250] sm:$0xff] %v3782
      %3887 = vst [vmem:[#allocation2 + $0x258] sm:$0xff] %v1494
      %3888 = vst [vmem:[#allocation2 + $0x260] sm:$0xff] %v2640
      %3889 = vst [vmem:[#allocation2 + $0x268] sm:$0xff] %v3786
      %3890 = vst [vmem:[#allocation2 + $0x270] sm:$0xff] %v1498
      %3891 = vst [vmem:[#allocation2 + $0x278] sm:$0xff] %v2644
      %3892 = vst [vmem:[#allocation2 + $0x280] sm:$0xff] %v3790
      %3893 = vst [vmem:[#allocation2 + $0x288] sm:$0xff] %v1502
      %3894 = vst [vmem:[#allocation2 + $0x290] sm:$0xff] %v2648
      %3895 = vst [vmem:[#allocation2 + $0x298] sm:$0xff] %v3794
      %3896 = vst [vmem:[#allocation2 + $0x2a0] sm:$0xff] %v1506
      %3897 = vst [vmem:[#allocation2 + $0x2a8] sm:$0xff] %v2652
      %3898 = vst [vmem:[#allocation2 + $0x2b0] sm:$0xff] %v3798
      %3899 = vst [vmem:[#allocation2 + $0x2b8] sm:$0xff] %v1510
      %3900 = vst [vmem:[#allocation2 + $0x2c0] sm:$0xff] %v2656
      %3901 = vst [vmem:[#allocation2 + $0x2c8] sm:$0xff] %v3802
      %3902 = vst [vmem:[#allocation2 + $0x2d0] sm:$0xff] %v1514
      %3903 = vst [vmem:[#allocation2 + $0x2d8] sm:$0xff] %v2660
      %3904 = vst [vmem:[#allocation2 + $0x2e0] sm:$0xff] %v3806
      %3905 = vst [vmem:[#allocation2 + $0x2e8] sm:$0xff] %v1518
      %3906 = vst [vmem:[#allocation2 + $0x2f0] sm:$0xff] %v2664
      %3907 = vst [vmem:[#allocation2 + $0x2f8] sm:$0xff] %v3810
      %v3908 = vlaneseq
      %v3909 = vand.u32 %v3908, 127
      %v3910 = vadd.s32 %v3909, 128
      %v3911 = vadd.s32 %v3909, 256
      %v3912 = vld [vmem:[%s228] sm:$0xff]
      %v3913 = vsub.s32 %v3909, 70
      %v3914 = vsub.s32 %v3910, 70
      %v3915 = vsub.s32 %v3911, 70
      %3916 = vset.pattern.permute.xlu0 0
      %3917 = vperm.xlu0 %3916, %v3912
      %v3918 = vpop.permute.xlu0 %3917
      %v3919 = vadd.s32 %v3918, %v3913
      %v3920 = vadd.s32 %v3918, %v3914
      %v3921 = vadd.s32 %v3918, %v3915
      %vm3922 = vcmp.ge.s32.totalorder %v3919, 0
      %vm3923 = vcmp.ge.s32.totalorder %v3920, 0
      %vm3924 = vcmp.ge.s32.totalorder %v3921, 0
      %vm3925 = vcmp.lt.s32.totalorder %v3919, 64
      %vm3926 = vcmp.lt.s32.totalorder %v3920, 64
      %vm3927 = vcmp.lt.s32.totalorder %v3921, 64
      %vm3928 = vmand %vm3922, %vm3925
      %vm3929 = vmand %vm3923, %vm3926
      %vm3930 = vmand %vm3924, %vm3927
      %v3931 = vsel %vm3928, 1.0, 0.0
      %v3932 = vsel %vm3929, 1.0, 0.0
      %v3933 = vsel %vm3930, 1.0, 0.0
      %v3934 = vld [vmem:[%s219] sm:$0xff]
      %v3935 = vld [vmem:[%s219 + $0x8] sm:$0xff]
      %v3936 = vld [vmem:[%s219 + $0x10] sm:$0xff]
      %3937 = vrot.lane.b32.xlu0 %v3934, 31
      %v3938 = vpop.permute.xlu0 %3937
      %3939 = vrot.lane.b32.xlu0 %v3935, 31
      %v3940 = vpop.permute.xlu0 %3939
      %3941 = vrot.lane.b32.xlu0 %v3936, 31
      %v3942 = vpop.permute.xlu0 %3941
      %vm3943 = vcmp.lt.s32.totalorder %v3909, 31
      %v3944 = vsel %vm3943, %v3940, %v3942
      %v3945 = vsel %vm3943, %v3938, %v3940
      %v3946 = vsel %vm3943, %v3942, %v3938
      %v3947 = vld [vmem:[#allocation2] sm:$0xff]
      %v3948 = vld [vmem:[#allocation2 + $0x8] sm:$0xff]
      %v3949 = vld [vmem:[#allocation2 + $0x10] sm:$0xff]
      %v3950 = vmul.f32 %v3946, %v3947
      %v3951 = vmul.f32 %v3945, %v3948
      %v3952 = vmul.f32 %v3944, %v3949
      %v3953 = vadd.f32 %v3950, 0.0
      %v3954 = vadd.f32 %v3951, 0.0
      %v3955 = vadd.f32 %v3952, 0.0
      %3956 = vrot.lane.b32.xlu0 %v3934, 30
      %v3957 = vpop.permute.xlu0 %3956
      %3958 = vrot.lane.b32.xlu0 %v3935, 30
      %v3959 = vpop.permute.xlu0 %3958
      %3960 = vrot.lane.b32.xlu0 %v3936, 30
      %v3961 = vpop.permute.xlu0 %3960
      %vm3962 = vcmp.lt.s32.totalorder %v3909, 30
      %v3963 = vsel %vm3962, %v3959, %v3961
      %v3964 = vsel %vm3962, %v3957, %v3959
      %v3965 = vsel %vm3962, %v3961, %v3957
      %v3966 = vld [vmem:[#allocation2 + $0x18] sm:$0xff]
      %v3967 = vld [vmem:[#allocation2 + $0x20] sm:$0xff]
      %v3968 = vld [vmem:[#allocation2 + $0x28] sm:$0xff]
      %v3969 = vmul.f32 %v3965, %v3966
      %v3970 = vmul.f32 %v3964, %v3967
      %v3971 = vmul.f32 %v3963, %v3968
      %v3972 = vadd.f32 %v3953, %v3969
      %v3973 = vadd.f32 %v3954, %v3970
      %v3974 = vadd.f32 %v3955, %v3971
      %3975 = vrot.lane.b32.xlu0 %v3934, 29
      %v3976 = vpop.permute.xlu0 %3975
      %3977 = vrot.lane.b32.xlu0 %v3935, 29
      %v3978 = vpop.permute.xlu0 %3977
      %3979 = vrot.lane.b32.xlu0 %v3936, 29
      %v3980 = vpop.permute.xlu0 %3979
      %vm3981 = vcmp.lt.s32.totalorder %v3909, 29
      %v3982 = vsel %vm3981, %v3978, %v3980
      %v3983 = vsel %vm3981, %v3976, %v3978
      %v3984 = vsel %vm3981, %v3980, %v3976
      %v3985 = vld [vmem:[#allocation2 + $0x30] sm:$0xff]
      %v3986 = vld [vmem:[#allocation2 + $0x38] sm:$0xff]
      %v3987 = vld [vmem:[#allocation2 + $0x40] sm:$0xff]
      %v3988 = vmul.f32 %v3984, %v3985
      %v3989 = vmul.f32 %v3983, %v3986
      %v3990 = vmul.f32 %v3982, %v3987
      %v3991 = vadd.f32 %v3972, %v3988
      %v3992 = vadd.f32 %v3973, %v3989
      %v3993 = vadd.f32 %v3974, %v3990
      %3994 = vrot.lane.b32.xlu0 %v3934, 28
      %v3995 = vpop.permute.xlu0 %3994
      %3996 = vrot.lane.b32.xlu0 %v3935, 28
      %v3997 = vpop.permute.xlu0 %3996
      %3998 = vrot.lane.b32.xlu0 %v3936, 28
      %v3999 = vpop.permute.xlu0 %3998
      %vm4000 = vcmp.lt.s32.totalorder %v3909, 28
      %v4001 = vsel %vm4000, %v3997, %v3999
      %v4002 = vsel %vm4000, %v3995, %v3997
      %v4003 = vsel %vm4000, %v3999, %v3995
      %v4004 = vld [vmem:[#allocation2 + $0x48] sm:$0xff]
      %v4005 = vld [vmem:[#allocation2 + $0x50] sm:$0xff]
      %v4006 = vld [vmem:[#allocation2 + $0x58] sm:$0xff]
      %v4007 = vmul.f32 %v4003, %v4004
      %v4008 = vmul.f32 %v4002, %v4005
      %v4009 = vmul.f32 %v4001, %v4006
      %v4010 = vadd.f32 %v3991, %v4007
      %v4011 = vadd.f32 %v3992, %v4008
      %v4012 = vadd.f32 %v3993, %v4009
      %4013 = vrot.lane.b32.xlu0 %v3934, 27
      %v4014 = vpop.permute.xlu0 %4013
      %4015 = vrot.lane.b32.xlu0 %v3935, 27
      %v4016 = vpop.permute.xlu0 %4015
      %4017 = vrot.lane.b32.xlu0 %v3936, 27
      %v4018 = vpop.permute.xlu0 %4017
      %vm4019 = vcmp.lt.s32.totalorder %v3909, 27
      %v4020 = vsel %vm4019, %v4016, %v4018
      %v4021 = vsel %vm4019, %v4014, %v4016
      %v4022 = vsel %vm4019, %v4018, %v4014
      %v4023 = vld [vmem:[#allocation2 + $0x60] sm:$0xff]
      %v4024 = vld [vmem:[#allocation2 + $0x68] sm:$0xff]
      %v4025 = vld [vmem:[#allocation2 + $0x70] sm:$0xff]
      %v4026 = vmul.f32 %v4022, %v4023
      %v4027 = vmul.f32 %v4021, %v4024
      %v4028 = vmul.f32 %v4020, %v4025
      %v4029 = vadd.f32 %v4010, %v4026
      %v4030 = vadd.f32 %v4011, %v4027
      %v4031 = vadd.f32 %v4012, %v4028
      %4032 = vrot.lane.b32.xlu0 %v3934, 26
      %v4033 = vpop.permute.xlu0 %4032
      %4034 = vrot.lane.b32.xlu0 %v3935, 26
      %v4035 = vpop.permute.xlu0 %4034
      %4036 = vrot.lane.b32.xlu0 %v3936, 26
      %v4037 = vpop.permute.xlu0 %4036
      %vm4038 = vcmp.lt.s32.totalorder %v3909, 26
      %v4039 = vsel %vm4038, %v4035, %v4037
      %v4040 = vsel %vm4038, %v4033, %v4035
      %v4041 = vsel %vm4038, %v4037, %v4033
      %v4042 = vld [vmem:[#allocation2 + $0x78] sm:$0xff]
      %v4043 = vld [vmem:[#allocation2 + $0x80] sm:$0xff]
      %v4044 = vld [vmem:[#allocation2 + $0x88] sm:$0xff]
      %v4045 = vmul.f32 %v4041, %v4042
      %v4046 = vmul.f32 %v4040, %v4043
      %v4047 = vmul.f32 %v4039, %v4044
      %v4048 = vadd.f32 %v4029, %v4045
      %v4049 = vadd.f32 %v4030, %v4046
      %v4050 = vadd.f32 %v4031, %v4047
      %4051 = vrot.lane.b32.xlu0 %v3934, 25
      %v4052 = vpop.permute.xlu0 %4051
      %4053 = vrot.lane.b32.xlu0 %v3935, 25
      %v4054 = vpop.permute.xlu0 %4053
      %4055 = vrot.lane.b32.xlu0 %v3936, 25
      %v4056 = vpop.permute.xlu0 %4055
      %vm4057 = vcmp.lt.s32.totalorder %v3909, 25
      %v4058 = vsel %vm4057, %v4054, %v4056
      %v4059 = vsel %vm4057, %v4052, %v4054
      %v4060 = vsel %vm4057, %v4056, %v4052
      %v4061 = vld [vmem:[#allocation2 + $0x90] sm:$0xff]
      %v4062 = vld [vmem:[#allocation2 + $0x98] sm:$0xff]
      %v4063 = vld [vmem:[#allocation2 + $0xa0] sm:$0xff]
      %v4064 = vmul.f32 %v4060, %v4061
      %v4065 = vmul.f32 %v4059, %v4062
      %v4066 = vmul.f32 %v4058, %v4063
      %v4067 = vadd.f32 %v4048, %v4064
      %v4068 = vadd.f32 %v4049, %v4065
      %v4069 = vadd.f32 %v4050, %v4066
      %4070 = vrot.lane.b32.xlu0 %v3934, 24
      %v4071 = vpop.permute.xlu0 %4070
      %4072 = vrot.lane.b32.xlu0 %v3935, 24
      %v4073 = vpop.permute.xlu0 %4072
      %4074 = vrot.lane.b32.xlu0 %v3936, 24
      %v4075 = vpop.permute.xlu0 %4074
      %vm4076 = vcmp.lt.s32.totalorder %v3909, 24
      %v4077 = vsel %vm4076, %v4073, %v4075
      %v4078 = vsel %vm4076, %v4071, %v4073
      %v4079 = vsel %vm4076, %v4075, %v4071
      %v4080 = vld [vmem:[#allocation2 + $0xa8] sm:$0xff]
      %v4081 = vld [vmem:[#allocation2 + $0xb0] sm:$0xff]
      %v4082 = vld [vmem:[#allocation2 + $0xb8] sm:$0xff]
      %v4083 = vmul.f32 %v4079, %v4080
      %v4084 = vmul.f32 %v4078, %v4081
      %v4085 = vmul.f32 %v4077, %v4082
      %v4086 = vadd.f32 %v4067, %v4083
      %v4087 = vadd.f32 %v4068, %v4084
      %v4088 = vadd.f32 %v4069, %v4085
      %4089 = vrot.lane.b32.xlu0 %v3934, 23
      %v4090 = vpop.permute.xlu0 %4089
      %4091 = vrot.lane.b32.xlu0 %v3935, 23
      %v4092 = vpop.permute.xlu0 %4091
      %4093 = vrot.lane.b32.xlu0 %v3936, 23
      %v4094 = vpop.permute.xlu0 %4093
      %vm4095 = vcmp.lt.s32.totalorder %v3909, 23
      %v4096 = vsel %vm4095, %v4092, %v4094
      %v4097 = vsel %vm4095, %v4090, %v4092
      %v4098 = vsel %vm4095, %v4094, %v4090
      %v4099 = vld [vmem:[#allocation2 + $0xc0] sm:$0xff]
      %v4100 = vld [vmem:[#allocation2 + $0xc8] sm:$0xff]
      %v4101 = vld [vmem:[#allocation2 + $0xd0] sm:$0xff]
      %v4102 = vmul.f32 %v4098, %v4099
      %v4103 = vmul.f32 %v4097, %v4100
      %v4104 = vmul.f32 %v4096, %v4101
      %v4105 = vadd.f32 %v4086, %v4102
      %v4106 = vadd.f32 %v4087, %v4103
      %v4107 = vadd.f32 %v4088, %v4104
      %4108 = vrot.lane.b32.xlu0 %v3934, 22
      %v4109 = vpop.permute.xlu0 %4108
      %4110 = vrot.lane.b32.xlu0 %v3935, 22
      %v4111 = vpop.permute.xlu0 %4110
      %4112 = vrot.lane.b32.xlu0 %v3936, 22
      %v4113 = vpop.permute.xlu0 %4112
      %vm4114 = vcmp.lt.s32.totalorder %v3909, 22
      %v4115 = vsel %vm4114, %v4111, %v4113
      %v4116 = vsel %vm4114, %v4109, %v4111
      %v4117 = vsel %vm4114, %v4113, %v4109
      %v4118 = vld [vmem:[#allocation2 + $0xd8] sm:$0xff]
      %v4119 = vld [vmem:[#allocation2 + $0xe0] sm:$0xff]
      %v4120 = vld [vmem:[#allocation2 + $0xe8] sm:$0xff]
      %v4121 = vmul.f32 %v4117, %v4118
      %v4122 = vmul.f32 %v4116, %v4119
      %v4123 = vmul.f32 %v4115, %v4120
      %v4124 = vadd.f32 %v4105, %v4121
      %v4125 = vadd.f32 %v4106, %v4122
      %v4126 = vadd.f32 %v4107, %v4123
      %4127 = vrot.lane.b32.xlu0 %v3934, 21
      %v4128 = vpop.permute.xlu0 %4127
      %4129 = vrot.lane.b32.xlu0 %v3935, 21
      %v4130 = vpop.permute.xlu0 %4129
      %4131 = vrot.lane.b32.xlu0 %v3936, 21
      %v4132 = vpop.permute.xlu0 %4131
      %vm4133 = vcmp.lt.s32.totalorder %v3909, 21
      %v4134 = vsel %vm4133, %v4130, %v4132
      %v4135 = vsel %vm4133, %v4128, %v4130
      %v4136 = vsel %vm4133, %v4132, %v4128
      %v4137 = vld [vmem:[#allocation2 + $0xf0] sm:$0xff]
      %v4138 = vld [vmem:[#allocation2 + $0xf8] sm:$0xff]
      %v4139 = vld [vmem:[#allocation2 + $0x100] sm:$0xff]
      %v4140 = vmul.f32 %v4136, %v4137
      %v4141 = vmul.f32 %v4135, %v4138
      %v4142 = vmul.f32 %v4134, %v4139
      %v4143 = vadd.f32 %v4124, %v4140
      %v4144 = vadd.f32 %v4125, %v4141
      %v4145 = vadd.f32 %v4126, %v4142
      %4146 = vrot.lane.b32.xlu0 %v3934, 20
      %v4147 = vpop.permute.xlu0 %4146
      %4148 = vrot.lane.b32.xlu0 %v3935, 20
      %v4149 = vpop.permute.xlu0 %4148
      %4150 = vrot.lane.b32.xlu0 %v3936, 20
      %v4151 = vpop.permute.xlu0 %4150
      %vm4152 = vcmp.lt.s32.totalorder %v3909, 20
      %v4153 = vsel %vm4152, %v4149, %v4151
      %v4154 = vsel %vm4152, %v4147, %v4149
      %v4155 = vsel %vm4152, %v4151, %v4147
      %v4156 = vld [vmem:[#allocation2 + $0x108] sm:$0xff]
      %v4157 = vld [vmem:[#allocation2 + $0x110] sm:$0xff]
      %v4158 = vld [vmem:[#allocation2 + $0x118] sm:$0xff]
      %v4159 = vmul.f32 %v4155, %v4156
      %v4160 = vmul.f32 %v4154, %v4157
      %v4161 = vmul.f32 %v4153, %v4158
      %v4162 = vadd.f32 %v4143, %v4159
      %v4163 = vadd.f32 %v4144, %v4160
      %v4164 = vadd.f32 %v4145, %v4161
      %4165 = vrot.lane.b32.xlu0 %v3934, 19
      %v4166 = vpop.permute.xlu0 %4165
      %4167 = vrot.lane.b32.xlu0 %v3935, 19
      %v4168 = vpop.permute.xlu0 %4167
      %4169 = vrot.lane.b32.xlu0 %v3936, 19
      %v4170 = vpop.permute.xlu0 %4169
      %vm4171 = vcmp.lt.s32.totalorder %v3909, 19
      %v4172 = vsel %vm4171, %v4168, %v4170
      %v4173 = vsel %vm4171, %v4166, %v4168
      %v4174 = vsel %vm4171, %v4170, %v4166
      %v4175 = vld [vmem:[#allocation2 + $0x120] sm:$0xff]
      %v4176 = vld [vmem:[#allocation2 + $0x128] sm:$0xff]
      %v4177 = vld [vmem:[#allocation2 + $0x130] sm:$0xff]
      %v4178 = vmul.f32 %v4174, %v4175
      %v4179 = vmul.f32 %v4173, %v4176
      %v4180 = vmul.f32 %v4172, %v4177
      %v4181 = vadd.f32 %v4162, %v4178
      %v4182 = vadd.f32 %v4163, %v4179
      %v4183 = vadd.f32 %v4164, %v4180
      %4184 = vrot.lane.b32.xlu0 %v3934, 18
      %v4185 = vpop.permute.xlu0 %4184
      %4186 = vrot.lane.b32.xlu0 %v3935, 18
      %v4187 = vpop.permute.xlu0 %4186
      %4188 = vrot.lane.b32.xlu0 %v3936, 18
      %v4189 = vpop.permute.xlu0 %4188
      %vm4190 = vcmp.lt.s32.totalorder %v3909, 18
      %v4191 = vsel %vm4190, %v4187, %v4189
      %v4192 = vsel %vm4190, %v4185, %v4187
      %v4193 = vsel %vm4190, %v4189, %v4185
      %v4194 = vld [vmem:[#allocation2 + $0x138] sm:$0xff]
      %v4195 = vld [vmem:[#allocation2 + $0x140] sm:$0xff]
      %v4196 = vld [vmem:[#allocation2 + $0x148] sm:$0xff]
      %v4197 = vmul.f32 %v4193, %v4194
      %v4198 = vmul.f32 %v4192, %v4195
      %v4199 = vmul.f32 %v4191, %v4196
      %v4200 = vadd.f32 %v4181, %v4197
      %v4201 = vadd.f32 %v4182, %v4198
      %v4202 = vadd.f32 %v4183, %v4199
      %4203 = vrot.lane.b32.xlu0 %v3934, 17
      %v4204 = vpop.permute.xlu0 %4203
      %4205 = vrot.lane.b32.xlu0 %v3935, 17
      %v4206 = vpop.permute.xlu0 %4205
      %4207 = vrot.lane.b32.xlu0 %v3936, 17
      %v4208 = vpop.permute.xlu0 %4207
      %vm4209 = vcmp.lt.s32.totalorder %v3909, 17
      %v4210 = vsel %vm4209, %v4206, %v4208
      %v4211 = vsel %vm4209, %v4204, %v4206
      %v4212 = vsel %vm4209, %v4208, %v4204
      %v4213 = vld [vmem:[#allocation2 + $0x150] sm:$0xff]
      %v4214 = vld [vmem:[#allocation2 + $0x158] sm:$0xff]
      %v4215 = vld [vmem:[#allocation2 + $0x160] sm:$0xff]
      %v4216 = vmul.f32 %v4212, %v4213
      %v4217 = vmul.f32 %v4211, %v4214
      %v4218 = vmul.f32 %v4210, %v4215
      %v4219 = vadd.f32 %v4200, %v4216
      %v4220 = vadd.f32 %v4201, %v4217
      %v4221 = vadd.f32 %v4202, %v4218
      %4222 = vrot.lane.b32.xlu0 %v3934, 16
      %v4223 = vpop.permute.xlu0 %4222
      %4224 = vrot.lane.b32.xlu0 %v3935, 16
      %v4225 = vpop.permute.xlu0 %4224
      %4226 = vrot.lane.b32.xlu0 %v3936, 16
      %v4227 = vpop.permute.xlu0 %4226
      %vm4228 = vcmp.lt.s32.totalorder %v3909, 16
      %v4229 = vsel %vm4228, %v4225, %v4227
      %v4230 = vsel %vm4228, %v4223, %v4225
      %v4231 = vsel %vm4228, %v4227, %v4223
      %v4232 = vld [vmem:[#allocation2 + $0x168] sm:$0xff]
      %v4233 = vld [vmem:[#allocation2 + $0x170] sm:$0xff]
      %v4234 = vld [vmem:[#allocation2 + $0x178] sm:$0xff]
      %v4235 = vmul.f32 %v4231, %v4232
      %v4236 = vmul.f32 %v4230, %v4233
      %v4237 = vmul.f32 %v4229, %v4234
      %v4238 = vadd.f32 %v4219, %v4235
      %v4239 = vadd.f32 %v4220, %v4236
      %v4240 = vadd.f32 %v4221, %v4237
      %4241 = vrot.lane.b32.xlu0 %v3934, 15
      %v4242 = vpop.permute.xlu0 %4241
      %4243 = vrot.lane.b32.xlu0 %v3935, 15
      %v4244 = vpop.permute.xlu0 %4243
      %4245 = vrot.lane.b32.xlu0 %v3936, 15
      %v4246 = vpop.permute.xlu0 %4245
      %vm4247 = vcmp.lt.s32.totalorder %v3909, 15
      %v4248 = vsel %vm4247, %v4244, %v4246
      %v4249 = vsel %vm4247, %v4242, %v4244
      %v4250 = vsel %vm4247, %v4246, %v4242
      %v4251 = vld [vmem:[#allocation2 + $0x180] sm:$0xff]
      %v4252 = vld [vmem:[#allocation2 + $0x188] sm:$0xff]
      %v4253 = vld [vmem:[#allocation2 + $0x190] sm:$0xff]
      %v4254 = vmul.f32 %v4250, %v4251
      %v4255 = vmul.f32 %v4249, %v4252
      %v4256 = vmul.f32 %v4248, %v4253
      %v4257 = vadd.f32 %v4238, %v4254
      %v4258 = vadd.f32 %v4239, %v4255
      %v4259 = vadd.f32 %v4240, %v4256
      %4260 = vrot.lane.b32.xlu0 %v3934, 14
      %v4261 = vpop.permute.xlu0 %4260
      %4262 = vrot.lane.b32.xlu0 %v3935, 14
      %v4263 = vpop.permute.xlu0 %4262
      %4264 = vrot.lane.b32.xlu0 %v3936, 14
      %v4265 = vpop.permute.xlu0 %4264
      %vm4266 = vcmp.lt.s32.totalorder %v3909, 14
      %v4267 = vsel %vm4266, %v4263, %v4265
      %v4268 = vsel %vm4266, %v4261, %v4263
      %v4269 = vsel %vm4266, %v4265, %v4261
      %v4270 = vld [vmem:[#allocation2 + $0x198] sm:$0xff]
      %v4271 = vld [vmem:[#allocation2 + $0x1a0] sm:$0xff]
      %v4272 = vld [vmem:[#allocation2 + $0x1a8] sm:$0xff]
      %v4273 = vmul.f32 %v4269, %v4270
      %v4274 = vmul.f32 %v4268, %v4271
      %v4275 = vmul.f32 %v4267, %v4272
      %v4276 = vadd.f32 %v4257, %v4273
      %v4277 = vadd.f32 %v4258, %v4274
      %v4278 = vadd.f32 %v4259, %v4275
      %4279 = vrot.lane.b32.xlu0 %v3934, 13
      %v4280 = vpop.permute.xlu0 %4279
      %4281 = vrot.lane.b32.xlu0 %v3935, 13
      %v4282 = vpop.permute.xlu0 %4281
      %4283 = vrot.lane.b32.xlu0 %v3936, 13
      %v4284 = vpop.permute.xlu0 %4283
      %vm4285 = vcmp.lt.s32.totalorder %v3909, 13
      %v4286 = vsel %vm4285, %v4282, %v4284
      %v4287 = vsel %vm4285, %v4280, %v4282
      %v4288 = vsel %vm4285, %v4284, %v4280
      %v4289 = vld [vmem:[#allocation2 + $0x1b0] sm:$0xff]
      %v4290 = vld [vmem:[#allocation2 + $0x1b8] sm:$0xff]
      %v4291 = vld [vmem:[#allocation2 + $0x1c0] sm:$0xff]
      %v4292 = vmul.f32 %v4288, %v4289
      %v4293 = vmul.f32 %v4287, %v4290
      %v4294 = vmul.f32 %v4286, %v4291
      %v4295 = vadd.f32 %v4276, %v4292
      %v4296 = vadd.f32 %v4277, %v4293
      %v4297 = vadd.f32 %v4278, %v4294
      %4298 = vrot.lane.b32.xlu0 %v3934, 12
      %v4299 = vpop.permute.xlu0 %4298
      %4300 = vrot.lane.b32.xlu0 %v3935, 12
      %v4301 = vpop.permute.xlu0 %4300
      %4302 = vrot.lane.b32.xlu0 %v3936, 12
      %v4303 = vpop.permute.xlu0 %4302
      %vm4304 = vcmp.lt.s32.totalorder %v3909, 12
      %v4305 = vsel %vm4304, %v4301, %v4303
      %v4306 = vsel %vm4304, %v4299, %v4301
      %v4307 = vsel %vm4304, %v4303, %v4299
      %v4308 = vld [vmem:[#allocation2 + $0x1c8] sm:$0xff]
      %v4309 = vld [vmem:[#allocation2 + $0x1d0] sm:$0xff]
      %v4310 = vld [vmem:[#allocation2 + $0x1d8] sm:$0xff]
      %v4311 = vmul.f32 %v4307, %v4308
      %v4312 = vmul.f32 %v4306, %v4309
      %v4313 = vmul.f32 %v4305, %v4310
      %v4314 = vadd.f32 %v4295, %v4311
      %v4315 = vadd.f32 %v4296, %v4312
      %v4316 = vadd.f32 %v4297, %v4313
      %4317 = vrot.lane.b32.xlu0 %v3934, 11
      %v4318 = vpop.permute.xlu0 %4317
      %4319 = vrot.lane.b32.xlu0 %v3935, 11
      %v4320 = vpop.permute.xlu0 %4319
      %4321 = vrot.lane.b32.xlu0 %v3936, 11
      %v4322 = vpop.permute.xlu0 %4321
      %vm4323 = vcmp.lt.s32.totalorder %v3909, 11
      %v4324 = vsel %vm4323, %v4320, %v4322
      %v4325 = vsel %vm4323, %v4318, %v4320
      %v4326 = vsel %vm4323, %v4322, %v4318
      %v4327 = vld [vmem:[#allocation2 + $0x1e0] sm:$0xff]
      %v4328 = vld [vmem:[#allocation2 + $0x1e8] sm:$0xff]
      %v4329 = vld [vmem:[#allocation2 + $0x1f0] sm:$0xff]
      %v4330 = vmul.f32 %v4326, %v4327
      %v4331 = vmul.f32 %v4325, %v4328
      %v4332 = vmul.f32 %v4324, %v4329
      %v4333 = vadd.f32 %v4314, %v4330
      %v4334 = vadd.f32 %v4315, %v4331
      %v4335 = vadd.f32 %v4316, %v4332
      %4336 = vrot.lane.b32.xlu0 %v3934, 10
      %v4337 = vpop.permute.xlu0 %4336
      %4338 = vrot.lane.b32.xlu0 %v3935, 10
      %v4339 = vpop.permute.xlu0 %4338
      %4340 = vrot.lane.b32.xlu0 %v3936, 10
      %v4341 = vpop.permute.xlu0 %4340
      %vm4342 = vcmp.lt.s32.totalorder %v3909, 10
      %v4343 = vsel %vm4342, %v4339, %v4341
      %v4344 = vsel %vm4342, %v4337, %v4339
      %v4345 = vsel %vm4342, %v4341, %v4337
      %v4346 = vld [vmem:[#allocation2 + $0x1f8] sm:$0xff]
      %v4347 = vld [vmem:[#allocation2 + $0x200] sm:$0xff]
      %v4348 = vld [vmem:[#allocation2 + $0x208] sm:$0xff]
      %v4349 = vmul.f32 %v4345, %v4346
      %v4350 = vmul.f32 %v4344, %v4347
      %v4351 = vmul.f32 %v4343, %v4348
      %v4352 = vadd.f32 %v4333, %v4349
      %v4353 = vadd.f32 %v4334, %v4350
      %v4354 = vadd.f32 %v4335, %v4351
      %4355 = vrot.lane.b32.xlu0 %v3934, 9
      %v4356 = vpop.permute.xlu0 %4355
      %4357 = vrot.lane.b32.xlu0 %v3935, 9
      %v4358 = vpop.permute.xlu0 %4357
      %4359 = vrot.lane.b32.xlu0 %v3936, 9
      %v4360 = vpop.permute.xlu0 %4359
      %vm4361 = vcmp.lt.s32.totalorder %v3909, 9
      %v4362 = vsel %vm4361, %v4358, %v4360
      %v4363 = vsel %vm4361, %v4356, %v4358
      %v4364 = vsel %vm4361, %v4360, %v4356
      %v4365 = vld [vmem:[#allocation2 + $0x210] sm:$0xff]
      %v4366 = vld [vmem:[#allocation2 + $0x218] sm:$0xff]
      %v4367 = vld [vmem:[#allocation2 + $0x220] sm:$0xff]
      %v4368 = vmul.f32 %v4364, %v4365
      %v4369 = vmul.f32 %v4363, %v4366
      %v4370 = vmul.f32 %v4362, %v4367
      %v4371 = vadd.f32 %v4352, %v4368
      %v4372 = vadd.f32 %v4353, %v4369
      %v4373 = vadd.f32 %v4354, %v4370
      %4374 = vrot.lane.b32.xlu0 %v3934, 8
      %v4375 = vpop.permute.xlu0 %4374
      %4376 = vrot.lane.b32.xlu0 %v3935, 8
      %v4377 = vpop.permute.xlu0 %4376
      %4378 = vrot.lane.b32.xlu0 %v3936, 8
      %v4379 = vpop.permute.xlu0 %4378
      %vm4380 = vcmp.lt.s32.totalorder %v3909, 8
      %v4381 = vsel %vm4380, %v4377, %v4379
      %v4382 = vsel %vm4380, %v4375, %v4377
      %v4383 = vsel %vm4380, %v4379, %v4375
      %v4384 = vld [vmem:[#allocation2 + $0x228] sm:$0xff]
      %v4385 = vld [vmem:[#allocation2 + $0x230] sm:$0xff]
      %v4386 = vld [vmem:[#allocation2 + $0x238] sm:$0xff]
      %v4387 = vmul.f32 %v4383, %v4384
      %v4388 = vmul.f32 %v4382, %v4385
      %v4389 = vmul.f32 %v4381, %v4386
      %v4390 = vadd.f32 %v4371, %v4387
      %v4391 = vadd.f32 %v4372, %v4388
      %v4392 = vadd.f32 %v4373, %v4389
      %4393 = vrot.lane.b32.xlu0 %v3934, 7
      %v4394 = vpop.permute.xlu0 %4393
      %4395 = vrot.lane.b32.xlu0 %v3935, 7
      %v4396 = vpop.permute.xlu0 %4395
      %4397 = vrot.lane.b32.xlu0 %v3936, 7
      %v4398 = vpop.permute.xlu0 %4397
      %vm4399 = vcmp.lt.s32.totalorder %v3909, 7
      %v4400 = vsel %vm4399, %v4396, %v4398
      %v4401 = vsel %vm4399, %v4394, %v4396
      %v4402 = vsel %vm4399, %v4398, %v4394
      %v4403 = vld [vmem:[#allocation2 + $0x240] sm:$0xff]
      %v4404 = vld [vmem:[#allocation2 + $0x248] sm:$0xff]
      %v4405 = vld [vmem:[#allocation2 + $0x250] sm:$0xff]
      %v4406 = vmul.f32 %v4402, %v4403
      %v4407 = vmul.f32 %v4401, %v4404
      %v4408 = vmul.f32 %v4400, %v4405
      %v4409 = vadd.f32 %v4390, %v4406
      %v4410 = vadd.f32 %v4391, %v4407
      %v4411 = vadd.f32 %v4392, %v4408
      %4412 = vrot.lane.b32.xlu0 %v3934, 6
      %v4413 = vpop.permute.xlu0 %4412
      %4414 = vrot.lane.b32.xlu0 %v3935, 6
      %v4415 = vpop.permute.xlu0 %4414
      %4416 = vrot.lane.b32.xlu0 %v3936, 6
      %v4417 = vpop.permute.xlu0 %4416
      %vm4418 = vcmp.lt.s32.totalorder %v3909, 6
      %v4419 = vsel %vm4418, %v4415, %v4417
      %v4420 = vsel %vm4418, %v4413, %v4415
      %v4421 = vsel %vm4418, %v4417, %v4413
      %v4422 = vld [vmem:[#allocation2 + $0x258] sm:$0xff]
      %v4423 = vld [vmem:[#allocation2 + $0x260] sm:$0xff]
      %v4424 = vld [vmem:[#allocation2 + $0x268] sm:$0xff]
      %v4425 = vmul.f32 %v4421, %v4422
      %v4426 = vmul.f32 %v4420, %v4423
      %v4427 = vmul.f32 %v4419, %v4424
      %v4428 = vadd.f32 %v4409, %v4425
      %v4429 = vadd.f32 %v4410, %v4426
      %v4430 = vadd.f32 %v4411, %v4427
      %4431 = vrot.lane.b32.xlu0 %v3934, 5
      %v4432 = vpop.permute.xlu0 %4431
      %4433 = vrot.lane.b32.xlu0 %v3935, 5
      %v4434 = vpop.permute.xlu0 %4433
      %4435 = vrot.lane.b32.xlu0 %v3936, 5
      %v4436 = vpop.permute.xlu0 %4435
      %vm4437 = vcmp.lt.s32.totalorder %v3909, 5
      %v4438 = vsel %vm4437, %v4434, %v4436
      %v4439 = vsel %vm4437, %v4432, %v4434
      %v4440 = vsel %vm4437, %v4436, %v4432
      %v4441 = vld [vmem:[#allocation2 + $0x270] sm:$0xff]
      %v4442 = vld [vmem:[#allocation2 + $0x278] sm:$0xff]
      %v4443 = vld [vmem:[#allocation2 + $0x280] sm:$0xff]
      %v4444 = vmul.f32 %v4440, %v4441
      %v4445 = vmul.f32 %v4439, %v4442
      %v4446 = vmul.f32 %v4438, %v4443
      %v4447 = vadd.f32 %v4428, %v4444
      %v4448 = vadd.f32 %v4429, %v4445
      %v4449 = vadd.f32 %v4430, %v4446
      %4450 = vrot.lane.b32.xlu0 %v3934, 4
      %v4451 = vpop.permute.xlu0 %4450
      %4452 = vrot.lane.b32.xlu0 %v3935, 4
      %v4453 = vpop.permute.xlu0 %4452
      %4454 = vrot.lane.b32.xlu0 %v3936, 4
      %v4455 = vpop.permute.xlu0 %4454
      %vm4456 = vcmp.lt.s32.totalorder %v3909, 4
      %v4457 = vsel %vm4456, %v4453, %v4455
      %v4458 = vsel %vm4456, %v4451, %v4453
      %v4459 = vsel %vm4456, %v4455, %v4451
      %v4460 = vld [vmem:[#allocation2 + $0x288] sm:$0xff]
      %v4461 = vld [vmem:[#allocation2 + $0x290] sm:$0xff]
      %v4462 = vld [vmem:[#allocation2 + $0x298] sm:$0xff]
      %v4463 = vmul.f32 %v4459, %v4460
      %v4464 = vmul.f32 %v4458, %v4461
      %v4465 = vmul.f32 %v4457, %v4462
      %v4466 = vadd.f32 %v4447, %v4463
      %v4467 = vadd.f32 %v4448, %v4464
      %v4468 = vadd.f32 %v4449, %v4465
      %4469 = vrot.lane.b32.xlu0 %v3934, 3
      %v4470 = vpop.permute.xlu0 %4469
      %4471 = vrot.lane.b32.xlu0 %v3935, 3
      %v4472 = vpop.permute.xlu0 %4471
      %4473 = vrot.lane.b32.xlu0 %v3936, 3
      %v4474 = vpop.permute.xlu0 %4473
      %vm4475 = vcmp.lt.s32.totalorder %v3909, 3
      %v4476 = vsel %vm4475, %v4472, %v4474
      %v4477 = vsel %vm4475, %v4470, %v4472
      %v4478 = vsel %vm4475, %v4474, %v4470
      %v4479 = vld [vmem:[#allocation2 + $0x2a0] sm:$0xff]
      %v4480 = vld [vmem:[#allocation2 + $0x2a8] sm:$0xff]
      %v4481 = vld [vmem:[#allocation2 + $0x2b0] sm:$0xff]
      %v4482 = vmul.f32 %v4478, %v4479
      %v4483 = vmul.f32 %v4477, %v4480
      %v4484 = vmul.f32 %v4476, %v4481
      %v4485 = vadd.f32 %v4466, %v4482
      %v4486 = vadd.f32 %v4467, %v4483
      %v4487 = vadd.f32 %v4468, %v4484
      %4488 = vrot.lane.b32.xlu0 %v3934, 2
      %v4489 = vpop.permute.xlu0 %4488
      %4490 = vrot.lane.b32.xlu0 %v3935, 2
      %v4491 = vpop.permute.xlu0 %4490
      %4492 = vrot.lane.b32.xlu0 %v3936, 2
      %v4493 = vpop.permute.xlu0 %4492
      %vm4494 = vcmp.lt.s32.totalorder %v3909, 2
      %v4495 = vsel %vm4494, %v4491, %v4493
      %v4496 = vsel %vm4494, %v4489, %v4491
      %v4497 = vsel %vm4494, %v4493, %v4489
      %v4498 = vld [vmem:[#allocation2 + $0x2b8] sm:$0xff]
      %v4499 = vld [vmem:[#allocation2 + $0x2c0] sm:$0xff]
      %v4500 = vld [vmem:[#allocation2 + $0x2c8] sm:$0xff]
      %v4501 = vmul.f32 %v4497, %v4498
      %v4502 = vmul.f32 %v4496, %v4499
      %v4503 = vmul.f32 %v4495, %v4500
      %v4504 = vadd.f32 %v4485, %v4501
      %v4505 = vadd.f32 %v4486, %v4502
      %v4506 = vadd.f32 %v4487, %v4503
      %4507 = vrot.lane.b32.xlu0 %v3934, 1
      %v4508 = vpop.permute.xlu0 %4507
      %4509 = vrot.lane.b32.xlu0 %v3935, 1
      %v4510 = vpop.permute.xlu0 %4509
      %4511 = vrot.lane.b32.xlu0 %v3936, 1
      %v4512 = vpop.permute.xlu0 %4511
      %vm4513 = vcmp.lt.s32.totalorder %v3909, 1
      %v4514 = vsel %vm4513, %v4510, %v4512
      %v4515 = vsel %vm4513, %v4508, %v4510
      %v4516 = vsel %vm4513, %v4512, %v4508
      %v4517 = vld [vmem:[#allocation2 + $0x2d0] sm:$0xff]
      %v4518 = vld [vmem:[#allocation2 + $0x2d8] sm:$0xff]
      %v4519 = vld [vmem:[#allocation2 + $0x2e0] sm:$0xff]
      %v4520 = vmul.f32 %v4516, %v4517
      %v4521 = vmul.f32 %v4515, %v4518
      %v4522 = vmul.f32 %v4514, %v4519
      %v4523 = vadd.f32 %v4504, %v4520
      %v4524 = vadd.f32 %v4505, %v4521
      %v4525 = vadd.f32 %v4506, %v4522
      %v4526 = vld [vmem:[#allocation2 + $0x2e8] sm:$0xff]
      %v4527 = vld [vmem:[#allocation2 + $0x2f0] sm:$0xff]
      %v4528 = vld [vmem:[#allocation2 + $0x2f8] sm:$0xff]
      %v4529 = vmul.f32 %v3934, %v4526
      %v4530 = vmul.f32 %v3935, %v4527
      %v4531 = vmul.f32 %v3936, %v4528
      %v4532 = vadd.f32 %v4523, %v4529
      %v4533 = vadd.f32 %v4524, %v4530
      %v4534 = vadd.f32 %v4525, %v4531
      %v4535 = vmul.f32 %v4532, %v3931
      %v4536 = vmul.f32 %v4533, %v3932
      %v4537 = vmul.f32 %v4534, %v3933
      %v4538 = vadd.f32 %v3936, %v4537
      %4539 = vrot.lane.b32.xlu0 %v4535, 31
      %v4540 = vpop.permute.xlu0 %4539
      %4541 = vrot.lane.b32.xlu0 %v4536, 31
      %v4542 = vpop.permute.xlu0 %4541
      %4543 = vrot.lane.b32.xlu0 %v4537, 31
      %v4544 = vpop.permute.xlu0 %4543
      %v4545 = vsel %vm3943, %v4542, %v4544
      %v4546 = vsel %vm3943, %v4540, %v4542
      %v4547 = vsel %vm3943, %v4544, %v4540
      %v4548 = vmul.f32 %v4547, %v3947
      %v4549 = vmul.f32 %v4546, %v3948
      %v4550 = vmul.f32 %v4545, %v3949
      %v4551 = vadd.f32 %v4548, 0.0
      %v4552 = vadd.f32 %v4549, 0.0
      %v4553 = vadd.f32 %v4550, 0.0
      %4554 = vrot.lane.b32.xlu0 %v4535, 30
      %v4555 = vpop.permute.xlu0 %4554
      %4556 = vrot.lane.b32.xlu0 %v4536, 30
      %v4557 = vpop.permute.xlu0 %4556
      %4558 = vrot.lane.b32.xlu0 %v4537, 30
      %v4559 = vpop.permute.xlu0 %4558
      %v4560 = vsel %vm3962, %v4557, %v4559
      %v4561 = vsel %vm3962, %v4555, %v4557
      %v4562 = vsel %vm3962, %v4559, %v4555
      %v4563 = vmul.f32 %v4562, %v3966
      %v4564 = vmul.f32 %v4561, %v3967
      %v4565 = vmul.f32 %v4560, %v3968
      %v4566 = vadd.f32 %v4551, %v4563
      %v4567 = vadd.f32 %v4552, %v4564
      %v4568 = vadd.f32 %v4553, %v4565
      %4569 = vrot.lane.b32.xlu0 %v4535, 29
      %v4570 = vpop.permute.xlu0 %4569
      %4571 = vrot.lane.b32.xlu0 %v4536, 29
      %v4572 = vpop.permute.xlu0 %4571
      %4573 = vrot.lane.b32.xlu0 %v4537, 29
      %v4574 = vpop.permute.xlu0 %4573
      %v4575 = vsel %vm3981, %v4572, %v4574
      %v4576 = vsel %vm3981, %v4570, %v4572
      %v4577 = vsel %vm3981, %v4574, %v4570
      %v4578 = vmul.f32 %v4577, %v3985
      %v4579 = vmul.f32 %v4576, %v3986
      %v4580 = vmul.f32 %v4575, %v3987
      %v4581 = vadd.f32 %v4566, %v4578
      %v4582 = vadd.f32 %v4567, %v4579
      %v4583 = vadd.f32 %v4568, %v4580
      %4584 = vrot.lane.b32.xlu0 %v4535, 28
      %v4585 = vpop.permute.xlu0 %4584
      %4586 = vrot.lane.b32.xlu0 %v4536, 28
      %v4587 = vpop.permute.xlu0 %4586
      %4588 = vrot.lane.b32.xlu0 %v4537, 28
      %v4589 = vpop.permute.xlu0 %4588
      %v4590 = vsel %vm4000, %v4587, %v4589
      %v4591 = vsel %vm4000, %v4585, %v4587
      %v4592 = vsel %vm4000, %v4589, %v4585
      %v4593 = vmul.f32 %v4592, %v4004
      %v4594 = vmul.f32 %v4591, %v4005
      %v4595 = vmul.f32 %v4590, %v4006
      %v4596 = vadd.f32 %v4581, %v4593
      %v4597 = vadd.f32 %v4582, %v4594
      %v4598 = vadd.f32 %v4583, %v4595
      %4599 = vrot.lane.b32.xlu0 %v4535, 27
      %v4600 = vpop.permute.xlu0 %4599
      %4601 = vrot.lane.b32.xlu0 %v4536, 27
      %v4602 = vpop.permute.xlu0 %4601
      %4603 = vrot.lane.b32.xlu0 %v4537, 27
      %v4604 = vpop.permute.xlu0 %4603
      %v4605 = vsel %vm4019, %v4602, %v4604
      %v4606 = vsel %vm4019, %v4600, %v4602
      %v4607 = vsel %vm4019, %v4604, %v4600
      %v4608 = vmul.f32 %v4607, %v4023
      %v4609 = vmul.f32 %v4606, %v4024
      %v4610 = vmul.f32 %v4605, %v4025
      %v4611 = vadd.f32 %v4596, %v4608
      %v4612 = vadd.f32 %v4597, %v4609
      %v4613 = vadd.f32 %v4598, %v4610
      %4614 = vrot.lane.b32.xlu0 %v4535, 26
      %v4615 = vpop.permute.xlu0 %4614
      %4616 = vrot.lane.b32.xlu0 %v4536, 26
      %v4617 = vpop.permute.xlu0 %4616
      %4618 = vrot.lane.b32.xlu0 %v4537, 26
      %v4619 = vpop.permute.xlu0 %4618
      %v4620 = vsel %vm4038, %v4617, %v4619
      %v4621 = vsel %vm4038, %v4615, %v4617
      %v4622 = vsel %vm4038, %v4619, %v4615
      %v4623 = vmul.f32 %v4622, %v4042
      %v4624 = vmul.f32 %v4621, %v4043
      %v4625 = vmul.f32 %v4620, %v4044
      %v4626 = vadd.f32 %v4611, %v4623
      %v4627 = vadd.f32 %v4612, %v4624
      %v4628 = vadd.f32 %v4613, %v4625
      %4629 = vrot.lane.b32.xlu0 %v4535, 25
      %v4630 = vpop.permute.xlu0 %4629
      %4631 = vrot.lane.b32.xlu0 %v4536, 25
      %v4632 = vpop.permute.xlu0 %4631
      %4633 = vrot.lane.b32.xlu0 %v4537, 25
      %v4634 = vpop.permute.xlu0 %4633
      %v4635 = vsel %vm4057, %v4632, %v4634
      %v4636 = vsel %vm4057, %v4630, %v4632
      %v4637 = vsel %vm4057, %v4634, %v4630
      %v4638 = vmul.f32 %v4637, %v4061
      %v4639 = vmul.f32 %v4636, %v4062
      %v4640 = vmul.f32 %v4635, %v4063
      %v4641 = vadd.f32 %v4626, %v4638
      %v4642 = vadd.f32 %v4627, %v4639
      %v4643 = vadd.f32 %v4628, %v4640
      %4644 = vrot.lane.b32.xlu0 %v4535, 24
      %v4645 = vpop.permute.xlu0 %4644
      %4646 = vrot.lane.b32.xlu0 %v4536, 24
      %v4647 = vpop.permute.xlu0 %4646
      %4648 = vrot.lane.b32.xlu0 %v4537, 24
      %v4649 = vpop.permute.xlu0 %4648
      %v4650 = vsel %vm4076, %v4647, %v4649
      %v4651 = vsel %vm4076, %v4645, %v4647
      %v4652 = vsel %vm4076, %v4649, %v4645
      %v4653 = vmul.f32 %v4652, %v4080
      %v4654 = vmul.f32 %v4651, %v4081
      %v4655 = vmul.f32 %v4650, %v4082
      %v4656 = vadd.f32 %v4641, %v4653
      %v4657 = vadd.f32 %v4642, %v4654
      %v4658 = vadd.f32 %v4643, %v4655
      %4659 = vrot.lane.b32.xlu0 %v4535, 23
      %v4660 = vpop.permute.xlu0 %4659
      %4661 = vrot.lane.b32.xlu0 %v4536, 23
      %v4662 = vpop.permute.xlu0 %4661
      %4663 = vrot.lane.b32.xlu0 %v4537, 23
      %v4664 = vpop.permute.xlu0 %4663
      %v4665 = vsel %vm4095, %v4662, %v4664
      %v4666 = vsel %vm4095, %v4660, %v4662
      %v4667 = vsel %vm4095, %v4664, %v4660
      %v4668 = vmul.f32 %v4667, %v4099
      %v4669 = vmul.f32 %v4666, %v4100
      %v4670 = vmul.f32 %v4665, %v4101
      %v4671 = vadd.f32 %v4656, %v4668
      %v4672 = vadd.f32 %v4657, %v4669
      %v4673 = vadd.f32 %v4658, %v4670
      %4674 = vrot.lane.b32.xlu0 %v4535, 22
      %v4675 = vpop.permute.xlu0 %4674
      %4676 = vrot.lane.b32.xlu0 %v4536, 22
      %v4677 = vpop.permute.xlu0 %4676
      %4678 = vrot.lane.b32.xlu0 %v4537, 22
      %v4679 = vpop.permute.xlu0 %4678
      %v4680 = vsel %vm4114, %v4677, %v4679
      %v4681 = vsel %vm4114, %v4675, %v4677
      %v4682 = vsel %vm4114, %v4679, %v4675
      %v4683 = vmul.f32 %v4682, %v4118
      %v4684 = vmul.f32 %v4681, %v4119
      %v4685 = vmul.f32 %v4680, %v4120
      %v4686 = vadd.f32 %v4671, %v4683
      %v4687 = vadd.f32 %v4672, %v4684
      %v4688 = vadd.f32 %v4673, %v4685
      %4689 = vrot.lane.b32.xlu0 %v4535, 21
      %v4690 = vpop.permute.xlu0 %4689
      %4691 = vrot.lane.b32.xlu0 %v4536, 21
      %v4692 = vpop.permute.xlu0 %4691
      %4693 = vrot.lane.b32.xlu0 %v4537, 21
      %v4694 = vpop.permute.xlu0 %4693
      %v4695 = vsel %vm4133, %v4692, %v4694
      %v4696 = vsel %vm4133, %v4690, %v4692
      %v4697 = vsel %vm4133, %v4694, %v4690
      %v4698 = vmul.f32 %v4697, %v4137
      %v4699 = vmul.f32 %v4696, %v4138
      %v4700 = vmul.f32 %v4695, %v4139
      %v4701 = vadd.f32 %v4686, %v4698
      %v4702 = vadd.f32 %v4687, %v4699
      %v4703 = vadd.f32 %v4688, %v4700
      %4704 = vrot.lane.b32.xlu0 %v4535, 20
      %v4705 = vpop.permute.xlu0 %4704
      %4706 = vrot.lane.b32.xlu0 %v4536, 20
      %v4707 = vpop.permute.xlu0 %4706
      %4708 = vrot.lane.b32.xlu0 %v4537, 20
      %v4709 = vpop.permute.xlu0 %4708
      %v4710 = vsel %vm4152, %v4707, %v4709
      %v4711 = vsel %vm4152, %v4705, %v4707
      %v4712 = vsel %vm4152, %v4709, %v4705
      %v4713 = vmul.f32 %v4712, %v4156
      %v4714 = vmul.f32 %v4711, %v4157
      %v4715 = vmul.f32 %v4710, %v4158
      %v4716 = vadd.f32 %v4701, %v4713
      %v4717 = vadd.f32 %v4702, %v4714
      %v4718 = vadd.f32 %v4703, %v4715
      %4719 = vrot.lane.b32.xlu0 %v4535, 19
      %v4720 = vpop.permute.xlu0 %4719
      %4721 = vrot.lane.b32.xlu0 %v4536, 19
      %v4722 = vpop.permute.xlu0 %4721
      %4723 = vrot.lane.b32.xlu0 %v4537, 19
      %v4724 = vpop.permute.xlu0 %4723
      %v4725 = vsel %vm4171, %v4722, %v4724
      %v4726 = vsel %vm4171, %v4720, %v4722
      %v4727 = vsel %vm4171, %v4724, %v4720
      %v4728 = vmul.f32 %v4727, %v4175
      %v4729 = vmul.f32 %v4726, %v4176
      %v4730 = vmul.f32 %v4725, %v4177
      %v4731 = vadd.f32 %v4716, %v4728
      %v4732 = vadd.f32 %v4717, %v4729
      %v4733 = vadd.f32 %v4718, %v4730
      %4734 = vrot.lane.b32.xlu0 %v4535, 18
      %v4735 = vpop.permute.xlu0 %4734
      %4736 = vrot.lane.b32.xlu0 %v4536, 18
      %v4737 = vpop.permute.xlu0 %4736
      %4738 = vrot.lane.b32.xlu0 %v4537, 18
      %v4739 = vpop.permute.xlu0 %4738
      %v4740 = vsel %vm4190, %v4737, %v4739
      %v4741 = vsel %vm4190, %v4735, %v4737
      %v4742 = vsel %vm4190, %v4739, %v4735
      %v4743 = vmul.f32 %v4742, %v4194
      %v4744 = vmul.f32 %v4741, %v4195
      %v4745 = vmul.f32 %v4740, %v4196
      %v4746 = vadd.f32 %v4731, %v4743
      %v4747 = vadd.f32 %v4732, %v4744
      %v4748 = vadd.f32 %v4733, %v4745
      %4749 = vrot.lane.b32.xlu0 %v4535, 17
      %v4750 = vpop.permute.xlu0 %4749
      %4751 = vrot.lane.b32.xlu0 %v4536, 17
      %v4752 = vpop.permute.xlu0 %4751
      %4753 = vrot.lane.b32.xlu0 %v4537, 17
      %v4754 = vpop.permute.xlu0 %4753
      %v4755 = vsel %vm4209, %v4752, %v4754
      %v4756 = vsel %vm4209, %v4750, %v4752
      %v4757 = vsel %vm4209, %v4754, %v4750
      %v4758 = vmul.f32 %v4757, %v4213
      %v4759 = vmul.f32 %v4756, %v4214
      %v4760 = vmul.f32 %v4755, %v4215
      %v4761 = vadd.f32 %v4746, %v4758
      %v4762 = vadd.f32 %v4747, %v4759
      %v4763 = vadd.f32 %v4748, %v4760
      %4764 = vrot.lane.b32.xlu0 %v4535, 16
      %v4765 = vpop.permute.xlu0 %4764
      %4766 = vrot.lane.b32.xlu0 %v4536, 16
      %v4767 = vpop.permute.xlu0 %4766
      %4768 = vrot.lane.b32.xlu0 %v4537, 16
      %v4769 = vpop.permute.xlu0 %4768
      %v4770 = vsel %vm4228, %v4767, %v4769
      %v4771 = vsel %vm4228, %v4765, %v4767
      %v4772 = vsel %vm4228, %v4769, %v4765
      %v4773 = vmul.f32 %v4772, %v4232
      %v4774 = vmul.f32 %v4771, %v4233
      %v4775 = vmul.f32 %v4770, %v4234
      %v4776 = vadd.f32 %v4761, %v4773
      %v4777 = vadd.f32 %v4762, %v4774
      %v4778 = vadd.f32 %v4763, %v4775
      %4779 = vrot.lane.b32.xlu0 %v4535, 15
      %v4780 = vpop.permute.xlu0 %4779
      %4781 = vrot.lane.b32.xlu0 %v4536, 15
      %v4782 = vpop.permute.xlu0 %4781
      %4783 = vrot.lane.b32.xlu0 %v4537, 15
      %v4784 = vpop.permute.xlu0 %4783
      %v4785 = vsel %vm4247, %v4782, %v4784
      %v4786 = vsel %vm4247, %v4780, %v4782
      %v4787 = vsel %vm4247, %v4784, %v4780
      %v4788 = vmul.f32 %v4787, %v4251
      %v4789 = vmul.f32 %v4786, %v4252
      %v4790 = vmul.f32 %v4785, %v4253
      %v4791 = vadd.f32 %v4776, %v4788
      %v4792 = vadd.f32 %v4777, %v4789
      %v4793 = vadd.f32 %v4778, %v4790
      %4794 = vrot.lane.b32.xlu0 %v4535, 14
      %v4795 = vpop.permute.xlu0 %4794
      %4796 = vrot.lane.b32.xlu0 %v4536, 14
      %v4797 = vpop.permute.xlu0 %4796
      %4798 = vrot.lane.b32.xlu0 %v4537, 14
      %v4799 = vpop.permute.xlu0 %4798
      %v4800 = vsel %vm4266, %v4797, %v4799
      %v4801 = vsel %vm4266, %v4795, %v4797
      %v4802 = vsel %vm4266, %v4799, %v4795
      %v4803 = vmul.f32 %v4802, %v4270
      %v4804 = vmul.f32 %v4801, %v4271
      %v4805 = vmul.f32 %v4800, %v4272
      %v4806 = vadd.f32 %v4791, %v4803
      %v4807 = vadd.f32 %v4792, %v4804
      %v4808 = vadd.f32 %v4793, %v4805
      %4809 = vrot.lane.b32.xlu0 %v4535, 13
      %v4810 = vpop.permute.xlu0 %4809
      %4811 = vrot.lane.b32.xlu0 %v4536, 13
      %v4812 = vpop.permute.xlu0 %4811
      %4813 = vrot.lane.b32.xlu0 %v4537, 13
      %v4814 = vpop.permute.xlu0 %4813
      %v4815 = vsel %vm4285, %v4812, %v4814
      %v4816 = vsel %vm4285, %v4810, %v4812
      %v4817 = vsel %vm4285, %v4814, %v4810
      %v4818 = vmul.f32 %v4817, %v4289
      %v4819 = vmul.f32 %v4816, %v4290
      %v4820 = vmul.f32 %v4815, %v4291
      %v4821 = vadd.f32 %v4806, %v4818
      %v4822 = vadd.f32 %v4807, %v4819
      %v4823 = vadd.f32 %v4808, %v4820
      %4824 = vrot.lane.b32.xlu0 %v4535, 12
      %v4825 = vpop.permute.xlu0 %4824
      %4826 = vrot.lane.b32.xlu0 %v4536, 12
      %v4827 = vpop.permute.xlu0 %4826
      %4828 = vrot.lane.b32.xlu0 %v4537, 12
      %v4829 = vpop.permute.xlu0 %4828
      %v4830 = vsel %vm4304, %v4827, %v4829
      %v4831 = vsel %vm4304, %v4825, %v4827
      %v4832 = vsel %vm4304, %v4829, %v4825
      %v4833 = vmul.f32 %v4832, %v4308
      %v4834 = vmul.f32 %v4831, %v4309
      %v4835 = vmul.f32 %v4830, %v4310
      %v4836 = vadd.f32 %v4821, %v4833
      %v4837 = vadd.f32 %v4822, %v4834
      %v4838 = vadd.f32 %v4823, %v4835
      %4839 = vrot.lane.b32.xlu0 %v4535, 11
      %v4840 = vpop.permute.xlu0 %4839
      %4841 = vrot.lane.b32.xlu0 %v4536, 11
      %v4842 = vpop.permute.xlu0 %4841
      %4843 = vrot.lane.b32.xlu0 %v4537, 11
      %v4844 = vpop.permute.xlu0 %4843
      %v4845 = vsel %vm4323, %v4842, %v4844
      %v4846 = vsel %vm4323, %v4840, %v4842
      %v4847 = vsel %vm4323, %v4844, %v4840
      %v4848 = vmul.f32 %v4847, %v4327
      %v4849 = vmul.f32 %v4846, %v4328
      %v4850 = vmul.f32 %v4845, %v4329
      %v4851 = vadd.f32 %v4836, %v4848
      %v4852 = vadd.f32 %v4837, %v4849
      %v4853 = vadd.f32 %v4838, %v4850
      %4854 = vrot.lane.b32.xlu0 %v4535, 10
      %v4855 = vpop.permute.xlu0 %4854
      %4856 = vrot.lane.b32.xlu0 %v4536, 10
      %v4857 = vpop.permute.xlu0 %4856
      %4858 = vrot.lane.b32.xlu0 %v4537, 10
      %v4859 = vpop.permute.xlu0 %4858
      %v4860 = vsel %vm4342, %v4857, %v4859
      %v4861 = vsel %vm4342, %v4855, %v4857
      %v4862 = vsel %vm4342, %v4859, %v4855
      %v4863 = vmul.f32 %v4862, %v4346
      %v4864 = vmul.f32 %v4861, %v4347
      %v4865 = vmul.f32 %v4860, %v4348
      %v4866 = vadd.f32 %v4851, %v4863
      %v4867 = vadd.f32 %v4852, %v4864
      %v4868 = vadd.f32 %v4853, %v4865
      %4869 = vrot.lane.b32.xlu0 %v4535, 9
      %v4870 = vpop.permute.xlu0 %4869
      %4871 = vrot.lane.b32.xlu0 %v4536, 9
      %v4872 = vpop.permute.xlu0 %4871
      %4873 = vrot.lane.b32.xlu0 %v4537, 9
      %v4874 = vpop.permute.xlu0 %4873
      %v4875 = vsel %vm4361, %v4872, %v4874
      %v4876 = vsel %vm4361, %v4870, %v4872
      %v4877 = vsel %vm4361, %v4874, %v4870
      %v4878 = vmul.f32 %v4877, %v4365
      %v4879 = vmul.f32 %v4876, %v4366
      %v4880 = vmul.f32 %v4875, %v4367
      %v4881 = vadd.f32 %v4866, %v4878
      %v4882 = vadd.f32 %v4867, %v4879
      %v4883 = vadd.f32 %v4868, %v4880
      %4884 = vrot.lane.b32.xlu0 %v4535, 8
      %v4885 = vpop.permute.xlu0 %4884
      %4886 = vrot.lane.b32.xlu0 %v4536, 8
      %v4887 = vpop.permute.xlu0 %4886
      %4888 = vrot.lane.b32.xlu0 %v4537, 8
      %v4889 = vpop.permute.xlu0 %4888
      %v4890 = vsel %vm4380, %v4887, %v4889
      %v4891 = vsel %vm4380, %v4885, %v4887
      %v4892 = vsel %vm4380, %v4889, %v4885
      %v4893 = vmul.f32 %v4892, %v4384
      %v4894 = vmul.f32 %v4891, %v4385
      %v4895 = vmul.f32 %v4890, %v4386
      %v4896 = vadd.f32 %v4881, %v4893
      %v4897 = vadd.f32 %v4882, %v4894
      %v4898 = vadd.f32 %v4883, %v4895
      %4899 = vrot.lane.b32.xlu0 %v4535, 7
      %v4900 = vpop.permute.xlu0 %4899
      %4901 = vrot.lane.b32.xlu0 %v4536, 7
      %v4902 = vpop.permute.xlu0 %4901
      %4903 = vrot.lane.b32.xlu0 %v4537, 7
      %v4904 = vpop.permute.xlu0 %4903
      %v4905 = vsel %vm4399, %v4902, %v4904
      %v4906 = vsel %vm4399, %v4900, %v4902
      %v4907 = vsel %vm4399, %v4904, %v4900
      %v4908 = vmul.f32 %v4907, %v4403
      %v4909 = vmul.f32 %v4906, %v4404
      %v4910 = vmul.f32 %v4905, %v4405
      %v4911 = vadd.f32 %v4896, %v4908
      %v4912 = vadd.f32 %v4897, %v4909
      %v4913 = vadd.f32 %v4898, %v4910
      %4914 = vrot.lane.b32.xlu0 %v4535, 6
      %v4915 = vpop.permute.xlu0 %4914
      %4916 = vrot.lane.b32.xlu0 %v4536, 6
      %v4917 = vpop.permute.xlu0 %4916
      %4918 = vrot.lane.b32.xlu0 %v4537, 6
      %v4919 = vpop.permute.xlu0 %4918
      %v4920 = vsel %vm4418, %v4917, %v4919
      %v4921 = vsel %vm4418, %v4915, %v4917
      %v4922 = vsel %vm4418, %v4919, %v4915
      %v4923 = vmul.f32 %v4922, %v4422
      %v4924 = vmul.f32 %v4921, %v4423
      %v4925 = vmul.f32 %v4920, %v4424
      %v4926 = vadd.f32 %v4911, %v4923
      %v4927 = vadd.f32 %v4912, %v4924
      %v4928 = vadd.f32 %v4913, %v4925
      %4929 = vrot.lane.b32.xlu0 %v4535, 5
      %v4930 = vpop.permute.xlu0 %4929
      %4931 = vrot.lane.b32.xlu0 %v4536, 5
      %v4932 = vpop.permute.xlu0 %4931
      %4933 = vrot.lane.b32.xlu0 %v4537, 5
      %v4934 = vpop.permute.xlu0 %4933
      %v4935 = vsel %vm4437, %v4932, %v4934
      %v4936 = vsel %vm4437, %v4930, %v4932
      %v4937 = vsel %vm4437, %v4934, %v4930
      %v4938 = vmul.f32 %v4937, %v4441
      %v4939 = vmul.f32 %v4936, %v4442
      %v4940 = vmul.f32 %v4935, %v4443
      %v4941 = vadd.f32 %v4926, %v4938
      %v4942 = vadd.f32 %v4927, %v4939
      %v4943 = vadd.f32 %v4928, %v4940
      %4944 = vrot.lane.b32.xlu0 %v4535, 4
      %v4945 = vpop.permute.xlu0 %4944
      %4946 = vrot.lane.b32.xlu0 %v4536, 4
      %v4947 = vpop.permute.xlu0 %4946
      %4948 = vrot.lane.b32.xlu0 %v4537, 4
      %v4949 = vpop.permute.xlu0 %4948
      %v4950 = vsel %vm4456, %v4947, %v4949
      %v4951 = vsel %vm4456, %v4945, %v4947
      %v4952 = vsel %vm4456, %v4949, %v4945
      %v4953 = vmul.f32 %v4952, %v4460
      %v4954 = vmul.f32 %v4951, %v4461
      %v4955 = vmul.f32 %v4950, %v4462
      %v4956 = vadd.f32 %v4941, %v4953
      %v4957 = vadd.f32 %v4942, %v4954
      %v4958 = vadd.f32 %v4943, %v4955
      %4959 = vrot.lane.b32.xlu0 %v4535, 3
      %v4960 = vpop.permute.xlu0 %4959
      %4961 = vrot.lane.b32.xlu0 %v4536, 3
      %v4962 = vpop.permute.xlu0 %4961
      %4963 = vrot.lane.b32.xlu0 %v4537, 3
      %v4964 = vpop.permute.xlu0 %4963
      %v4965 = vsel %vm4475, %v4962, %v4964
      %v4966 = vsel %vm4475, %v4960, %v4962
      %v4967 = vsel %vm4475, %v4964, %v4960
      %v4968 = vmul.f32 %v4967, %v4479
      %v4969 = vmul.f32 %v4966, %v4480
      %v4970 = vmul.f32 %v4965, %v4481
      %v4971 = vadd.f32 %v4956, %v4968
      %v4972 = vadd.f32 %v4957, %v4969
      %v4973 = vadd.f32 %v4958, %v4970
      %4974 = vrot.lane.b32.xlu0 %v4535, 2
      %v4975 = vpop.permute.xlu0 %4974
      %4976 = vrot.lane.b32.xlu0 %v4536, 2
      %v4977 = vpop.permute.xlu0 %4976
      %4978 = vrot.lane.b32.xlu0 %v4537, 2
      %v4979 = vpop.permute.xlu0 %4978
      %v4980 = vsel %vm4494, %v4977, %v4979
      %v4981 = vsel %vm4494, %v4975, %v4977
      %v4982 = vsel %vm4494, %v4979, %v4975
      %v4983 = vmul.f32 %v4982, %v4498
      %v4984 = vmul.f32 %v4981, %v4499
      %v4985 = vmul.f32 %v4980, %v4500
      %v4986 = vadd.f32 %v4971, %v4983
      %v4987 = vadd.f32 %v4972, %v4984
      %v4988 = vadd.f32 %v4973, %v4985
      %4989 = vrot.lane.b32.xlu0 %v4535, 1
      %v4990 = vpop.permute.xlu0 %4989
      %4991 = vrot.lane.b32.xlu0 %v4536, 1
      %v4992 = vpop.permute.xlu0 %4991
      %4993 = vrot.lane.b32.xlu0 %v4537, 1
      %v4994 = vpop.permute.xlu0 %4993
      %v4995 = vsel %vm4513, %v4992, %v4994
      %v4996 = vsel %vm4513, %v4990, %v4992
      %v4997 = vsel %vm4513, %v4994, %v4990
      %v4998 = vmul.f32 %v4997, %v4517
      %v4999 = vmul.f32 %v4996, %v4518
      %v5000 = vmul.f32 %v4995, %v4519
      %v5001 = vadd.f32 %v4986, %v4998
      %v5002 = vadd.f32 %v4987, %v4999
      %v5003 = vadd.f32 %v4988, %v5000
      %v5004 = vmul.f32 %v4535, %v4526
      %v5005 = vmul.f32 %v4536, %v4527
      %v5006 = vmul.f32 %v4537, %v4528
      %v5007 = vadd.f32 %v5001, %v5004
      %v5008 = vadd.f32 %v5002, %v5005
      %v5009 = vadd.f32 %v5003, %v5006
      %v5010 = vmul.f32 %v5007, %v3931
      %v5011 = vmul.f32 %v5008, %v3932
      %v5012 = vmul.f32 %v5009, %v3933
      %v5013 = vmul.f32 %v5010, 0.5
      %v5014 = vmul.f32 %v5011, 0.5
      %v5015 = vmul.f32 %v5012, 0.5
      %v5016 = vadd.f32 %v4538, %v5015
      %5017 = vrot.lane.b32.xlu0 %v5013, 31
      %v5018 = vpop.permute.xlu0 %5017
      %5019 = vrot.lane.b32.xlu0 %v5014, 31
      %v5020 = vpop.permute.xlu0 %5019
      %5021 = vrot.lane.b32.xlu0 %v5015, 31
      %v5022 = vpop.permute.xlu0 %5021
      %v5023 = vsel %vm3943, %v5020, %v5022
      %v5024 = vsel %vm3943, %v5018, %v5020
      %v5025 = vsel %vm3943, %v5022, %v5018
      %v5026 = vmul.f32 %v5025, %v3947
      %v5027 = vmul.f32 %v5024, %v3948
      %v5028 = vmul.f32 %v5023, %v3949
      %v5029 = vadd.f32 %v5026, 0.0
      %v5030 = vadd.f32 %v5027, 0.0
      %v5031 = vadd.f32 %v5028, 0.0
      %5032 = vrot.lane.b32.xlu0 %v5013, 30
      %v5033 = vpop.permute.xlu0 %5032
      %5034 = vrot.lane.b32.xlu0 %v5014, 30
      %v5035 = vpop.permute.xlu0 %5034
      %5036 = vrot.lane.b32.xlu0 %v5015, 30
      %v5037 = vpop.permute.xlu0 %5036
      %v5038 = vsel %vm3962, %v5035, %v5037
      %v5039 = vsel %vm3962, %v5033, %v5035
      %v5040 = vsel %vm3962, %v5037, %v5033
      %v5041 = vmul.f32 %v5040, %v3966
      %v5042 = vmul.f32 %v5039, %v3967
      %v5043 = vmul.f32 %v5038, %v3968
      %v5044 = vadd.f32 %v5029, %v5041
      %v5045 = vadd.f32 %v5030, %v5042
      %v5046 = vadd.f32 %v5031, %v5043
      %5047 = vrot.lane.b32.xlu0 %v5013, 29
      %v5048 = vpop.permute.xlu0 %5047
      %5049 = vrot.lane.b32.xlu0 %v5014, 29
      %v5050 = vpop.permute.xlu0 %5049
      %5051 = vrot.lane.b32.xlu0 %v5015, 29
      %v5052 = vpop.permute.xlu0 %5051
      %v5053 = vsel %vm3981, %v5050, %v5052
      %v5054 = vsel %vm3981, %v5048, %v5050
      %v5055 = vsel %vm3981, %v5052, %v5048
      %v5056 = vmul.f32 %v5055, %v3985
      %v5057 = vmul.f32 %v5054, %v3986
      %v5058 = vmul.f32 %v5053, %v3987
      %v5059 = vadd.f32 %v5044, %v5056
      %v5060 = vadd.f32 %v5045, %v5057
      %v5061 = vadd.f32 %v5046, %v5058
      %5062 = vrot.lane.b32.xlu0 %v5013, 28
      %v5063 = vpop.permute.xlu0 %5062
      %5064 = vrot.lane.b32.xlu0 %v5014, 28
      %v5065 = vpop.permute.xlu0 %5064
      %5066 = vrot.lane.b32.xlu0 %v5015, 28
      %v5067 = vpop.permute.xlu0 %5066
      %v5068 = vsel %vm4000, %v5065, %v5067
      %v5069 = vsel %vm4000, %v5063, %v5065
      %v5070 = vsel %vm4000, %v5067, %v5063
      %v5071 = vmul.f32 %v5070, %v4004
      %v5072 = vmul.f32 %v5069, %v4005
      %v5073 = vmul.f32 %v5068, %v4006
      %v5074 = vadd.f32 %v5059, %v5071
      %v5075 = vadd.f32 %v5060, %v5072
      %v5076 = vadd.f32 %v5061, %v5073
      %5077 = vrot.lane.b32.xlu0 %v5013, 27
      %v5078 = vpop.permute.xlu0 %5077
      %5079 = vrot.lane.b32.xlu0 %v5014, 27
      %v5080 = vpop.permute.xlu0 %5079
      %5081 = vrot.lane.b32.xlu0 %v5015, 27
      %v5082 = vpop.permute.xlu0 %5081
      %v5083 = vsel %vm4019, %v5080, %v5082
      %v5084 = vsel %vm4019, %v5078, %v5080
      %v5085 = vsel %vm4019, %v5082, %v5078
      %v5086 = vmul.f32 %v5085, %v4023
      %v5087 = vmul.f32 %v5084, %v4024
      %v5088 = vmul.f32 %v5083, %v4025
      %v5089 = vadd.f32 %v5074, %v5086
      %v5090 = vadd.f32 %v5075, %v5087
      %v5091 = vadd.f32 %v5076, %v5088
      %5092 = vrot.lane.b32.xlu0 %v5013, 26
      %v5093 = vpop.permute.xlu0 %5092
      %5094 = vrot.lane.b32.xlu0 %v5014, 26
      %v5095 = vpop.permute.xlu0 %5094
      %5096 = vrot.lane.b32.xlu0 %v5015, 26
      %v5097 = vpop.permute.xlu0 %5096
      %v5098 = vsel %vm4038, %v5095, %v5097
      %v5099 = vsel %vm4038, %v5093, %v5095
      %v5100 = vsel %vm4038, %v5097, %v5093
      %v5101 = vmul.f32 %v5100, %v4042
      %v5102 = vmul.f32 %v5099, %v4043
      %v5103 = vmul.f32 %v5098, %v4044
      %v5104 = vadd.f32 %v5089, %v5101
      %v5105 = vadd.f32 %v5090, %v5102
      %v5106 = vadd.f32 %v5091, %v5103
      %5107 = vrot.lane.b32.xlu0 %v5013, 25
      %v5108 = vpop.permute.xlu0 %5107
      %5109 = vrot.lane.b32.xlu0 %v5014, 25
      %v5110 = vpop.permute.xlu0 %5109
      %5111 = vrot.lane.b32.xlu0 %v5015, 25
      %v5112 = vpop.permute.xlu0 %5111
      %v5113 = vsel %vm4057, %v5110, %v5112
      %v5114 = vsel %vm4057, %v5108, %v5110
      %v5115 = vsel %vm4057, %v5112, %v5108
      %v5116 = vmul.f32 %v5115, %v4061
      %v5117 = vmul.f32 %v5114, %v4062
      %v5118 = vmul.f32 %v5113, %v4063
      %v5119 = vadd.f32 %v5104, %v5116
      %v5120 = vadd.f32 %v5105, %v5117
      %v5121 = vadd.f32 %v5106, %v5118
      %5122 = vrot.lane.b32.xlu0 %v5013, 24
      %v5123 = vpop.permute.xlu0 %5122
      %5124 = vrot.lane.b32.xlu0 %v5014, 24
      %v5125 = vpop.permute.xlu0 %5124
      %5126 = vrot.lane.b32.xlu0 %v5015, 24
      %v5127 = vpop.permute.xlu0 %5126
      %v5128 = vsel %vm4076, %v5125, %v5127
      %v5129 = vsel %vm4076, %v5123, %v5125
      %v5130 = vsel %vm4076, %v5127, %v5123
      %v5131 = vmul.f32 %v5130, %v4080
      %v5132 = vmul.f32 %v5129, %v4081
      %v5133 = vmul.f32 %v5128, %v4082
      %v5134 = vadd.f32 %v5119, %v5131
      %v5135 = vadd.f32 %v5120, %v5132
      %v5136 = vadd.f32 %v5121, %v5133
      %5137 = vrot.lane.b32.xlu0 %v5013, 23
      %v5138 = vpop.permute.xlu0 %5137
      %5139 = vrot.lane.b32.xlu0 %v5014, 23
      %v5140 = vpop.permute.xlu0 %5139
      %5141 = vrot.lane.b32.xlu0 %v5015, 23
      %v5142 = vpop.permute.xlu0 %5141
      %v5143 = vsel %vm4095, %v5140, %v5142
      %v5144 = vsel %vm4095, %v5138, %v5140
      %v5145 = vsel %vm4095, %v5142, %v5138
      %v5146 = vmul.f32 %v5145, %v4099
      %v5147 = vmul.f32 %v5144, %v4100
      %v5148 = vmul.f32 %v5143, %v4101
      %v5149 = vadd.f32 %v5134, %v5146
      %v5150 = vadd.f32 %v5135, %v5147
      %v5151 = vadd.f32 %v5136, %v5148
      %5152 = vrot.lane.b32.xlu0 %v5013, 22
      %v5153 = vpop.permute.xlu0 %5152
      %5154 = vrot.lane.b32.xlu0 %v5014, 22
      %v5155 = vpop.permute.xlu0 %5154
      %5156 = vrot.lane.b32.xlu0 %v5015, 22
      %v5157 = vpop.permute.xlu0 %5156
      %v5158 = vsel %vm4114, %v5155, %v5157
      %v5159 = vsel %vm4114, %v5153, %v5155
      %v5160 = vsel %vm4114, %v5157, %v5153
      %v5161 = vmul.f32 %v5160, %v4118
      %v5162 = vmul.f32 %v5159, %v4119
      %v5163 = vmul.f32 %v5158, %v4120
      %v5164 = vadd.f32 %v5149, %v5161
      %v5165 = vadd.f32 %v5150, %v5162
      %v5166 = vadd.f32 %v5151, %v5163
      %5167 = vrot.lane.b32.xlu0 %v5013, 21
      %v5168 = vpop.permute.xlu0 %5167
      %5169 = vrot.lane.b32.xlu0 %v5014, 21
      %v5170 = vpop.permute.xlu0 %5169
      %5171 = vrot.lane.b32.xlu0 %v5015, 21
      %v5172 = vpop.permute.xlu0 %5171
      %v5173 = vsel %vm4133, %v5170, %v5172
      %v5174 = vsel %vm4133, %v5168, %v5170
      %v5175 = vsel %vm4133, %v5172, %v5168
      %v5176 = vmul.f32 %v5175, %v4137
      %v5177 = vmul.f32 %v5174, %v4138
      %v5178 = vmul.f32 %v5173, %v4139
      %v5179 = vadd.f32 %v5164, %v5176
      %v5180 = vadd.f32 %v5165, %v5177
      %v5181 = vadd.f32 %v5166, %v5178
      %5182 = vrot.lane.b32.xlu0 %v5013, 20
      %v5183 = vpop.permute.xlu0 %5182
      %5184 = vrot.lane.b32.xlu0 %v5014, 20
      %v5185 = vpop.permute.xlu0 %5184
      %5186 = vrot.lane.b32.xlu0 %v5015, 20
      %v5187 = vpop.permute.xlu0 %5186
      %v5188 = vsel %vm4152, %v5185, %v5187
      %v5189 = vsel %vm4152, %v5183, %v5185
      %v5190 = vsel %vm4152, %v5187, %v5183
      %v5191 = vmul.f32 %v5190, %v4156
      %v5192 = vmul.f32 %v5189, %v4157
      %v5193 = vmul.f32 %v5188, %v4158
      %v5194 = vadd.f32 %v5179, %v5191
      %v5195 = vadd.f32 %v5180, %v5192
      %v5196 = vadd.f32 %v5181, %v5193
      %5197 = vrot.lane.b32.xlu0 %v5013, 19
      %v5198 = vpop.permute.xlu0 %5197
      %5199 = vrot.lane.b32.xlu0 %v5014, 19
      %v5200 = vpop.permute.xlu0 %5199
      %5201 = vrot.lane.b32.xlu0 %v5015, 19
      %v5202 = vpop.permute.xlu0 %5201
      %v5203 = vsel %vm4171, %v5200, %v5202
      %v5204 = vsel %vm4171, %v5198, %v5200
      %v5205 = vsel %vm4171, %v5202, %v5198
      %v5206 = vmul.f32 %v5205, %v4175
      %v5207 = vmul.f32 %v5204, %v4176
      %v5208 = vmul.f32 %v5203, %v4177
      %v5209 = vadd.f32 %v5194, %v5206
      %v5210 = vadd.f32 %v5195, %v5207
      %v5211 = vadd.f32 %v5196, %v5208
      %5212 = vrot.lane.b32.xlu0 %v5013, 18
      %v5213 = vpop.permute.xlu0 %5212
      %5214 = vrot.lane.b32.xlu0 %v5014, 18
      %v5215 = vpop.permute.xlu0 %5214
      %5216 = vrot.lane.b32.xlu0 %v5015, 18
      %v5217 = vpop.permute.xlu0 %5216
      %v5218 = vsel %vm4190, %v5215, %v5217
      %v5219 = vsel %vm4190, %v5213, %v5215
      %v5220 = vsel %vm4190, %v5217, %v5213
      %v5221 = vmul.f32 %v5220, %v4194
      %v5222 = vmul.f32 %v5219, %v4195
      %v5223 = vmul.f32 %v5218, %v4196
      %v5224 = vadd.f32 %v5209, %v5221
      %v5225 = vadd.f32 %v5210, %v5222
      %v5226 = vadd.f32 %v5211, %v5223
      %5227 = vrot.lane.b32.xlu0 %v5013, 17
      %v5228 = vpop.permute.xlu0 %5227
      %5229 = vrot.lane.b32.xlu0 %v5014, 17
      %v5230 = vpop.permute.xlu0 %5229
      %5231 = vrot.lane.b32.xlu0 %v5015, 17
      %v5232 = vpop.permute.xlu0 %5231
      %v5233 = vsel %vm4209, %v5230, %v5232
      %v5234 = vsel %vm4209, %v5228, %v5230
      %v5235 = vsel %vm4209, %v5232, %v5228
      %v5236 = vmul.f32 %v5235, %v4213
      %v5237 = vmul.f32 %v5234, %v4214
      %v5238 = vmul.f32 %v5233, %v4215
      %v5239 = vadd.f32 %v5224, %v5236
      %v5240 = vadd.f32 %v5225, %v5237
      %v5241 = vadd.f32 %v5226, %v5238
      %5242 = vrot.lane.b32.xlu0 %v5013, 16
      %v5243 = vpop.permute.xlu0 %5242
      %5244 = vrot.lane.b32.xlu0 %v5014, 16
      %v5245 = vpop.permute.xlu0 %5244
      %5246 = vrot.lane.b32.xlu0 %v5015, 16
      %v5247 = vpop.permute.xlu0 %5246
      %v5248 = vsel %vm4228, %v5245, %v5247
      %v5249 = vsel %vm4228, %v5243, %v5245
      %v5250 = vsel %vm4228, %v5247, %v5243
      %v5251 = vmul.f32 %v5250, %v4232
      %v5252 = vmul.f32 %v5249, %v4233
      %v5253 = vmul.f32 %v5248, %v4234
      %v5254 = vadd.f32 %v5239, %v5251
      %v5255 = vadd.f32 %v5240, %v5252
      %v5256 = vadd.f32 %v5241, %v5253
      %5257 = vrot.lane.b32.xlu0 %v5013, 15
      %v5258 = vpop.permute.xlu0 %5257
      %5259 = vrot.lane.b32.xlu0 %v5014, 15
      %v5260 = vpop.permute.xlu0 %5259
      %5261 = vrot.lane.b32.xlu0 %v5015, 15
      %v5262 = vpop.permute.xlu0 %5261
      %v5263 = vsel %vm4247, %v5260, %v5262
      %v5264 = vsel %vm4247, %v5258, %v5260
      %v5265 = vsel %vm4247, %v5262, %v5258
      %v5266 = vmul.f32 %v5265, %v4251
      %v5267 = vmul.f32 %v5264, %v4252
      %v5268 = vmul.f32 %v5263, %v4253
      %v5269 = vadd.f32 %v5254, %v5266
      %v5270 = vadd.f32 %v5255, %v5267
      %v5271 = vadd.f32 %v5256, %v5268
      %5272 = vrot.lane.b32.xlu0 %v5013, 14
      %v5273 = vpop.permute.xlu0 %5272
      %5274 = vrot.lane.b32.xlu0 %v5014, 14
      %v5275 = vpop.permute.xlu0 %5274
      %5276 = vrot.lane.b32.xlu0 %v5015, 14
      %v5277 = vpop.permute.xlu0 %5276
      %v5278 = vsel %vm4266, %v5275, %v5277
      %v5279 = vsel %vm4266, %v5273, %v5275
      %v5280 = vsel %vm4266, %v5277, %v5273
      %v5281 = vmul.f32 %v5280, %v4270
      %v5282 = vmul.f32 %v5279, %v4271
      %v5283 = vmul.f32 %v5278, %v4272
      %v5284 = vadd.f32 %v5269, %v5281
      %v5285 = vadd.f32 %v5270, %v5282
      %v5286 = vadd.f32 %v5271, %v5283
      %5287 = vrot.lane.b32.xlu0 %v5013, 13
      %v5288 = vpop.permute.xlu0 %5287
      %5289 = vrot.lane.b32.xlu0 %v5014, 13
      %v5290 = vpop.permute.xlu0 %5289
      %5291 = vrot.lane.b32.xlu0 %v5015, 13
      %v5292 = vpop.permute.xlu0 %5291
      %v5293 = vsel %vm4285, %v5290, %v5292
      %v5294 = vsel %vm4285, %v5288, %v5290
      %v5295 = vsel %vm4285, %v5292, %v5288
      %v5296 = vmul.f32 %v5295, %v4289
      %v5297 = vmul.f32 %v5294, %v4290
      %v5298 = vmul.f32 %v5293, %v4291
      %v5299 = vadd.f32 %v5284, %v5296
      %v5300 = vadd.f32 %v5285, %v5297
      %v5301 = vadd.f32 %v5286, %v5298
      %5302 = vrot.lane.b32.xlu0 %v5013, 12
      %v5303 = vpop.permute.xlu0 %5302
      %5304 = vrot.lane.b32.xlu0 %v5014, 12
      %v5305 = vpop.permute.xlu0 %5304
      %5306 = vrot.lane.b32.xlu0 %v5015, 12
      %v5307 = vpop.permute.xlu0 %5306
      %v5308 = vsel %vm4304, %v5305, %v5307
      %v5309 = vsel %vm4304, %v5303, %v5305
      %v5310 = vsel %vm4304, %v5307, %v5303
      %v5311 = vmul.f32 %v5310, %v4308
      %v5312 = vmul.f32 %v5309, %v4309
      %v5313 = vmul.f32 %v5308, %v4310
      %v5314 = vadd.f32 %v5299, %v5311
      %v5315 = vadd.f32 %v5300, %v5312
      %v5316 = vadd.f32 %v5301, %v5313
      %5317 = vrot.lane.b32.xlu0 %v5013, 11
      %v5318 = vpop.permute.xlu0 %5317
      %5319 = vrot.lane.b32.xlu0 %v5014, 11
      %v5320 = vpop.permute.xlu0 %5319
      %5321 = vrot.lane.b32.xlu0 %v5015, 11
      %v5322 = vpop.permute.xlu0 %5321
      %v5323 = vsel %vm4323, %v5320, %v5322
      %v5324 = vsel %vm4323, %v5318, %v5320
      %v5325 = vsel %vm4323, %v5322, %v5318
      %v5326 = vmul.f32 %v5325, %v4327
      %v5327 = vmul.f32 %v5324, %v4328
      %v5328 = vmul.f32 %v5323, %v4329
      %v5329 = vadd.f32 %v5314, %v5326
      %v5330 = vadd.f32 %v5315, %v5327
      %v5331 = vadd.f32 %v5316, %v5328
      %5332 = vrot.lane.b32.xlu0 %v5013, 10
      %v5333 = vpop.permute.xlu0 %5332
      %5334 = vrot.lane.b32.xlu0 %v5014, 10
      %v5335 = vpop.permute.xlu0 %5334
      %5336 = vrot.lane.b32.xlu0 %v5015, 10
      %v5337 = vpop.permute.xlu0 %5336
      %v5338 = vsel %vm4342, %v5335, %v5337
      %v5339 = vsel %vm4342, %v5333, %v5335
      %v5340 = vsel %vm4342, %v5337, %v5333
      %v5341 = vmul.f32 %v5340, %v4346
      %v5342 = vmul.f32 %v5339, %v4347
      %v5343 = vmul.f32 %v5338, %v4348
      %v5344 = vadd.f32 %v5329, %v5341
      %v5345 = vadd.f32 %v5330, %v5342
      %v5346 = vadd.f32 %v5331, %v5343
      %5347 = vrot.lane.b32.xlu0 %v5013, 9
      %v5348 = vpop.permute.xlu0 %5347
      %5349 = vrot.lane.b32.xlu0 %v5014, 9
      %v5350 = vpop.permute.xlu0 %5349
      %5351 = vrot.lane.b32.xlu0 %v5015, 9
      %v5352 = vpop.permute.xlu0 %5351
      %v5353 = vsel %vm4361, %v5350, %v5352
      %v5354 = vsel %vm4361, %v5348, %v5350
      %v5355 = vsel %vm4361, %v5352, %v5348
      %v5356 = vmul.f32 %v5355, %v4365
      %v5357 = vmul.f32 %v5354, %v4366
      %v5358 = vmul.f32 %v5353, %v4367
      %v5359 = vadd.f32 %v5344, %v5356
      %v5360 = vadd.f32 %v5345, %v5357
      %v5361 = vadd.f32 %v5346, %v5358
      %5362 = vrot.lane.b32.xlu0 %v5013, 8
      %v5363 = vpop.permute.xlu0 %5362
      %5364 = vrot.lane.b32.xlu0 %v5014, 8
      %v5365 = vpop.permute.xlu0 %5364
      %5366 = vrot.lane.b32.xlu0 %v5015, 8
      %v5367 = vpop.permute.xlu0 %5366
      %v5368 = vsel %vm4380, %v5365, %v5367
      %v5369 = vsel %vm4380, %v5363, %v5365
      %v5370 = vsel %vm4380, %v5367, %v5363
      %v5371 = vmul.f32 %v5370, %v4384
      %v5372 = vmul.f32 %v5369, %v4385
      %v5373 = vmul.f32 %v5368, %v4386
      %v5374 = vadd.f32 %v5359, %v5371
      %v5375 = vadd.f32 %v5360, %v5372
      %v5376 = vadd.f32 %v5361, %v5373
      %5377 = vrot.lane.b32.xlu0 %v5013, 7
      %v5378 = vpop.permute.xlu0 %5377
      %5379 = vrot.lane.b32.xlu0 %v5014, 7
      %v5380 = vpop.permute.xlu0 %5379
      %5381 = vrot.lane.b32.xlu0 %v5015, 7
      %v5382 = vpop.permute.xlu0 %5381
      %v5383 = vsel %vm4399, %v5380, %v5382
      %v5384 = vsel %vm4399, %v5378, %v5380
      %v5385 = vsel %vm4399, %v5382, %v5378
      %v5386 = vmul.f32 %v5385, %v4403
      %v5387 = vmul.f32 %v5384, %v4404
      %v5388 = vmul.f32 %v5383, %v4405
      %v5389 = vadd.f32 %v5374, %v5386
      %v5390 = vadd.f32 %v5375, %v5387
      %v5391 = vadd.f32 %v5376, %v5388
      %5392 = vrot.lane.b32.xlu0 %v5013, 6
      %v5393 = vpop.permute.xlu0 %5392
      %5394 = vrot.lane.b32.xlu0 %v5014, 6
      %v5395 = vpop.permute.xlu0 %5394
      %5396 = vrot.lane.b32.xlu0 %v5015, 6
      %v5397 = vpop.permute.xlu0 %5396
      %v5398 = vsel %vm4418, %v5395, %v5397
      %v5399 = vsel %vm4418, %v5393, %v5395
      %v5400 = vsel %vm4418, %v5397, %v5393
      %v5401 = vmul.f32 %v5400, %v4422
      %v5402 = vmul.f32 %v5399, %v4423
      %v5403 = vmul.f32 %v5398, %v4424
      %v5404 = vadd.f32 %v5389, %v5401
      %v5405 = vadd.f32 %v5390, %v5402
      %v5406 = vadd.f32 %v5391, %v5403
      %5407 = vrot.lane.b32.xlu0 %v5013, 5
      %v5408 = vpop.permute.xlu0 %5407
      %5409 = vrot.lane.b32.xlu0 %v5014, 5
      %v5410 = vpop.permute.xlu0 %5409
      %5411 = vrot.lane.b32.xlu0 %v5015, 5
      %v5412 = vpop.permute.xlu0 %5411
      %v5413 = vsel %vm4437, %v5410, %v5412
      %v5414 = vsel %vm4437, %v5408, %v5410
      %v5415 = vsel %vm4437, %v5412, %v5408
      %v5416 = vmul.f32 %v5415, %v4441
      %v5417 = vmul.f32 %v5414, %v4442
      %v5418 = vmul.f32 %v5413, %v4443
      %v5419 = vadd.f32 %v5404, %v5416
      %v5420 = vadd.f32 %v5405, %v5417
      %v5421 = vadd.f32 %v5406, %v5418
      %5422 = vrot.lane.b32.xlu0 %v5013, 4
      %v5423 = vpop.permute.xlu0 %5422
      %5424 = vrot.lane.b32.xlu0 %v5014, 4
      %v5425 = vpop.permute.xlu0 %5424
      %5426 = vrot.lane.b32.xlu0 %v5015, 4
      %v5427 = vpop.permute.xlu0 %5426
      %v5428 = vsel %vm4456, %v5425, %v5427
      %v5429 = vsel %vm4456, %v5423, %v5425
      %v5430 = vsel %vm4456, %v5427, %v5423
      %v5431 = vmul.f32 %v5430, %v4460
      %v5432 = vmul.f32 %v5429, %v4461
      %v5433 = vmul.f32 %v5428, %v4462
      %v5434 = vadd.f32 %v5419, %v5431
      %v5435 = vadd.f32 %v5420, %v5432
      %v5436 = vadd.f32 %v5421, %v5433
      %5437 = vrot.lane.b32.xlu0 %v5013, 3
      %v5438 = vpop.permute.xlu0 %5437
      %5439 = vrot.lane.b32.xlu0 %v5014, 3
      %v5440 = vpop.permute.xlu0 %5439
      %5441 = vrot.lane.b32.xlu0 %v5015, 3
      %v5442 = vpop.permute.xlu0 %5441
      %v5443 = vsel %vm4475, %v5440, %v5442
      %v5444 = vsel %vm4475, %v5438, %v5440
      %v5445 = vsel %vm4475, %v5442, %v5438
      %v5446 = vmul.f32 %v5445, %v4479
      %v5447 = vmul.f32 %v5444, %v4480
      %v5448 = vmul.f32 %v5443, %v4481
      %v5449 = vadd.f32 %v5434, %v5446
      %v5450 = vadd.f32 %v5435, %v5447
      %v5451 = vadd.f32 %v5436, %v5448
      %5452 = vrot.lane.b32.xlu0 %v5013, 2
      %v5453 = vpop.permute.xlu0 %5452
      %5454 = vrot.lane.b32.xlu0 %v5014, 2
      %v5455 = vpop.permute.xlu0 %5454
      %5456 = vrot.lane.b32.xlu0 %v5015, 2
      %v5457 = vpop.permute.xlu0 %5456
      %v5458 = vsel %vm4494, %v5455, %v5457
      %v5459 = vsel %vm4494, %v5453, %v5455
      %v5460 = vsel %vm4494, %v5457, %v5453
      %v5461 = vmul.f32 %v5460, %v4498
      %v5462 = vmul.f32 %v5459, %v4499
      %v5463 = vmul.f32 %v5458, %v4500
      %v5464 = vadd.f32 %v5449, %v5461
      %v5465 = vadd.f32 %v5450, %v5462
      %v5466 = vadd.f32 %v5451, %v5463
      %5467 = vrot.lane.b32.xlu0 %v5013, 1
      %v5468 = vpop.permute.xlu0 %5467
      %5469 = vrot.lane.b32.xlu0 %v5014, 1
      %v5470 = vpop.permute.xlu0 %5469
      %5471 = vrot.lane.b32.xlu0 %v5015, 1
      %v5472 = vpop.permute.xlu0 %5471
      %v5473 = vsel %vm4513, %v5470, %v5472
      %v5474 = vsel %vm4513, %v5468, %v5470
      %v5475 = vsel %vm4513, %v5472, %v5468
      %v5476 = vmul.f32 %v5475, %v4517
      %v5477 = vmul.f32 %v5474, %v4518
      %v5478 = vmul.f32 %v5473, %v4519
      %v5479 = vadd.f32 %v5464, %v5476
      %v5480 = vadd.f32 %v5465, %v5477
      %v5481 = vadd.f32 %v5466, %v5478
      %v5482 = vmul.f32 %v5013, %v4526
      %v5483 = vmul.f32 %v5014, %v4527
      %v5484 = vmul.f32 %v5015, %v4528
      %v5485 = vadd.f32 %v5479, %v5482
      %v5486 = vadd.f32 %v5480, %v5483
      %v5487 = vadd.f32 %v5481, %v5484
      %v5488 = vmul.f32 %v5485, %v3931
      %v5489 = vmul.f32 %v5486, %v3932
      %v5490 = vmul.f32 %v5487, %v3933
      %v5491 = vmul.f32 %v5488, 0.33333334
      %v5492 = vmul.f32 %v5489, 0.33333334
      %v5493 = vmul.f32 %v5490, 0.33333334
      %v5494 = vadd.f32 %v5016, %v5493
      %5495 = vrot.lane.b32.xlu0 %v5491, 31
      %v5496 = vpop.permute.xlu0 %5495
      %5497 = vrot.lane.b32.xlu0 %v5492, 31
      %v5498 = vpop.permute.xlu0 %5497
      %5499 = vrot.lane.b32.xlu0 %v5493, 31
      %v5500 = vpop.permute.xlu0 %5499
      %v5501 = vsel %vm3943, %v5498, %v5500
      %v5502 = vsel %vm3943, %v5496, %v5498
      %v5503 = vsel %vm3943, %v5500, %v5496
      %v5504 = vmul.f32 %v5503, %v3947
      %v5505 = vmul.f32 %v5502, %v3948
      %v5506 = vmul.f32 %v5501, %v3949
      %v5507 = vadd.f32 %v5504, 0.0
      %v5508 = vadd.f32 %v5505, 0.0
      %v5509 = vadd.f32 %v5506, 0.0
      %5510 = vrot.lane.b32.xlu0 %v5491, 30
      %v5511 = vpop.permute.xlu0 %5510
      %5512 = vrot.lane.b32.xlu0 %v5492, 30
      %v5513 = vpop.permute.xlu0 %5512
      %5514 = vrot.lane.b32.xlu0 %v5493, 30
      %v5515 = vpop.permute.xlu0 %5514
      %v5516 = vsel %vm3962, %v5513, %v5515
      %v5517 = vsel %vm3962, %v5511, %v5513
      %v5518 = vsel %vm3962, %v5515, %v5511
      %v5519 = vmul.f32 %v5518, %v3966
      %v5520 = vmul.f32 %v5517, %v3967
      %v5521 = vmul.f32 %v5516, %v3968
      %v5522 = vadd.f32 %v5507, %v5519
      %v5523 = vadd.f32 %v5508, %v5520
      %v5524 = vadd.f32 %v5509, %v5521
      %5525 = vrot.lane.b32.xlu0 %v5491, 29
      %v5526 = vpop.permute.xlu0 %5525
      %5527 = vrot.lane.b32.xlu0 %v5492, 29
      %v5528 = vpop.permute.xlu0 %5527
      %5529 = vrot.lane.b32.xlu0 %v5493, 29
      %v5530 = vpop.permute.xlu0 %5529
      %v5531 = vsel %vm3981, %v5528, %v5530
      %v5532 = vsel %vm3981, %v5526, %v5528
      %v5533 = vsel %vm3981, %v5530, %v5526
      %v5534 = vmul.f32 %v5533, %v3985
      %v5535 = vmul.f32 %v5532, %v3986
      %v5536 = vmul.f32 %v5531, %v3987
      %v5537 = vadd.f32 %v5522, %v5534
      %v5538 = vadd.f32 %v5523, %v5535
      %v5539 = vadd.f32 %v5524, %v5536
      %5540 = vrot.lane.b32.xlu0 %v5491, 28
      %v5541 = vpop.permute.xlu0 %5540
      %5542 = vrot.lane.b32.xlu0 %v5492, 28
      %v5543 = vpop.permute.xlu0 %5542
      %5544 = vrot.lane.b32.xlu0 %v5493, 28
      %v5545 = vpop.permute.xlu0 %5544
      %v5546 = vsel %vm4000, %v5543, %v5545
      %v5547 = vsel %vm4000, %v5541, %v5543
      %v5548 = vsel %vm4000, %v5545, %v5541
      %v5549 = vmul.f32 %v5548, %v4004
      %v5550 = vmul.f32 %v5547, %v4005
      %v5551 = vmul.f32 %v5546, %v4006
      %v5552 = vadd.f32 %v5537, %v5549
      %v5553 = vadd.f32 %v5538, %v5550
      %v5554 = vadd.f32 %v5539, %v5551
      %5555 = vrot.lane.b32.xlu0 %v5491, 27
      %v5556 = vpop.permute.xlu0 %5555
      %5557 = vrot.lane.b32.xlu0 %v5492, 27
      %v5558 = vpop.permute.xlu0 %5557
      %5559 = vrot.lane.b32.xlu0 %v5493, 27
      %v5560 = vpop.permute.xlu0 %5559
      %v5561 = vsel %vm4019, %v5558, %v5560
      %v5562 = vsel %vm4019, %v5556, %v5558
      %v5563 = vsel %vm4019, %v5560, %v5556
      %v5564 = vmul.f32 %v5563, %v4023
      %v5565 = vmul.f32 %v5562, %v4024
      %v5566 = vmul.f32 %v5561, %v4025
      %v5567 = vadd.f32 %v5552, %v5564
      %v5568 = vadd.f32 %v5553, %v5565
      %v5569 = vadd.f32 %v5554, %v5566
      %5570 = vrot.lane.b32.xlu0 %v5491, 26
      %v5571 = vpop.permute.xlu0 %5570
      %5572 = vrot.lane.b32.xlu0 %v5492, 26
      %v5573 = vpop.permute.xlu0 %5572
      %5574 = vrot.lane.b32.xlu0 %v5493, 26
      %v5575 = vpop.permute.xlu0 %5574
      %v5576 = vsel %vm4038, %v5573, %v5575
      %v5577 = vsel %vm4038, %v5571, %v5573
      %v5578 = vsel %vm4038, %v5575, %v5571
      %v5579 = vmul.f32 %v5578, %v4042
      %v5580 = vmul.f32 %v5577, %v4043
      %v5581 = vmul.f32 %v5576, %v4044
      %v5582 = vadd.f32 %v5567, %v5579
      %v5583 = vadd.f32 %v5568, %v5580
      %v5584 = vadd.f32 %v5569, %v5581
      %5585 = vrot.lane.b32.xlu0 %v5491, 25
      %v5586 = vpop.permute.xlu0 %5585
      %5587 = vrot.lane.b32.xlu0 %v5492, 25
      %v5588 = vpop.permute.xlu0 %5587
      %5589 = vrot.lane.b32.xlu0 %v5493, 25
      %v5590 = vpop.permute.xlu0 %5589
      %v5591 = vsel %vm4057, %v5588, %v5590
      %v5592 = vsel %vm4057, %v5586, %v5588
      %v5593 = vsel %vm4057, %v5590, %v5586
      %v5594 = vmul.f32 %v5593, %v4061
      %v5595 = vmul.f32 %v5592, %v4062
      %v5596 = vmul.f32 %v5591, %v4063
      %v5597 = vadd.f32 %v5582, %v5594
      %v5598 = vadd.f32 %v5583, %v5595
      %v5599 = vadd.f32 %v5584, %v5596
      %5600 = vrot.lane.b32.xlu0 %v5491, 24
      %v5601 = vpop.permute.xlu0 %5600
      %5602 = vrot.lane.b32.xlu0 %v5492, 24
      %v5603 = vpop.permute.xlu0 %5602
      %5604 = vrot.lane.b32.xlu0 %v5493, 24
      %v5605 = vpop.permute.xlu0 %5604
      %v5606 = vsel %vm4076, %v5603, %v5605
      %v5607 = vsel %vm4076, %v5601, %v5603
      %v5608 = vsel %vm4076, %v5605, %v5601
      %v5609 = vmul.f32 %v5608, %v4080
      %v5610 = vmul.f32 %v5607, %v4081
      %v5611 = vmul.f32 %v5606, %v4082
      %v5612 = vadd.f32 %v5597, %v5609
      %v5613 = vadd.f32 %v5598, %v5610
      %v5614 = vadd.f32 %v5599, %v5611
      %5615 = vrot.lane.b32.xlu0 %v5491, 23
      %v5616 = vpop.permute.xlu0 %5615
      %5617 = vrot.lane.b32.xlu0 %v5492, 23
      %v5618 = vpop.permute.xlu0 %5617
      %5619 = vrot.lane.b32.xlu0 %v5493, 23
      %v5620 = vpop.permute.xlu0 %5619
      %v5621 = vsel %vm4095, %v5618, %v5620
      %v5622 = vsel %vm4095, %v5616, %v5618
      %v5623 = vsel %vm4095, %v5620, %v5616
      %v5624 = vmul.f32 %v5623, %v4099
      %v5625 = vmul.f32 %v5622, %v4100
      %v5626 = vmul.f32 %v5621, %v4101
      %v5627 = vadd.f32 %v5612, %v5624
      %v5628 = vadd.f32 %v5613, %v5625
      %v5629 = vadd.f32 %v5614, %v5626
      %5630 = vrot.lane.b32.xlu0 %v5491, 22
      %v5631 = vpop.permute.xlu0 %5630
      %5632 = vrot.lane.b32.xlu0 %v5492, 22
      %v5633 = vpop.permute.xlu0 %5632
      %5634 = vrot.lane.b32.xlu0 %v5493, 22
      %v5635 = vpop.permute.xlu0 %5634
      %v5636 = vsel %vm4114, %v5633, %v5635
      %v5637 = vsel %vm4114, %v5631, %v5633
      %v5638 = vsel %vm4114, %v5635, %v5631
      %v5639 = vmul.f32 %v5638, %v4118
      %v5640 = vmul.f32 %v5637, %v4119
      %v5641 = vmul.f32 %v5636, %v4120
      %v5642 = vadd.f32 %v5627, %v5639
      %v5643 = vadd.f32 %v5628, %v5640
      %v5644 = vadd.f32 %v5629, %v5641
      %5645 = vrot.lane.b32.xlu0 %v5491, 21
      %v5646 = vpop.permute.xlu0 %5645
      %5647 = vrot.lane.b32.xlu0 %v5492, 21
      %v5648 = vpop.permute.xlu0 %5647
      %5649 = vrot.lane.b32.xlu0 %v5493, 21
      %v5650 = vpop.permute.xlu0 %5649
      %v5651 = vsel %vm4133, %v5648, %v5650
      %v5652 = vsel %vm4133, %v5646, %v5648
      %v5653 = vsel %vm4133, %v5650, %v5646
      %v5654 = vmul.f32 %v5653, %v4137
      %v5655 = vmul.f32 %v5652, %v4138
      %v5656 = vmul.f32 %v5651, %v4139
      %v5657 = vadd.f32 %v5642, %v5654
      %v5658 = vadd.f32 %v5643, %v5655
      %v5659 = vadd.f32 %v5644, %v5656
      %5660 = vrot.lane.b32.xlu0 %v5491, 20
      %v5661 = vpop.permute.xlu0 %5660
      %5662 = vrot.lane.b32.xlu0 %v5492, 20
      %v5663 = vpop.permute.xlu0 %5662
      %5664 = vrot.lane.b32.xlu0 %v5493, 20
      %v5665 = vpop.permute.xlu0 %5664
      %v5666 = vsel %vm4152, %v5663, %v5665
      %v5667 = vsel %vm4152, %v5661, %v5663
      %v5668 = vsel %vm4152, %v5665, %v5661
      %v5669 = vmul.f32 %v5668, %v4156
      %v5670 = vmul.f32 %v5667, %v4157
      %v5671 = vmul.f32 %v5666, %v4158
      %v5672 = vadd.f32 %v5657, %v5669
      %v5673 = vadd.f32 %v5658, %v5670
      %v5674 = vadd.f32 %v5659, %v5671
      %5675 = vrot.lane.b32.xlu0 %v5491, 19
      %v5676 = vpop.permute.xlu0 %5675
      %5677 = vrot.lane.b32.xlu0 %v5492, 19
      %v5678 = vpop.permute.xlu0 %5677
      %5679 = vrot.lane.b32.xlu0 %v5493, 19
      %v5680 = vpop.permute.xlu0 %5679
      %v5681 = vsel %vm4171, %v5678, %v5680
      %v5682 = vsel %vm4171, %v5676, %v5678
      %v5683 = vsel %vm4171, %v5680, %v5676
      %v5684 = vmul.f32 %v5683, %v4175
      %v5685 = vmul.f32 %v5682, %v4176
      %v5686 = vmul.f32 %v5681, %v4177
      %v5687 = vadd.f32 %v5672, %v5684
      %v5688 = vadd.f32 %v5673, %v5685
      %v5689 = vadd.f32 %v5674, %v5686
      %5690 = vrot.lane.b32.xlu0 %v5491, 18
      %v5691 = vpop.permute.xlu0 %5690
      %5692 = vrot.lane.b32.xlu0 %v5492, 18
      %v5693 = vpop.permute.xlu0 %5692
      %5694 = vrot.lane.b32.xlu0 %v5493, 18
      %v5695 = vpop.permute.xlu0 %5694
      %v5696 = vsel %vm4190, %v5693, %v5695
      %v5697 = vsel %vm4190, %v5691, %v5693
      %v5698 = vsel %vm4190, %v5695, %v5691
      %v5699 = vmul.f32 %v5698, %v4194
      %v5700 = vmul.f32 %v5697, %v4195
      %v5701 = vmul.f32 %v5696, %v4196
      %v5702 = vadd.f32 %v5687, %v5699
      %v5703 = vadd.f32 %v5688, %v5700
      %v5704 = vadd.f32 %v5689, %v5701
      %5705 = vrot.lane.b32.xlu0 %v5491, 17
      %v5706 = vpop.permute.xlu0 %5705
      %5707 = vrot.lane.b32.xlu0 %v5492, 17
      %v5708 = vpop.permute.xlu0 %5707
      %5709 = vrot.lane.b32.xlu0 %v5493, 17
      %v5710 = vpop.permute.xlu0 %5709
      %v5711 = vsel %vm4209, %v5708, %v5710
      %v5712 = vsel %vm4209, %v5706, %v5708
      %v5713 = vsel %vm4209, %v5710, %v5706
      %v5714 = vmul.f32 %v5713, %v4213
      %v5715 = vmul.f32 %v5712, %v4214
      %v5716 = vmul.f32 %v5711, %v4215
      %v5717 = vadd.f32 %v5702, %v5714
      %v5718 = vadd.f32 %v5703, %v5715
      %v5719 = vadd.f32 %v5704, %v5716
      %5720 = vrot.lane.b32.xlu0 %v5491, 16
      %v5721 = vpop.permute.xlu0 %5720
      %5722 = vrot.lane.b32.xlu0 %v5492, 16
      %v5723 = vpop.permute.xlu0 %5722
      %5724 = vrot.lane.b32.xlu0 %v5493, 16
      %v5725 = vpop.permute.xlu0 %5724
      %v5726 = vsel %vm4228, %v5723, %v5725
      %v5727 = vsel %vm4228, %v5721, %v5723
      %v5728 = vsel %vm4228, %v5725, %v5721
      %v5729 = vmul.f32 %v5728, %v4232
      %v5730 = vmul.f32 %v5727, %v4233
      %v5731 = vmul.f32 %v5726, %v4234
      %v5732 = vadd.f32 %v5717, %v5729
      %v5733 = vadd.f32 %v5718, %v5730
      %v5734 = vadd.f32 %v5719, %v5731
      %5735 = vrot.lane.b32.xlu0 %v5491, 15
      %v5736 = vpop.permute.xlu0 %5735
      %5737 = vrot.lane.b32.xlu0 %v5492, 15
      %v5738 = vpop.permute.xlu0 %5737
      %5739 = vrot.lane.b32.xlu0 %v5493, 15
      %v5740 = vpop.permute.xlu0 %5739
      %v5741 = vsel %vm4247, %v5738, %v5740
      %v5742 = vsel %vm4247, %v5736, %v5738
      %v5743 = vsel %vm4247, %v5740, %v5736
      %v5744 = vmul.f32 %v5743, %v4251
      %v5745 = vmul.f32 %v5742, %v4252
      %v5746 = vmul.f32 %v5741, %v4253
      %v5747 = vadd.f32 %v5732, %v5744
      %v5748 = vadd.f32 %v5733, %v5745
      %v5749 = vadd.f32 %v5734, %v5746
      %5750 = vrot.lane.b32.xlu0 %v5491, 14
      %v5751 = vpop.permute.xlu0 %5750
      %5752 = vrot.lane.b32.xlu0 %v5492, 14
      %v5753 = vpop.permute.xlu0 %5752
      %5754 = vrot.lane.b32.xlu0 %v5493, 14
      %v5755 = vpop.permute.xlu0 %5754
      %v5756 = vsel %vm4266, %v5753, %v5755
      %v5757 = vsel %vm4266, %v5751, %v5753
      %v5758 = vsel %vm4266, %v5755, %v5751
      %v5759 = vmul.f32 %v5758, %v4270
      %v5760 = vmul.f32 %v5757, %v4271
      %v5761 = vmul.f32 %v5756, %v4272
      %v5762 = vadd.f32 %v5747, %v5759
      %v5763 = vadd.f32 %v5748, %v5760
      %v5764 = vadd.f32 %v5749, %v5761
      %5765 = vrot.lane.b32.xlu0 %v5491, 13
      %v5766 = vpop.permute.xlu0 %5765
      %5767 = vrot.lane.b32.xlu0 %v5492, 13
      %v5768 = vpop.permute.xlu0 %5767
      %5769 = vrot.lane.b32.xlu0 %v5493, 13
      %v5770 = vpop.permute.xlu0 %5769
      %v5771 = vsel %vm4285, %v5768, %v5770
      %v5772 = vsel %vm4285, %v5766, %v5768
      %v5773 = vsel %vm4285, %v5770, %v5766
      %v5774 = vmul.f32 %v5773, %v4289
      %v5775 = vmul.f32 %v5772, %v4290
      %v5776 = vmul.f32 %v5771, %v4291
      %v5777 = vadd.f32 %v5762, %v5774
      %v5778 = vadd.f32 %v5763, %v5775
      %v5779 = vadd.f32 %v5764, %v5776
      %5780 = vrot.lane.b32.xlu0 %v5491, 12
      %v5781 = vpop.permute.xlu0 %5780
      %5782 = vrot.lane.b32.xlu0 %v5492, 12
      %v5783 = vpop.permute.xlu0 %5782
      %5784 = vrot.lane.b32.xlu0 %v5493, 12
      %v5785 = vpop.permute.xlu0 %5784
      %v5786 = vsel %vm4304, %v5783, %v5785
      %v5787 = vsel %vm4304, %v5781, %v5783
      %v5788 = vsel %vm4304, %v5785, %v5781
      %v5789 = vmul.f32 %v5788, %v4308
      %v5790 = vmul.f32 %v5787, %v4309
      %v5791 = vmul.f32 %v5786, %v4310
      %v5792 = vadd.f32 %v5777, %v5789
      %v5793 = vadd.f32 %v5778, %v5790
      %v5794 = vadd.f32 %v5779, %v5791
      %5795 = vrot.lane.b32.xlu0 %v5491, 11
      %v5796 = vpop.permute.xlu0 %5795
      %5797 = vrot.lane.b32.xlu0 %v5492, 11
      %v5798 = vpop.permute.xlu0 %5797
      %5799 = vrot.lane.b32.xlu0 %v5493, 11
      %v5800 = vpop.permute.xlu0 %5799
      %v5801 = vsel %vm4323, %v5798, %v5800
      %v5802 = vsel %vm4323, %v5796, %v5798
      %v5803 = vsel %vm4323, %v5800, %v5796
      %v5804 = vmul.f32 %v5803, %v4327
      %v5805 = vmul.f32 %v5802, %v4328
      %v5806 = vmul.f32 %v5801, %v4329
      %v5807 = vadd.f32 %v5792, %v5804
      %v5808 = vadd.f32 %v5793, %v5805
      %v5809 = vadd.f32 %v5794, %v5806
      %5810 = vrot.lane.b32.xlu0 %v5491, 10
      %v5811 = vpop.permute.xlu0 %5810
      %5812 = vrot.lane.b32.xlu0 %v5492, 10
      %v5813 = vpop.permute.xlu0 %5812
      %5814 = vrot.lane.b32.xlu0 %v5493, 10
      %v5815 = vpop.permute.xlu0 %5814
      %v5816 = vsel %vm4342, %v5813, %v5815
      %v5817 = vsel %vm4342, %v5811, %v5813
      %v5818 = vsel %vm4342, %v5815, %v5811
      %v5819 = vmul.f32 %v5818, %v4346
      %v5820 = vmul.f32 %v5817, %v4347
      %v5821 = vmul.f32 %v5816, %v4348
      %v5822 = vadd.f32 %v5807, %v5819
      %v5823 = vadd.f32 %v5808, %v5820
      %v5824 = vadd.f32 %v5809, %v5821
      %5825 = vrot.lane.b32.xlu0 %v5491, 9
      %v5826 = vpop.permute.xlu0 %5825
      %5827 = vrot.lane.b32.xlu0 %v5492, 9
      %v5828 = vpop.permute.xlu0 %5827
      %5829 = vrot.lane.b32.xlu0 %v5493, 9
      %v5830 = vpop.permute.xlu0 %5829
      %v5831 = vsel %vm4361, %v5828, %v5830
      %v5832 = vsel %vm4361, %v5826, %v5828
      %v5833 = vsel %vm4361, %v5830, %v5826
      %v5834 = vmul.f32 %v5833, %v4365
      %v5835 = vmul.f32 %v5832, %v4366
      %v5836 = vmul.f32 %v5831, %v4367
      %v5837 = vadd.f32 %v5822, %v5834
      %v5838 = vadd.f32 %v5823, %v5835
      %v5839 = vadd.f32 %v5824, %v5836
      %5840 = vrot.lane.b32.xlu0 %v5491, 8
      %v5841 = vpop.permute.xlu0 %5840
      %5842 = vrot.lane.b32.xlu0 %v5492, 8
      %v5843 = vpop.permute.xlu0 %5842
      %5844 = vrot.lane.b32.xlu0 %v5493, 8
      %v5845 = vpop.permute.xlu0 %5844
      %v5846 = vsel %vm4380, %v5843, %v5845
      %v5847 = vsel %vm4380, %v5841, %v5843
      %v5848 = vsel %vm4380, %v5845, %v5841
      %v5849 = vmul.f32 %v5848, %v4384
      %v5850 = vmul.f32 %v5847, %v4385
      %v5851 = vmul.f32 %v5846, %v4386
      %v5852 = vadd.f32 %v5837, %v5849
      %v5853 = vadd.f32 %v5838, %v5850
      %v5854 = vadd.f32 %v5839, %v5851
      %5855 = vrot.lane.b32.xlu0 %v5491, 7
      %v5856 = vpop.permute.xlu0 %5855
      %5857 = vrot.lane.b32.xlu0 %v5492, 7
      %v5858 = vpop.permute.xlu0 %5857
      %5859 = vrot.lane.b32.xlu0 %v5493, 7
      %v5860 = vpop.permute.xlu0 %5859
      %v5861 = vsel %vm4399, %v5858, %v5860
      %v5862 = vsel %vm4399, %v5856, %v5858
      %v5863 = vsel %vm4399, %v5860, %v5856
      %v5864 = vmul.f32 %v5863, %v4403
      %v5865 = vmul.f32 %v5862, %v4404
      %v5866 = vmul.f32 %v5861, %v4405
      %v5867 = vadd.f32 %v5852, %v5864
      %v5868 = vadd.f32 %v5853, %v5865
      %v5869 = vadd.f32 %v5854, %v5866
      %5870 = vrot.lane.b32.xlu0 %v5491, 6
      %v5871 = vpop.permute.xlu0 %5870
      %5872 = vrot.lane.b32.xlu0 %v5492, 6
      %v5873 = vpop.permute.xlu0 %5872
      %5874 = vrot.lane.b32.xlu0 %v5493, 6
      %v5875 = vpop.permute.xlu0 %5874
      %v5876 = vsel %vm4418, %v5873, %v5875
      %v5877 = vsel %vm4418, %v5871, %v5873
      %v5878 = vsel %vm4418, %v5875, %v5871
      %v5879 = vmul.f32 %v5878, %v4422
      %v5880 = vmul.f32 %v5877, %v4423
      %v5881 = vmul.f32 %v5876, %v4424
      %v5882 = vadd.f32 %v5867, %v5879
      %v5883 = vadd.f32 %v5868, %v5880
      %v5884 = vadd.f32 %v5869, %v5881
      %5885 = vrot.lane.b32.xlu0 %v5491, 5
      %v5886 = vpop.permute.xlu0 %5885
      %5887 = vrot.lane.b32.xlu0 %v5492, 5
      %v5888 = vpop.permute.xlu0 %5887
      %5889 = vrot.lane.b32.xlu0 %v5493, 5
      %v5890 = vpop.permute.xlu0 %5889
      %v5891 = vsel %vm4437, %v5888, %v5890
      %v5892 = vsel %vm4437, %v5886, %v5888
      %v5893 = vsel %vm4437, %v5890, %v5886
      %v5894 = vmul.f32 %v5893, %v4441
      %v5895 = vmul.f32 %v5892, %v4442
      %v5896 = vmul.f32 %v5891, %v4443
      %v5897 = vadd.f32 %v5882, %v5894
      %v5898 = vadd.f32 %v5883, %v5895
      %v5899 = vadd.f32 %v5884, %v5896
      %5900 = vrot.lane.b32.xlu0 %v5491, 4
      %v5901 = vpop.permute.xlu0 %5900
      %5902 = vrot.lane.b32.xlu0 %v5492, 4
      %v5903 = vpop.permute.xlu0 %5902
      %5904 = vrot.lane.b32.xlu0 %v5493, 4
      %v5905 = vpop.permute.xlu0 %5904
      %v5906 = vsel %vm4456, %v5903, %v5905
      %v5907 = vsel %vm4456, %v5901, %v5903
      %v5908 = vsel %vm4456, %v5905, %v5901
      %v5909 = vmul.f32 %v5908, %v4460
      %v5910 = vmul.f32 %v5907, %v4461
      %v5911 = vmul.f32 %v5906, %v4462
      %v5912 = vadd.f32 %v5897, %v5909
      %v5913 = vadd.f32 %v5898, %v5910
      %v5914 = vadd.f32 %v5899, %v5911
      %5915 = vrot.lane.b32.xlu0 %v5491, 3
      %v5916 = vpop.permute.xlu0 %5915
      %5917 = vrot.lane.b32.xlu0 %v5492, 3
      %v5918 = vpop.permute.xlu0 %5917
      %5919 = vrot.lane.b32.xlu0 %v5493, 3
      %v5920 = vpop.permute.xlu0 %5919
      %v5921 = vsel %vm4475, %v5918, %v5920
      %v5922 = vsel %vm4475, %v5916, %v5918
      %v5923 = vsel %vm4475, %v5920, %v5916
      %v5924 = vmul.f32 %v5923, %v4479
      %v5925 = vmul.f32 %v5922, %v4480
      %v5926 = vmul.f32 %v5921, %v4481
      %v5927 = vadd.f32 %v5912, %v5924
      %v5928 = vadd.f32 %v5913, %v5925
      %v5929 = vadd.f32 %v5914, %v5926
      %5930 = vrot.lane.b32.xlu0 %v5491, 2
      %v5931 = vpop.permute.xlu0 %5930
      %5932 = vrot.lane.b32.xlu0 %v5492, 2
      %v5933 = vpop.permute.xlu0 %5932
      %5934 = vrot.lane.b32.xlu0 %v5493, 2
      %v5935 = vpop.permute.xlu0 %5934
      %v5936 = vsel %vm4494, %v5933, %v5935
      %v5937 = vsel %vm4494, %v5931, %v5933
      %v5938 = vsel %vm4494, %v5935, %v5931
      %v5939 = vmul.f32 %v5938, %v4498
      %v5940 = vmul.f32 %v5937, %v4499
      %v5941 = vmul.f32 %v5936, %v4500
      %v5942 = vadd.f32 %v5927, %v5939
      %v5943 = vadd.f32 %v5928, %v5940
      %v5944 = vadd.f32 %v5929, %v5941
      %5945 = vrot.lane.b32.xlu0 %v5491, 1
      %v5946 = vpop.permute.xlu0 %5945
      %5947 = vrot.lane.b32.xlu0 %v5492, 1
      %v5948 = vpop.permute.xlu0 %5947
      %5949 = vrot.lane.b32.xlu0 %v5493, 1
      %v5950 = vpop.permute.xlu0 %5949
      %v5951 = vsel %vm4513, %v5948, %v5950
      %v5952 = vsel %vm4513, %v5946, %v5948
      %v5953 = vsel %vm4513, %v5950, %v5946
      %v5954 = vmul.f32 %v5953, %v4517
      %v5955 = vmul.f32 %v5952, %v4518
      %v5956 = vmul.f32 %v5951, %v4519
      %v5957 = vadd.f32 %v5942, %v5954
      %v5958 = vadd.f32 %v5943, %v5955
      %v5959 = vadd.f32 %v5944, %v5956
      %v5960 = vmul.f32 %v5491, %v4526
      %v5961 = vmul.f32 %v5492, %v4527
      %v5962 = vmul.f32 %v5493, %v4528
      %v5963 = vadd.f32 %v5957, %v5960
      %v5964 = vadd.f32 %v5958, %v5961
      %v5965 = vadd.f32 %v5959, %v5962
      %v5966 = vmul.f32 %v5963, %v3931
      %v5967 = vmul.f32 %v5964, %v3932
      %v5968 = vmul.f32 %v5965, %v3933
      %v5969 = vmul.f32 %v5966, 0.25
      %v5970 = vmul.f32 %v5967, 0.25
      %v5971 = vmul.f32 %v5968, 0.25
      %v5972 = vadd.f32 %v5494, %v5971
      %5973 = vrot.lane.b32.xlu0 %v5969, 31
      %v5974 = vpop.permute.xlu0 %5973
      %5975 = vrot.lane.b32.xlu0 %v5970, 31
      %v5976 = vpop.permute.xlu0 %5975
      %5977 = vrot.lane.b32.xlu0 %v5971, 31
      %v5978 = vpop.permute.xlu0 %5977
      %v5979 = vsel %vm3943, %v5976, %v5978
      %v5980 = vsel %vm3943, %v5974, %v5976
      %v5981 = vmul.f32 %v5980, %v3948
      %v5982 = vmul.f32 %v5979, %v3949
      %v5983 = vadd.f32 %v5981, 0.0
      %v5984 = vadd.f32 %v5982, 0.0
      %5985 = vrot.lane.b32.xlu0 %v5969, 30
      %v5986 = vpop.permute.xlu0 %5985
      %5987 = vrot.lane.b32.xlu0 %v5970, 30
      %v5988 = vpop.permute.xlu0 %5987
      %5989 = vrot.lane.b32.xlu0 %v5971, 30
      %v5990 = vpop.permute.xlu0 %5989
      %v5991 = vsel %vm3962, %v5988, %v5990
      %v5992 = vsel %vm3962, %v5986, %v5988
      %v5993 = vmul.f32 %v5992, %v3967
      %v5994 = vmul.f32 %v5991, %v3968
      %v5995 = vadd.f32 %v5983, %v5993
      %v5996 = vadd.f32 %v5984, %v5994
      %5997 = vrot.lane.b32.xlu0 %v5969, 29
      %v5998 = vpop.permute.xlu0 %5997
      %5999 = vrot.lane.b32.xlu0 %v5970, 29
      %v6000 = vpop.permute.xlu0 %5999
      %6001 = vrot.lane.b32.xlu0 %v5971, 29
      %v6002 = vpop.permute.xlu0 %6001
      %v6003 = vsel %vm3981, %v6000, %v6002
      %v6004 = vsel %vm3981, %v5998, %v6000
      %v6005 = vmul.f32 %v6004, %v3986
      %v6006 = vmul.f32 %v6003, %v3987
      %v6007 = vadd.f32 %v5995, %v6005
      %v6008 = vadd.f32 %v5996, %v6006
      %6009 = vrot.lane.b32.xlu0 %v5969, 28
      %v6010 = vpop.permute.xlu0 %6009
      %6011 = vrot.lane.b32.xlu0 %v5970, 28
      %v6012 = vpop.permute.xlu0 %6011
      %6013 = vrot.lane.b32.xlu0 %v5971, 28
      %v6014 = vpop.permute.xlu0 %6013
      %v6015 = vsel %vm4000, %v6012, %v6014
      %v6016 = vsel %vm4000, %v6010, %v6012
      %v6017 = vmul.f32 %v6016, %v4005
      %v6018 = vmul.f32 %v6015, %v4006
      %v6019 = vadd.f32 %v6007, %v6017
      %v6020 = vadd.f32 %v6008, %v6018
      %6021 = vrot.lane.b32.xlu0 %v5969, 27
      %v6022 = vpop.permute.xlu0 %6021
      %6023 = vrot.lane.b32.xlu0 %v5970, 27
      %v6024 = vpop.permute.xlu0 %6023
      %6025 = vrot.lane.b32.xlu0 %v5971, 27
      %v6026 = vpop.permute.xlu0 %6025
      %v6027 = vsel %vm4019, %v6024, %v6026
      %v6028 = vsel %vm4019, %v6022, %v6024
      %v6029 = vmul.f32 %v6028, %v4024
      %v6030 = vmul.f32 %v6027, %v4025
      %v6031 = vadd.f32 %v6019, %v6029
      %v6032 = vadd.f32 %v6020, %v6030
      %6033 = vrot.lane.b32.xlu0 %v5969, 26
      %v6034 = vpop.permute.xlu0 %6033
      %6035 = vrot.lane.b32.xlu0 %v5970, 26
      %v6036 = vpop.permute.xlu0 %6035
      %6037 = vrot.lane.b32.xlu0 %v5971, 26
      %v6038 = vpop.permute.xlu0 %6037
      %v6039 = vsel %vm4038, %v6036, %v6038
      %v6040 = vsel %vm4038, %v6034, %v6036
      %v6041 = vmul.f32 %v6040, %v4043
      %v6042 = vmul.f32 %v6039, %v4044
      %v6043 = vadd.f32 %v6031, %v6041
      %v6044 = vadd.f32 %v6032, %v6042
      %6045 = vrot.lane.b32.xlu0 %v5969, 25
      %v6046 = vpop.permute.xlu0 %6045
      %6047 = vrot.lane.b32.xlu0 %v5970, 25
      %v6048 = vpop.permute.xlu0 %6047
      %6049 = vrot.lane.b32.xlu0 %v5971, 25
      %v6050 = vpop.permute.xlu0 %6049
      %v6051 = vsel %vm4057, %v6048, %v6050
      %v6052 = vsel %vm4057, %v6046, %v6048
      %v6053 = vmul.f32 %v6052, %v4062
      %v6054 = vmul.f32 %v6051, %v4063
      %v6055 = vadd.f32 %v6043, %v6053
      %v6056 = vadd.f32 %v6044, %v6054
      %6057 = vrot.lane.b32.xlu0 %v5969, 24
      %v6058 = vpop.permute.xlu0 %6057
      %6059 = vrot.lane.b32.xlu0 %v5970, 24
      %v6060 = vpop.permute.xlu0 %6059
      %6061 = vrot.lane.b32.xlu0 %v5971, 24
      %v6062 = vpop.permute.xlu0 %6061
      %v6063 = vsel %vm4076, %v6060, %v6062
      %v6064 = vsel %vm4076, %v6058, %v6060
      %v6065 = vmul.f32 %v6064, %v4081
      %v6066 = vmul.f32 %v6063, %v4082
      %v6067 = vadd.f32 %v6055, %v6065
      %v6068 = vadd.f32 %v6056, %v6066
      %6069 = vrot.lane.b32.xlu0 %v5969, 23
      %v6070 = vpop.permute.xlu0 %6069
      %6071 = vrot.lane.b32.xlu0 %v5970, 23
      %v6072 = vpop.permute.xlu0 %6071
      %6073 = vrot.lane.b32.xlu0 %v5971, 23
      %v6074 = vpop.permute.xlu0 %6073
      %v6075 = vsel %vm4095, %v6072, %v6074
      %v6076 = vsel %vm4095, %v6070, %v6072
      %v6077 = vmul.f32 %v6076, %v4100
      %v6078 = vmul.f32 %v6075, %v4101
      %v6079 = vadd.f32 %v6067, %v6077
      %v6080 = vadd.f32 %v6068, %v6078
      %6081 = vrot.lane.b32.xlu0 %v5969, 22
      %v6082 = vpop.permute.xlu0 %6081
      %6083 = vrot.lane.b32.xlu0 %v5970, 22
      %v6084 = vpop.permute.xlu0 %6083
      %6085 = vrot.lane.b32.xlu0 %v5971, 22
      %v6086 = vpop.permute.xlu0 %6085
      %v6087 = vsel %vm4114, %v6084, %v6086
      %v6088 = vsel %vm4114, %v6082, %v6084
      %v6089 = vmul.f32 %v6088, %v4119
      %v6090 = vmul.f32 %v6087, %v4120
      %v6091 = vadd.f32 %v6079, %v6089
      %v6092 = vadd.f32 %v6080, %v6090
      %6093 = vrot.lane.b32.xlu0 %v5969, 21
      %v6094 = vpop.permute.xlu0 %6093
      %6095 = vrot.lane.b32.xlu0 %v5970, 21
      %v6096 = vpop.permute.xlu0 %6095
      %6097 = vrot.lane.b32.xlu0 %v5971, 21
      %v6098 = vpop.permute.xlu0 %6097
      %v6099 = vsel %vm4133, %v6096, %v6098
      %v6100 = vsel %vm4133, %v6094, %v6096
      %v6101 = vmul.f32 %v6100, %v4138
      %v6102 = vmul.f32 %v6099, %v4139
      %v6103 = vadd.f32 %v6091, %v6101
      %v6104 = vadd.f32 %v6092, %v6102
      %6105 = vrot.lane.b32.xlu0 %v5969, 20
      %v6106 = vpop.permute.xlu0 %6105
      %6107 = vrot.lane.b32.xlu0 %v5970, 20
      %v6108 = vpop.permute.xlu0 %6107
      %6109 = vrot.lane.b32.xlu0 %v5971, 20
      %v6110 = vpop.permute.xlu0 %6109
      %v6111 = vsel %vm4152, %v6108, %v6110
      %v6112 = vsel %vm4152, %v6106, %v6108
      %v6113 = vmul.f32 %v6112, %v4157
      %v6114 = vmul.f32 %v6111, %v4158
      %v6115 = vadd.f32 %v6103, %v6113
      %v6116 = vadd.f32 %v6104, %v6114
      %6117 = vrot.lane.b32.xlu0 %v5969, 19
      %v6118 = vpop.permute.xlu0 %6117
      %6119 = vrot.lane.b32.xlu0 %v5970, 19
      %v6120 = vpop.permute.xlu0 %6119
      %6121 = vrot.lane.b32.xlu0 %v5971, 19
      %v6122 = vpop.permute.xlu0 %6121
      %v6123 = vsel %vm4171, %v6120, %v6122
      %v6124 = vsel %vm4171, %v6118, %v6120
      %v6125 = vmul.f32 %v6124, %v4176
      %v6126 = vmul.f32 %v6123, %v4177
      %v6127 = vadd.f32 %v6115, %v6125
      %v6128 = vadd.f32 %v6116, %v6126
      %6129 = vrot.lane.b32.xlu0 %v5969, 18
      %v6130 = vpop.permute.xlu0 %6129
      %6131 = vrot.lane.b32.xlu0 %v5970, 18
      %v6132 = vpop.permute.xlu0 %6131
      %6133 = vrot.lane.b32.xlu0 %v5971, 18
      %v6134 = vpop.permute.xlu0 %6133
      %v6135 = vsel %vm4190, %v6132, %v6134
      %v6136 = vsel %vm4190, %v6130, %v6132
      %v6137 = vmul.f32 %v6136, %v4195
      %v6138 = vmul.f32 %v6135, %v4196
      %v6139 = vadd.f32 %v6127, %v6137
      %v6140 = vadd.f32 %v6128, %v6138
      %6141 = vrot.lane.b32.xlu0 %v5969, 17
      %v6142 = vpop.permute.xlu0 %6141
      %6143 = vrot.lane.b32.xlu0 %v5970, 17
      %v6144 = vpop.permute.xlu0 %6143
      %6145 = vrot.lane.b32.xlu0 %v5971, 17
      %v6146 = vpop.permute.xlu0 %6145
      %v6147 = vsel %vm4209, %v6144, %v6146
      %v6148 = vsel %vm4209, %v6142, %v6144
      %v6149 = vmul.f32 %v6148, %v4214
      %v6150 = vmul.f32 %v6147, %v4215
      %v6151 = vadd.f32 %v6139, %v6149
      %v6152 = vadd.f32 %v6140, %v6150
      %6153 = vrot.lane.b32.xlu0 %v5969, 16
      %v6154 = vpop.permute.xlu0 %6153
      %6155 = vrot.lane.b32.xlu0 %v5970, 16
      %v6156 = vpop.permute.xlu0 %6155
      %6157 = vrot.lane.b32.xlu0 %v5971, 16
      %v6158 = vpop.permute.xlu0 %6157
      %v6159 = vsel %vm4228, %v6156, %v6158
      %v6160 = vsel %vm4228, %v6154, %v6156
      %v6161 = vmul.f32 %v6160, %v4233
      %v6162 = vmul.f32 %v6159, %v4234
      %v6163 = vadd.f32 %v6151, %v6161
      %v6164 = vadd.f32 %v6152, %v6162
      %6165 = vrot.lane.b32.xlu0 %v5969, 15
      %v6166 = vpop.permute.xlu0 %6165
      %6167 = vrot.lane.b32.xlu0 %v5970, 15
      %v6168 = vpop.permute.xlu0 %6167
      %6169 = vrot.lane.b32.xlu0 %v5971, 15
      %v6170 = vpop.permute.xlu0 %6169
      %v6171 = vsel %vm4247, %v6168, %v6170
      %v6172 = vsel %vm4247, %v6166, %v6168
      %v6173 = vmul.f32 %v6172, %v4252
      %v6174 = vmul.f32 %v6171, %v4253
      %v6175 = vadd.f32 %v6163, %v6173
      %v6176 = vadd.f32 %v6164, %v6174
      %6177 = vrot.lane.b32.xlu0 %v5969, 14
      %v6178 = vpop.permute.xlu0 %6177
      %6179 = vrot.lane.b32.xlu0 %v5970, 14
      %v6180 = vpop.permute.xlu0 %6179
      %6181 = vrot.lane.b32.xlu0 %v5971, 14
      %v6182 = vpop.permute.xlu0 %6181
      %v6183 = vsel %vm4266, %v6180, %v6182
      %v6184 = vsel %vm4266, %v6178, %v6180
      %v6185 = vmul.f32 %v6184, %v4271
      %v6186 = vmul.f32 %v6183, %v4272
      %v6187 = vadd.f32 %v6175, %v6185
      %v6188 = vadd.f32 %v6176, %v6186
      %6189 = vrot.lane.b32.xlu0 %v5969, 13
      %v6190 = vpop.permute.xlu0 %6189
      %6191 = vrot.lane.b32.xlu0 %v5970, 13
      %v6192 = vpop.permute.xlu0 %6191
      %6193 = vrot.lane.b32.xlu0 %v5971, 13
      %v6194 = vpop.permute.xlu0 %6193
      %v6195 = vsel %vm4285, %v6192, %v6194
      %v6196 = vsel %vm4285, %v6190, %v6192
      %v6197 = vmul.f32 %v6196, %v4290
      %v6198 = vmul.f32 %v6195, %v4291
      %v6199 = vadd.f32 %v6187, %v6197
      %v6200 = vadd.f32 %v6188, %v6198
      %6201 = vrot.lane.b32.xlu0 %v5969, 12
      %v6202 = vpop.permute.xlu0 %6201
      %6203 = vrot.lane.b32.xlu0 %v5970, 12
      %v6204 = vpop.permute.xlu0 %6203
      %6205 = vrot.lane.b32.xlu0 %v5971, 12
      %v6206 = vpop.permute.xlu0 %6205
      %v6207 = vsel %vm4304, %v6204, %v6206
      %v6208 = vsel %vm4304, %v6202, %v6204
      %v6209 = vmul.f32 %v6208, %v4309
      %v6210 = vmul.f32 %v6207, %v4310
      %v6211 = vadd.f32 %v6199, %v6209
      %v6212 = vadd.f32 %v6200, %v6210
      %6213 = vrot.lane.b32.xlu0 %v5969, 11
      %v6214 = vpop.permute.xlu0 %6213
      %6215 = vrot.lane.b32.xlu0 %v5970, 11
      %v6216 = vpop.permute.xlu0 %6215
      %6217 = vrot.lane.b32.xlu0 %v5971, 11
      %v6218 = vpop.permute.xlu0 %6217
      %v6219 = vsel %vm4323, %v6216, %v6218
      %v6220 = vsel %vm4323, %v6214, %v6216
      %v6221 = vmul.f32 %v6220, %v4328
      %v6222 = vmul.f32 %v6219, %v4329
      %v6223 = vadd.f32 %v6211, %v6221
      %v6224 = vadd.f32 %v6212, %v6222
      %6225 = vrot.lane.b32.xlu0 %v5969, 10
      %v6226 = vpop.permute.xlu0 %6225
      %6227 = vrot.lane.b32.xlu0 %v5970, 10
      %v6228 = vpop.permute.xlu0 %6227
      %6229 = vrot.lane.b32.xlu0 %v5971, 10
      %v6230 = vpop.permute.xlu0 %6229
      %v6231 = vsel %vm4342, %v6228, %v6230
      %v6232 = vsel %vm4342, %v6226, %v6228
      %v6233 = vmul.f32 %v6232, %v4347
      %v6234 = vmul.f32 %v6231, %v4348
      %v6235 = vadd.f32 %v6223, %v6233
      %v6236 = vadd.f32 %v6224, %v6234
      %6237 = vrot.lane.b32.xlu0 %v5969, 9
      %v6238 = vpop.permute.xlu0 %6237
      %6239 = vrot.lane.b32.xlu0 %v5970, 9
      %v6240 = vpop.permute.xlu0 %6239
      %6241 = vrot.lane.b32.xlu0 %v5971, 9
      %v6242 = vpop.permute.xlu0 %6241
      %v6243 = vsel %vm4361, %v6240, %v6242
      %v6244 = vsel %vm4361, %v6238, %v6240
      %v6245 = vmul.f32 %v6244, %v4366
      %v6246 = vmul.f32 %v6243, %v4367
      %v6247 = vadd.f32 %v6235, %v6245
      %v6248 = vadd.f32 %v6236, %v6246
      %6249 = vrot.lane.b32.xlu0 %v5969, 8
      %v6250 = vpop.permute.xlu0 %6249
      %6251 = vrot.lane.b32.xlu0 %v5970, 8
      %v6252 = vpop.permute.xlu0 %6251
      %6253 = vrot.lane.b32.xlu0 %v5971, 8
      %v6254 = vpop.permute.xlu0 %6253
      %v6255 = vsel %vm4380, %v6252, %v6254
      %v6256 = vsel %vm4380, %v6250, %v6252
      %v6257 = vmul.f32 %v6256, %v4385
      %v6258 = vmul.f32 %v6255, %v4386
      %v6259 = vadd.f32 %v6247, %v6257
      %v6260 = vadd.f32 %v6248, %v6258
      %6261 = vrot.lane.b32.xlu0 %v5969, 7
      %v6262 = vpop.permute.xlu0 %6261
      %6263 = vrot.lane.b32.xlu0 %v5970, 7
      %v6264 = vpop.permute.xlu0 %6263
      %6265 = vrot.lane.b32.xlu0 %v5971, 7
      %v6266 = vpop.permute.xlu0 %6265
      %v6267 = vsel %vm4399, %v6264, %v6266
      %v6268 = vsel %vm4399, %v6262, %v6264
      %v6269 = vmul.f32 %v6268, %v4404
      %v6270 = vmul.f32 %v6267, %v4405
      %v6271 = vadd.f32 %v6259, %v6269
      %v6272 = vadd.f32 %v6260, %v6270
      %6273 = vrot.lane.b32.xlu0 %v5969, 6
      %v6274 = vpop.permute.xlu0 %6273
      %6275 = vrot.lane.b32.xlu0 %v5970, 6
      %v6276 = vpop.permute.xlu0 %6275
      %6277 = vrot.lane.b32.xlu0 %v5971, 6
      %v6278 = vpop.permute.xlu0 %6277
      %v6279 = vsel %vm4418, %v6276, %v6278
      %v6280 = vsel %vm4418, %v6274, %v6276
      %v6281 = vmul.f32 %v6280, %v4423
      %v6282 = vmul.f32 %v6279, %v4424
      %v6283 = vadd.f32 %v6271, %v6281
      %v6284 = vadd.f32 %v6272, %v6282
      %6285 = vrot.lane.b32.xlu0 %v5969, 5
      %v6286 = vpop.permute.xlu0 %6285
      %6287 = vrot.lane.b32.xlu0 %v5970, 5
      %v6288 = vpop.permute.xlu0 %6287
      %6289 = vrot.lane.b32.xlu0 %v5971, 5
      %v6290 = vpop.permute.xlu0 %6289
      %v6291 = vsel %vm4437, %v6288, %v6290
      %v6292 = vsel %vm4437, %v6286, %v6288
      %v6293 = vmul.f32 %v6292, %v4442
      %v6294 = vmul.f32 %v6291, %v4443
      %v6295 = vadd.f32 %v6283, %v6293
      %v6296 = vadd.f32 %v6284, %v6294
      %6297 = vrot.lane.b32.xlu0 %v5969, 4
      %v6298 = vpop.permute.xlu0 %6297
      %6299 = vrot.lane.b32.xlu0 %v5970, 4
      %v6300 = vpop.permute.xlu0 %6299
      %6301 = vrot.lane.b32.xlu0 %v5971, 4
      %v6302 = vpop.permute.xlu0 %6301
      %v6303 = vsel %vm4456, %v6300, %v6302
      %v6304 = vsel %vm4456, %v6298, %v6300
      %v6305 = vmul.f32 %v6304, %v4461
      %v6306 = vmul.f32 %v6303, %v4462
      %v6307 = vadd.f32 %v6295, %v6305
      %v6308 = vadd.f32 %v6296, %v6306
      %6309 = vrot.lane.b32.xlu0 %v5969, 3
      %v6310 = vpop.permute.xlu0 %6309
      %6311 = vrot.lane.b32.xlu0 %v5970, 3
      %v6312 = vpop.permute.xlu0 %6311
      %6313 = vrot.lane.b32.xlu0 %v5971, 3
      %v6314 = vpop.permute.xlu0 %6313
      %v6315 = vsel %vm4475, %v6312, %v6314
      %v6316 = vsel %vm4475, %v6310, %v6312
      %v6317 = vmul.f32 %v6316, %v4480
      %v6318 = vmul.f32 %v6315, %v4481
      %v6319 = vadd.f32 %v6307, %v6317
      %v6320 = vadd.f32 %v6308, %v6318
      %6321 = vrot.lane.b32.xlu0 %v5969, 2
      %v6322 = vpop.permute.xlu0 %6321
      %6323 = vrot.lane.b32.xlu0 %v5970, 2
      %v6324 = vpop.permute.xlu0 %6323
      %6325 = vrot.lane.b32.xlu0 %v5971, 2
      %v6326 = vpop.permute.xlu0 %6325
      %v6327 = vsel %vm4494, %v6324, %v6326
      %v6328 = vsel %vm4494, %v6322, %v6324
      %v6329 = vmul.f32 %v6328, %v4499
      %v6330 = vmul.f32 %v6327, %v4500
      %v6331 = vadd.f32 %v6319, %v6329
      %v6332 = vadd.f32 %v6320, %v6330
      %6333 = vrot.lane.b32.xlu0 %v5969, 1
      %v6334 = vpop.permute.xlu0 %6333
      %6335 = vrot.lane.b32.xlu0 %v5970, 1
      %v6336 = vpop.permute.xlu0 %6335
      %6337 = vrot.lane.b32.xlu0 %v5971, 1
      %v6338 = vpop.permute.xlu0 %6337
      %v6339 = vsel %vm4513, %v6336, %v6338
      %v6340 = vsel %vm4513, %v6334, %v6336
      %v6341 = vmul.f32 %v6340, %v4518
      %v6342 = vmul.f32 %v6339, %v4519
      %v6343 = vadd.f32 %v6331, %v6341
      %v6344 = vadd.f32 %v6332, %v6342
      %v6345 = vmul.f32 %v5970, %v4527
      %v6346 = vmul.f32 %v5971, %v4528
      %v6347 = vadd.f32 %v6343, %v6345
      %v6348 = vadd.f32 %v6344, %v6346
      %v6349 = vmul.f32 %v6347, %v3932
      %v6350 = vmul.f32 %v6348, %v3933
      %v6351 = vmul.f32 %v6349, 0.2
      %v6352 = vmul.f32 %v6350, 0.2
      %v6353 = vadd.f32 %v5972, %v6352
      %6354 = vrot.lane.b32.xlu0 %v6351, 31
      %v6355 = vpop.permute.xlu0 %6354
      %6356 = vrot.lane.b32.xlu0 %v6352, 31
      %v6357 = vpop.permute.xlu0 %6356
      %v6358 = vsel %vm3943, %v6355, %v6357
      %v6359 = vmul.f32 %v6358, %v3949
      %v6360 = vadd.f32 %v6359, 0.0
      %6361 = vrot.lane.b32.xlu0 %v6351, 30
      %v6362 = vpop.permute.xlu0 %6361
      %6363 = vrot.lane.b32.xlu0 %v6352, 30
      %v6364 = vpop.permute.xlu0 %6363
      %v6365 = vsel %vm3962, %v6362, %v6364
      %v6366 = vmul.f32 %v6365, %v3968
      %v6367 = vadd.f32 %v6360, %v6366
      %6368 = vrot.lane.b32.xlu0 %v6351, 29
      %v6369 = vpop.permute.xlu0 %6368
      %6370 = vrot.lane.b32.xlu0 %v6352, 29
      %v6371 = vpop.permute.xlu0 %6370
      %v6372 = vsel %vm3981, %v6369, %v6371
      %v6373 = vmul.f32 %v6372, %v3987
      %v6374 = vadd.f32 %v6367, %v6373
      %6375 = vrot.lane.b32.xlu0 %v6351, 28
      %v6376 = vpop.permute.xlu0 %6375
      %6377 = vrot.lane.b32.xlu0 %v6352, 28
      %v6378 = vpop.permute.xlu0 %6377
      %v6379 = vsel %vm4000, %v6376, %v6378
      %v6380 = vmul.f32 %v6379, %v4006
      %v6381 = vadd.f32 %v6374, %v6380
      %6382 = vrot.lane.b32.xlu0 %v6351, 27
      %v6383 = vpop.permute.xlu0 %6382
      %6384 = vrot.lane.b32.xlu0 %v6352, 27
      %v6385 = vpop.permute.xlu0 %6384
      %v6386 = vsel %vm4019, %v6383, %v6385
      %v6387 = vmul.f32 %v6386, %v4025
      %v6388 = vadd.f32 %v6381, %v6387
      %6389 = vrot.lane.b32.xlu0 %v6351, 26
      %v6390 = vpop.permute.xlu0 %6389
      %6391 = vrot.lane.b32.xlu0 %v6352, 26
      %v6392 = vpop.permute.xlu0 %6391
      %v6393 = vsel %vm4038, %v6390, %v6392
      %v6394 = vmul.f32 %v6393, %v4044
      %v6395 = vadd.f32 %v6388, %v6394
      %6396 = vrot.lane.b32.xlu0 %v6351, 25
      %v6397 = vpop.permute.xlu0 %6396
      %6398 = vrot.lane.b32.xlu0 %v6352, 25
      %v6399 = vpop.permute.xlu0 %6398
      %v6400 = vsel %vm4057, %v6397, %v6399
      %v6401 = vmul.f32 %v6400, %v4063
      %v6402 = vadd.f32 %v6395, %v6401
      %6403 = vrot.lane.b32.xlu0 %v6351, 24
      %v6404 = vpop.permute.xlu0 %6403
      %6405 = vrot.lane.b32.xlu0 %v6352, 24
      %v6406 = vpop.permute.xlu0 %6405
      %v6407 = vsel %vm4076, %v6404, %v6406
      %v6408 = vmul.f32 %v6407, %v4082
      %v6409 = vadd.f32 %v6402, %v6408
      %6410 = vrot.lane.b32.xlu0 %v6351, 23
      %v6411 = vpop.permute.xlu0 %6410
      %6412 = vrot.lane.b32.xlu0 %v6352, 23
      %v6413 = vpop.permute.xlu0 %6412
      %v6414 = vsel %vm4095, %v6411, %v6413
      %v6415 = vmul.f32 %v6414, %v4101
      %v6416 = vadd.f32 %v6409, %v6415
      %6417 = vrot.lane.b32.xlu0 %v6351, 22
      %v6418 = vpop.permute.xlu0 %6417
      %6419 = vrot.lane.b32.xlu0 %v6352, 22
      %v6420 = vpop.permute.xlu0 %6419
      %v6421 = vsel %vm4114, %v6418, %v6420
      %v6422 = vmul.f32 %v6421, %v4120
      %v6423 = vadd.f32 %v6416, %v6422
      %6424 = vrot.lane.b32.xlu0 %v6351, 21
      %v6425 = vpop.permute.xlu0 %6424
      %6426 = vrot.lane.b32.xlu0 %v6352, 21
      %v6427 = vpop.permute.xlu0 %6426
      %v6428 = vsel %vm4133, %v6425, %v6427
      %v6429 = vmul.f32 %v6428, %v4139
      %v6430 = vadd.f32 %v6423, %v6429
      %6431 = vrot.lane.b32.xlu0 %v6351, 20
      %v6432 = vpop.permute.xlu0 %6431
      %6433 = vrot.lane.b32.xlu0 %v6352, 20
      %v6434 = vpop.permute.xlu0 %6433
      %v6435 = vsel %vm4152, %v6432, %v6434
      %v6436 = vmul.f32 %v6435, %v4158
      %v6437 = vadd.f32 %v6430, %v6436
      %6438 = vrot.lane.b32.xlu0 %v6351, 19
      %v6439 = vpop.permute.xlu0 %6438
      %6440 = vrot.lane.b32.xlu0 %v6352, 19
      %v6441 = vpop.permute.xlu0 %6440
      %v6442 = vsel %vm4171, %v6439, %v6441
      %v6443 = vmul.f32 %v6442, %v4177
      %v6444 = vadd.f32 %v6437, %v6443
      %6445 = vrot.lane.b32.xlu0 %v6351, 18
      %v6446 = vpop.permute.xlu0 %6445
      %6447 = vrot.lane.b32.xlu0 %v6352, 18
      %v6448 = vpop.permute.xlu0 %6447
      %v6449 = vsel %vm4190, %v6446, %v6448
      %v6450 = vmul.f32 %v6449, %v4196
      %v6451 = vadd.f32 %v6444, %v6450
      %6452 = vrot.lane.b32.xlu0 %v6351, 17
      %v6453 = vpop.permute.xlu0 %6452
      %6454 = vrot.lane.b32.xlu0 %v6352, 17
      %v6455 = vpop.permute.xlu0 %6454
      %v6456 = vsel %vm4209, %v6453, %v6455
      %v6457 = vmul.f32 %v6456, %v4215
      %v6458 = vadd.f32 %v6451, %v6457
      %6459 = vrot.lane.b32.xlu0 %v6351, 16
      %v6460 = vpop.permute.xlu0 %6459
      %6461 = vrot.lane.b32.xlu0 %v6352, 16
      %v6462 = vpop.permute.xlu0 %6461
      %v6463 = vsel %vm4228, %v6460, %v6462
      %v6464 = vmul.f32 %v6463, %v4234
      %v6465 = vadd.f32 %v6458, %v6464
      %6466 = vrot.lane.b32.xlu0 %v6351, 15
      %v6467 = vpop.permute.xlu0 %6466
      %6468 = vrot.lane.b32.xlu0 %v6352, 15
      %v6469 = vpop.permute.xlu0 %6468
      %v6470 = vsel %vm4247, %v6467, %v6469
      %v6471 = vmul.f32 %v6470, %v4253
      %v6472 = vadd.f32 %v6465, %v6471
      %6473 = vrot.lane.b32.xlu0 %v6351, 14
      %v6474 = vpop.permute.xlu0 %6473
      %6475 = vrot.lane.b32.xlu0 %v6352, 14
      %v6476 = vpop.permute.xlu0 %6475
      %v6477 = vsel %vm4266, %v6474, %v6476
      %v6478 = vmul.f32 %v6477, %v4272
      %v6479 = vadd.f32 %v6472, %v6478
      %6480 = vrot.lane.b32.xlu0 %v6351, 13
      %v6481 = vpop.permute.xlu0 %6480
      %6482 = vrot.lane.b32.xlu0 %v6352, 13
      %v6483 = vpop.permute.xlu0 %6482
      %v6484 = vsel %vm4285, %v6481, %v6483
      %v6485 = vmul.f32 %v6484, %v4291
      %v6486 = vadd.f32 %v6479, %v6485
      %6487 = vrot.lane.b32.xlu0 %v6351, 12
      %v6488 = vpop.permute.xlu0 %6487
      %6489 = vrot.lane.b32.xlu0 %v6352, 12
      %v6490 = vpop.permute.xlu0 %6489
      %v6491 = vsel %vm4304, %v6488, %v6490
      %v6492 = vmul.f32 %v6491, %v4310
      %v6493 = vadd.f32 %v6486, %v6492
      %6494 = vrot.lane.b32.xlu0 %v6351, 11
      %v6495 = vpop.permute.xlu0 %6494
      %6496 = vrot.lane.b32.xlu0 %v6352, 11
      %v6497 = vpop.permute.xlu0 %6496
      %v6498 = vsel %vm4323, %v6495, %v6497
      %v6499 = vmul.f32 %v6498, %v4329
      %v6500 = vadd.f32 %v6493, %v6499
      %6501 = vrot.lane.b32.xlu0 %v6351, 10
      %v6502 = vpop.permute.xlu0 %6501
      %6503 = vrot.lane.b32.xlu0 %v6352, 10
      %v6504 = vpop.permute.xlu0 %6503
      %v6505 = vsel %vm4342, %v6502, %v6504
      %v6506 = vmul.f32 %v6505, %v4348
      %v6507 = vadd.f32 %v6500, %v6506
      %6508 = vrot.lane.b32.xlu0 %v6351, 9
      %v6509 = vpop.permute.xlu0 %6508
      %6510 = vrot.lane.b32.xlu0 %v6352, 9
      %v6511 = vpop.permute.xlu0 %6510
      %v6512 = vsel %vm4361, %v6509, %v6511
      %v6513 = vmul.f32 %v6512, %v4367
      %v6514 = vadd.f32 %v6507, %v6513
      %6515 = vrot.lane.b32.xlu0 %v6351, 8
      %v6516 = vpop.permute.xlu0 %6515
      %6517 = vrot.lane.b32.xlu0 %v6352, 8
      %v6518 = vpop.permute.xlu0 %6517
      %v6519 = vsel %vm4380, %v6516, %v6518
      %v6520 = vmul.f32 %v6519, %v4386
      %v6521 = vadd.f32 %v6514, %v6520
      %6522 = vrot.lane.b32.xlu0 %v6351, 7
      %v6523 = vpop.permute.xlu0 %6522
      %6524 = vrot.lane.b32.xlu0 %v6352, 7
      %v6525 = vpop.permute.xlu0 %6524
      %v6526 = vsel %vm4399, %v6523, %v6525
      %v6527 = vmul.f32 %v6526, %v4405
      %v6528 = vadd.f32 %v6521, %v6527
      %6529 = vrot.lane.b32.xlu0 %v6351, 6
      %v6530 = vpop.permute.xlu0 %6529
      %6531 = vrot.lane.b32.xlu0 %v6352, 6
      %v6532 = vpop.permute.xlu0 %6531
      %v6533 = vsel %vm4418, %v6530, %v6532
      %v6534 = vmul.f32 %v6533, %v4424
      %v6535 = vadd.f32 %v6528, %v6534
      %6536 = vrot.lane.b32.xlu0 %v6351, 5
      %v6537 = vpop.permute.xlu0 %6536
      %6538 = vrot.lane.b32.xlu0 %v6352, 5
      %v6539 = vpop.permute.xlu0 %6538
      %v6540 = vsel %vm4437, %v6537, %v6539
      %v6541 = vmul.f32 %v6540, %v4443
      %v6542 = vadd.f32 %v6535, %v6541
      %6543 = vrot.lane.b32.xlu0 %v6351, 4
      %v6544 = vpop.permute.xlu0 %6543
      %6545 = vrot.lane.b32.xlu0 %v6352, 4
      %v6546 = vpop.permute.xlu0 %6545
      %v6547 = vsel %vm4456, %v6544, %v6546
      %v6548 = vmul.f32 %v6547, %v4462
      %v6549 = vadd.f32 %v6542, %v6548
      %6550 = vrot.lane.b32.xlu0 %v6351, 3
      %v6551 = vpop.permute.xlu0 %6550
      %6552 = vrot.lane.b32.xlu0 %v6352, 3
      %v6553 = vpop.permute.xlu0 %6552
      %v6554 = vsel %vm4475, %v6551, %v6553
      %v6555 = vmul.f32 %v6554, %v4481
      %v6556 = vadd.f32 %v6549, %v6555
      %6557 = vrot.lane.b32.xlu0 %v6351, 2
      %v6558 = vpop.permute.xlu0 %6557
      %6559 = vrot.lane.b32.xlu0 %v6352, 2
      %v6560 = vpop.permute.xlu0 %6559
      %v6561 = vsel %vm4494, %v6558, %v6560
      %v6562 = vmul.f32 %v6561, %v4500
      %v6563 = vadd.f32 %v6556, %v6562
      %6564 = vrot.lane.b32.xlu0 %v6351, 1
      %v6565 = vpop.permute.xlu0 %6564
      %6566 = vrot.lane.b32.xlu0 %v6352, 1
      %v6567 = vpop.permute.xlu0 %6566
      %v6568 = vsel %vm4513, %v6565, %v6567
      %v6569 = vmul.f32 %v6568, %v4519
      %v6570 = vadd.f32 %v6563, %v6569
      %v6571 = vmul.f32 %v6352, %v4528
      %v6572 = vadd.f32 %v6570, %v6571
      %v6573 = vmul.f32 %v6572, %v3933
      %v6574 = vmul.f32 %v6573, 0.16666667
      %v6575 = vadd.f32 %v6353, %v6574
      %vm6576 = vcmask 64512
      %6577 = vst.msk [vmem:[%s232] sm:$0xff] %vm6576, %v6575
      %p6578 = scmp.lt.s32.totalorder %s15, 1
      %s6579 = scalar_select %p6578, %s15, 1
      %s6580 = smul.addr %s6579, 8
      %s6581 = scalar_lea.vmem %s4, %s6580
      // Predicated region
      $region37: #{tpu_custom_call.1} parent=35 // pred_check
        %p6582 = pneg %p132
      $region38: #{tpu_custom_call.1} parent=35 // pred_check_branch
        %6584 = sbr.rel (%p6582) target = $region40
      $region39: #{tpu_custom_call.1} parent=35 // pred_region
        _
      $region40: #{tpu_custom_call.1} parent=35 // pred_fallthru
        _
    $region36: #{tpu_custom_call.1} parent=5 // pred_fallthru
      _
    %p6585 = scmp.le.s32.totalorder 2, %s10
    // Predicated region
    $region41: #{tpu_custom_call.1} parent=5 // pred_check
      %p6586 = pneg %p6585
    $region42: #{tpu_custom_call.1} parent=5 // pred_check_branch
      %6588 = sbr.rel (%p6586) target = $region44
    $region43: #{tpu_custom_call.1} parent=5 // pred_region
      %s6589 = ssub.s32 %s10, 2
      // Predicated region
      $region45: #{tpu_custom_call.1} parent=43 // pred_check
        %p6590 = pneg %p138
      $region46: #{tpu_custom_call.1} parent=43 // pred_check_branch
        %6592 = sbr.rel (%p6590) target = $region48
      $region47: #{tpu_custom_call.1} parent=43 // pred_region
        %p6593 = scmp.lt.s32.totalorder %s16, 1
        %s6594 = scalar_select %p6593, %s16, 1
        %s6595 = smul.addr %s6594, 8
        %s6596 = scalar_lea.vmem %s4, %s6595
      $region48: #{tpu_custom_call.1} parent=43 // pred_fallthru
        _
    $region44: #{tpu_custom_call.1} parent=5 // pred_fallthru
      _
  $region6: #{tpu_custom_call.1} parent=0 // loop_footer
    %s14 = sadd.s32 1, %s10
  $region7: #{tpu_custom_call.1} parent=0 // loop_footer_branch
    %9 = sbr.rel target = $region3
  $region8: #{tpu_custom_call.1} parent=0 // loop_exit
    _

</llo_original>
